<compile_context>
chip_gen: v6e
topology: v6e:2x2x1
jax: 0.10.0
libtpu: 0.0.40
codegen_flags: <defaults>
</compile_context>

<pallas_src>
import jax
import jax.numpy as jnp
from jax.experimental import pallas as pl
from jax.experimental.pallas import tpu as pltpu

D_IN = 768     # AddInfo input dim
D_HID = 1024   # AddInfo output / Generator input dim
D_OUT = 768    # Generator output dim


def _round_up(x, m):
    return ((x + m - 1) // m) * m


# ---------------------------------------------------------------------------
# Kernel
# ---------------------------------------------------------------------------
def generator_net_kernel(a_ref, b1_ref, b2_ref, w1_ref, bias1_ref, w2_ref,
                         bias2_ref, out_ref):
    """One batch tile of GeneratorNet.forward (eval mode)."""
    w1 = w1_ref[...]           # (768, 1024) bf16 -- resident across the grid
    bias1 = bias1_ref[...]     # (1, 1024) f32

    def first_layer(x_ref):
        # bf16 cast done in-kernel so HBM only ever sees the original f32
        # activations once (no wrapper-side stack / cast / pad pass).
        x = x_ref[...].astype(jnp.bfloat16)                       # (tm, 768)
        h = jnp.dot(x, w1, preferred_element_type=jnp.float32)    # MXU, f32 acc
        # Bias + tanh in f32.  NOTE(perf, v6e/v7x): if profiling shows the EUP
        # (tanh) slot saturating before the MXU, this tanh can be moved to bf16.
        return jnp.tanh(h + bias1)

    # Three back-to-back dots reuse the already-resident W1 on the MXU.
    add_info = first_layer(a_ref) + (first_layer(b1_ref) - first_layer(b2_ref))
    # TODO(synk): nn.Dropout(0.5) is active only in train mode; identity here (eval).

    # Second layer: (tm, 1024) @ (1024, 768), bf16 operands, f32 accumulation.
    out = jnp.dot(add_info.astype(jnp.bfloat16), w2_ref[...],
                  preferred_element_type=jnp.float32)
    out_ref[...] = jnp.tanh(out + bias2_ref[...]).astype(out_ref.dtype)


# ---------------------------------------------------------------------------
# Wrapper
# ---------------------------------------------------------------------------
def _pick_tile(batch, tile_m):
    """Row tile: multiple of 16 (bf16 sublane packing), capped at tile_m, and
    shrunk so the grid has >= 2 steps whenever possible so the "parallel"
    batch axis can shard across v7x's two TensorCores."""
    tm = max(16, (min(tile_m, _round_up(batch, 16)) // 16) * 16)
    if batch > 16:
        tm = min(tm, _round_up(pl.cdiv(batch, 2), 16))
    return tm


def _const_spec(shape):
    """BlockSpec for an operand that is identical for every grid step
    (weights / biases).  Single-buffer it when the installed Pallas exposes
    pipeline_mode, since no re-fetch ever happens."""
    idx = lambda i: (0,) * len(shape)
    try:
        return pl.BlockSpec(shape, idx, pipeline_mode=pl.Buffered(1))
    except (TypeError, AttributeError):
        return pl.BlockSpec(shape, idx)


def generator_net(A, B1, B2, w1, b1, w2, b2, *, tile_m=512,
                  out_dtype=jnp.float32):
    """Pallas forward pass of GeneratorNet (eval mode).

    A/B1/B2 are streamed as-is (f32) -- no stack/cast/pad pre-pass.  Weights are
    cast to bf16 (in a serving loop, pre-cast them once outside the step fn).
    TODO(synk): for repeated tiny-batch calls, keep W1/W2 resident in VMEM via a
    cross-pallas_call residency pattern instead of re-streaming ~3 MiB per call.
    """
    B = A.shape[0]
    assert A.shape == (B, D_IN) and B1.shape == (B, D_IN) and B2.shape == (B, D_IN)

    tm = _pick_tile(B, tile_m)
    grid = (pl.cdiv(B, tm),)           # partial last tile handled by masking

    w1_bf = w1.astype(jnp.bfloat16)
    w2_bf = w2.astype(jnp.bfloat16)
    b1_2d = b1.reshape(1, D_HID).astype(jnp.float32)
    b2_2d = b2.reshape(1, D_OUT).astype(jnp.float32)

    in_specs = [
        pl.BlockSpec((tm, D_IN), lambda i: (i, 0)),   # A  (f32, cast in-kernel)
        pl.BlockSpec((tm, D_IN), lambda i: (i, 0)),   # B1
        pl.BlockSpec((tm, D_IN), lambda i: (i, 0)),   # B2
        _const_spec((D_IN, D_HID)),                   # W1 (bf16, resident)
        _const_spec((1, D_HID)),                      # b1
        _const_spec((D_HID, D_OUT)),                  # W2 (bf16, resident)
        _const_spec((1, D_OUT)),                      # b2
    ]
    out_spec = pl.BlockSpec((tm, D_OUT), lambda i: (i, 0))

    return pl.pallas_call(
        generator_net_kernel,
        out_shape=jax.ShapeDtypeStruct((B, D_OUT), out_dtype),
        grid_spec=pltpu.PrefetchScalarGridSpec(
            num_scalar_prefetch=0,
            grid=grid,
            in_specs=in_specs,
            out_specs=out_spec,
        ),
        compiler_params=pltpu.CompilerParams(
            # Batch tiles are independent -> shard across TCs on v7x.
            dimension_semantics=("parallel",),
            # ~29 MiB needed at tm=512; 48 MiB is safe on v5e/v6e (128 MiB
            # physical) and leaves headroom under v7x's 64 MiB VMEM.
            vmem_limit_bytes=48 * 1024 * 1024,
        ),
    )(A, B1, B2, w1_bf, b1_2d, w2_bf, b2_2d)


# ---------------------------------------------------------------------------
# Params + references
# ---------------------------------------------------------------------------
def init_params(key):
    """Deterministic parameter init (same shapes as the PyTorch module)."""
    k1, k2, k3, k4 = jax.random.split(key, 4)
    s1 = 1.0 / jnp.sqrt(D_IN)
    s2 = 1.0 / jnp.sqrt(D_HID)
    w1 = jax.random.uniform(k1, (D_IN, D_HID), jnp.float32, -s1, s1)
    b1 = jax.random.uniform(k2, (D_HID,), jnp.float32, -s1, s1)
    w2 = jax.random.uniform(k3, (D_HID, D_OUT), jnp.float32, -s2, s2)
    b2 = jax.random.uniform(k4, (D_OUT,), jnp.float32, -s2, s2)
    return w1, b1, w2, b2


def reference_f32(A, B1, B2, w1, b1, w2, b2):
    act = lambda x: jnp.tanh(jnp.dot(x, w1, preferred_element_type=jnp.float32) + b1)
    add_info = act(A) + (act(B1) - act(B2))
    return jnp.tanh(jnp.dot(add_info, w2, preferred_element_type=jnp.float32) + b2)


def reference_bf16(A, B1, B2, w1, b1, w2, b2):
    """Mirror the kernel's bf16 quantization steps (f32 accumulation)."""
    bf = lambda t: t.astype(jnp.bfloat16).astype(jnp.float32)
    w1q, w2q = bf(w1), bf(w2)
    act = lambda x: jnp.tanh(jnp.dot(bf(x), w1q, preferred_element_type=jnp.float32) + b1)
    add_info = act(A) + (act(B1) - act(B2))
    return jnp.tanh(jnp.dot(bf(add_info), w2q, preferred_element_type=jnp.float32) + b2)


# ---------------------------------------------------------------------------
# Demo / self-test
# ---------------------------------------------------------------------------
if __name__ == "__main__":
    key = jax.random.PRNGKey(0)
    kp, ka, kb1, kb2 = jax.random.split(key, 4)
    w1, b1, w2, b2 = init_params(kp)

    # Small, non-multiple-of-16 batch: exercises tile clamping, a 2-step
    # "parallel" grid (megacore path) and partial-tile masking.
    BATCH = 20
    A = jax.random.normal(ka, (BATCH, D_IN), jnp.float32)
    B1 = jax.random.normal(kb1, (BATCH, D_IN), jnp.float32)
    B2 = jax.random.normal(kb2, (BATCH, D_IN), jnp.float32)

    out = jax.block_until_ready(generator_net(A, B1, B2, w1, b1, w2, b2))
    assert out.shape == (BATCH, D_OUT)

    ref_q = reference_bf16(A, B1, B2, w1, b1, w2, b2)
    ref_f = reference_f32(A, B1, B2, w1, b1, w2, b2)
    assert jnp.allclose(out, ref_q, atol=5e-3, rtol=5e-3), "mismatch vs bf16 reference"
    assert jnp.allclose(out, ref_f, atol=3e-2, rtol=3e-2), "mismatch vs f32 reference"

    # Second check: force a multi-step pipelined grid with a small tile.
    BATCH2 = 48
    ka2, kb12, kb22 = jax.random.split(jax.random.PRNGKey(1), 3)
    A2 = jax.random.normal(ka2, (BATCH2, D_IN), jnp.float32)
    B12 = jax.random.normal(kb12, (BATCH2, D_IN), jnp.float32)
    B22 = jax.random.normal(kb22, (BATCH2, D_IN), jnp.float32)
    out2 = jax.block_until_ready(
        generator_net(A2, B12, B22, w1, b1, w2, b2, tile_m=16))
    assert out2.shape == (BATCH2, D_OUT)
    assert jnp.allclose(out2, reference_bf16(A2, B12, B22, w1, b1, w2, b2),
                        atol=5e-3, rtol=5e-3), "mismatch (tiled grid)"

    print("KERNEL_OK")
</pallas_src>

<mosaic_0001>
module attributes {stable_mosaic.version = 11 : i64} {
  func.func @generator_net_kernel(%arg0: i32, %arg1: memref<16x768xf32, #tpu.memory_space<vmem>>, %arg2: memref<16x768xf32, #tpu.memory_space<vmem>>, %arg3: memref<16x768xf32, #tpu.memory_space<vmem>>, %arg4: memref<768x1024xbf16, #tpu.memory_space<vmem>>, %arg5: memref<1x1024xf32, #tpu.memory_space<vmem>>, %arg6: memref<1024x768xbf16, #tpu.memory_space<vmem>>, %arg7: memref<1x768xf32, #tpu.memory_space<vmem>>, %arg8: memref<16x768xf32, #tpu.memory_space<vmem>>) attributes {dimension_semantics = [#tpu.dimension_semantics<parallel>], iteration_bounds = array<i64: 2>, scalar_prefetch = 0 : i64, scratch_operands = 0 : i64, tpu.core_type = #tpu.core_type<tc>, window_params = [{transform_indices = @transform_0, window_bounds = array<i64: 16, 768>}, {transform_indices = @transform_1, window_bounds = array<i64: 16, 768>}, {transform_indices = @transform_2, window_bounds = array<i64: 16, 768>}, {pipeline_mode = #tpu.pipeline_mode<synchronous>, transform_indices = @transform_3, window_bounds = array<i64: 768, 1024>}, {pipeline_mode = #tpu.pipeline_mode<synchronous>, transform_indices = @transform_4, window_bounds = array<i64: 1, 1024>}, {pipeline_mode = #tpu.pipeline_mode<synchronous>, transform_indices = @transform_5, window_bounds = array<i64: 1024, 768>}, {pipeline_mode = #tpu.pipeline_mode<synchronous>, transform_indices = @transform_6, window_bounds = array<i64: 1, 768>}, {transform_indices = @transform_7, window_bounds = array<i64: 16, 768>}]} {
    %c0 = arith.constant 0 : index
    %c0_0 = arith.constant 0 : index
    %0 = vector.load %arg4[%c0, %c0_0] : memref<768x1024xbf16, #tpu.memory_space<vmem>>, vector<768x1024xbf16>
    %c0_1 = arith.constant 0 : index
    %c0_2 = arith.constant 0 : index
    %1 = vector.load %arg5[%c0_1, %c0_2] : memref<1x1024xf32, #tpu.memory_space<vmem>>, vector<1x1024xf32>
    %c0_3 = arith.constant 0 : index
    %c0_4 = arith.constant 0 : index
    %2 = vector.load %arg1[%c0_3, %c0_4] : memref<16x768xf32, #tpu.memory_space<vmem>>, vector<16x768xf32>
    %3 = arith.truncf %2 : vector<16x768xf32> to vector<16x768xbf16>
    %cst = arith.constant dense<0.000000e+00> : vector<16x1024xf32>
    %4 = tpu.matmul %3, %0, %cst {dimension_numbers = #tpu.dot_dimension_numbers<[1], [0], [0], [1], [0, 0, 1, 1], [], []>} : vector<16x768xbf16>, vector<768x1024xbf16>, vector<16x1024xf32> -> vector<16x1024xf32>
    %5 = vector.broadcast %1 : vector<1x1024xf32> to vector<16x1024xf32>
    %6 = arith.addf %4, %5 : vector<16x1024xf32>
    %7 = math.tanh %6 : vector<16x1024xf32>
    %c0_5 = arith.constant 0 : index
    %c0_6 = arith.constant 0 : index
    %8 = vector.load %arg2[%c0_5, %c0_6] : memref<16x768xf32, #tpu.memory_space<vmem>>, vector<16x768xf32>
    %9 = arith.truncf %8 : vector<16x768xf32> to vector<16x768xbf16>
    %cst_7 = arith.constant dense<0.000000e+00> : vector<16x1024xf32>
    %10 = tpu.matmul %9, %0, %cst_7 {dimension_numbers = #tpu.dot_dimension_numbers<[1], [0], [0], [1], [0, 0, 1, 1], [], []>} : vector<16x768xbf16>, vector<768x1024xbf16>, vector<16x1024xf32> -> vector<16x1024xf32>
    %11 = vector.broadcast %1 : vector<1x1024xf32> to vector<16x1024xf32>
    %12 = arith.addf %10, %11 : vector<16x1024xf32>
    %13 = math.tanh %12 : vector<16x1024xf32>
    %c0_8 = arith.constant 0 : index
    %c0_9 = arith.constant 0 : index
    %14 = vector.load %arg3[%c0_8, %c0_9] : memref<16x768xf32, #tpu.memory_space<vmem>>, vector<16x768xf32>
    %15 = arith.truncf %14 : vector<16x768xf32> to vector<16x768xbf16>
    %cst_10 = arith.constant dense<0.000000e+00> : vector<16x1024xf32>
    %16 = tpu.matmul %15, %0, %cst_10 {dimension_numbers = #tpu.dot_dimension_numbers<[1], [0], [0], [1], [0, 0, 1, 1], [], []>} : vector<16x768xbf16>, vector<768x1024xbf16>, vector<16x1024xf32> -> vector<16x1024xf32>
    %17 = vector.broadcast %1 : vector<1x1024xf32> to vector<16x1024xf32>
    %18 = arith.addf %16, %17 : vector<16x1024xf32>
    %19 = math.tanh %18 : vector<16x1024xf32>
    %20 = arith.subf %13, %19 : vector<16x1024xf32>
    %21 = arith.addf %7, %20 : vector<16x1024xf32>
    %22 = arith.truncf %21 : vector<16x1024xf32> to vector<16x1024xbf16>
    %c0_11 = arith.constant 0 : index
    %c0_12 = arith.constant 0 : index
    %23 = vector.load %arg6[%c0_11, %c0_12] : memref<1024x768xbf16, #tpu.memory_space<vmem>>, vector<1024x768xbf16>
    %cst_13 = arith.constant dense<0.000000e+00> : vector<16x768xf32>
    %24 = tpu.matmul %22, %23, %cst_13 {dimension_numbers = #tpu.dot_dimension_numbers<[1], [0], [0], [1], [0, 0, 1, 1], [], []>} : vector<16x1024xbf16>, vector<1024x768xbf16>, vector<16x768xf32> -> vector<16x768xf32>
    %c0_14 = arith.constant 0 : index
    %c0_15 = arith.constant 0 : index
    %25 = vector.load %arg7[%c0_14, %c0_15] : memref<1x768xf32, #tpu.memory_space<vmem>>, vector<1x768xf32>
    %26 = vector.broadcast %25 : vector<1x768xf32> to vector<16x768xf32>
    %27 = arith.addf %24, %26 : vector<16x768xf32>
    %28 = math.tanh %27 : vector<16x768xf32>
    %c0_16 = arith.constant 0 : index
    %c0_17 = arith.constant 0 : index
    %29 = vector.load %arg8[%c0_16, %c0_17] : memref<16x768xf32, #tpu.memory_space<vmem>>, vector<16x768xf32>
    tpu.vector_store %arg8[%c0_16, %c0_17], %28 {strides = array<i32>} : memref<16x768xf32, #tpu.memory_space<vmem>>, vector<16x768xf32>,
    return
  }
  func.func @transform_0(%arg0: i32) -> (i32, i32) {
    %c0_i32 = arith.constant 0 : i32
    %c0_i32_0 = arith.constant 0 : i32
    return %arg0, %c0_i32 : i32, i32
  }
  func.func @transform_1(%arg0: i32) -> (i32, i32) {
    %c0_i32 = arith.constant 0 : i32
    %c0_i32_0 = arith.constant 0 : i32
    return %arg0, %c0_i32 : i32, i32
  }
  func.func @transform_2(%arg0: i32) -> (i32, i32) {
    %c0_i32 = arith.constant 0 : i32
    %c0_i32_0 = arith.constant 0 : i32
    return %arg0, %c0_i32 : i32, i32
  }
  func.func @transform_3(%arg0: i32) -> (i32, i32) {
    %c0_i32 = arith.constant 0 : i32
    %c0_i32_0 = arith.constant 0 : i32
    %c0_i32_1 = arith.constant 0 : i32
    return %c0_i32, %c0_i32_0 : i32, i32
  }
  func.func @transform_4(%arg0: i32) -> (i32, i32) {
    %c0_i32 = arith.constant 0 : i32
    %c0_i32_0 = arith.constant 0 : i32
    %c0_i32_1 = arith.constant 0 : i32
    return %c0_i32, %c0_i32_0 : i32, i32
  }
  func.func @transform_5(%arg0: i32) -> (i32, i32) {
    %c0_i32 = arith.constant 0 : i32
    %c0_i32_0 = arith.constant 0 : i32
    %c0_i32_1 = arith.constant 0 : i32
    return %c0_i32, %c0_i32_0 : i32, i32
  }
  func.func @transform_6(%arg0: i32) -> (i32, i32) {
    %c0_i32 = arith.constant 0 : i32
    %c0_i32_0 = arith.constant 0 : i32
    %c0_i32_1 = arith.constant 0 : i32
    return %c0_i32, %c0_i32_0 : i32, i32
  }
  func.func @transform_7(%arg0: i32) -> (i32, i32) {
    %c0_i32 = arith.constant 0 : i32
    %c0_i32_0 = arith.constant 0 : i32
    return %arg0, %c0_i32 : i32, i32
  }
}

</mosaic_0001>

<llo_original>
// kernel: tpu_custom_call.1
$region0: #{tpu_custom_call.1}
  #allocation0 [shape = 'u32[]', space=smem, size = 0x4, offset = 0x4, fixed_abs, tag = 'smem constant byte address 0x4 - core index']
  #allocation1 [shape = 'u32[144,128]{1,0:T(1,128)}', space=vmem, size = 0x12000, scoped, tag = 'internal scratch']
  %s0 = inlined_call_operand.hbm [shape: f32[20,768], index: 0, kind: input, shape index: {}]
  %s1 = inlined_call_operand.hbm [shape: f32[20,768], index: 1, kind: input, shape index: {}]
  %s2 = inlined_call_operand.hbm [shape: f32[20,768], index: 2, kind: input, shape index: {}]
  %s3 = inlined_call_operand.hbm [shape: bf16[768,1024], index: 3, kind: input, shape index: {}]
  %s4 = inlined_call_operand.hbm [shape: f32[1,1024], index: 4, kind: input, shape index: {}]
  %s5 = inlined_call_operand.hbm [shape: bf16[1024,768], index: 5, kind: input, shape index: {}]
  %s6 = inlined_call_operand.hbm [shape: f32[1,768], index: 6, kind: input, shape index: {}]
  %s7 = inlined_call_operand.hbm [shape: f32[20,768], index: 7, kind: output, shape index: {}]
  %s8 = sld [smem:[#allocation0]]
  $region89: #{tpu_custom_call.1} parent=0
    _
  %s10 = ssub.s32 1, %s8
  %s11 = scalar_select 0, %s10, %s8
  $region1: #{tpu_custom_call.1} parent=0
    #allocation2 [shape = 'u8[98304]{0}', space=vmem, size = 0x18000, scoped, tag = 'input window, operand 0']
    #allocation3 [shape = 's32[2]{0}', space=sflag, size = 0x8, scoped, tag = 'scoped memory for tpu_custom_call.1']
    #allocation4 [shape = 's32[2]{0}', space=sflag, size = 0x8, scoped, tag = 'scoped memory for tpu_custom_call.1']
    #allocation5 [shape = 'u8[98304]{0}', space=vmem, size = 0x18000, scoped, tag = 'input window, operand 1']
    #allocation6 [shape = 's32[2]{0}', space=sflag, size = 0x8, scoped, tag = 'scoped memory for tpu_custom_call.1']
    #allocation7 [shape = 'u8[98304]{0}', space=vmem, size = 0x18000, scoped, tag = 'input window, operand 2']
    #allocation8 [shape = 'u8[1572864]{0}', space=vmem, size = 0x180000, scoped, tag = 'input window, operand 3, single buffered']
    #allocation9 [shape = 's32[1]{0}', space=sflag, size = 0x4, scoped, tag = 'scoped memory for tpu_custom_call.1']
    #allocation10 [shape = 'u8[4096]{0}', space=vmem, size = 0x1000, scoped, tag = 'input window, operand 4, single buffered']
    #allocation11 [shape = 'u8[1572864]{0}', space=vmem, size = 0x180000, scoped, tag = 'input window, operand 5, single buffered']
    #allocation12 [shape = 's32[1]{0}', space=sflag, size = 0x4, scoped, tag = 'scoped memory for tpu_custom_call.1']
    #allocation13 [shape = 'u8[3072]{0}', space=vmem, size = 0xc00, scoped, tag = 'input window, operand 6, single buffered']
    #allocation14 [shape = 'u8[98304]{0}', space=vmem, size = 0x18000, scoped, tag = 'output window, operand 0']
    %12 = vsyncpa [#allocation3], 0
    %s13 = scalar_lea.sflag [#allocation3], 1
    %14 = vsyncpa %s13, 0
    %15 = vsyncpa [#allocation6], 0
    %s16 = scalar_lea.sflag [#allocation6], 1
    %17 = vsyncpa %s16, 0
    %18 = vsyncpa [#allocation9], 0
    %19 = vsyncpa [#allocation12], 0
    %20 = vsyncpa [#allocation4], 0
    %s21 = scalar_lea.sflag [#allocation4], 1
    %22 = vsyncpa %s21, 0
    loop: start=0, step=1, limit=4
    $region2: #{tpu_custom_call.1} parent=1 // loop_pre_header
      _
    $region3: #{tpu_custom_call.1} parent=1 // loop_header
      %s24 = sphi 0, %s28
      %p25 = scmp.ge.s32.totalorder %s24, 4
      %s34 = sphi 0, %s36
      %s37 = sphi 0, %s34
      %s38 = sphi 0, %s37
      %s54 = sphi 0, %s38
      %s60 = sphi 0, %s62
      %s63 = sphi 0, %s60
      %s64 = sphi 0, %s63
      %s80 = sphi 0, %s64
      %s86 = sphi 0, %s88
      %s89 = sphi 0, %s86
      %s90 = sphi 0, %s89
      %s106 = sphi 0, %s90
      %s110 = sphi 0, %s110
      %s112 = sphi 0, %s110
      %s113 = sphi 0, %s112
      %s127 = sphi 0, %s113
      %s131 = sphi 0, %s131
      %s133 = sphi 0, %s131
      %s134 = sphi 0, %s133
      %s148 = sphi 0, %s134
      %s152 = sphi 0, %s152
      %s154 = sphi 0, %s152
      %s155 = sphi 0, %s154
      %s169 = sphi 0, %s155
      %s173 = sphi 0, %s173
      %s175 = sphi 0, %s173
      %s176 = sphi 0, %s175
      %s190 = sphi 0, %s176
      %s196 = sphi 0, %s198
      %s199 = sphi 0, %s196
      %s200 = sphi 0, %s199
      %s216 = sphi 0, %s200
    $region4: #{tpu_custom_call.1} parent=1 // loop_header_branch
      %27 = sbr.rel (%p25) target = $region8
    $region5: #{tpu_custom_call.1} parent=1 // loop_body
      %s29 = ssub.s32 %s24, 1
      %s30 = ssub.s32 %s24, 2
      %s31 = sadd.s32 %s24, 1
      %s32 = ssub.s32 %s24, %s31
      %p33 = scmp.eq.s32.totalorder %s32, 0
      %s35 = sadd.s32 %s34, 1
      %s36 = scalar_select %p33, %s34, %s35
      %p39 = pneg %p33
      %p40 = scmp.eq.s32.totalorder %s24, 1
      %p41 = por %p39, %p40
      %p42 = scmp.ne.s32.totalorder %s34, %s37
      %p43 = scmp.eq.s32.totalorder %s24, 0
      %p44 = por %p42, %p43
      %p45 = scmp.ne.s32.totalorder %s34, %s37
      %p46 = scmp.eq.s32.totalorder %s29, 1
      %p47 = por %p45, %p46
      %p48 = scmp.ne.s32.totalorder %s37, %s38
      %p49 = scmp.eq.s32.totalorder %s29, 0
      %p50 = por %p48, %p49
      %p51 = scmp.ne.s32.totalorder %s37, %s38
      %p52 = scmp.eq.s32.totalorder %s30, 1
      %p53 = por %p51, %p52
      %p55 = scmp.ne.s32.totalorder %s38, %s54
      %p56 = scmp.eq.s32.totalorder %s30, 0
      %p57 = por %p55, %p56
      %s58 = ssub.s32 %s24, %s31
      %p59 = scmp.eq.s32.totalorder %s58, 0
      %s61 = sadd.s32 %s60, 1
      %s62 = scalar_select %p59, %s60, %s61
      %p65 = pneg %p59
      %p66 = scmp.eq.s32.totalorder %s24, 1
      %p67 = por %p65, %p66
      %p68 = scmp.ne.s32.totalorder %s60, %s63
      %p69 = scmp.eq.s32.totalorder %s24, 0
      %p70 = por %p68, %p69
      %p71 = scmp.ne.s32.totalorder %s60, %s63
      %p72 = scmp.eq.s32.totalorder %s29, 1
      %p73 = por %p71, %p72
      %p74 = scmp.ne.s32.totalorder %s63, %s64
      %p75 = scmp.eq.s32.totalorder %s29, 0
      %p76 = por %p74, %p75
      %p77 = scmp.ne.s32.totalorder %s63, %s64
      %p78 = scmp.eq.s32.totalorder %s30, 1
      %p79 = por %p77, %p78
      %p81 = scmp.ne.s32.totalorder %s64, %s80
      %p82 = scmp.eq.s32.totalorder %s30, 0
      %p83 = por %p81, %p82
      %s84 = ssub.s32 %s24, %s31
      %p85 = scmp.eq.s32.totalorder %s84, 0
      %s87 = sadd.s32 %s86, 1
      %s88 = scalar_select %p85, %s86, %s87
      %p91 = pneg %p85
      %p92 = scmp.eq.s32.totalorder %s24, 1
      %p93 = por %p91, %p92
      %p94 = scmp.ne.s32.totalorder %s86, %s89
      %p95 = scmp.eq.s32.totalorder %s24, 0
      %p96 = por %p94, %p95
      %p97 = scmp.ne.s32.totalorder %s86, %s89
      %p98 = scmp.eq.s32.totalorder %s29, 1
      %p99 = por %p97, %p98
      %p100 = scmp.ne.s32.totalorder %s89, %s90
      %p101 = scmp.eq.s32.totalorder %s29, 0
      %p102 = por %p100, %p101
      %p103 = scmp.ne.s32.totalorder %s89, %s90
      %p104 = scmp.eq.s32.totalorder %s30, 1
      %p105 = por %p103, %p104
      %p107 = scmp.ne.s32.totalorder %s90, %s106
      %p108 = scmp.eq.s32.totalorder %s30, 0
      %p109 = por %p107, %p108
      %s111 = sadd.s32 %s110, 1
      %p114 = scmp.eq.s32.totalorder %s24, 1
      %p115 = scmp.ne.s32.totalorder %s110, %s112
      %p116 = scmp.eq.s32.totalorder %s24, 0
      %p117 = por %p115, %p116
      %p118 = scmp.ne.s32.totalorder %s110, %s112
      %p119 = scmp.eq.s32.totalorder %s29, 1
      %p120 = por %p118, %p119
      %p121 = scmp.ne.s32.totalorder %s112, %s113
      %p122 = scmp.eq.s32.totalorder %s29, 0
      %p123 = por %p121, %p122
      %p124 = scmp.ne.s32.totalorder %s112, %s113
      %p125 = scmp.eq.s32.totalorder %s30, 1
      %p126 = por %p124, %p125
      %p128 = scmp.ne.s32.totalorder %s113, %s127
      %p129 = scmp.eq.s32.totalorder %s30, 0
      %p130 = por %p128, %p129
      %s132 = sadd.s32 %s131, 1
      %p135 = scmp.eq.s32.totalorder %s24, 1
      %p136 = scmp.ne.s32.totalorder %s131, %s133
      %p137 = scmp.eq.s32.totalorder %s24, 0
      %p138 = por %p136, %p137
      %p139 = scmp.ne.s32.totalorder %s131, %s133
      %p140 = scmp.eq.s32.totalorder %s29, 1
      %p141 = por %p139, %p140
      %p142 = scmp.ne.s32.totalorder %s133, %s134
      %p143 = scmp.eq.s32.totalorder %s29, 0
      %p144 = por %p142, %p143
      %p145 = scmp.ne.s32.totalorder %s133, %s134
      %p146 = scmp.eq.s32.totalorder %s30, 1
      %p147 = por %p145, %p146
      %p149 = scmp.ne.s32.totalorder %s134, %s148
      %p150 = scmp.eq.s32.totalorder %s30, 0
      %p151 = por %p149, %p150
      %s153 = sadd.s32 %s152, 1
      %p156 = scmp.eq.s32.totalorder %s24, 1
      %p157 = scmp.ne.s32.totalorder %s152, %s154
      %p158 = scmp.eq.s32.totalorder %s24, 0
      %p159 = por %p157, %p158
      %p160 = scmp.ne.s32.totalorder %s152, %s154
      %p161 = scmp.eq.s32.totalorder %s29, 1
      %p162 = por %p160, %p161
      %p163 = scmp.ne.s32.totalorder %s154, %s155
      %p164 = scmp.eq.s32.totalorder %s29, 0
      %p165 = por %p163, %p164
      %p166 = scmp.ne.s32.totalorder %s154, %s155
      %p167 = scmp.eq.s32.totalorder %s30, 1
      %p168 = por %p166, %p167
      %p170 = scmp.ne.s32.totalorder %s155, %s169
      %p171 = scmp.eq.s32.totalorder %s30, 0
      %p172 = por %p170, %p171
      %s174 = sadd.s32 %s173, 1
      %p177 = scmp.eq.s32.totalorder %s24, 1
      %p178 = scmp.ne.s32.totalorder %s173, %s175
      %p179 = scmp.eq.s32.totalorder %s24, 0
      %p180 = por %p178, %p179
      %p181 = scmp.ne.s32.totalorder %s173, %s175
      %p182 = scmp.eq.s32.totalorder %s29, 1
      %p183 = por %p181, %p182
      %p184 = scmp.ne.s32.totalorder %s175, %s176
      %p185 = scmp.eq.s32.totalorder %s29, 0
      %p186 = por %p184, %p185
      %p187 = scmp.ne.s32.totalorder %s175, %s176
      %p188 = scmp.eq.s32.totalorder %s30, 1
      %p189 = por %p187, %p188
      %p191 = scmp.ne.s32.totalorder %s176, %s190
      %p192 = scmp.eq.s32.totalorder %s30, 0
      %p193 = por %p191, %p192
      %s194 = ssub.s32 %s24, %s31
      %p195 = scmp.eq.s32.totalorder %s194, 0
      %s197 = sadd.s32 %s196, 1
      %s198 = scalar_select %p195, %s196, %s197
      %p201 = pneg %p195
      %p202 = scmp.eq.s32.totalorder %s24, 1
      %p203 = por %p201, %p202
      %p204 = scmp.ne.s32.totalorder %s196, %s199
      %p205 = scmp.eq.s32.totalorder %s24, 0
      %p206 = por %p204, %p205
      %p207 = scmp.ne.s32.totalorder %s196, %s199
      %p208 = scmp.eq.s32.totalorder %s29, 1
      %p209 = por %p207, %p208
      %p210 = scmp.ne.s32.totalorder %s199, %s200
      %p211 = scmp.eq.s32.totalorder %s29, 0
      %p212 = por %p210, %p211
      %p213 = scmp.ne.s32.totalorder %s199, %s200
      %p214 = scmp.eq.s32.totalorder %s30, 1
      %p215 = por %p213, %p214
      %p217 = scmp.ne.s32.totalorder %s200, %s216
      %p218 = scmp.eq.s32.totalorder %s30, 0
      %p219 = por %p217, %p218
      %p220 = scmp.le.s32.totalorder 1, %s24
      %p221 = scmp.lt.s32.totalorder %s24, 3
      %p222 = pnand %p220, %p221
      %p223 = pneg %p222
      // Predicated region
      $region9: #{tpu_custom_call.1} parent=5 // pred_check
        _
      $region10: #{tpu_custom_call.1} parent=5 // pred_check_branch
        %225 = sbr.rel (%p222) target = $region12
      $region11: #{tpu_custom_call.1} parent=5 // pred_region
        %s226 = ssub.s32 %s24, 1
        // Predicated region
        $region13: #{tpu_custom_call.1} parent=11 // pred_check
          %p227 = pneg %p123
        $region14: #{tpu_custom_call.1} parent=11 // pred_check_branch
          %229 = sbr.rel (%p227) target = $region16
        $region15: #{tpu_custom_call.1} parent=11 // pred_region
          %s231 = ssub.s32 49152, 49152
          %232 = vsyncadd [#allocation9], %s231
          %s233 = sshll.u32 [#allocation8], 4
          %s234 = int_to_ptr.vmem [resolvable:$true] %s233
          %239 = dma.hbm_to_vmem [thread:$0]  %s3, 49152, %s234, [#allocation9], 512, 512, 32
        $region16: #{tpu_custom_call.1} parent=11 // pred_fallthru
          _
        // Predicated region
        $region17: #{tpu_custom_call.1} parent=11 // pred_check
          %p240 = pneg %p144
        $region18: #{tpu_custom_call.1} parent=11 // pred_check_branch
          %242 = sbr.rel (%p240) target = $region20
        $region19: #{tpu_custom_call.1} parent=11 // pred_region
          %s244 = ssub.s32 128, 128
          %245 = vsyncadd [#allocation9], %s244
          %s247 = sshll.u32 [#allocation10], 4
          %s248 = int_to_ptr.vmem [resolvable:$true] %s247
          %250 = dma.hbm_to_vmem [thread:$0]  %s4, 128, %s248, [#allocation9]
        $region20: #{tpu_custom_call.1} parent=11 // pred_fallthru
          _
        // Predicated region
        $region21: #{tpu_custom_call.1} parent=11 // pred_check
          %p251 = pneg %p165
        $region22: #{tpu_custom_call.1} parent=11 // pred_check_branch
          %253 = sbr.rel (%p251) target = $region24
        $region23: #{tpu_custom_call.1} parent=11 // pred_region
          %s255 = ssub.s32 49152, 49152
          %256 = vsyncadd [#allocation12], %s255
          %s257 = sshll.u32 [#allocation11], 4
          %s258 = int_to_ptr.vmem [resolvable:$true] %s257
          %263 = dma.hbm_to_vmem [thread:$0]  %s5, 49152, %s258, [#allocation12], 384, 384, 24
        $region24: #{tpu_custom_call.1} parent=11 // pred_fallthru
          _
        // Predicated region
        $region25: #{tpu_custom_call.1} parent=11 // pred_check
          %p264 = pneg %p186
        $region26: #{tpu_custom_call.1} parent=11 // pred_check_branch
          %266 = sbr.rel (%p264) target = $region28
        $region27: #{tpu_custom_call.1} parent=11 // pred_region
          %s268 = ssub.s32 96, 96
          %269 = vsyncadd [#allocation12], %s268
          %s271 = sshll.u32 [#allocation13], 4
          %s272 = int_to_ptr.vmem [resolvable:$true] %s271
          %274 = dma.hbm_to_vmem [thread:$0]  %s6, 96, %s272, [#allocation12]
        $region28: #{tpu_custom_call.1} parent=11 // pred_fallthru
          _
      $region12: #{tpu_custom_call.1} parent=5 // pred_fallthru
        _
      %p275 = scmp.lt.s32.totalorder %s24, 2
      // Predicated region
      $region29: #{tpu_custom_call.1} parent=5 // pred_check
        %p276 = pneg %p275
      $region30: #{tpu_custom_call.1} parent=5 // pred_check_branch
        %278 = sbr.rel (%p276) target = $region32
      $region31: #{tpu_custom_call.1} parent=5 // pred_region
        // Predicated region
        $region33: #{tpu_custom_call.1} parent=31 // pred_check
          %p279 = pneg %p44
        $region34: #{tpu_custom_call.1} parent=31 // pred_check_branch
          %281 = sbr.rel (%p279) target = $region36
        $region35: #{tpu_custom_call.1} parent=31 // pred_region
          %s282 = sand.u32 %s34, 1
          %s283 = scalar_lea.sflag [#allocation3], %s282
          %s284 = sand.u32 %s34, 1
          %s285 = smul.addr %s284, 96
          %s286 = scalar_lea.vmem [#allocation2], %s285
          %s287 = smul.u32 2, %s24
          %s288 = ssub.s32 3, %s287
          %p289 = scmp.lt.s32.totalorder %s288, 2
          %s290 = scalar_select %p289, %s288, 2
          %s291 = smul.u32 128, %s290
          %s292 = smul.u32 %s291, 6
          %s294 = ssub.s32 1536, %s292
          %295 = vsyncadd %s283, %s294
          %p296 = scmp.ne.s32.totalorder 0, %s292
          %s297 = smul.addr %s287, 6
          %s298 = smul.addr %s297, 128
          %s299 = scalar_lea.hbm %s0, %s298
          %s300 = smul.u32 48, %s290
          %s301 = sshll.u32 %s286, 4
          %s302 = int_to_ptr.vmem [resolvable:$true] %s301
          %s303 = sshll.u32 %s300, 4
          %307 = dma.hbm_to_vmem [thread:$0]  (%p296), %s299, %s303, %s302, %s283, 768, 768, 48
        $region36: #{tpu_custom_call.1} parent=31 // pred_fallthru
          _
        // Predicated region
        $region37: #{tpu_custom_call.1} parent=31 // pred_check
          %p308 = pneg %p70
        $region38: #{tpu_custom_call.1} parent=31 // pred_check_branch
          %310 = sbr.rel (%p308) target = $region40
        $region39: #{tpu_custom_call.1} parent=31 // pred_region
          %s311 = sand.u32 %s24, 1
          %s312 = scalar_lea.sflag [#allocation6], %s311
          %s313 = sand.u32 %s60, 1
          %s314 = smul.addr %s313, 96
          %s315 = scalar_lea.vmem [#allocation5], %s314
          %s316 = smul.u32 2, %s24
          %s317 = ssub.s32 3, %s316
          %p318 = scmp.lt.s32.totalorder %s317, 2
          %s319 = scalar_select %p318, %s317, 2
          %s320 = smul.u32 128, %s319
          %s321 = smul.u32 %s320, 6
          %s323 = ssub.s32 1536, %s321
          %324 = vsyncadd %s312, %s323
          %p325 = scmp.ne.s32.totalorder 0, %s321
          %s326 = smul.addr %s316, 6
          %s327 = smul.addr %s326, 128
          %s328 = scalar_lea.hbm %s1, %s327
          %s329 = smul.u32 48, %s319
          %s330 = sshll.u32 %s315, 4
          %s331 = int_to_ptr.vmem [resolvable:$true] %s330
          %s332 = sshll.u32 %s329, 4
          %336 = dma.hbm_to_vmem [thread:$0]  (%p325), %s328, %s332, %s331, %s312, 768, 768, 48
        $region40: #{tpu_custom_call.1} parent=31 // pred_fallthru
          _
        // Predicated region
        $region41: #{tpu_custom_call.1} parent=31 // pred_check
          %p337 = pneg %p96
        $region42: #{tpu_custom_call.1} parent=31 // pred_check_branch
          %339 = sbr.rel (%p337) target = $region44
        $region43: #{tpu_custom_call.1} parent=31 // pred_region
          %s340 = sand.u32 %s24, 1
          %s341 = scalar_lea.sflag [#allocation6], %s340
          %s342 = sand.u32 %s86, 1
          %s343 = smul.addr %s342, 96
          %s344 = scalar_lea.vmem [#allocation7], %s343
          %s345 = smul.u32 2, %s24
          %s346 = ssub.s32 3, %s345
          %p347 = scmp.lt.s32.totalorder %s346, 2
          %s348 = scalar_select %p347, %s346, 2
          %s349 = smul.u32 128, %s348
          %s350 = smul.u32 %s349, 6
          %s352 = ssub.s32 1536, %s350
          %353 = vsyncadd %s341, %s352
          %p354 = scmp.ne.s32.totalorder 0, %s350
          %s355 = smul.addr %s345, 6
          %s356 = smul.addr %s355, 128
          %s357 = scalar_lea.hbm %s2, %s356
          %s358 = smul.u32 48, %s348
          %s359 = sshll.u32 %s344, 4
          %s360 = int_to_ptr.vmem [resolvable:$true] %s359
          %s361 = sshll.u32 %s358, 4
          %365 = dma.hbm_to_vmem [thread:$0]  (%p354), %s357, %s361, %s360, %s341, 768, 768, 48
        $region44: #{tpu_custom_call.1} parent=31 // pred_fallthru
          _
      $region32: #{tpu_custom_call.1} parent=5 // pred_fallthru
        _
      %p366 = scmp.le.s32.totalorder 1, %s24
      %p367 = scmp.lt.s32.totalorder %s24, 3
      %p368 = pnand %p366, %p367
      %p369 = pneg %p368
      // Predicated region
      $region45: #{tpu_custom_call.1} parent=5 // pred_check
        _
      $region46: #{tpu_custom_call.1} parent=5 // pred_check_branch
        %371 = sbr.rel (%p368) target = $region48
      $region47: #{tpu_custom_call.1} parent=5 // pred_region
        %s372 = ssub.s32 %s24, 1
        %s373 = sand.u32 %s37, 1
        %s374 = scalar_lea.sflag [#allocation3], %s373
        %s375 = sand.u32 %s37, 1
        %s376 = smul.addr %s375, 96
        %s377 = scalar_lea.vmem [#allocation2], %s376
        // Predicated region
        $region49: #{tpu_custom_call.1} parent=47 // pred_check
          %p378 = pneg %p50
        $region50: #{tpu_custom_call.1} parent=47 // pred_check_branch
          %380 = sbr.rel (%p378) target = $region52
        $region51: #{tpu_custom_call.1} parent=47 // pred_region
          %381 = dma.done %s374, 1536
        $region52: #{tpu_custom_call.1} parent=47 // pred_fallthru
          _
        %s382 = sand.u32 %s29, 1
        %s383 = scalar_lea.sflag [#allocation6], %s382
        %s384 = sand.u32 %s63, 1
        %s385 = smul.addr %s384, 96
        %s386 = scalar_lea.vmem [#allocation5], %s385
        // Predicated region
        $region53: #{tpu_custom_call.1} parent=47 // pred_check
          %p387 = pneg %p76
        $region54: #{tpu_custom_call.1} parent=47 // pred_check_branch
          %389 = sbr.rel (%p387) target = $region56
        $region55: #{tpu_custom_call.1} parent=47 // pred_region
          %390 = dma.done %s383, 1536
        $region56: #{tpu_custom_call.1} parent=47 // pred_fallthru
          _
        %s391 = sand.u32 %s29, 1
        %s392 = scalar_lea.sflag [#allocation6], %s391
        %s393 = sand.u32 %s89, 1
        %s394 = smul.addr %s393, 96
        %s395 = scalar_lea.vmem [#allocation7], %s394
        // Predicated region
        $region57: #{tpu_custom_call.1} parent=47 // pred_check
          %p396 = pneg %p102
        $region58: #{tpu_custom_call.1} parent=47 // pred_check_branch
          %398 = sbr.rel (%p396) target = $region60
        $region59: #{tpu_custom_call.1} parent=47 // pred_region
          %399 = dma.done %s392, 1536
        $region60: #{tpu_custom_call.1} parent=47 // pred_fallthru
          _
        // Predicated region
        $region61: #{tpu_custom_call.1} parent=47 // pred_check
          %p400 = pneg %p123
        $region62: #{tpu_custom_call.1} parent=47 // pred_check_branch
          %402 = sbr.rel (%p400) target = $region64
        $region63: #{tpu_custom_call.1} parent=47 // pred_region
          %403 = dma.done [#allocation9], 49152
        $region64: #{tpu_custom_call.1} parent=47 // pred_fallthru
          _
        // Predicated region
        $region65: #{tpu_custom_call.1} parent=47 // pred_check
          %p404 = pneg %p144
        $region66: #{tpu_custom_call.1} parent=47 // pred_check_branch
          %406 = sbr.rel (%p404) target = $region68
        $region67: #{tpu_custom_call.1} parent=47 // pred_region
          %407 = dma.done [#allocation9], 128
        $region68: #{tpu_custom_call.1} parent=47 // pred_fallthru
          _
        // Predicated region
        $region69: #{tpu_custom_call.1} parent=47 // pred_check
          %p408 = pneg %p165
        $region70: #{tpu_custom_call.1} parent=47 // pred_check_branch
          %410 = sbr.rel (%p408) target = $region72
        $region71: #{tpu_custom_call.1} parent=47 // pred_region
          %411 = dma.done [#allocation12], 49152
        $region72: #{tpu_custom_call.1} parent=47 // pred_fallthru
          _
        // Predicated region
        $region73: #{tpu_custom_call.1} parent=47 // pred_check
          %p412 = pneg %p186
        $region74: #{tpu_custom_call.1} parent=47 // pred_check_branch
          %414 = sbr.rel (%p412) target = $region76
        $region75: #{tpu_custom_call.1} parent=47 // pred_region
          %415 = dma.done [#allocation12], 96
        $region76: #{tpu_custom_call.1} parent=47 // pred_fallthru
          _
        %s416 = sand.u32 %s37, 1
        %s417 = scalar_lea.sflag [#allocation3], %s416
        %s418 = sand.u32 %s37, 1
        %s419 = smul.addr %s418, 96
        %s420 = scalar_lea.vmem [#allocation2], %s419
        %p421 = pneg %p50
        %p422 = pneg %p47
        %s423 = sand.u32 %s29, 1
        %s424 = scalar_lea.sflag [#allocation6], %s423
        %s425 = sand.u32 %s63, 1
        %s426 = smul.addr %s425, 96
        %s427 = scalar_lea.vmem [#allocation5], %s426
        %p428 = pneg %p76
        %p429 = pneg %p73
        %s430 = sand.u32 %s29, 1
        %s431 = scalar_lea.sflag [#allocation6], %s430
        %s432 = sand.u32 %s89, 1
        %s433 = smul.addr %s432, 96
        %s434 = scalar_lea.vmem [#allocation7], %s433
        %p435 = pneg %p102
        %p436 = pneg %p99
        %p437 = pneg %p123
        %p438 = pneg %p120
        %p439 = pneg %p144
        %p440 = pneg %p141
        %p441 = pneg %p165
        %p442 = pneg %p162
        %p443 = pneg %p186
        %p444 = pneg %p183
        %p445 = pneg %p212
        %p446 = pneg %p209
        %s447 = sand.u32 %s199, 1
        %s448 = scalar_lea.sflag [#allocation4], %s447
        %s449 = sand.u32 %s199, 1
        %s450 = smul.addr %s449, 96
        %s451 = scalar_lea.vmem [#allocation14], %s450
        %s452 = smul.u32 2, %s29
        %s453 = ssub.s32 3, %s452
        %p454 = scmp.lt.s32.totalorder %s453, 2
        %s455 = scalar_select %p454, %s453, 2
        %s456 = smul.u32 128, %s455
        %s457 = smul.u32 %s456, 6
        %s458 = smul.u32 2, %s29
        %s459 = ssub.s32 3, %s458
        %p460 = scmp.lt.s32.totalorder %s459, 2
        %s461 = scalar_select %p460, %s459, 2
        %s462 = smul.u32 128, %s461
        %s463 = smul.u32 %s462, 6
        %s464 = smul.u32 2, %s29
        %s465 = ssub.s32 3, %s464
        %p466 = scmp.lt.s32.totalorder %s465, 2
        %s467 = scalar_select %p466, %s465, 2
        %s468 = smul.u32 128, %s467
        %s469 = smul.u32 %s468, 6
        %s470 = smul.u32 2, %s29
        %s471 = ssub.s32 3, %s470
        %p472 = scmp.lt.s32.totalorder %s471, 2
        %s473 = scalar_select %p472, %s471, 2
        %s474 = smul.u32 128, %s473
        %s475 = smul.u32 %s474, 6
        %v476 = vld [vmem:[#allocation8] sm:$0xff]
        %v477 = vld [vmem:[#allocation8 + $0x8] sm:$0xff]
        %v478 = vld [vmem:[#allocation8 + $0x10] sm:$0xff]
        %v479 = vld [vmem:[#allocation8 + $0x18] sm:$0xff]
        %v480 = vld [vmem:[#allocation8 + $0x20] sm:$0xff]
        %v481 = vld [vmem:[#allocation8 + $0x28] sm:$0xff]
        %v482 = vld [vmem:[#allocation8 + $0x30] sm:$0xff]
        %v483 = vld [vmem:[#allocation8 + $0x38] sm:$0xff]
        %v484 = vld [vmem:[#allocation8 + $0x40] sm:$0xff]
        %v485 = vld [vmem:[#allocation8 + $0x48] sm:$0xff]
        %v486 = vld [vmem:[#allocation8 + $0x50] sm:$0xff]
        %v487 = vld [vmem:[#allocation8 + $0x58] sm:$0xff]
        %v488 = vld [vmem:[#allocation8 + $0x60] sm:$0xff]
        %v489 = vld [vmem:[#allocation8 + $0x68] sm:$0xff]
        %v490 = vld [vmem:[#allocation8 + $0x70] sm:$0xff]
        %v491 = vld [vmem:[#allocation8 + $0x78] sm:$0xff]
        %v492 = vld [vmem:[#allocation8 + $0x80] sm:$0xff]
        %v493 = vld [vmem:[#allocation8 + $0x88] sm:$0xff]
        %v494 = vld [vmem:[#allocation8 + $0x90] sm:$0xff]
        %v495 = vld [vmem:[#allocation8 + $0x98] sm:$0xff]
        %v496 = vld [vmem:[#allocation8 + $0xa0] sm:$0xff]
        %v497 = vld [vmem:[#allocation8 + $0xa8] sm:$0xff]
        %v498 = vld [vmem:[#allocation8 + $0xb0] sm:$0xff]
        %v499 = vld [vmem:[#allocation8 + $0xb8] sm:$0xff]
        %v500 = vld [vmem:[#allocation8 + $0xc0] sm:$0xff]
        %v501 = vld [vmem:[#allocation8 + $0xc8] sm:$0xff]
        %v502 = vld [vmem:[#allocation8 + $0xd0] sm:$0xff]
        %v503 = vld [vmem:[#allocation8 + $0xd8] sm:$0xff]
        %v504 = vld [vmem:[#allocation8 + $0xe0] sm:$0xff]
        %v505 = vld [vmem:[#allocation8 + $0xe8] sm:$0xff]
        %v506 = vld [vmem:[#allocation8 + $0xf0] sm:$0xff]
        %v507 = vld [vmem:[#allocation8 + $0xf8] sm:$0xff]
        %v508 = vld [vmem:[#allocation8 + $0x100] sm:$0xff]
        %v509 = vld [vmem:[#allocation8 + $0x108] sm:$0xff]
        %v510 = vld [vmem:[#allocation8 + $0x110] sm:$0xff]
        %v511 = vld [vmem:[#allocation8 + $0x118] sm:$0xff]
        %v512 = vld [vmem:[#allocation8 + $0x120] sm:$0xff]
        %v513 = vld [vmem:[#allocation8 + $0x128] sm:$0xff]
        %v514 = vld [vmem:[#allocation8 + $0x130] sm:$0xff]
        %v515 = vld [vmem:[#allocation8 + $0x138] sm:$0xff]
        %v516 = vld [vmem:[#allocation8 + $0x140] sm:$0xff]
        %v517 = vld [vmem:[#allocation8 + $0x148] sm:$0xff]
        %v518 = vld [vmem:[#allocation8 + $0x150] sm:$0xff]
        %v519 = vld [vmem:[#allocation8 + $0x158] sm:$0xff]
        %v520 = vld [vmem:[#allocation8 + $0x160] sm:$0xff]
        %v521 = vld [vmem:[#allocation8 + $0x168] sm:$0xff]
        %v522 = vld [vmem:[#allocation8 + $0x170] sm:$0xff]
        %v523 = vld [vmem:[#allocation8 + $0x178] sm:$0xff]
        %v524 = vld [vmem:[#allocation8 + $0x180] sm:$0xff]
        %v525 = vld [vmem:[#allocation8 + $0x188] sm:$0xff]
        %v526 = vld [vmem:[#allocation8 + $0x190] sm:$0xff]
        %v527 = vld [vmem:[#allocation8 + $0x198] sm:$0xff]
        %v528 = vld [vmem:[#allocation8 + $0x1a0] sm:$0xff]
        %v529 = vld [vmem:[#allocation8 + $0x1a8] sm:$0xff]
        %v530 = vld [vmem:[#allocation8 + $0x1b0] sm:$0xff]
        %v531 = vld [vmem:[#allocation8 + $0x1b8] sm:$0xff]
        %v532 = vld [vmem:[#allocation8 + $0x1c0] sm:$0xff]
        %v533 = vld [vmem:[#allocation8 + $0x1c8] sm:$0xff]
        %v534 = vld [vmem:[#allocation8 + $0x1d0] sm:$0xff]
        %v535 = vld [vmem:[#allocation8 + $0x1d8] sm:$0xff]
        %v536 = vld [vmem:[#allocation8 + $0x1e0] sm:$0xff]
        %v537 = vld [vmem:[#allocation8 + $0x1e8] sm:$0xff]
        %v538 = vld [vmem:[#allocation8 + $0x1f0] sm:$0xff]
        %v539 = vld [vmem:[#allocation8 + $0x1f8] sm:$0xff]
        %v540 = vld [vmem:[#allocation8 + $0x200] sm:$0xff]
        %v541 = vld [vmem:[#allocation8 + $0x208] sm:$0xff]
        %v542 = vld [vmem:[#allocation8 + $0x210] sm:$0xff]
        %v543 = vld [vmem:[#allocation8 + $0x218] sm:$0xff]
        %v544 = vld [vmem:[#allocation8 + $0x220] sm:$0xff]
        %v545 = vld [vmem:[#allocation8 + $0x228] sm:$0xff]
        %v546 = vld [vmem:[#allocation8 + $0x230] sm:$0xff]
        %v547 = vld [vmem:[#allocation8 + $0x238] sm:$0xff]
        %v548 = vld [vmem:[#allocation8 + $0x240] sm:$0xff]
        %v549 = vld [vmem:[#allocation8 + $0x248] sm:$0xff]
        %v550 = vld [vmem:[#allocation8 + $0x250] sm:$0xff]
        %v551 = vld [vmem:[#allocation8 + $0x258] sm:$0xff]
        %v552 = vld [vmem:[#allocation8 + $0x260] sm:$0xff]
        %v553 = vld [vmem:[#allocation8 + $0x268] sm:$0xff]
        %v554 = vld [vmem:[#allocation8 + $0x270] sm:$0xff]
        %v555 = vld [vmem:[#allocation8 + $0x278] sm:$0xff]
        %v556 = vld [vmem:[#allocation8 + $0x280] sm:$0xff]
        %v557 = vld [vmem:[#allocation8 + $0x288] sm:$0xff]
        %v558 = vld [vmem:[#allocation8 + $0x290] sm:$0xff]
        %v559 = vld [vmem:[#allocation8 + $0x298] sm:$0xff]
        %v560 = vld [vmem:[#allocation8 + $0x2a0] sm:$0xff]
        %v561 = vld [vmem:[#allocation8 + $0x2a8] sm:$0xff]
        %v562 = vld [vmem:[#allocation8 + $0x2b0] sm:$0xff]
        %v563 = vld [vmem:[#allocation8 + $0x2b8] sm:$0xff]
        %v564 = vld [vmem:[#allocation8 + $0x2c0] sm:$0xff]
        %v565 = vld [vmem:[#allocation8 + $0x2c8] sm:$0xff]
        %v566 = vld [vmem:[#allocation8 + $0x2d0] sm:$0xff]
        %v567 = vld [vmem:[#allocation8 + $0x2d8] sm:$0xff]
        %v568 = vld [vmem:[#allocation8 + $0x2e0] sm:$0xff]
        %v569 = vld [vmem:[#allocation8 + $0x2e8] sm:$0xff]
        %v570 = vld [vmem:[#allocation8 + $0x2f0] sm:$0xff]
        %v571 = vld [vmem:[#allocation8 + $0x2f8] sm:$0xff]
        %v572 = vld [vmem:[#allocation8 + $0x300] sm:$0xff]
        %v573 = vld [vmem:[#allocation8 + $0x308] sm:$0xff]
        %v574 = vld [vmem:[#allocation8 + $0x310] sm:$0xff]
        %v575 = vld [vmem:[#allocation8 + $0x318] sm:$0xff]
        %v576 = vld [vmem:[#allocation8 + $0x320] sm:$0xff]
        %v577 = vld [vmem:[#allocation8 + $0x328] sm:$0xff]
        %v578 = vld [vmem:[#allocation8 + $0x330] sm:$0xff]
        %v579 = vld [vmem:[#allocation8 + $0x338] sm:$0xff]
        %v580 = vld [vmem:[#allocation8 + $0x340] sm:$0xff]
        %v581 = vld [vmem:[#allocation8 + $0x348] sm:$0xff]
        %v582 = vld [vmem:[#allocation8 + $0x350] sm:$0xff]
        %v583 = vld [vmem:[#allocation8 + $0x358] sm:$0xff]
        %v584 = vld [vmem:[#allocation8 + $0x360] sm:$0xff]
        %v585 = vld [vmem:[#allocation8 + $0x368] sm:$0xff]
        %v586 = vld [vmem:[#allocation8 + $0x370] sm:$0xff]
        %v587 = vld [vmem:[#allocation8 + $0x378] sm:$0xff]
        %v588 = vld [vmem:[#allocation8 + $0x380] sm:$0xff]
        %v589 = vld [vmem:[#allocation8 + $0x388] sm:$0xff]
        %v590 = vld [vmem:[#allocation8 + $0x390] sm:$0xff]
        %v591 = vld [vmem:[#allocation8 + $0x398] sm:$0xff]
        %v592 = vld [vmem:[#allocation8 + $0x3a0] sm:$0xff]
        %v593 = vld [vmem:[#allocation8 + $0x3a8] sm:$0xff]
        %v594 = vld [vmem:[#allocation8 + $0x3b0] sm:$0xff]
        %v595 = vld [vmem:[#allocation8 + $0x3b8] sm:$0xff]
        %v596 = vld [vmem:[#allocation8 + $0x3c0] sm:$0xff]
        %v597 = vld [vmem:[#allocation8 + $0x3c8] sm:$0xff]
        %v598 = vld [vmem:[#allocation8 + $0x3d0] sm:$0xff]
        %v599 = vld [vmem:[#allocation8 + $0x3d8] sm:$0xff]
        %v600 = vld [vmem:[#allocation8 + $0x3e0] sm:$0xff]
        %v601 = vld [vmem:[#allocation8 + $0x3e8] sm:$0xff]
        %v602 = vld [vmem:[#allocation8 + $0x3f0] sm:$0xff]
        %v603 = vld [vmem:[#allocation8 + $0x3f8] sm:$0xff]
        %v604 = vld [vmem:[#allocation8 + $0x400] sm:$0xff]
        %v605 = vld [vmem:[#allocation8 + $0x408] sm:$0xff]
        %v606 = vld [vmem:[#allocation8 + $0x410] sm:$0xff]
        %v607 = vld [vmem:[#allocation8 + $0x418] sm:$0xff]
        %v608 = vld [vmem:[#allocation8 + $0x420] sm:$0xff]
        %v609 = vld [vmem:[#allocation8 + $0x428] sm:$0xff]
        %v610 = vld [vmem:[#allocation8 + $0x430] sm:$0xff]
        %v611 = vld [vmem:[#allocation8 + $0x438] sm:$0xff]
        %v612 = vld [vmem:[#allocation8 + $0x440] sm:$0xff]
        %v613 = vld [vmem:[#allocation8 + $0x448] sm:$0xff]
        %v614 = vld [vmem:[#allocation8 + $0x450] sm:$0xff]
        %v615 = vld [vmem:[#allocation8 + $0x458] sm:$0xff]
        %v616 = vld [vmem:[#allocation8 + $0x460] sm:$0xff]
        %v617 = vld [vmem:[#allocation8 + $0x468] sm:$0xff]
        %v618 = vld [vmem:[#allocation8 + $0x470] sm:$0xff]
        %v619 = vld [vmem:[#allocation8 + $0x478] sm:$0xff]
        %v620 = vld [vmem:[#allocation8 + $0x480] sm:$0xff]
        %v621 = vld [vmem:[#allocation8 + $0x488] sm:$0xff]
        %v622 = vld [vmem:[#allocation8 + $0x490] sm:$0xff]
        %v623 = vld [vmem:[#allocation8 + $0x498] sm:$0xff]
        %v624 = vld [vmem:[#allocation8 + $0x4a0] sm:$0xff]
        %v625 = vld [vmem:[#allocation8 + $0x4a8] sm:$0xff]
        %v626 = vld [vmem:[#allocation8 + $0x4b0] sm:$0xff]
        %v627 = vld [vmem:[#allocation8 + $0x4b8] sm:$0xff]
        %v628 = vld [vmem:[#allocation8 + $0x4c0] sm:$0xff]
        %v629 = vld [vmem:[#allocation8 + $0x4c8] sm:$0xff]
        %v630 = vld [vmem:[#allocation8 + $0x4d0] sm:$0xff]
        %v631 = vld [vmem:[#allocation8 + $0x4d8] sm:$0xff]
        %v632 = vld [vmem:[#allocation8 + $0x4e0] sm:$0xff]
        %v633 = vld [vmem:[#allocation8 + $0x4e8] sm:$0xff]
        %v634 = vld [vmem:[#allocation8 + $0x4f0] sm:$0xff]
        %v635 = vld [vmem:[#allocation8 + $0x4f8] sm:$0xff]
        %v636 = vld [vmem:[#allocation8 + $0x500] sm:$0xff]
        %v637 = vld [vmem:[#allocation8 + $0x508] sm:$0xff]
        %v638 = vld [vmem:[#allocation8 + $0x510] sm:$0xff]
        %v639 = vld [vmem:[#allocation8 + $0x518] sm:$0xff]
        %v640 = vld [vmem:[#allocation8 + $0x520] sm:$0xff]
        %v641 = vld [vmem:[#allocation8 + $0x528] sm:$0xff]
        %v642 = vld [vmem:[#allocation8 + $0x530] sm:$0xff]
        %v643 = vld [vmem:[#allocation8 + $0x538] sm:$0xff]
        %v644 = vld [vmem:[#allocation8 + $0x540] sm:$0xff]
        %v645 = vld [vmem:[#allocation8 + $0x548] sm:$0xff]
        %v646 = vld [vmem:[#allocation8 + $0x550] sm:$0xff]
        %v647 = vld [vmem:[#allocation8 + $0x558] sm:$0xff]
        %v648 = vld [vmem:[#allocation8 + $0x560] sm:$0xff]
        %v649 = vld [vmem:[#allocation8 + $0x568] sm:$0xff]
        %v650 = vld [vmem:[#allocation8 + $0x570] sm:$0xff]
        %v651 = vld [vmem:[#allocation8 + $0x578] sm:$0xff]
        %v652 = vld [vmem:[#allocation8 + $0x580] sm:$0xff]
        %v653 = vld [vmem:[#allocation8 + $0x588] sm:$0xff]
        %v654 = vld [vmem:[#allocation8 + $0x590] sm:$0xff]
        %v655 = vld [vmem:[#allocation8 + $0x598] sm:$0xff]
        %v656 = vld [vmem:[#allocation8 + $0x5a0] sm:$0xff]
        %v657 = vld [vmem:[#allocation8 + $0x5a8] sm:$0xff]
        %v658 = vld [vmem:[#allocation8 + $0x5b0] sm:$0xff]
        %v659 = vld [vmem:[#allocation8 + $0x5b8] sm:$0xff]
        %v660 = vld [vmem:[#allocation8 + $0x5c0] sm:$0xff]
        %v661 = vld [vmem:[#allocation8 + $0x5c8] sm:$0xff]
        %v662 = vld [vmem:[#allocation8 + $0x5d0] sm:$0xff]
        %v663 = vld [vmem:[#allocation8 + $0x5d8] sm:$0xff]
        %v664 = vld [vmem:[#allocation8 + $0x5e0] sm:$0xff]
        %v665 = vld [vmem:[#allocation8 + $0x5e8] sm:$0xff]
        %v666 = vld [vmem:[#allocation8 + $0x5f0] sm:$0xff]
        %v667 = vld [vmem:[#allocation8 + $0x5f8] sm:$0xff]
        %v668 = vld [vmem:[#allocation8 + $0x600] sm:$0xff]
        %v669 = vld [vmem:[#allocation8 + $0x608] sm:$0xff]
        %v670 = vld [vmem:[#allocation8 + $0x610] sm:$0xff]
        %v671 = vld [vmem:[#allocation8 + $0x618] sm:$0xff]
        %v672 = vld [vmem:[#allocation8 + $0x620] sm:$0xff]
        %v673 = vld [vmem:[#allocation8 + $0x628] sm:$0xff]
        %v674 = vld [vmem:[#allocation8 + $0x630] sm:$0xff]
        %v675 = vld [vmem:[#allocation8 + $0x638] sm:$0xff]
        %v676 = vld [vmem:[#allocation8 + $0x640] sm:$0xff]
        %v677 = vld [vmem:[#allocation8 + $0x648] sm:$0xff]
        %v678 = vld [vmem:[#allocation8 + $0x650] sm:$0xff]
        %v679 = vld [vmem:[#allocation8 + $0x658] sm:$0xff]
        %v680 = vld [vmem:[#allocation8 + $0x660] sm:$0xff]
        %v681 = vld [vmem:[#allocation8 + $0x668] sm:$0xff]
        %v682 = vld [vmem:[#allocation8 + $0x670] sm:$0xff]
        %v683 = vld [vmem:[#allocation8 + $0x678] sm:$0xff]
        %v684 = vld [vmem:[#allocation8 + $0x680] sm:$0xff]
        %v685 = vld [vmem:[#allocation8 + $0x688] sm:$0xff]
        %v686 = vld [vmem:[#allocation8 + $0x690] sm:$0xff]
        %v687 = vld [vmem:[#allocation8 + $0x698] sm:$0xff]
        %v688 = vld [vmem:[#allocation8 + $0x6a0] sm:$0xff]
        %v689 = vld [vmem:[#allocation8 + $0x6a8] sm:$0xff]
        %v690 = vld [vmem:[#allocation8 + $0x6b0] sm:$0xff]
        %v691 = vld [vmem:[#allocation8 + $0x6b8] sm:$0xff]
        %v692 = vld [vmem:[#allocation8 + $0x6c0] sm:$0xff]
        %v693 = vld [vmem:[#allocation8 + $0x6c8] sm:$0xff]
        %v694 = vld [vmem:[#allocation8 + $0x6d0] sm:$0xff]
        %v695 = vld [vmem:[#allocation8 + $0x6d8] sm:$0xff]
        %v696 = vld [vmem:[#allocation8 + $0x6e0] sm:$0xff]
        %v697 = vld [vmem:[#allocation8 + $0x6e8] sm:$0xff]
        %v698 = vld [vmem:[#allocation8 + $0x6f0] sm:$0xff]
        %v699 = vld [vmem:[#allocation8 + $0x6f8] sm:$0xff]
        %v700 = vld [vmem:[#allocation8 + $0x700] sm:$0xff]
        %v701 = vld [vmem:[#allocation8 + $0x708] sm:$0xff]
        %v702 = vld [vmem:[#allocation8 + $0x710] sm:$0xff]
        %v703 = vld [vmem:[#allocation8 + $0x718] sm:$0xff]
        %v704 = vld [vmem:[#allocation8 + $0x720] sm:$0xff]
        %v705 = vld [vmem:[#allocation8 + $0x728] sm:$0xff]
        %v706 = vld [vmem:[#allocation8 + $0x730] sm:$0xff]
        %v707 = vld [vmem:[#allocation8 + $0x738] sm:$0xff]
        %v708 = vld [vmem:[#allocation8 + $0x740] sm:$0xff]
        %v709 = vld [vmem:[#allocation8 + $0x748] sm:$0xff]
        %v710 = vld [vmem:[#allocation8 + $0x750] sm:$0xff]
        %v711 = vld [vmem:[#allocation8 + $0x758] sm:$0xff]
        %v712 = vld [vmem:[#allocation8 + $0x760] sm:$0xff]
        %v713 = vld [vmem:[#allocation8 + $0x768] sm:$0xff]
        %v714 = vld [vmem:[#allocation8 + $0x770] sm:$0xff]
        %v715 = vld [vmem:[#allocation8 + $0x778] sm:$0xff]
        %v716 = vld [vmem:[#allocation8 + $0x780] sm:$0xff]
        %v717 = vld [vmem:[#allocation8 + $0x788] sm:$0xff]
        %v718 = vld [vmem:[#allocation8 + $0x790] sm:$0xff]
        %v719 = vld [vmem:[#allocation8 + $0x798] sm:$0xff]
        %v720 = vld [vmem:[#allocation8 + $0x7a0] sm:$0xff]
        %v721 = vld [vmem:[#allocation8 + $0x7a8] sm:$0xff]
        %v722 = vld [vmem:[#allocation8 + $0x7b0] sm:$0xff]
        %v723 = vld [vmem:[#allocation8 + $0x7b8] sm:$0xff]
        %v724 = vld [vmem:[#allocation8 + $0x7c0] sm:$0xff]
        %v725 = vld [vmem:[#allocation8 + $0x7c8] sm:$0xff]
        %v726 = vld [vmem:[#allocation8 + $0x7d0] sm:$0xff]
        %v727 = vld [vmem:[#allocation8 + $0x7d8] sm:$0xff]
        %v728 = vld [vmem:[#allocation8 + $0x7e0] sm:$0xff]
        %v729 = vld [vmem:[#allocation8 + $0x7e8] sm:$0xff]
        %v730 = vld [vmem:[#allocation8 + $0x7f0] sm:$0xff]
        %v731 = vld [vmem:[#allocation8 + $0x7f8] sm:$0xff]
        %v732 = vld [vmem:[#allocation8 + $0x800] sm:$0xff]
        %v733 = vld [vmem:[#allocation8 + $0x808] sm:$0xff]
        %v734 = vld [vmem:[#allocation8 + $0x810] sm:$0xff]
        %v735 = vld [vmem:[#allocation8 + $0x818] sm:$0xff]
        %v736 = vld [vmem:[#allocation8 + $0x820] sm:$0xff]
        %v737 = vld [vmem:[#allocation8 + $0x828] sm:$0xff]
        %v738 = vld [vmem:[#allocation8 + $0x830] sm:$0xff]
        %v739 = vld [vmem:[#allocation8 + $0x838] sm:$0xff]
        %v740 = vld [vmem:[#allocation8 + $0x840] sm:$0xff]
        %v741 = vld [vmem:[#allocation8 + $0x848] sm:$0xff]
        %v742 = vld [vmem:[#allocation8 + $0x850] sm:$0xff]
        %v743 = vld [vmem:[#allocation8 + $0x858] sm:$0xff]
        %v744 = vld [vmem:[#allocation8 + $0x860] sm:$0xff]
        %v745 = vld [vmem:[#allocation8 + $0x868] sm:$0xff]
        %v746 = vld [vmem:[#allocation8 + $0x870] sm:$0xff]
        %v747 = vld [vmem:[#allocation8 + $0x878] sm:$0xff]
        %v748 = vld [vmem:[#allocation8 + $0x880] sm:$0xff]
        %v749 = vld [vmem:[#allocation8 + $0x888] sm:$0xff]
        %v750 = vld [vmem:[#allocation8 + $0x890] sm:$0xff]
        %v751 = vld [vmem:[#allocation8 + $0x898] sm:$0xff]
        %v752 = vld [vmem:[#allocation8 + $0x8a0] sm:$0xff]
        %v753 = vld [vmem:[#allocation8 + $0x8a8] sm:$0xff]
        %v754 = vld [vmem:[#allocation8 + $0x8b0] sm:$0xff]
        %v755 = vld [vmem:[#allocation8 + $0x8b8] sm:$0xff]
        %v756 = vld [vmem:[#allocation8 + $0x8c0] sm:$0xff]
        %v757 = vld [vmem:[#allocation8 + $0x8c8] sm:$0xff]
        %v758 = vld [vmem:[#allocation8 + $0x8d0] sm:$0xff]
        %v759 = vld [vmem:[#allocation8 + $0x8d8] sm:$0xff]
        %v760 = vld [vmem:[#allocation8 + $0x8e0] sm:$0xff]
        %v761 = vld [vmem:[#allocation8 + $0x8e8] sm:$0xff]
        %v762 = vld [vmem:[#allocation8 + $0x8f0] sm:$0xff]
        %v763 = vld [vmem:[#allocation8 + $0x8f8] sm:$0xff]
        %v764 = vld [vmem:[#allocation8 + $0x900] sm:$0xff]
        %v765 = vld [vmem:[#allocation8 + $0x908] sm:$0xff]
        %v766 = vld [vmem:[#allocation8 + $0x910] sm:$0xff]
        %v767 = vld [vmem:[#allocation8 + $0x918] sm:$0xff]
        %v768 = vld [vmem:[#allocation8 + $0x920] sm:$0xff]
        %v769 = vld [vmem:[#allocation8 + $0x928] sm:$0xff]
        %v770 = vld [vmem:[#allocation8 + $0x930] sm:$0xff]
        %v771 = vld [vmem:[#allocation8 + $0x938] sm:$0xff]
        %v772 = vld [vmem:[#allocation8 + $0x940] sm:$0xff]
        %v773 = vld [vmem:[#allocation8 + $0x948] sm:$0xff]
        %v774 = vld [vmem:[#allocation8 + $0x950] sm:$0xff]
        %v775 = vld [vmem:[#allocation8 + $0x958] sm:$0xff]
        %v776 = vld [vmem:[#allocation8 + $0x960] sm:$0xff]
        %v777 = vld [vmem:[#allocation8 + $0x968] sm:$0xff]
        %v778 = vld [vmem:[#allocation8 + $0x970] sm:$0xff]
        %v779 = vld [vmem:[#allocation8 + $0x978] sm:$0xff]
        %v780 = vld [vmem:[#allocation8 + $0x980] sm:$0xff]
        %v781 = vld [vmem:[#allocation8 + $0x988] sm:$0xff]
        %v782 = vld [vmem:[#allocation8 + $0x990] sm:$0xff]
        %v783 = vld [vmem:[#allocation8 + $0x998] sm:$0xff]
        %v784 = vld [vmem:[#allocation8 + $0x9a0] sm:$0xff]
        %v785 = vld [vmem:[#allocation8 + $0x9a8] sm:$0xff]
        %v786 = vld [vmem:[#allocation8 + $0x9b0] sm:$0xff]
        %v787 = vld [vmem:[#allocation8 + $0x9b8] sm:$0xff]
        %v788 = vld [vmem:[#allocation8 + $0x9c0] sm:$0xff]
        %v789 = vld [vmem:[#allocation8 + $0x9c8] sm:$0xff]
        %v790 = vld [vmem:[#allocation8 + $0x9d0] sm:$0xff]
        %v791 = vld [vmem:[#allocation8 + $0x9d8] sm:$0xff]
        %v792 = vld [vmem:[#allocation8 + $0x9e0] sm:$0xff]
        %v793 = vld [vmem:[#allocation8 + $0x9e8] sm:$0xff]
        %v794 = vld [vmem:[#allocation8 + $0x9f0] sm:$0xff]
        %v795 = vld [vmem:[#allocation8 + $0x9f8] sm:$0xff]
        %v796 = vld [vmem:[#allocation8 + $0xa00] sm:$0xff]
        %v797 = vld [vmem:[#allocation8 + $0xa08] sm:$0xff]
        %v798 = vld [vmem:[#allocation8 + $0xa10] sm:$0xff]
        %v799 = vld [vmem:[#allocation8 + $0xa18] sm:$0xff]
        %v800 = vld [vmem:[#allocation8 + $0xa20] sm:$0xff]
        %v801 = vld [vmem:[#allocation8 + $0xa28] sm:$0xff]
        %v802 = vld [vmem:[#allocation8 + $0xa30] sm:$0xff]
        %v803 = vld [vmem:[#allocation8 + $0xa38] sm:$0xff]
        %v804 = vld [vmem:[#allocation8 + $0xa40] sm:$0xff]
        %v805 = vld [vmem:[#allocation8 + $0xa48] sm:$0xff]
        %v806 = vld [vmem:[#allocation8 + $0xa50] sm:$0xff]
        %v807 = vld [vmem:[#allocation8 + $0xa58] sm:$0xff]
        %v808 = vld [vmem:[#allocation8 + $0xa60] sm:$0xff]
        %v809 = vld [vmem:[#allocation8 + $0xa68] sm:$0xff]
        %v810 = vld [vmem:[#allocation8 + $0xa70] sm:$0xff]
        %v811 = vld [vmem:[#allocation8 + $0xa78] sm:$0xff]
        %v812 = vld [vmem:[#allocation8 + $0xa80] sm:$0xff]
        %v813 = vld [vmem:[#allocation8 + $0xa88] sm:$0xff]
        %v814 = vld [vmem:[#allocation8 + $0xa90] sm:$0xff]
        %v815 = vld [vmem:[#allocation8 + $0xa98] sm:$0xff]
        %v816 = vld [vmem:[#allocation8 + $0xaa0] sm:$0xff]
        %v817 = vld [vmem:[#allocation8 + $0xaa8] sm:$0xff]
        %v818 = vld [vmem:[#allocation8 + $0xab0] sm:$0xff]
        %v819 = vld [vmem:[#allocation8 + $0xab8] sm:$0xff]
        %v820 = vld [vmem:[#allocation8 + $0xac0] sm:$0xff]
        %v821 = vld [vmem:[#allocation8 + $0xac8] sm:$0xff]
        %v822 = vld [vmem:[#allocation8 + $0xad0] sm:$0xff]
        %v823 = vld [vmem:[#allocation8 + $0xad8] sm:$0xff]
        %v824 = vld [vmem:[#allocation8 + $0xae0] sm:$0xff]
        %v825 = vld [vmem:[#allocation8 + $0xae8] sm:$0xff]
        %v826 = vld [vmem:[#allocation8 + $0xaf0] sm:$0xff]
        %v827 = vld [vmem:[#allocation8 + $0xaf8] sm:$0xff]
        %v828 = vld [vmem:[#allocation8 + $0xb00] sm:$0xff]
        %v829 = vld [vmem:[#allocation8 + $0xb08] sm:$0xff]
        %v830 = vld [vmem:[#allocation8 + $0xb10] sm:$0xff]
        %v831 = vld [vmem:[#allocation8 + $0xb18] sm:$0xff]
        %v832 = vld [vmem:[#allocation8 + $0xb20] sm:$0xff]
        %v833 = vld [vmem:[#allocation8 + $0xb28] sm:$0xff]
        %v834 = vld [vmem:[#allocation8 + $0xb30] sm:$0xff]
        %v835 = vld [vmem:[#allocation8 + $0xb38] sm:$0xff]
        %v836 = vld [vmem:[#allocation8 + $0xb40] sm:$0xff]
        %v837 = vld [vmem:[#allocation8 + $0xb48] sm:$0xff]
        %v838 = vld [vmem:[#allocation8 + $0xb50] sm:$0xff]
        %v839 = vld [vmem:[#allocation8 + $0xb58] sm:$0xff]
        %v840 = vld [vmem:[#allocation8 + $0xb60] sm:$0xff]
        %v841 = vld [vmem:[#allocation8 + $0xb68] sm:$0xff]
        %v842 = vld [vmem:[#allocation8 + $0xb70] sm:$0xff]
        %v843 = vld [vmem:[#allocation8 + $0xb78] sm:$0xff]
        %v844 = vld [vmem:[#allocation8 + $0xb80] sm:$0xff]
        %v845 = vld [vmem:[#allocation8 + $0xb88] sm:$0xff]
        %v846 = vld [vmem:[#allocation8 + $0xb90] sm:$0xff]
        %v847 = vld [vmem:[#allocation8 + $0xb98] sm:$0xff]
        %v848 = vld [vmem:[#allocation8 + $0xba0] sm:$0xff]
        %v849 = vld [vmem:[#allocation8 + $0xba8] sm:$0xff]
        %v850 = vld [vmem:[#allocation8 + $0xbb0] sm:$0xff]
        %v851 = vld [vmem:[#allocation8 + $0xbb8] sm:$0xff]
        %v852 = vld [vmem:[#allocation8 + $0xbc0] sm:$0xff]
        %v853 = vld [vmem:[#allocation8 + $0xbc8] sm:$0xff]
        %v854 = vld [vmem:[#allocation8 + $0xbd0] sm:$0xff]
        %v855 = vld [vmem:[#allocation8 + $0xbd8] sm:$0xff]
        %v856 = vld [vmem:[#allocation8 + $0xbe0] sm:$0xff]
        %v857 = vld [vmem:[#allocation8 + $0xbe8] sm:$0xff]
        %v858 = vld [vmem:[#allocation8 + $0xbf0] sm:$0xff]
        %v859 = vld [vmem:[#allocation8 + $0xbf8] sm:$0xff]
        %v860 = vld [vmem:[#allocation10] sm:$0xff]
        %v861 = vld [vmem:[%s377] sm:$0xff]
        %v862 = vld [vmem:[%s377 + $0x8] sm:$0xff]
        %v863 = vld [vmem:[%s377 + $0x10] sm:$0xff]
        %v864 = vld [vmem:[%s377 + $0x18] sm:$0xff]
        %v865 = vld [vmem:[%s377 + $0x20] sm:$0xff]
        %v866 = vld [vmem:[%s377 + $0x28] sm:$0xff]
        %v867 = vld [vmem:[%s377 + $0x30] sm:$0xff]
        %v868 = vld [vmem:[%s377 + $0x38] sm:$0xff]
        %v869 = vld [vmem:[%s377 + $0x40] sm:$0xff]
        %v870 = vld [vmem:[%s377 + $0x48] sm:$0xff]
        %v871 = vld [vmem:[%s377 + $0x50] sm:$0xff]
        %v872 = vld [vmem:[%s377 + $0x58] sm:$0xff]
        %v873 = vpack.c.bf16 %v867, %v861
        %v874 = vpack.c.bf16 %v868, %v862
        %v875 = vpack.c.bf16 %v869, %v863
        %v876 = vpack.c.bf16 %v870, %v864
        %v877 = vpack.c.bf16 %v871, %v865
        %v878 = vpack.c.bf16 %v872, %v866
        %v880 = vlaneseq
        %v881 = vshrl.u32 %v880, 7
        %v882 = vsub.s32 0, %v881
        %v883 = vrot.slane %v860, %v882
        %v884 = vlaneseq
        %v885 = vshrl.u32 %v884, 7
        %v886 = vsub.s32 1, %v885
        %v887 = vrot.slane %v860, %v886
        %v888 = vlaneseq
        %v889 = vshrl.u32 %v888, 7
        %v890 = vsub.s32 2, %v889
        %v891 = vrot.slane %v860, %v890
        %v892 = vlaneseq
        %v893 = vshrl.u32 %v892, 7
        %v894 = vsub.s32 3, %v893
        %v895 = vrot.slane %v860, %v894
        %v896 = vlaneseq
        %v897 = vshrl.u32 %v896, 7
        %v898 = vsub.s32 4, %v897
        %v899 = vrot.slane %v860, %v898
        %v900 = vlaneseq
        %v901 = vshrl.u32 %v900, 7
        %v902 = vsub.s32 5, %v901
        %v903 = vrot.slane %v860, %v902
        %v904 = vlaneseq
        %v905 = vshrl.u32 %v904, 7
        %v906 = vsub.s32 6, %v905
        %v907 = vrot.slane %v860, %v906
        %v908 = vlaneseq
        %v909 = vshrl.u32 %v908, 7
        %v910 = vsub.s32 7, %v909
        %v911 = vrot.slane %v860, %v910
        %v1304 = vunpack.c.l.b16 %v476
        %v1305 = vunpack.c.h.b16 %v476
        %v1306 = vunpack.c.l.b16 %v477
        %v1307 = vunpack.c.h.b16 %v477
        %v1308 = vunpack.c.l.b16 %v478
        %v1309 = vunpack.c.h.b16 %v478
        %v1310 = vunpack.c.l.b16 %v479
        %v1311 = vunpack.c.h.b16 %v479
        %v1312 = vunpack.c.l.b16 %v480
        %v1313 = vunpack.c.h.b16 %v480
        %v1314 = vunpack.c.l.b16 %v481
        %v1315 = vunpack.c.h.b16 %v481
        %v1316 = vunpack.c.l.b16 %v482
        %v1317 = vunpack.c.h.b16 %v482
        %v1318 = vunpack.c.l.b16 %v483
        %v1319 = vunpack.c.h.b16 %v483
        %v1320 = vunpack.c.l.b16 %v484
        %v1321 = vunpack.c.h.b16 %v484
        %v1322 = vunpack.c.l.b16 %v485
        %v1323 = vunpack.c.h.b16 %v485
        %v1324 = vunpack.c.l.b16 %v486
        %v1325 = vunpack.c.h.b16 %v486
        %v1326 = vunpack.c.l.b16 %v487
        %v1327 = vunpack.c.h.b16 %v487
        %v1328 = vunpack.c.l.b16 %v488
        %v1329 = vunpack.c.h.b16 %v488
        %v1330 = vunpack.c.l.b16 %v489
        %v1331 = vunpack.c.h.b16 %v489
        %v1332 = vunpack.c.l.b16 %v490
        %v1333 = vunpack.c.h.b16 %v490
        %v1334 = vunpack.c.l.b16 %v491
        %v1335 = vunpack.c.h.b16 %v491
        %v1336 = vunpack.c.l.b16 %v492
        %v1337 = vunpack.c.h.b16 %v492
        %v1338 = vunpack.c.l.b16 %v493
        %v1339 = vunpack.c.h.b16 %v493
        %v1340 = vunpack.c.l.b16 %v494
        %v1341 = vunpack.c.h.b16 %v494
        %v1342 = vunpack.c.l.b16 %v495
        %v1343 = vunpack.c.h.b16 %v495
        %v1344 = vunpack.c.l.b16 %v496
        %v1345 = vunpack.c.h.b16 %v496
        %v1346 = vunpack.c.l.b16 %v497
        %v1347 = vunpack.c.h.b16 %v497
        %v1348 = vunpack.c.l.b16 %v498
        %v1349 = vunpack.c.h.b16 %v498
        %v1350 = vunpack.c.l.b16 %v499
        %v1351 = vunpack.c.h.b16 %v499
        %v1352 = vunpack.c.l.b16 %v500
        %v1353 = vunpack.c.h.b16 %v500
        %v1354 = vunpack.c.l.b16 %v501
        %v1355 = vunpack.c.h.b16 %v501
        %v1356 = vunpack.c.l.b16 %v502
        %v1357 = vunpack.c.h.b16 %v502
        %v1358 = vunpack.c.l.b16 %v503
        %v1359 = vunpack.c.h.b16 %v503
        %v1360 = vunpack.c.l.b16 %v504
        %v1361 = vunpack.c.h.b16 %v504
        %v1362 = vunpack.c.l.b16 %v505
        %v1363 = vunpack.c.h.b16 %v505
        %v1364 = vunpack.c.l.b16 %v506
        %v1365 = vunpack.c.h.b16 %v506
        %v1366 = vunpack.c.l.b16 %v507
        %v1367 = vunpack.c.h.b16 %v507
        %v1368 = vunpack.c.l.b16 %v508
        %v1369 = vunpack.c.h.b16 %v508
        %v1370 = vunpack.c.l.b16 %v509
        %v1371 = vunpack.c.h.b16 %v509
        %v1372 = vunpack.c.l.b16 %v510
        %v1373 = vunpack.c.h.b16 %v510
        %v1374 = vunpack.c.l.b16 %v511
        %v1375 = vunpack.c.h.b16 %v511
        %v1376 = vunpack.c.l.b16 %v512
        %v1377 = vunpack.c.h.b16 %v512
        %v1378 = vunpack.c.l.b16 %v513
        %v1379 = vunpack.c.h.b16 %v513
        %v1380 = vunpack.c.l.b16 %v514
        %v1381 = vunpack.c.h.b16 %v514
        %v1382 = vunpack.c.l.b16 %v515
        %v1383 = vunpack.c.h.b16 %v515
        %v1384 = vunpack.c.l.b16 %v516
        %v1385 = vunpack.c.h.b16 %v516
        %v1386 = vunpack.c.l.b16 %v517
        %v1387 = vunpack.c.h.b16 %v517
        %v1388 = vunpack.c.l.b16 %v518
        %v1389 = vunpack.c.h.b16 %v518
        %v1390 = vunpack.c.l.b16 %v519
        %v1391 = vunpack.c.h.b16 %v519
        %v1392 = vunpack.c.l.b16 %v520
        %v1393 = vunpack.c.h.b16 %v520
        %v1394 = vunpack.c.l.b16 %v521
        %v1395 = vunpack.c.h.b16 %v521
        %v1396 = vunpack.c.l.b16 %v522
        %v1397 = vunpack.c.h.b16 %v522
        %v1398 = vunpack.c.l.b16 %v523
        %v1399 = vunpack.c.h.b16 %v523
        %v1400 = vunpack.c.l.b16 %v524
        %v1401 = vunpack.c.h.b16 %v524
        %v1402 = vunpack.c.l.b16 %v525
        %v1403 = vunpack.c.h.b16 %v525
        %v1404 = vunpack.c.l.b16 %v526
        %v1405 = vunpack.c.h.b16 %v526
        %v1406 = vunpack.c.l.b16 %v527
        %v1407 = vunpack.c.h.b16 %v527
        %v1408 = vunpack.c.l.b16 %v528
        %v1409 = vunpack.c.h.b16 %v528
        %v1410 = vunpack.c.l.b16 %v529
        %v1411 = vunpack.c.h.b16 %v529
        %v1412 = vunpack.c.l.b16 %v530
        %v1413 = vunpack.c.h.b16 %v530
        %v1414 = vunpack.c.l.b16 %v531
        %v1415 = vunpack.c.h.b16 %v531
        %v1416 = vunpack.c.l.b16 %v532
        %v1417 = vunpack.c.h.b16 %v532
        %v1418 = vunpack.c.l.b16 %v533
        %v1419 = vunpack.c.h.b16 %v533
        %v1420 = vunpack.c.l.b16 %v534
        %v1421 = vunpack.c.h.b16 %v534
        %v1422 = vunpack.c.l.b16 %v535
        %v1423 = vunpack.c.h.b16 %v535
        %v1424 = vunpack.c.l.b16 %v536
        %v1425 = vunpack.c.h.b16 %v536
        %v1426 = vunpack.c.l.b16 %v537
        %v1427 = vunpack.c.h.b16 %v537
        %v1428 = vunpack.c.l.b16 %v538
        %v1429 = vunpack.c.h.b16 %v538
        %v1430 = vunpack.c.l.b16 %v539
        %v1431 = vunpack.c.h.b16 %v539
        %v1432 = vunpack.c.l.b16 %v540
        %v1433 = vunpack.c.h.b16 %v540
        %v1434 = vunpack.c.l.b16 %v541
        %v1435 = vunpack.c.h.b16 %v541
        %v1436 = vunpack.c.l.b16 %v542
        %v1437 = vunpack.c.h.b16 %v542
        %v1438 = vunpack.c.l.b16 %v543
        %v1439 = vunpack.c.h.b16 %v543
        %v1440 = vunpack.c.l.b16 %v544
        %v1441 = vunpack.c.h.b16 %v544
        %v1442 = vunpack.c.l.b16 %v545
        %v1443 = vunpack.c.h.b16 %v545
        %v1444 = vunpack.c.l.b16 %v546
        %v1445 = vunpack.c.h.b16 %v546
        %v1446 = vunpack.c.l.b16 %v547
        %v1447 = vunpack.c.h.b16 %v547
        %v1448 = vunpack.c.l.b16 %v548
        %v1449 = vunpack.c.h.b16 %v548
        %v1450 = vunpack.c.l.b16 %v549
        %v1451 = vunpack.c.h.b16 %v549
        %v1452 = vunpack.c.l.b16 %v550
        %v1453 = vunpack.c.h.b16 %v550
        %v1454 = vunpack.c.l.b16 %v551
        %v1455 = vunpack.c.h.b16 %v551
        %v1456 = vunpack.c.l.b16 %v552
        %v1457 = vunpack.c.h.b16 %v552
        %v1458 = vunpack.c.l.b16 %v553
        %v1459 = vunpack.c.h.b16 %v553
        %v1460 = vunpack.c.l.b16 %v554
        %v1461 = vunpack.c.h.b16 %v554
        %v1462 = vunpack.c.l.b16 %v555
        %v1463 = vunpack.c.h.b16 %v555
        %v1464 = vunpack.c.l.b16 %v556
        %v1465 = vunpack.c.h.b16 %v556
        %v1466 = vunpack.c.l.b16 %v557
        %v1467 = vunpack.c.h.b16 %v557
        %v1468 = vunpack.c.l.b16 %v558
        %v1469 = vunpack.c.h.b16 %v558
        %v1470 = vunpack.c.l.b16 %v559
        %v1471 = vunpack.c.h.b16 %v559
        %v1472 = vunpack.c.l.b16 %v560
        %v1473 = vunpack.c.h.b16 %v560
        %v1474 = vunpack.c.l.b16 %v561
        %v1475 = vunpack.c.h.b16 %v561
        %v1476 = vunpack.c.l.b16 %v562
        %v1477 = vunpack.c.h.b16 %v562
        %v1478 = vunpack.c.l.b16 %v563
        %v1479 = vunpack.c.h.b16 %v563
        %v1480 = vunpack.c.l.b16 %v564
        %v1481 = vunpack.c.h.b16 %v564
        %v1482 = vunpack.c.l.b16 %v565
        %v1483 = vunpack.c.h.b16 %v565
        %v1484 = vunpack.c.l.b16 %v566
        %v1485 = vunpack.c.h.b16 %v566
        %v1486 = vunpack.c.l.b16 %v567
        %v1487 = vunpack.c.h.b16 %v567
        %v1488 = vunpack.c.l.b16 %v568
        %v1489 = vunpack.c.h.b16 %v568
        %v1490 = vunpack.c.l.b16 %v569
        %v1491 = vunpack.c.h.b16 %v569
        %v1492 = vunpack.c.l.b16 %v570
        %v1493 = vunpack.c.h.b16 %v570
        %v1494 = vunpack.c.l.b16 %v571
        %v1495 = vunpack.c.h.b16 %v571
        %v1496 = vunpack.c.l.b16 %v572
        %v1497 = vunpack.c.h.b16 %v572
        %v1498 = vunpack.c.l.b16 %v573
        %v1499 = vunpack.c.h.b16 %v573
        %v1500 = vunpack.c.l.b16 %v574
        %v1501 = vunpack.c.h.b16 %v574
        %v1502 = vunpack.c.l.b16 %v575
        %v1503 = vunpack.c.h.b16 %v575
        %v1504 = vunpack.c.l.b16 %v576
        %v1505 = vunpack.c.h.b16 %v576
        %v1506 = vunpack.c.l.b16 %v577
        %v1507 = vunpack.c.h.b16 %v577
        %v1508 = vunpack.c.l.b16 %v578
        %v1509 = vunpack.c.h.b16 %v578
        %v1510 = vunpack.c.l.b16 %v579
        %v1511 = vunpack.c.h.b16 %v579
        %v1512 = vunpack.c.l.b16 %v580
        %v1513 = vunpack.c.h.b16 %v580
        %v1514 = vunpack.c.l.b16 %v581
        %v1515 = vunpack.c.h.b16 %v581
        %v1516 = vunpack.c.l.b16 %v582
        %v1517 = vunpack.c.h.b16 %v582
        %v1518 = vunpack.c.l.b16 %v583
        %v1519 = vunpack.c.h.b16 %v583
        %v1520 = vunpack.c.l.b16 %v584
        %v1521 = vunpack.c.h.b16 %v584
        %v1522 = vunpack.c.l.b16 %v585
        %v1523 = vunpack.c.h.b16 %v585
        %v1524 = vunpack.c.l.b16 %v586
        %v1525 = vunpack.c.h.b16 %v586
        %v1526 = vunpack.c.l.b16 %v587
        %v1527 = vunpack.c.h.b16 %v587
        %v1528 = vunpack.c.l.b16 %v588
        %v1529 = vunpack.c.h.b16 %v588
        %v1530 = vunpack.c.l.b16 %v589
        %v1531 = vunpack.c.h.b16 %v589
        %v1532 = vunpack.c.l.b16 %v590
        %v1533 = vunpack.c.h.b16 %v590
        %v1534 = vunpack.c.l.b16 %v591
        %v1535 = vunpack.c.h.b16 %v591
        %v1536 = vunpack.c.l.b16 %v592
        %v1537 = vunpack.c.h.b16 %v592
        %v1538 = vunpack.c.l.b16 %v593
        %v1539 = vunpack.c.h.b16 %v593
        %v1540 = vunpack.c.l.b16 %v594
        %v1541 = vunpack.c.h.b16 %v594
        %v1542 = vunpack.c.l.b16 %v595
        %v1543 = vunpack.c.h.b16 %v595
        %v1544 = vunpack.c.l.b16 %v596
        %v1545 = vunpack.c.h.b16 %v596
        %v1546 = vunpack.c.l.b16 %v597
        %v1547 = vunpack.c.h.b16 %v597
        %v1548 = vunpack.c.l.b16 %v598
        %v1549 = vunpack.c.h.b16 %v598
        %v1550 = vunpack.c.l.b16 %v599
        %v1551 = vunpack.c.h.b16 %v599
        %v1552 = vunpack.c.l.b16 %v600
        %v1553 = vunpack.c.h.b16 %v600
        %v1554 = vunpack.c.l.b16 %v601
        %v1555 = vunpack.c.h.b16 %v601
        %v1556 = vunpack.c.l.b16 %v602
        %v1557 = vunpack.c.h.b16 %v602
        %v1558 = vunpack.c.l.b16 %v603
        %v1559 = vunpack.c.h.b16 %v603
        %v1560 = vunpack.c.l.b16 %v604
        %v1561 = vunpack.c.h.b16 %v604
        %v1562 = vunpack.c.l.b16 %v605
        %v1563 = vunpack.c.h.b16 %v605
        %v1564 = vunpack.c.l.b16 %v606
        %v1565 = vunpack.c.h.b16 %v606
        %v1566 = vunpack.c.l.b16 %v607
        %v1567 = vunpack.c.h.b16 %v607
        %v1568 = vunpack.c.l.b16 %v608
        %v1569 = vunpack.c.h.b16 %v608
        %v1570 = vunpack.c.l.b16 %v609
        %v1571 = vunpack.c.h.b16 %v609
        %v1572 = vunpack.c.l.b16 %v610
        %v1573 = vunpack.c.h.b16 %v610
        %v1574 = vunpack.c.l.b16 %v611
        %v1575 = vunpack.c.h.b16 %v611
        %v1576 = vunpack.c.l.b16 %v612
        %v1577 = vunpack.c.h.b16 %v612
        %v1578 = vunpack.c.l.b16 %v613
        %v1579 = vunpack.c.h.b16 %v613
        %v1580 = vunpack.c.l.b16 %v614
        %v1581 = vunpack.c.h.b16 %v614
        %v1582 = vunpack.c.l.b16 %v615
        %v1583 = vunpack.c.h.b16 %v615
        %v1584 = vunpack.c.l.b16 %v616
        %v1585 = vunpack.c.h.b16 %v616
        %v1586 = vunpack.c.l.b16 %v617
        %v1587 = vunpack.c.h.b16 %v617
        %v1588 = vunpack.c.l.b16 %v618
        %v1589 = vunpack.c.h.b16 %v618
        %v1590 = vunpack.c.l.b16 %v619
        %v1591 = vunpack.c.h.b16 %v619
        %v1592 = vunpack.c.l.b16 %v620
        %v1593 = vunpack.c.h.b16 %v620
        %v1594 = vunpack.c.l.b16 %v621
        %v1595 = vunpack.c.h.b16 %v621
        %v1596 = vunpack.c.l.b16 %v622
        %v1597 = vunpack.c.h.b16 %v622
        %v1598 = vunpack.c.l.b16 %v623
        %v1599 = vunpack.c.h.b16 %v623
        %v1600 = vunpack.c.l.b16 %v624
        %v1601 = vunpack.c.h.b16 %v624
        %v1602 = vunpack.c.l.b16 %v625
        %v1603 = vunpack.c.h.b16 %v625
        %v1604 = vunpack.c.l.b16 %v626
        %v1605 = vunpack.c.h.b16 %v626
        %v1606 = vunpack.c.l.b16 %v627
        %v1607 = vunpack.c.h.b16 %v627
        %v1608 = vunpack.c.l.b16 %v628
        %v1609 = vunpack.c.h.b16 %v628
        %v1610 = vunpack.c.l.b16 %v629
        %v1611 = vunpack.c.h.b16 %v629
        %v1612 = vunpack.c.l.b16 %v630
        %v1613 = vunpack.c.h.b16 %v630
        %v1614 = vunpack.c.l.b16 %v631
        %v1615 = vunpack.c.h.b16 %v631
        %v1616 = vunpack.c.l.b16 %v632
        %v1617 = vunpack.c.h.b16 %v632
        %v1618 = vunpack.c.l.b16 %v633
        %v1619 = vunpack.c.h.b16 %v633
        %v1620 = vunpack.c.l.b16 %v634
        %v1621 = vunpack.c.h.b16 %v634
        %v1622 = vunpack.c.l.b16 %v635
        %v1623 = vunpack.c.h.b16 %v635
        %v1624 = vunpack.c.l.b16 %v636
        %v1625 = vunpack.c.h.b16 %v636
        %v1626 = vunpack.c.l.b16 %v637
        %v1627 = vunpack.c.h.b16 %v637
        %v1628 = vunpack.c.l.b16 %v638
        %v1629 = vunpack.c.h.b16 %v638
        %v1630 = vunpack.c.l.b16 %v639
        %v1631 = vunpack.c.h.b16 %v639
        %v1632 = vunpack.c.l.b16 %v640
        %v1633 = vunpack.c.h.b16 %v640
        %v1634 = vunpack.c.l.b16 %v641
        %v1635 = vunpack.c.h.b16 %v641
        %v1636 = vunpack.c.l.b16 %v642
        %v1637 = vunpack.c.h.b16 %v642
        %v1638 = vunpack.c.l.b16 %v643
        %v1639 = vunpack.c.h.b16 %v643
        %v1640 = vunpack.c.l.b16 %v644
        %v1641 = vunpack.c.h.b16 %v644
        %v1642 = vunpack.c.l.b16 %v645
        %v1643 = vunpack.c.h.b16 %v645
        %v1644 = vunpack.c.l.b16 %v646
        %v1645 = vunpack.c.h.b16 %v646
        %v1646 = vunpack.c.l.b16 %v647
        %v1647 = vunpack.c.h.b16 %v647
        %v1648 = vunpack.c.l.b16 %v648
        %v1649 = vunpack.c.h.b16 %v648
        %v1650 = vunpack.c.l.b16 %v649
        %v1651 = vunpack.c.h.b16 %v649
        %v1652 = vunpack.c.l.b16 %v650
        %v1653 = vunpack.c.h.b16 %v650
        %v1654 = vunpack.c.l.b16 %v651
        %v1655 = vunpack.c.h.b16 %v651
        %v1656 = vunpack.c.l.b16 %v652
        %v1657 = vunpack.c.h.b16 %v652
        %v1658 = vunpack.c.l.b16 %v653
        %v1659 = vunpack.c.h.b16 %v653
        %v1660 = vunpack.c.l.b16 %v654
        %v1661 = vunpack.c.h.b16 %v654
        %v1662 = vunpack.c.l.b16 %v655
        %v1663 = vunpack.c.h.b16 %v655
        %v1664 = vunpack.c.l.b16 %v656
        %v1665 = vunpack.c.h.b16 %v656
        %v1666 = vunpack.c.l.b16 %v657
        %v1667 = vunpack.c.h.b16 %v657
        %v1668 = vunpack.c.l.b16 %v658
        %v1669 = vunpack.c.h.b16 %v658
        %v1670 = vunpack.c.l.b16 %v659
        %v1671 = vunpack.c.h.b16 %v659
        %v1672 = vunpack.c.l.b16 %v660
        %v1673 = vunpack.c.h.b16 %v660
        %v1674 = vunpack.c.l.b16 %v661
        %v1675 = vunpack.c.h.b16 %v661
        %v1676 = vunpack.c.l.b16 %v662
        %v1677 = vunpack.c.h.b16 %v662
        %v1678 = vunpack.c.l.b16 %v663
        %v1679 = vunpack.c.h.b16 %v663
        %v1680 = vunpack.c.l.b16 %v664
        %v1681 = vunpack.c.h.b16 %v664
        %v1682 = vunpack.c.l.b16 %v665
        %v1683 = vunpack.c.h.b16 %v665
        %v1684 = vunpack.c.l.b16 %v666
        %v1685 = vunpack.c.h.b16 %v666
        %v1686 = vunpack.c.l.b16 %v667
        %v1687 = vunpack.c.h.b16 %v667
        %v1688 = vunpack.c.l.b16 %v668
        %v1689 = vunpack.c.h.b16 %v668
        %v1690 = vunpack.c.l.b16 %v669
        %v1691 = vunpack.c.h.b16 %v669
        %v1692 = vunpack.c.l.b16 %v670
        %v1693 = vunpack.c.h.b16 %v670
        %v1694 = vunpack.c.l.b16 %v671
        %v1695 = vunpack.c.h.b16 %v671
        %v1696 = vunpack.c.l.b16 %v672
        %v1697 = vunpack.c.h.b16 %v672
        %v1698 = vunpack.c.l.b16 %v673
        %v1699 = vunpack.c.h.b16 %v673
        %v1700 = vunpack.c.l.b16 %v674
        %v1701 = vunpack.c.h.b16 %v674
        %v1702 = vunpack.c.l.b16 %v675
        %v1703 = vunpack.c.h.b16 %v675
        %v1704 = vunpack.c.l.b16 %v676
        %v1705 = vunpack.c.h.b16 %v676
        %v1706 = vunpack.c.l.b16 %v677
        %v1707 = vunpack.c.h.b16 %v677
        %v1708 = vunpack.c.l.b16 %v678
        %v1709 = vunpack.c.h.b16 %v678
        %v1710 = vunpack.c.l.b16 %v679
        %v1711 = vunpack.c.h.b16 %v679
        %v1712 = vunpack.c.l.b16 %v680
        %v1713 = vunpack.c.h.b16 %v680
        %v1714 = vunpack.c.l.b16 %v681
        %v1715 = vunpack.c.h.b16 %v681
        %v1716 = vunpack.c.l.b16 %v682
        %v1717 = vunpack.c.h.b16 %v682
        %v1718 = vunpack.c.l.b16 %v683
        %v1719 = vunpack.c.h.b16 %v683
        %v1720 = vunpack.c.l.b16 %v684
        %v1721 = vunpack.c.h.b16 %v684
        %v1722 = vunpack.c.l.b16 %v685
        %v1723 = vunpack.c.h.b16 %v685
        %v1724 = vunpack.c.l.b16 %v686
        %v1725 = vunpack.c.h.b16 %v686
        %v1726 = vunpack.c.l.b16 %v687
        %v1727 = vunpack.c.h.b16 %v687
        %v1728 = vunpack.c.l.b16 %v688
        %v1729 = vunpack.c.h.b16 %v688
        %v1730 = vunpack.c.l.b16 %v689
        %v1731 = vunpack.c.h.b16 %v689
        %v1732 = vunpack.c.l.b16 %v690
        %v1733 = vunpack.c.h.b16 %v690
        %v1734 = vunpack.c.l.b16 %v691
        %v1735 = vunpack.c.h.b16 %v691
        %v1736 = vunpack.c.l.b16 %v692
        %v1737 = vunpack.c.h.b16 %v692
        %v1738 = vunpack.c.l.b16 %v693
        %v1739 = vunpack.c.h.b16 %v693
        %v1740 = vunpack.c.l.b16 %v694
        %v1741 = vunpack.c.h.b16 %v694
        %v1742 = vunpack.c.l.b16 %v695
        %v1743 = vunpack.c.h.b16 %v695
        %v1744 = vunpack.c.l.b16 %v696
        %v1745 = vunpack.c.h.b16 %v696
        %v1746 = vunpack.c.l.b16 %v697
        %v1747 = vunpack.c.h.b16 %v697
        %v1748 = vunpack.c.l.b16 %v698
        %v1749 = vunpack.c.h.b16 %v698
        %v1750 = vunpack.c.l.b16 %v699
        %v1751 = vunpack.c.h.b16 %v699
        %v1752 = vunpack.c.l.b16 %v700
        %v1753 = vunpack.c.h.b16 %v700
        %v1754 = vunpack.c.l.b16 %v701
        %v1755 = vunpack.c.h.b16 %v701
        %v1756 = vunpack.c.l.b16 %v702
        %v1757 = vunpack.c.h.b16 %v702
        %v1758 = vunpack.c.l.b16 %v703
        %v1759 = vunpack.c.h.b16 %v703
        %v1760 = vunpack.c.l.b16 %v704
        %v1761 = vunpack.c.h.b16 %v704
        %v1762 = vunpack.c.l.b16 %v705
        %v1763 = vunpack.c.h.b16 %v705
        %v1764 = vunpack.c.l.b16 %v706
        %v1765 = vunpack.c.h.b16 %v706
        %v1766 = vunpack.c.l.b16 %v707
        %v1767 = vunpack.c.h.b16 %v707
        %v1768 = vunpack.c.l.b16 %v708
        %v1769 = vunpack.c.h.b16 %v708
        %v1770 = vunpack.c.l.b16 %v709
        %v1771 = vunpack.c.h.b16 %v709
        %v1772 = vunpack.c.l.b16 %v710
        %v1773 = vunpack.c.h.b16 %v710
        %v1774 = vunpack.c.l.b16 %v711
        %v1775 = vunpack.c.h.b16 %v711
        %v1776 = vunpack.c.l.b16 %v712
        %v1777 = vunpack.c.h.b16 %v712
        %v1778 = vunpack.c.l.b16 %v713
        %v1779 = vunpack.c.h.b16 %v713
        %v1780 = vunpack.c.l.b16 %v714
        %v1781 = vunpack.c.h.b16 %v714
        %v1782 = vunpack.c.l.b16 %v715
        %v1783 = vunpack.c.h.b16 %v715
        %v1784 = vunpack.c.l.b16 %v716
        %v1785 = vunpack.c.h.b16 %v716
        %v1786 = vunpack.c.l.b16 %v717
        %v1787 = vunpack.c.h.b16 %v717
        %v1788 = vunpack.c.l.b16 %v718
        %v1789 = vunpack.c.h.b16 %v718
        %v1790 = vunpack.c.l.b16 %v719
        %v1791 = vunpack.c.h.b16 %v719
        %v1792 = vunpack.c.l.b16 %v720
        %v1793 = vunpack.c.h.b16 %v720
        %v1794 = vunpack.c.l.b16 %v721
        %v1795 = vunpack.c.h.b16 %v721
        %v1796 = vunpack.c.l.b16 %v722
        %v1797 = vunpack.c.h.b16 %v722
        %v1798 = vunpack.c.l.b16 %v723
        %v1799 = vunpack.c.h.b16 %v723
        %v1800 = vunpack.c.l.b16 %v724
        %v1801 = vunpack.c.h.b16 %v724
        %v1802 = vunpack.c.l.b16 %v725
        %v1803 = vunpack.c.h.b16 %v725
        %v1804 = vunpack.c.l.b16 %v726
        %v1805 = vunpack.c.h.b16 %v726
        %v1806 = vunpack.c.l.b16 %v727
        %v1807 = vunpack.c.h.b16 %v727
        %v1808 = vunpack.c.l.b16 %v728
        %v1809 = vunpack.c.h.b16 %v728
        %v1810 = vunpack.c.l.b16 %v729
        %v1811 = vunpack.c.h.b16 %v729
        %v1812 = vunpack.c.l.b16 %v730
        %v1813 = vunpack.c.h.b16 %v730
        %v1814 = vunpack.c.l.b16 %v731
        %v1815 = vunpack.c.h.b16 %v731
        %v1816 = vunpack.c.l.b16 %v732
        %v1817 = vunpack.c.h.b16 %v732
        %v1818 = vunpack.c.l.b16 %v733
        %v1819 = vunpack.c.h.b16 %v733
        %v1820 = vunpack.c.l.b16 %v734
        %v1821 = vunpack.c.h.b16 %v734
        %v1822 = vunpack.c.l.b16 %v735
        %v1823 = vunpack.c.h.b16 %v735
        %v1824 = vunpack.c.l.b16 %v736
        %v1825 = vunpack.c.h.b16 %v736
        %v1826 = vunpack.c.l.b16 %v737
        %v1827 = vunpack.c.h.b16 %v737
        %v1828 = vunpack.c.l.b16 %v738
        %v1829 = vunpack.c.h.b16 %v738
        %v1830 = vunpack.c.l.b16 %v739
        %v1831 = vunpack.c.h.b16 %v739
        %v1832 = vunpack.c.l.b16 %v740
        %v1833 = vunpack.c.h.b16 %v740
        %v1834 = vunpack.c.l.b16 %v741
        %v1835 = vunpack.c.h.b16 %v741
        %v1836 = vunpack.c.l.b16 %v742
        %v1837 = vunpack.c.h.b16 %v742
        %v1838 = vunpack.c.l.b16 %v743
        %v1839 = vunpack.c.h.b16 %v743
        %v1840 = vunpack.c.l.b16 %v744
        %v1841 = vunpack.c.h.b16 %v744
        %v1842 = vunpack.c.l.b16 %v745
        %v1843 = vunpack.c.h.b16 %v745
        %v1844 = vunpack.c.l.b16 %v746
        %v1845 = vunpack.c.h.b16 %v746
        %v1846 = vunpack.c.l.b16 %v747
        %v1847 = vunpack.c.h.b16 %v747
        %v1848 = vunpack.c.l.b16 %v748
        %v1849 = vunpack.c.h.b16 %v748
        %v1850 = vunpack.c.l.b16 %v749
        %v1851 = vunpack.c.h.b16 %v749
        %v1852 = vunpack.c.l.b16 %v750
        %v1853 = vunpack.c.h.b16 %v750
        %v1854 = vunpack.c.l.b16 %v751
        %v1855 = vunpack.c.h.b16 %v751
        %v1856 = vunpack.c.l.b16 %v752
        %v1857 = vunpack.c.h.b16 %v752
        %v1858 = vunpack.c.l.b16 %v753
        %v1859 = vunpack.c.h.b16 %v753
        %v1860 = vunpack.c.l.b16 %v754
        %v1861 = vunpack.c.h.b16 %v754
        %v1862 = vunpack.c.l.b16 %v755
        %v1863 = vunpack.c.h.b16 %v755
        %v1864 = vunpack.c.l.b16 %v756
        %v1865 = vunpack.c.h.b16 %v756
        %v1866 = vunpack.c.l.b16 %v757
        %v1867 = vunpack.c.h.b16 %v757
        %v1868 = vunpack.c.l.b16 %v758
        %v1869 = vunpack.c.h.b16 %v758
        %v1870 = vunpack.c.l.b16 %v759
        %v1871 = vunpack.c.h.b16 %v759
        %v1872 = vunpack.c.l.b16 %v760
        %v1873 = vunpack.c.h.b16 %v760
        %v1874 = vunpack.c.l.b16 %v761
        %v1875 = vunpack.c.h.b16 %v761
        %v1876 = vunpack.c.l.b16 %v762
        %v1877 = vunpack.c.h.b16 %v762
        %v1878 = vunpack.c.l.b16 %v763
        %v1879 = vunpack.c.h.b16 %v763
        %v1880 = vunpack.c.l.b16 %v764
        %v1881 = vunpack.c.h.b16 %v764
        %v1882 = vunpack.c.l.b16 %v765
        %v1883 = vunpack.c.h.b16 %v765
        %v1884 = vunpack.c.l.b16 %v766
        %v1885 = vunpack.c.h.b16 %v766
        %v1886 = vunpack.c.l.b16 %v767
        %v1887 = vunpack.c.h.b16 %v767
        %v1888 = vunpack.c.l.b16 %v768
        %v1889 = vunpack.c.h.b16 %v768
        %v1890 = vunpack.c.l.b16 %v769
        %v1891 = vunpack.c.h.b16 %v769
        %v1892 = vunpack.c.l.b16 %v770
        %v1893 = vunpack.c.h.b16 %v770
        %v1894 = vunpack.c.l.b16 %v771
        %v1895 = vunpack.c.h.b16 %v771
        %v1896 = vunpack.c.l.b16 %v772
        %v1897 = vunpack.c.h.b16 %v772
        %v1898 = vunpack.c.l.b16 %v773
        %v1899 = vunpack.c.h.b16 %v773
        %v1900 = vunpack.c.l.b16 %v774
        %v1901 = vunpack.c.h.b16 %v774
        %v1902 = vunpack.c.l.b16 %v775
        %v1903 = vunpack.c.h.b16 %v775
        %v1904 = vunpack.c.l.b16 %v776
        %v1905 = vunpack.c.h.b16 %v776
        %v1906 = vunpack.c.l.b16 %v777
        %v1907 = vunpack.c.h.b16 %v777
        %v1908 = vunpack.c.l.b16 %v778
        %v1909 = vunpack.c.h.b16 %v778
        %v1910 = vunpack.c.l.b16 %v779
        %v1911 = vunpack.c.h.b16 %v779
        %v1912 = vunpack.c.l.b16 %v780
        %v1913 = vunpack.c.h.b16 %v780
        %v1914 = vunpack.c.l.b16 %v781
        %v1915 = vunpack.c.h.b16 %v781
        %v1916 = vunpack.c.l.b16 %v782
        %v1917 = vunpack.c.h.b16 %v782
        %v1918 = vunpack.c.l.b16 %v783
        %v1919 = vunpack.c.h.b16 %v783
        %v1920 = vunpack.c.l.b16 %v784
        %v1921 = vunpack.c.h.b16 %v784
        %v1922 = vunpack.c.l.b16 %v785
        %v1923 = vunpack.c.h.b16 %v785
        %v1924 = vunpack.c.l.b16 %v786
        %v1925 = vunpack.c.h.b16 %v786
        %v1926 = vunpack.c.l.b16 %v787
        %v1927 = vunpack.c.h.b16 %v787
        %v1928 = vunpack.c.l.b16 %v788
        %v1929 = vunpack.c.h.b16 %v788
        %v1930 = vunpack.c.l.b16 %v789
        %v1931 = vunpack.c.h.b16 %v789
        %v1932 = vunpack.c.l.b16 %v790
        %v1933 = vunpack.c.h.b16 %v790
        %v1934 = vunpack.c.l.b16 %v791
        %v1935 = vunpack.c.h.b16 %v791
        %v1936 = vunpack.c.l.b16 %v792
        %v1937 = vunpack.c.h.b16 %v792
        %v1938 = vunpack.c.l.b16 %v793
        %v1939 = vunpack.c.h.b16 %v793
        %v1940 = vunpack.c.l.b16 %v794
        %v1941 = vunpack.c.h.b16 %v794
        %v1942 = vunpack.c.l.b16 %v795
        %v1943 = vunpack.c.h.b16 %v795
        %v1944 = vunpack.c.l.b16 %v796
        %v1945 = vunpack.c.h.b16 %v796
        %v1946 = vunpack.c.l.b16 %v797
        %v1947 = vunpack.c.h.b16 %v797
        %v1948 = vunpack.c.l.b16 %v798
        %v1949 = vunpack.c.h.b16 %v798
        %v1950 = vunpack.c.l.b16 %v799
        %v1951 = vunpack.c.h.b16 %v799
        %v1952 = vunpack.c.l.b16 %v800
        %v1953 = vunpack.c.h.b16 %v800
        %v1954 = vunpack.c.l.b16 %v801
        %v1955 = vunpack.c.h.b16 %v801
        %v1956 = vunpack.c.l.b16 %v802
        %v1957 = vunpack.c.h.b16 %v802
        %v1958 = vunpack.c.l.b16 %v803
        %v1959 = vunpack.c.h.b16 %v803
        %v1960 = vunpack.c.l.b16 %v804
        %v1961 = vunpack.c.h.b16 %v804
        %v1962 = vunpack.c.l.b16 %v805
        %v1963 = vunpack.c.h.b16 %v805
        %v1964 = vunpack.c.l.b16 %v806
        %v1965 = vunpack.c.h.b16 %v806
        %v1966 = vunpack.c.l.b16 %v807
        %v1967 = vunpack.c.h.b16 %v807
        %v1968 = vunpack.c.l.b16 %v808
        %v1969 = vunpack.c.h.b16 %v808
        %v1970 = vunpack.c.l.b16 %v809
        %v1971 = vunpack.c.h.b16 %v809
        %v1972 = vunpack.c.l.b16 %v810
        %v1973 = vunpack.c.h.b16 %v810
        %v1974 = vunpack.c.l.b16 %v811
        %v1975 = vunpack.c.h.b16 %v811
        %v1976 = vunpack.c.l.b16 %v812
        %v1977 = vunpack.c.h.b16 %v812
        %v1978 = vunpack.c.l.b16 %v813
        %v1979 = vunpack.c.h.b16 %v813
        %v1980 = vunpack.c.l.b16 %v814
        %v1981 = vunpack.c.h.b16 %v814
        %v1982 = vunpack.c.l.b16 %v815
        %v1983 = vunpack.c.h.b16 %v815
        %v1984 = vunpack.c.l.b16 %v816
        %v1985 = vunpack.c.h.b16 %v816
        %v1986 = vunpack.c.l.b16 %v817
        %v1987 = vunpack.c.h.b16 %v817
        %v1988 = vunpack.c.l.b16 %v818
        %v1989 = vunpack.c.h.b16 %v818
        %v1990 = vunpack.c.l.b16 %v819
        %v1991 = vunpack.c.h.b16 %v819
        %v1992 = vunpack.c.l.b16 %v820
        %v1993 = vunpack.c.h.b16 %v820
        %v1994 = vunpack.c.l.b16 %v821
        %v1995 = vunpack.c.h.b16 %v821
        %v1996 = vunpack.c.l.b16 %v822
        %v1997 = vunpack.c.h.b16 %v822
        %v1998 = vunpack.c.l.b16 %v823
        %v1999 = vunpack.c.h.b16 %v823
        %v2000 = vunpack.c.l.b16 %v824
        %v2001 = vunpack.c.h.b16 %v824
        %v2002 = vunpack.c.l.b16 %v825
        %v2003 = vunpack.c.h.b16 %v825
        %v2004 = vunpack.c.l.b16 %v826
        %v2005 = vunpack.c.h.b16 %v826
        %v2006 = vunpack.c.l.b16 %v827
        %v2007 = vunpack.c.h.b16 %v827
        %v2008 = vunpack.c.l.b16 %v828
        %v2009 = vunpack.c.h.b16 %v828
        %v2010 = vunpack.c.l.b16 %v829
        %v2011 = vunpack.c.h.b16 %v829
        %v2012 = vunpack.c.l.b16 %v830
        %v2013 = vunpack.c.h.b16 %v830
        %v2014 = vunpack.c.l.b16 %v831
        %v2015 = vunpack.c.h.b16 %v831
        %v2016 = vunpack.c.l.b16 %v832
        %v2017 = vunpack.c.h.b16 %v832
        %v2018 = vunpack.c.l.b16 %v833
        %v2019 = vunpack.c.h.b16 %v833
        %v2020 = vunpack.c.l.b16 %v834
        %v2021 = vunpack.c.h.b16 %v834
        %v2022 = vunpack.c.l.b16 %v835
        %v2023 = vunpack.c.h.b16 %v835
        %v2024 = vunpack.c.l.b16 %v836
        %v2025 = vunpack.c.h.b16 %v836
        %v2026 = vunpack.c.l.b16 %v837
        %v2027 = vunpack.c.h.b16 %v837
        %v2028 = vunpack.c.l.b16 %v838
        %v2029 = vunpack.c.h.b16 %v838
        %v2030 = vunpack.c.l.b16 %v839
        %v2031 = vunpack.c.h.b16 %v839
        %v2032 = vunpack.c.l.b16 %v840
        %v2033 = vunpack.c.h.b16 %v840
        %v2034 = vunpack.c.l.b16 %v841
        %v2035 = vunpack.c.h.b16 %v841
        %v2036 = vunpack.c.l.b16 %v842
        %v2037 = vunpack.c.h.b16 %v842
        %v2038 = vunpack.c.l.b16 %v843
        %v2039 = vunpack.c.h.b16 %v843
        %v2040 = vunpack.c.l.b16 %v844
        %v2041 = vunpack.c.h.b16 %v844
        %v2042 = vunpack.c.l.b16 %v845
        %v2043 = vunpack.c.h.b16 %v845
        %v2044 = vunpack.c.l.b16 %v846
        %v2045 = vunpack.c.h.b16 %v846
        %v2046 = vunpack.c.l.b16 %v847
        %v2047 = vunpack.c.h.b16 %v847
        %v2048 = vunpack.c.l.b16 %v848
        %v2049 = vunpack.c.h.b16 %v848
        %v2050 = vunpack.c.l.b16 %v849
        %v2051 = vunpack.c.h.b16 %v849
        %v2052 = vunpack.c.l.b16 %v850
        %v2053 = vunpack.c.h.b16 %v850
        %v2054 = vunpack.c.l.b16 %v851
        %v2055 = vunpack.c.h.b16 %v851
        %v2056 = vunpack.c.l.b16 %v852
        %v2057 = vunpack.c.h.b16 %v852
        %v2058 = vunpack.c.l.b16 %v853
        %v2059 = vunpack.c.h.b16 %v853
        %v2060 = vunpack.c.l.b16 %v854
        %v2061 = vunpack.c.h.b16 %v854
        %v2062 = vunpack.c.l.b16 %v855
        %v2063 = vunpack.c.h.b16 %v855
        %v2064 = vunpack.c.l.b16 %v856
        %v2065 = vunpack.c.h.b16 %v856
        %v2066 = vunpack.c.l.b16 %v857
        %v2067 = vunpack.c.h.b16 %v857
        %v2068 = vunpack.c.l.b16 %v858
        %v2069 = vunpack.c.h.b16 %v858
        %v2070 = vunpack.c.l.b16 %v859
        %v2071 = vunpack.c.h.b16 %v859
        %v2072 = vpack.c.b16 %v1312, %v1304
        %v2073 = vpack.c.b16 %v1313, %v1305
        %v2074 = vpack.c.b16 %v1314, %v1306
        %v2075 = vpack.c.b16 %v1315, %v1307
        %v2076 = vpack.c.b16 %v1316, %v1308
        %v2077 = vpack.c.b16 %v1317, %v1309
        %v2078 = vpack.c.b16 %v1318, %v1310
        %v2079 = vpack.c.b16 %v1319, %v1311
        %v2080 = vpack.c.b16 %v1328, %v1320
        %v2081 = vpack.c.b16 %v1329, %v1321
        %v2082 = vpack.c.b16 %v1330, %v1322
        %v2083 = vpack.c.b16 %v1331, %v1323
        %v2084 = vpack.c.b16 %v1332, %v1324
        %v2085 = vpack.c.b16 %v1333, %v1325
        %v2086 = vpack.c.b16 %v1334, %v1326
        %v2087 = vpack.c.b16 %v1335, %v1327
        %v2088 = vpack.c.b16 %v1344, %v1336
        %v2089 = vpack.c.b16 %v1345, %v1337
        %v2090 = vpack.c.b16 %v1346, %v1338
        %v2091 = vpack.c.b16 %v1347, %v1339
        %v2092 = vpack.c.b16 %v1348, %v1340
        %v2093 = vpack.c.b16 %v1349, %v1341
        %v2094 = vpack.c.b16 %v1350, %v1342
        %v2095 = vpack.c.b16 %v1351, %v1343
        %v2096 = vpack.c.b16 %v1360, %v1352
        %v2097 = vpack.c.b16 %v1361, %v1353
        %v2098 = vpack.c.b16 %v1362, %v1354
        %v2099 = vpack.c.b16 %v1363, %v1355
        %v2100 = vpack.c.b16 %v1364, %v1356
        %v2101 = vpack.c.b16 %v1365, %v1357
        %v2102 = vpack.c.b16 %v1366, %v1358
        %v2103 = vpack.c.b16 %v1367, %v1359
        %v2104 = vpack.c.b16 %v1376, %v1368
        %v2105 = vpack.c.b16 %v1377, %v1369
        %v2106 = vpack.c.b16 %v1378, %v1370
        %v2107 = vpack.c.b16 %v1379, %v1371
        %v2108 = vpack.c.b16 %v1380, %v1372
        %v2109 = vpack.c.b16 %v1381, %v1373
        %v2110 = vpack.c.b16 %v1382, %v1374
        %v2111 = vpack.c.b16 %v1383, %v1375
        %v2112 = vpack.c.b16 %v1392, %v1384
        %v2113 = vpack.c.b16 %v1393, %v1385
        %v2114 = vpack.c.b16 %v1394, %v1386
        %v2115 = vpack.c.b16 %v1395, %v1387
        %v2116 = vpack.c.b16 %v1396, %v1388
        %v2117 = vpack.c.b16 %v1397, %v1389
        %v2118 = vpack.c.b16 %v1398, %v1390
        %v2119 = vpack.c.b16 %v1399, %v1391
        %v2120 = vpack.c.b16 %v1408, %v1400
        %v2121 = vpack.c.b16 %v1409, %v1401
        %v2122 = vpack.c.b16 %v1410, %v1402
        %v2123 = vpack.c.b16 %v1411, %v1403
        %v2124 = vpack.c.b16 %v1412, %v1404
        %v2125 = vpack.c.b16 %v1413, %v1405
        %v2126 = vpack.c.b16 %v1414, %v1406
        %v2127 = vpack.c.b16 %v1415, %v1407
        %v2128 = vpack.c.b16 %v1424, %v1416
        %v2129 = vpack.c.b16 %v1425, %v1417
        %v2130 = vpack.c.b16 %v1426, %v1418
        %v2131 = vpack.c.b16 %v1427, %v1419
        %v2132 = vpack.c.b16 %v1428, %v1420
        %v2133 = vpack.c.b16 %v1429, %v1421
        %v2134 = vpack.c.b16 %v1430, %v1422
        %v2135 = vpack.c.b16 %v1431, %v1423
        %v2136 = vpack.c.b16 %v1440, %v1432
        %v2137 = vpack.c.b16 %v1441, %v1433
        %v2138 = vpack.c.b16 %v1442, %v1434
        %v2139 = vpack.c.b16 %v1443, %v1435
        %v2140 = vpack.c.b16 %v1444, %v1436
        %v2141 = vpack.c.b16 %v1445, %v1437
        %v2142 = vpack.c.b16 %v1446, %v1438
        %v2143 = vpack.c.b16 %v1447, %v1439
        %v2144 = vpack.c.b16 %v1456, %v1448
        %v2145 = vpack.c.b16 %v1457, %v1449
        %v2146 = vpack.c.b16 %v1458, %v1450
        %v2147 = vpack.c.b16 %v1459, %v1451
        %v2148 = vpack.c.b16 %v1460, %v1452
        %v2149 = vpack.c.b16 %v1461, %v1453
        %v2150 = vpack.c.b16 %v1462, %v1454
        %v2151 = vpack.c.b16 %v1463, %v1455
        %v2152 = vpack.c.b16 %v1472, %v1464
        %v2153 = vpack.c.b16 %v1473, %v1465
        %v2154 = vpack.c.b16 %v1474, %v1466
        %v2155 = vpack.c.b16 %v1475, %v1467
        %v2156 = vpack.c.b16 %v1476, %v1468
        %v2157 = vpack.c.b16 %v1477, %v1469
        %v2158 = vpack.c.b16 %v1478, %v1470
        %v2159 = vpack.c.b16 %v1479, %v1471
        %v2160 = vpack.c.b16 %v1488, %v1480
        %v2161 = vpack.c.b16 %v1489, %v1481
        %v2162 = vpack.c.b16 %v1490, %v1482
        %v2163 = vpack.c.b16 %v1491, %v1483
        %v2164 = vpack.c.b16 %v1492, %v1484
        %v2165 = vpack.c.b16 %v1493, %v1485
        %v2166 = vpack.c.b16 %v1494, %v1486
        %v2167 = vpack.c.b16 %v1495, %v1487
        %v2168 = vpack.c.b16 %v1504, %v1496
        %v2169 = vpack.c.b16 %v1505, %v1497
        %v2170 = vpack.c.b16 %v1506, %v1498
        %v2171 = vpack.c.b16 %v1507, %v1499
        %v2172 = vpack.c.b16 %v1508, %v1500
        %v2173 = vpack.c.b16 %v1509, %v1501
        %v2174 = vpack.c.b16 %v1510, %v1502
        %v2175 = vpack.c.b16 %v1511, %v1503
        %v2176 = vpack.c.b16 %v1520, %v1512
        %v2177 = vpack.c.b16 %v1521, %v1513
        %v2178 = vpack.c.b16 %v1522, %v1514
        %v2179 = vpack.c.b16 %v1523, %v1515
        %v2180 = vpack.c.b16 %v1524, %v1516
        %v2181 = vpack.c.b16 %v1525, %v1517
        %v2182 = vpack.c.b16 %v1526, %v1518
        %v2183 = vpack.c.b16 %v1527, %v1519
        %v2184 = vpack.c.b16 %v1536, %v1528
        %v2185 = vpack.c.b16 %v1537, %v1529
        %v2186 = vpack.c.b16 %v1538, %v1530
        %v2187 = vpack.c.b16 %v1539, %v1531
        %v2188 = vpack.c.b16 %v1540, %v1532
        %v2189 = vpack.c.b16 %v1541, %v1533
        %v2190 = vpack.c.b16 %v1542, %v1534
        %v2191 = vpack.c.b16 %v1543, %v1535
        %v2192 = vpack.c.b16 %v1552, %v1544
        %v2193 = vpack.c.b16 %v1553, %v1545
        %v2194 = vpack.c.b16 %v1554, %v1546
        %v2195 = vpack.c.b16 %v1555, %v1547
        %v2196 = vpack.c.b16 %v1556, %v1548
        %v2197 = vpack.c.b16 %v1557, %v1549
        %v2198 = vpack.c.b16 %v1558, %v1550
        %v2199 = vpack.c.b16 %v1559, %v1551
        %v2200 = vpack.c.b16 %v1568, %v1560
        %v2201 = vpack.c.b16 %v1569, %v1561
        %v2202 = vpack.c.b16 %v1570, %v1562
        %v2203 = vpack.c.b16 %v1571, %v1563
        %v2204 = vpack.c.b16 %v1572, %v1564
        %v2205 = vpack.c.b16 %v1573, %v1565
        %v2206 = vpack.c.b16 %v1574, %v1566
        %v2207 = vpack.c.b16 %v1575, %v1567
        %v2208 = vpack.c.b16 %v1584, %v1576
        %v2209 = vpack.c.b16 %v1585, %v1577
        %v2210 = vpack.c.b16 %v1586, %v1578
        %v2211 = vpack.c.b16 %v1587, %v1579
        %v2212 = vpack.c.b16 %v1588, %v1580
        %v2213 = vpack.c.b16 %v1589, %v1581
        %v2214 = vpack.c.b16 %v1590, %v1582
        %v2215 = vpack.c.b16 %v1591, %v1583
        %v2216 = vpack.c.b16 %v1600, %v1592
        %v2217 = vpack.c.b16 %v1601, %v1593
        %v2218 = vpack.c.b16 %v1602, %v1594
        %v2219 = vpack.c.b16 %v1603, %v1595
        %v2220 = vpack.c.b16 %v1604, %v1596
        %v2221 = vpack.c.b16 %v1605, %v1597
        %v2222 = vpack.c.b16 %v1606, %v1598
        %v2223 = vpack.c.b16 %v1607, %v1599
        %v2224 = vpack.c.b16 %v1616, %v1608
        %v2225 = vpack.c.b16 %v1617, %v1609
        %v2226 = vpack.c.b16 %v1618, %v1610
        %v2227 = vpack.c.b16 %v1619, %v1611
        %v2228 = vpack.c.b16 %v1620, %v1612
        %v2229 = vpack.c.b16 %v1621, %v1613
        %v2230 = vpack.c.b16 %v1622, %v1614
        %v2231 = vpack.c.b16 %v1623, %v1615
        %v2232 = vpack.c.b16 %v1632, %v1624
        %v2233 = vpack.c.b16 %v1633, %v1625
        %v2234 = vpack.c.b16 %v1634, %v1626
        %v2235 = vpack.c.b16 %v1635, %v1627
        %v2236 = vpack.c.b16 %v1636, %v1628
        %v2237 = vpack.c.b16 %v1637, %v1629
        %v2238 = vpack.c.b16 %v1638, %v1630
        %v2239 = vpack.c.b16 %v1639, %v1631
        %v2240 = vpack.c.b16 %v1648, %v1640
        %v2241 = vpack.c.b16 %v1649, %v1641
        %v2242 = vpack.c.b16 %v1650, %v1642
        %v2243 = vpack.c.b16 %v1651, %v1643
        %v2244 = vpack.c.b16 %v1652, %v1644
        %v2245 = vpack.c.b16 %v1653, %v1645
        %v2246 = vpack.c.b16 %v1654, %v1646
        %v2247 = vpack.c.b16 %v1655, %v1647
        %v2248 = vpack.c.b16 %v1664, %v1656
        %v2249 = vpack.c.b16 %v1665, %v1657
        %v2250 = vpack.c.b16 %v1666, %v1658
        %v2251 = vpack.c.b16 %v1667, %v1659
        %v2252 = vpack.c.b16 %v1668, %v1660
        %v2253 = vpack.c.b16 %v1669, %v1661
        %v2254 = vpack.c.b16 %v1670, %v1662
        %v2255 = vpack.c.b16 %v1671, %v1663
        %v2256 = vpack.c.b16 %v1680, %v1672
        %v2257 = vpack.c.b16 %v1681, %v1673
        %v2258 = vpack.c.b16 %v1682, %v1674
        %v2259 = vpack.c.b16 %v1683, %v1675
        %v2260 = vpack.c.b16 %v1684, %v1676
        %v2261 = vpack.c.b16 %v1685, %v1677
        %v2262 = vpack.c.b16 %v1686, %v1678
        %v2263 = vpack.c.b16 %v1687, %v1679
        %v2264 = vpack.c.b16 %v1696, %v1688
        %v2265 = vpack.c.b16 %v1697, %v1689
        %v2266 = vpack.c.b16 %v1698, %v1690
        %v2267 = vpack.c.b16 %v1699, %v1691
        %v2268 = vpack.c.b16 %v1700, %v1692
        %v2269 = vpack.c.b16 %v1701, %v1693
        %v2270 = vpack.c.b16 %v1702, %v1694
        %v2271 = vpack.c.b16 %v1703, %v1695
        %v2272 = vpack.c.b16 %v1712, %v1704
        %v2273 = vpack.c.b16 %v1713, %v1705
        %v2274 = vpack.c.b16 %v1714, %v1706
        %v2275 = vpack.c.b16 %v1715, %v1707
        %v2276 = vpack.c.b16 %v1716, %v1708
        %v2277 = vpack.c.b16 %v1717, %v1709
        %v2278 = vpack.c.b16 %v1718, %v1710
        %v2279 = vpack.c.b16 %v1719, %v1711
        %v2280 = vpack.c.b16 %v1728, %v1720
        %v2281 = vpack.c.b16 %v1729, %v1721
        %v2282 = vpack.c.b16 %v1730, %v1722
        %v2283 = vpack.c.b16 %v1731, %v1723
        %v2284 = vpack.c.b16 %v1732, %v1724
        %v2285 = vpack.c.b16 %v1733, %v1725
        %v2286 = vpack.c.b16 %v1734, %v1726
        %v2287 = vpack.c.b16 %v1735, %v1727
        %v2288 = vpack.c.b16 %v1744, %v1736
        %v2289 = vpack.c.b16 %v1745, %v1737
        %v2290 = vpack.c.b16 %v1746, %v1738
        %v2291 = vpack.c.b16 %v1747, %v1739
        %v2292 = vpack.c.b16 %v1748, %v1740
        %v2293 = vpack.c.b16 %v1749, %v1741
        %v2294 = vpack.c.b16 %v1750, %v1742
        %v2295 = vpack.c.b16 %v1751, %v1743
        %v2296 = vpack.c.b16 %v1760, %v1752
        %v2297 = vpack.c.b16 %v1761, %v1753
        %v2298 = vpack.c.b16 %v1762, %v1754
        %v2299 = vpack.c.b16 %v1763, %v1755
        %v2300 = vpack.c.b16 %v1764, %v1756
        %v2301 = vpack.c.b16 %v1765, %v1757
        %v2302 = vpack.c.b16 %v1766, %v1758
        %v2303 = vpack.c.b16 %v1767, %v1759
        %v2304 = vpack.c.b16 %v1776, %v1768
        %v2305 = vpack.c.b16 %v1777, %v1769
        %v2306 = vpack.c.b16 %v1778, %v1770
        %v2307 = vpack.c.b16 %v1779, %v1771
        %v2308 = vpack.c.b16 %v1780, %v1772
        %v2309 = vpack.c.b16 %v1781, %v1773
        %v2310 = vpack.c.b16 %v1782, %v1774
        %v2311 = vpack.c.b16 %v1783, %v1775
        %v2312 = vpack.c.b16 %v1792, %v1784
        %v2313 = vpack.c.b16 %v1793, %v1785
        %v2314 = vpack.c.b16 %v1794, %v1786
        %v2315 = vpack.c.b16 %v1795, %v1787
        %v2316 = vpack.c.b16 %v1796, %v1788
        %v2317 = vpack.c.b16 %v1797, %v1789
        %v2318 = vpack.c.b16 %v1798, %v1790
        %v2319 = vpack.c.b16 %v1799, %v1791
        %v2320 = vpack.c.b16 %v1808, %v1800
        %v2321 = vpack.c.b16 %v1809, %v1801
        %v2322 = vpack.c.b16 %v1810, %v1802
        %v2323 = vpack.c.b16 %v1811, %v1803
        %v2324 = vpack.c.b16 %v1812, %v1804
        %v2325 = vpack.c.b16 %v1813, %v1805
        %v2326 = vpack.c.b16 %v1814, %v1806
        %v2327 = vpack.c.b16 %v1815, %v1807
        %v2328 = vpack.c.b16 %v1824, %v1816
        %v2329 = vpack.c.b16 %v1825, %v1817
        %v2330 = vpack.c.b16 %v1826, %v1818
        %v2331 = vpack.c.b16 %v1827, %v1819
        %v2332 = vpack.c.b16 %v1828, %v1820
        %v2333 = vpack.c.b16 %v1829, %v1821
        %v2334 = vpack.c.b16 %v1830, %v1822
        %v2335 = vpack.c.b16 %v1831, %v1823
        %v2336 = vpack.c.b16 %v1840, %v1832
        %v2337 = vpack.c.b16 %v1841, %v1833
        %v2338 = vpack.c.b16 %v1842, %v1834
        %v2339 = vpack.c.b16 %v1843, %v1835
        %v2340 = vpack.c.b16 %v1844, %v1836
        %v2341 = vpack.c.b16 %v1845, %v1837
        %v2342 = vpack.c.b16 %v1846, %v1838
        %v2343 = vpack.c.b16 %v1847, %v1839
        %v2344 = vpack.c.b16 %v1856, %v1848
        %v2345 = vpack.c.b16 %v1857, %v1849
        %v2346 = vpack.c.b16 %v1858, %v1850
        %v2347 = vpack.c.b16 %v1859, %v1851
        %v2348 = vpack.c.b16 %v1860, %v1852
        %v2349 = vpack.c.b16 %v1861, %v1853
        %v2350 = vpack.c.b16 %v1862, %v1854
        %v2351 = vpack.c.b16 %v1863, %v1855
        %v2352 = vpack.c.b16 %v1872, %v1864
        %v2353 = vpack.c.b16 %v1873, %v1865
        %v2354 = vpack.c.b16 %v1874, %v1866
        %v2355 = vpack.c.b16 %v1875, %v1867
        %v2356 = vpack.c.b16 %v1876, %v1868
        %v2357 = vpack.c.b16 %v1877, %v1869
        %v2358 = vpack.c.b16 %v1878, %v1870
        %v2359 = vpack.c.b16 %v1879, %v1871
        %v2360 = vpack.c.b16 %v1888, %v1880
        %v2361 = vpack.c.b16 %v1889, %v1881
        %v2362 = vpack.c.b16 %v1890, %v1882
        %v2363 = vpack.c.b16 %v1891, %v1883
        %v2364 = vpack.c.b16 %v1892, %v1884
        %v2365 = vpack.c.b16 %v1893, %v1885
        %v2366 = vpack.c.b16 %v1894, %v1886
        %v2367 = vpack.c.b16 %v1895, %v1887
        %v2368 = vpack.c.b16 %v1904, %v1896
        %v2369 = vpack.c.b16 %v1905, %v1897
        %v2370 = vpack.c.b16 %v1906, %v1898
        %v2371 = vpack.c.b16 %v1907, %v1899
        %v2372 = vpack.c.b16 %v1908, %v1900
        %v2373 = vpack.c.b16 %v1909, %v1901
        %v2374 = vpack.c.b16 %v1910, %v1902
        %v2375 = vpack.c.b16 %v1911, %v1903
        %v2376 = vpack.c.b16 %v1920, %v1912
        %v2377 = vpack.c.b16 %v1921, %v1913
        %v2378 = vpack.c.b16 %v1922, %v1914
        %v2379 = vpack.c.b16 %v1923, %v1915
        %v2380 = vpack.c.b16 %v1924, %v1916
        %v2381 = vpack.c.b16 %v1925, %v1917
        %v2382 = vpack.c.b16 %v1926, %v1918
        %v2383 = vpack.c.b16 %v1927, %v1919
        %v2384 = vpack.c.b16 %v1936, %v1928
        %v2385 = vpack.c.b16 %v1937, %v1929
        %v2386 = vpack.c.b16 %v1938, %v1930
        %v2387 = vpack.c.b16 %v1939, %v1931
        %v2388 = vpack.c.b16 %v1940, %v1932
        %v2389 = vpack.c.b16 %v1941, %v1933
        %v2390 = vpack.c.b16 %v1942, %v1934
        %v2391 = vpack.c.b16 %v1943, %v1935
        %v2392 = vpack.c.b16 %v1952, %v1944
        %v2393 = vpack.c.b16 %v1953, %v1945
        %v2394 = vpack.c.b16 %v1954, %v1946
        %v2395 = vpack.c.b16 %v1955, %v1947
        %v2396 = vpack.c.b16 %v1956, %v1948
        %v2397 = vpack.c.b16 %v1957, %v1949
        %v2398 = vpack.c.b16 %v1958, %v1950
        %v2399 = vpack.c.b16 %v1959, %v1951
        %v2400 = vpack.c.b16 %v1968, %v1960
        %v2401 = vpack.c.b16 %v1969, %v1961
        %v2402 = vpack.c.b16 %v1970, %v1962
        %v2403 = vpack.c.b16 %v1971, %v1963
        %v2404 = vpack.c.b16 %v1972, %v1964
        %v2405 = vpack.c.b16 %v1973, %v1965
        %v2406 = vpack.c.b16 %v1974, %v1966
        %v2407 = vpack.c.b16 %v1975, %v1967
        %v2408 = vpack.c.b16 %v1984, %v1976
        %v2409 = vpack.c.b16 %v1985, %v1977
        %v2410 = vpack.c.b16 %v1986, %v1978
        %v2411 = vpack.c.b16 %v1987, %v1979
        %v2412 = vpack.c.b16 %v1988, %v1980
        %v2413 = vpack.c.b16 %v1989, %v1981
        %v2414 = vpack.c.b16 %v1990, %v1982
        %v2415 = vpack.c.b16 %v1991, %v1983
        %v2416 = vpack.c.b16 %v2000, %v1992
        %v2417 = vpack.c.b16 %v2001, %v1993
        %v2418 = vpack.c.b16 %v2002, %v1994
        %v2419 = vpack.c.b16 %v2003, %v1995
        %v2420 = vpack.c.b16 %v2004, %v1996
        %v2421 = vpack.c.b16 %v2005, %v1997
        %v2422 = vpack.c.b16 %v2006, %v1998
        %v2423 = vpack.c.b16 %v2007, %v1999
        %v2424 = vpack.c.b16 %v2016, %v2008
        %v2425 = vpack.c.b16 %v2017, %v2009
        %v2426 = vpack.c.b16 %v2018, %v2010
        %v2427 = vpack.c.b16 %v2019, %v2011
        %v2428 = vpack.c.b16 %v2020, %v2012
        %v2429 = vpack.c.b16 %v2021, %v2013
        %v2430 = vpack.c.b16 %v2022, %v2014
        %v2431 = vpack.c.b16 %v2023, %v2015
        %v2432 = vpack.c.b16 %v2032, %v2024
        %v2433 = vpack.c.b16 %v2033, %v2025
        %v2434 = vpack.c.b16 %v2034, %v2026
        %v2435 = vpack.c.b16 %v2035, %v2027
        %v2436 = vpack.c.b16 %v2036, %v2028
        %v2437 = vpack.c.b16 %v2037, %v2029
        %v2438 = vpack.c.b16 %v2038, %v2030
        %v2439 = vpack.c.b16 %v2039, %v2031
        %v2440 = vpack.c.b16 %v2048, %v2040
        %v2441 = vpack.c.b16 %v2049, %v2041
        %v2442 = vpack.c.b16 %v2050, %v2042
        %v2443 = vpack.c.b16 %v2051, %v2043
        %v2444 = vpack.c.b16 %v2052, %v2044
        %v2445 = vpack.c.b16 %v2053, %v2045
        %v2446 = vpack.c.b16 %v2054, %v2046
        %v2447 = vpack.c.b16 %v2055, %v2047
        %v2448 = vpack.c.b16 %v2064, %v2056
        %v2449 = vpack.c.b16 %v2065, %v2057
        %v2450 = vpack.c.b16 %v2066, %v2058
        %v2451 = vpack.c.b16 %v2067, %v2059
        %v2452 = vpack.c.b16 %v2068, %v2060
        %v2453 = vpack.c.b16 %v2069, %v2061
        %v2454 = vpack.c.b16 %v2070, %v2062
        %v2455 = vpack.c.b16 %v2071, %v2063
        %2840 = vmatprep.subr.bf16.mxu0 %v2129
        %2841 = vmatpush1.bf16.msra.mxu0 %v2128
        %2842 = vmatprep.subr.bf16.mxu0 %v2121
        %2843 = vmatpush1.bf16.msra.mxu0 %v2120
        %2844 = vmatprep.subr.bf16.mxu0 %v2113
        %2845 = vmatpush1.bf16.msra.mxu0 %v2112
        %2846 = vmatprep.subr.bf16.mxu0 %v2105
        %2847 = vmatpush1.bf16.msra.mxu0 %v2104
        %2848 = vmatprep.subr.bf16.mxu0 %v2097
        %2849 = vmatpush1.bf16.msra.mxu0 %v2096
        %2850 = vmatprep.subr.bf16.mxu0 %v2089
        %2851 = vmatpush1.bf16.msra.mxu0 %v2088
        %2852 = vmatprep.subr.bf16.mxu0 %v2081
        %2853 = vmatpush1.bf16.msra.mxu0 %v2080
        %2854 = vmatprep.subr.bf16.mxu0 %v2073
        %2855 = vmatpush1.bf16.msra.mxu0 %v2072
        %2856 = vmatprep.subr.bf16.mxu0 %v2193
        %2857 = vmatpush2.bf16.msra.mxu0 %v2192
        %2858 = vmatprep.subr.bf16.mxu0 %v2185
        %2859 = vmatpush2.bf16.msra.mxu0 %v2184
        %2860 = vmatprep.subr.bf16.mxu0 %v2177
        %2861 = vmatpush2.bf16.msra.mxu0 %v2176
        %2862 = vmatprep.subr.bf16.mxu0 %v2169
        %2863 = vmatpush2.bf16.msra.mxu0 %v2168
        %2864 = vmatprep.subr.bf16.mxu0 %v2161
        %2865 = vmatpush2.bf16.msra.mxu0 %v2160
        %2866 = vmatprep.subr.bf16.mxu0 %v2153
        %2867 = vmatpush2.bf16.msra.mxu0 %v2152
        %2868 = vmatprep.subr.bf16.mxu0 %v2145
        %2869 = vmatpush2.bf16.msra.mxu0 %v2144
        %2870 = vmatprep.subr.bf16.mxu0 %v2137
        %2871 = vmatpush2.bf16.msra.mxu0 %v2136
        %2872 = vmatprep.mubr.bf16.mxu0 %v874
        %2873 = vmatmul.mubr.bf16.gmra.mxu0 %v873
        %v2874 = vpop.f32.mrf.mxu0
        %v2875 = vadd.f32 %v883, %v2874
        %v2876 = vpop.f32.mrf.mxu0
        %v2877 = vadd.f32 %v887, %v2876
        %v2878 = vpop.f32.mrf.mxu0
        %v2879 = vadd.f32 %v883, %v2878
        %v2880 = vpop.f32.mrf.mxu0
        %v2881 = vadd.f32 %v887, %v2880
        %2882 = vdwg.mxu0
        %2883 = vmatprep.subr.bf16.mxu0 %v2257
        %2884 = vmatpush1.bf16.msra.mxu0 %v2256
        %2885 = vmatprep.subr.bf16.mxu0 %v2249
        %2886 = vmatpush1.bf16.msra.mxu0 %v2248
        %2887 = vmatprep.subr.bf16.mxu0 %v2241
        %2888 = vmatpush1.bf16.msra.mxu0 %v2240
        %2889 = vmatprep.subr.bf16.mxu0 %v2233
        %2890 = vmatpush1.bf16.msra.mxu0 %v2232
        %2891 = vmatprep.subr.bf16.mxu0 %v2225
        %2892 = vmatpush1.bf16.msra.mxu0 %v2224
        %2893 = vmatprep.subr.bf16.mxu0 %v2217
        %2894 = vmatpush1.bf16.msra.mxu0 %v2216
        %2895 = vmatprep.subr.bf16.mxu0 %v2209
        %2896 = vmatpush1.bf16.msra.mxu0 %v2208
        %2897 = vmatprep.subr.bf16.mxu0 %v2201
        %2898 = vmatpush1.bf16.msra.mxu0 %v2200
        %2899 = vmatprep.subr.bf16.mxu0 %v2321
        %2900 = vmatpush2.bf16.msra.mxu0 %v2320
        %2901 = vmatprep.subr.bf16.mxu0 %v2313
        %2902 = vmatpush2.bf16.msra.mxu0 %v2312
        %2903 = vmatprep.subr.bf16.mxu0 %v2305
        %2904 = vmatpush2.bf16.msra.mxu0 %v2304
        %2905 = vmatprep.subr.bf16.mxu0 %v2297
        %2906 = vmatpush2.bf16.msra.mxu0 %v2296
        %2907 = vmatprep.subr.bf16.mxu0 %v2289
        %2908 = vmatpush2.bf16.msra.mxu0 %v2288
        %2909 = vmatprep.subr.bf16.mxu0 %v2281
        %2910 = vmatpush2.bf16.msra.mxu0 %v2280
        %2911 = vmatprep.subr.bf16.mxu0 %v2273
        %2912 = vmatpush2.bf16.msra.mxu0 %v2272
        %2913 = vmatprep.subr.bf16.mxu0 %v2265
        %2914 = vmatpush2.bf16.msra.mxu0 %v2264
        %2915 = vmatprep.mubr.bf16.mxu0 %v876
        %2916 = vmatmul.mubr.bf16.gmra.mxu0 %v875
        %v2917 = vpop.f32.mrf.mxu0
        %v2918 = vadd.f32 %v2875, %v2917
        %v2919 = vpop.f32.mrf.mxu0
        %v2920 = vadd.f32 %v2877, %v2919
        %v2921 = vpop.f32.mrf.mxu0
        %v2922 = vadd.f32 %v2879, %v2921
        %v2923 = vpop.f32.mrf.mxu0
        %v2924 = vadd.f32 %v2881, %v2923
        %2925 = vdwg.mxu0
        %2926 = vmatprep.subr.bf16.mxu0 %v2385
        %2927 = vmatpush1.bf16.msra.mxu0 %v2384
        %2928 = vmatprep.subr.bf16.mxu0 %v2377
        %2929 = vmatpush1.bf16.msra.mxu0 %v2376
        %2930 = vmatprep.subr.bf16.mxu0 %v2369
        %2931 = vmatpush1.bf16.msra.mxu0 %v2368
        %2932 = vmatprep.subr.bf16.mxu0 %v2361
        %2933 = vmatpush1.bf16.msra.mxu0 %v2360
        %2934 = vmatprep.subr.bf16.mxu0 %v2353
        %2935 = vmatpush1.bf16.msra.mxu0 %v2352
        %2936 = vmatprep.subr.bf16.mxu0 %v2345
        %2937 = vmatpush1.bf16.msra.mxu0 %v2344
        %2938 = vmatprep.subr.bf16.mxu0 %v2337
        %2939 = vmatpush1.bf16.msra.mxu0 %v2336
        %2940 = vmatprep.subr.bf16.mxu0 %v2329
        %2941 = vmatpush1.bf16.msra.mxu0 %v2328
        %2942 = vmatprep.subr.bf16.mxu0 %v2449
        %2943 = vmatpush2.bf16.msra.mxu0 %v2448
        %2944 = vmatprep.subr.bf16.mxu0 %v2441
        %2945 = vmatpush2.bf16.msra.mxu0 %v2440
        %2946 = vmatprep.subr.bf16.mxu0 %v2433
        %2947 = vmatpush2.bf16.msra.mxu0 %v2432
        %2948 = vmatprep.subr.bf16.mxu0 %v2425
        %2949 = vmatpush2.bf16.msra.mxu0 %v2424
        %2950 = vmatprep.subr.bf16.mxu0 %v2417
        %2951 = vmatpush2.bf16.msra.mxu0 %v2416
        %2952 = vmatprep.subr.bf16.mxu0 %v2409
        %2953 = vmatpush2.bf16.msra.mxu0 %v2408
        %2954 = vmatprep.subr.bf16.mxu0 %v2401
        %2955 = vmatpush2.bf16.msra.mxu0 %v2400
        %2956 = vmatprep.subr.bf16.mxu0 %v2393
        %2957 = vmatpush2.bf16.msra.mxu0 %v2392
        %2958 = vmatprep.mubr.bf16.mxu0 %v878
        %2959 = vmatmul.mubr.bf16.gmra.mxu0 %v877
        %v2960 = vpop.f32.mrf.mxu0
        %v2961 = vadd.f32 %v2918, %v2960
        %v2962 = vpop.f32.mrf.mxu0
        %v2963 = vadd.f32 %v2920, %v2962
        %v2964 = vpop.f32.mrf.mxu0
        %v2965 = vadd.f32 %v2922, %v2964
        %v2966 = vpop.f32.mrf.mxu0
        %v2967 = vadd.f32 %v2924, %v2966
        %2968 = vdwg.mxu0
        %2969 = vmatprep.subr.bf16.mxu0 %v2131
        %2970 = vmatpush1.bf16.msra.mxu0 %v2130
        %2971 = vmatprep.subr.bf16.mxu0 %v2123
        %2972 = vmatpush1.bf16.msra.mxu0 %v2122
        %2973 = vmatprep.subr.bf16.mxu0 %v2115
        %2974 = vmatpush1.bf16.msra.mxu0 %v2114
        %2975 = vmatprep.subr.bf16.mxu0 %v2107
        %2976 = vmatpush1.bf16.msra.mxu0 %v2106
        %2977 = vmatprep.subr.bf16.mxu0 %v2099
        %2978 = vmatpush1.bf16.msra.mxu0 %v2098
        %2979 = vmatprep.subr.bf16.mxu0 %v2091
        %2980 = vmatpush1.bf16.msra.mxu0 %v2090
        %2981 = vmatprep.subr.bf16.mxu0 %v2083
        %2982 = vmatpush1.bf16.msra.mxu0 %v2082
        %2983 = vmatprep.subr.bf16.mxu0 %v2075
        %2984 = vmatpush1.bf16.msra.mxu0 %v2074
        %2985 = vmatprep.subr.bf16.mxu0 %v2195
        %2986 = vmatpush2.bf16.msra.mxu0 %v2194
        %2987 = vmatprep.subr.bf16.mxu0 %v2187
        %2988 = vmatpush2.bf16.msra.mxu0 %v2186
        %2989 = vmatprep.subr.bf16.mxu0 %v2179
        %2990 = vmatpush2.bf16.msra.mxu0 %v2178
        %2991 = vmatprep.subr.bf16.mxu0 %v2171
        %2992 = vmatpush2.bf16.msra.mxu0 %v2170
        %2993 = vmatprep.subr.bf16.mxu0 %v2163
        %2994 = vmatpush2.bf16.msra.mxu0 %v2162
        %2995 = vmatprep.subr.bf16.mxu0 %v2155
        %2996 = vmatpush2.bf16.msra.mxu0 %v2154
        %2997 = vmatprep.subr.bf16.mxu0 %v2147
        %2998 = vmatpush2.bf16.msra.mxu0 %v2146
        %2999 = vmatprep.subr.bf16.mxu0 %v2139
        %3000 = vmatpush2.bf16.msra.mxu0 %v2138
        %3001 = vmatprep.mubr.bf16.mxu0 %v874
        %3002 = vmatmul.mubr.bf16.gmra.mxu0 %v873
        %v3003 = vpop.f32.mrf.mxu0
        %v3004 = vadd.f32 %v891, %v3003
        %v3005 = vpop.f32.mrf.mxu0
        %v3006 = vadd.f32 %v895, %v3005
        %v3007 = vpop.f32.mrf.mxu0
        %v3008 = vadd.f32 %v891, %v3007
        %v3009 = vpop.f32.mrf.mxu0
        %v3010 = vadd.f32 %v895, %v3009
        %3011 = vdwg.mxu0
        %3012 = vmatprep.subr.bf16.mxu0 %v2259
        %3013 = vmatpush1.bf16.msra.mxu0 %v2258
        %3014 = vmatprep.subr.bf16.mxu0 %v2251
        %3015 = vmatpush1.bf16.msra.mxu0 %v2250
        %3016 = vmatprep.subr.bf16.mxu0 %v2243
        %3017 = vmatpush1.bf16.msra.mxu0 %v2242
        %3018 = vmatprep.subr.bf16.mxu0 %v2235
        %3019 = vmatpush1.bf16.msra.mxu0 %v2234
        %3020 = vmatprep.subr.bf16.mxu0 %v2227
        %3021 = vmatpush1.bf16.msra.mxu0 %v2226
        %3022 = vmatprep.subr.bf16.mxu0 %v2219
        %3023 = vmatpush1.bf16.msra.mxu0 %v2218
        %3024 = vmatprep.subr.bf16.mxu0 %v2211
        %3025 = vmatpush1.bf16.msra.mxu0 %v2210
        %3026 = vmatprep.subr.bf16.mxu0 %v2203
        %3027 = vmatpush1.bf16.msra.mxu0 %v2202
        %3028 = vmatprep.subr.bf16.mxu0 %v2323
        %3029 = vmatpush2.bf16.msra.mxu0 %v2322
        %3030 = vmatprep.subr.bf16.mxu0 %v2315
        %3031 = vmatpush2.bf16.msra.mxu0 %v2314
        %3032 = vmatprep.subr.bf16.mxu0 %v2307
        %3033 = vmatpush2.bf16.msra.mxu0 %v2306
        %3034 = vmatprep.subr.bf16.mxu0 %v2299
        %3035 = vmatpush2.bf16.msra.mxu0 %v2298
        %3036 = vmatprep.subr.bf16.mxu0 %v2291
        %3037 = vmatpush2.bf16.msra.mxu0 %v2290
        %3038 = vmatprep.subr.bf16.mxu0 %v2283
        %3039 = vmatpush2.bf16.msra.mxu0 %v2282
        %3040 = vmatprep.subr.bf16.mxu0 %v2275
        %3041 = vmatpush2.bf16.msra.mxu0 %v2274
        %3042 = vmatprep.subr.bf16.mxu0 %v2267
        %3043 = vmatpush2.bf16.msra.mxu0 %v2266
        %3044 = vmatprep.mubr.bf16.mxu0 %v876
        %3045 = vmatmul.mubr.bf16.gmra.mxu0 %v875
        %v3046 = vpop.f32.mrf.mxu0
        %v3047 = vadd.f32 %v3004, %v3046
        %v3048 = vpop.f32.mrf.mxu0
        %v3049 = vadd.f32 %v3006, %v3048
        %v3050 = vpop.f32.mrf.mxu0
        %v3051 = vadd.f32 %v3008, %v3050
        %v3052 = vpop.f32.mrf.mxu0
        %v3053 = vadd.f32 %v3010, %v3052
        %3054 = vdwg.mxu0
        %3055 = vmatprep.subr.bf16.mxu0 %v2387
        %3056 = vmatpush1.bf16.msra.mxu0 %v2386
        %3057 = vmatprep.subr.bf16.mxu0 %v2379
        %3058 = vmatpush1.bf16.msra.mxu0 %v2378
        %3059 = vmatprep.subr.bf16.mxu0 %v2371
        %3060 = vmatpush1.bf16.msra.mxu0 %v2370
        %3061 = vmatprep.subr.bf16.mxu0 %v2363
        %3062 = vmatpush1.bf16.msra.mxu0 %v2362
        %3063 = vmatprep.subr.bf16.mxu0 %v2355
        %3064 = vmatpush1.bf16.msra.mxu0 %v2354
        %3065 = vmatprep.subr.bf16.mxu0 %v2347
        %3066 = vmatpush1.bf16.msra.mxu0 %v2346
        %3067 = vmatprep.subr.bf16.mxu0 %v2339
        %3068 = vmatpush1.bf16.msra.mxu0 %v2338
        %3069 = vmatprep.subr.bf16.mxu0 %v2331
        %3070 = vmatpush1.bf16.msra.mxu0 %v2330
        %3071 = vmatprep.subr.bf16.mxu0 %v2451
        %3072 = vmatpush2.bf16.msra.mxu0 %v2450
        %3073 = vmatprep.subr.bf16.mxu0 %v2443
        %3074 = vmatpush2.bf16.msra.mxu0 %v2442
        %3075 = vmatprep.subr.bf16.mxu0 %v2435
        %3076 = vmatpush2.bf16.msra.mxu0 %v2434
        %3077 = vmatprep.subr.bf16.mxu0 %v2427
        %3078 = vmatpush2.bf16.msra.mxu0 %v2426
        %3079 = vmatprep.subr.bf16.mxu0 %v2419
        %3080 = vmatpush2.bf16.msra.mxu0 %v2418
        %3081 = vmatprep.subr.bf16.mxu0 %v2411
        %3082 = vmatpush2.bf16.msra.mxu0 %v2410
        %3083 = vmatprep.subr.bf16.mxu0 %v2403
        %3084 = vmatpush2.bf16.msra.mxu0 %v2402
        %3085 = vmatprep.subr.bf16.mxu0 %v2395
        %3086 = vmatpush2.bf16.msra.mxu0 %v2394
        %3087 = vmatprep.mubr.bf16.mxu0 %v878
        %3088 = vmatmul.mubr.bf16.gmra.mxu0 %v877
        %v3089 = vpop.f32.mrf.mxu0
        %v3090 = vadd.f32 %v3047, %v3089
        %v3091 = vpop.f32.mrf.mxu0
        %v3092 = vadd.f32 %v3049, %v3091
        %v3093 = vpop.f32.mrf.mxu0
        %v3094 = vadd.f32 %v3051, %v3093
        %v3095 = vpop.f32.mrf.mxu0
        %v3096 = vadd.f32 %v3053, %v3095
        %3097 = vdwg.mxu0
        %3098 = vmatprep.subr.bf16.mxu0 %v2133
        %3099 = vmatpush1.bf16.msra.mxu0 %v2132
        %3100 = vmatprep.subr.bf16.mxu0 %v2125
        %3101 = vmatpush1.bf16.msra.mxu0 %v2124
        %3102 = vmatprep.subr.bf16.mxu0 %v2117
        %3103 = vmatpush1.bf16.msra.mxu0 %v2116
        %3104 = vmatprep.subr.bf16.mxu0 %v2109
        %3105 = vmatpush1.bf16.msra.mxu0 %v2108
        %3106 = vmatprep.subr.bf16.mxu0 %v2101
        %3107 = vmatpush1.bf16.msra.mxu0 %v2100
        %3108 = vmatprep.subr.bf16.mxu0 %v2093
        %3109 = vmatpush1.bf16.msra.mxu0 %v2092
        %3110 = vmatprep.subr.bf16.mxu0 %v2085
        %3111 = vmatpush1.bf16.msra.mxu0 %v2084
        %3112 = vmatprep.subr.bf16.mxu0 %v2077
        %3113 = vmatpush1.bf16.msra.mxu0 %v2076
        %3114 = vmatprep.subr.bf16.mxu0 %v2197
        %3115 = vmatpush2.bf16.msra.mxu0 %v2196
        %3116 = vmatprep.subr.bf16.mxu0 %v2189
        %3117 = vmatpush2.bf16.msra.mxu0 %v2188
        %3118 = vmatprep.subr.bf16.mxu0 %v2181
        %3119 = vmatpush2.bf16.msra.mxu0 %v2180
        %3120 = vmatprep.subr.bf16.mxu0 %v2173
        %3121 = vmatpush2.bf16.msra.mxu0 %v2172
        %3122 = vmatprep.subr.bf16.mxu0 %v2165
        %3123 = vmatpush2.bf16.msra.mxu0 %v2164
        %3124 = vmatprep.subr.bf16.mxu0 %v2157
        %3125 = vmatpush2.bf16.msra.mxu0 %v2156
        %3126 = vmatprep.subr.bf16.mxu0 %v2149
        %3127 = vmatpush2.bf16.msra.mxu0 %v2148
        %3128 = vmatprep.subr.bf16.mxu0 %v2141
        %3129 = vmatpush2.bf16.msra.mxu0 %v2140
        %3130 = vmatprep.mubr.bf16.mxu0 %v874
        %3131 = vmatmul.mubr.bf16.gmra.mxu0 %v873
        %v3132 = vpop.f32.mrf.mxu0
        %v3133 = vadd.f32 %v899, %v3132
        %v3134 = vpop.f32.mrf.mxu0
        %v3135 = vadd.f32 %v903, %v3134
        %v3136 = vpop.f32.mrf.mxu0
        %v3137 = vadd.f32 %v899, %v3136
        %v3138 = vpop.f32.mrf.mxu0
        %v3139 = vadd.f32 %v903, %v3138
        %3140 = vdwg.mxu0
        %3141 = vmatprep.subr.bf16.mxu0 %v2261
        %3142 = vmatpush1.bf16.msra.mxu0 %v2260
        %3143 = vmatprep.subr.bf16.mxu0 %v2253
        %3144 = vmatpush1.bf16.msra.mxu0 %v2252
        %3145 = vmatprep.subr.bf16.mxu0 %v2245
        %3146 = vmatpush1.bf16.msra.mxu0 %v2244
        %3147 = vmatprep.subr.bf16.mxu0 %v2237
        %3148 = vmatpush1.bf16.msra.mxu0 %v2236
        %3149 = vmatprep.subr.bf16.mxu0 %v2229
        %3150 = vmatpush1.bf16.msra.mxu0 %v2228
        %3151 = vmatprep.subr.bf16.mxu0 %v2221
        %3152 = vmatpush1.bf16.msra.mxu0 %v2220
        %3153 = vmatprep.subr.bf16.mxu0 %v2213
        %3154 = vmatpush1.bf16.msra.mxu0 %v2212
        %3155 = vmatprep.subr.bf16.mxu0 %v2205
        %3156 = vmatpush1.bf16.msra.mxu0 %v2204
        %3157 = vmatprep.subr.bf16.mxu0 %v2325
        %3158 = vmatpush2.bf16.msra.mxu0 %v2324
        %3159 = vmatprep.subr.bf16.mxu0 %v2317
        %3160 = vmatpush2.bf16.msra.mxu0 %v2316
        %3161 = vmatprep.subr.bf16.mxu0 %v2309
        %3162 = vmatpush2.bf16.msra.mxu0 %v2308
        %3163 = vmatprep.subr.bf16.mxu0 %v2301
        %3164 = vmatpush2.bf16.msra.mxu0 %v2300
        %3165 = vmatprep.subr.bf16.mxu0 %v2293
        %3166 = vmatpush2.bf16.msra.mxu0 %v2292
        %3167 = vmatprep.subr.bf16.mxu0 %v2285
        %3168 = vmatpush2.bf16.msra.mxu0 %v2284
        %3169 = vmatprep.subr.bf16.mxu0 %v2277
        %3170 = vmatpush2.bf16.msra.mxu0 %v2276
        %3171 = vmatprep.subr.bf16.mxu0 %v2269
        %3172 = vmatpush2.bf16.msra.mxu0 %v2268
        %3173 = vmatprep.mubr.bf16.mxu0 %v876
        %3174 = vmatmul.mubr.bf16.gmra.mxu0 %v875
        %v3175 = vpop.f32.mrf.mxu0
        %v3176 = vadd.f32 %v3133, %v3175
        %v3177 = vpop.f32.mrf.mxu0
        %v3178 = vadd.f32 %v3135, %v3177
        %v3179 = vpop.f32.mrf.mxu0
        %v3180 = vadd.f32 %v3137, %v3179
        %v3181 = vpop.f32.mrf.mxu0
        %v3182 = vadd.f32 %v3139, %v3181
        %3183 = vdwg.mxu0
        %3184 = vmatprep.subr.bf16.mxu0 %v2389
        %3185 = vmatpush1.bf16.msra.mxu0 %v2388
        %3186 = vmatprep.subr.bf16.mxu0 %v2381
        %3187 = vmatpush1.bf16.msra.mxu0 %v2380
        %3188 = vmatprep.subr.bf16.mxu0 %v2373
        %3189 = vmatpush1.bf16.msra.mxu0 %v2372
        %3190 = vmatprep.subr.bf16.mxu0 %v2365
        %3191 = vmatpush1.bf16.msra.mxu0 %v2364
        %3192 = vmatprep.subr.bf16.mxu0 %v2357
        %3193 = vmatpush1.bf16.msra.mxu0 %v2356
        %3194 = vmatprep.subr.bf16.mxu0 %v2349
        %3195 = vmatpush1.bf16.msra.mxu0 %v2348
        %3196 = vmatprep.subr.bf16.mxu0 %v2341
        %3197 = vmatpush1.bf16.msra.mxu0 %v2340
        %3198 = vmatprep.subr.bf16.mxu0 %v2333
        %3199 = vmatpush1.bf16.msra.mxu0 %v2332
        %3200 = vmatprep.subr.bf16.mxu0 %v2453
        %3201 = vmatpush2.bf16.msra.mxu0 %v2452
        %3202 = vmatprep.subr.bf16.mxu0 %v2445
        %3203 = vmatpush2.bf16.msra.mxu0 %v2444
        %3204 = vmatprep.subr.bf16.mxu0 %v2437
        %3205 = vmatpush2.bf16.msra.mxu0 %v2436
        %3206 = vmatprep.subr.bf16.mxu0 %v2429
        %3207 = vmatpush2.bf16.msra.mxu0 %v2428
        %3208 = vmatprep.subr.bf16.mxu0 %v2421
        %3209 = vmatpush2.bf16.msra.mxu0 %v2420
        %3210 = vmatprep.subr.bf16.mxu0 %v2413
        %3211 = vmatpush2.bf16.msra.mxu0 %v2412
        %3212 = vmatprep.subr.bf16.mxu0 %v2405
        %3213 = vmatpush2.bf16.msra.mxu0 %v2404
        %3214 = vmatprep.subr.bf16.mxu0 %v2397
        %3215 = vmatpush2.bf16.msra.mxu0 %v2396
        %3216 = vmatprep.mubr.bf16.mxu0 %v878
        %3217 = vmatmul.mubr.bf16.gmra.mxu0 %v877
        %v3218 = vpop.f32.mrf.mxu0
        %v3219 = vadd.f32 %v3176, %v3218
        %v3220 = vpop.f32.mrf.mxu0
        %v3221 = vadd.f32 %v3178, %v3220
        %v3222 = vpop.f32.mrf.mxu0
        %v3223 = vadd.f32 %v3180, %v3222
        %v3224 = vpop.f32.mrf.mxu0
        %v3225 = vadd.f32 %v3182, %v3224
        %3226 = vdwg.mxu0
        %3227 = vmatprep.subr.bf16.mxu0 %v2135
        %3228 = vmatpush1.bf16.msra.mxu0 %v2134
        %3229 = vmatprep.subr.bf16.mxu0 %v2127
        %3230 = vmatpush1.bf16.msra.mxu0 %v2126
        %3231 = vmatprep.subr.bf16.mxu0 %v2119
        %3232 = vmatpush1.bf16.msra.mxu0 %v2118
        %3233 = vmatprep.subr.bf16.mxu0 %v2111
        %3234 = vmatpush1.bf16.msra.mxu0 %v2110
        %3235 = vmatprep.subr.bf16.mxu0 %v2103
        %3236 = vmatpush1.bf16.msra.mxu0 %v2102
        %3237 = vmatprep.subr.bf16.mxu0 %v2095
        %3238 = vmatpush1.bf16.msra.mxu0 %v2094
        %3239 = vmatprep.subr.bf16.mxu0 %v2087
        %3240 = vmatpush1.bf16.msra.mxu0 %v2086
        %3241 = vmatprep.subr.bf16.mxu0 %v2079
        %3242 = vmatpush1.bf16.msra.mxu0 %v2078
        %3243 = vmatprep.subr.bf16.mxu0 %v2199
        %3244 = vmatpush2.bf16.msra.mxu0 %v2198
        %3245 = vmatprep.subr.bf16.mxu0 %v2191
        %3246 = vmatpush2.bf16.msra.mxu0 %v2190
        %3247 = vmatprep.subr.bf16.mxu0 %v2183
        %3248 = vmatpush2.bf16.msra.mxu0 %v2182
        %3249 = vmatprep.subr.bf16.mxu0 %v2175
        %3250 = vmatpush2.bf16.msra.mxu0 %v2174
        %3251 = vmatprep.subr.bf16.mxu0 %v2167
        %3252 = vmatpush2.bf16.msra.mxu0 %v2166
        %3253 = vmatprep.subr.bf16.mxu0 %v2159
        %3254 = vmatpush2.bf16.msra.mxu0 %v2158
        %3255 = vmatprep.subr.bf16.mxu0 %v2151
        %3256 = vmatpush2.bf16.msra.mxu0 %v2150
        %3257 = vmatprep.subr.bf16.mxu0 %v2143
        %3258 = vmatpush2.bf16.msra.mxu0 %v2142
        %3259 = vmatprep.mubr.bf16.mxu0 %v874
        %3260 = vmatmul.mubr.bf16.gmra.mxu0 %v873
        %v3261 = vpop.f32.mrf.mxu0
        %v3262 = vadd.f32 %v907, %v3261
        %v3263 = vpop.f32.mrf.mxu0
        %v3264 = vadd.f32 %v911, %v3263
        %v3265 = vpop.f32.mrf.mxu0
        %v3266 = vadd.f32 %v907, %v3265
        %v3267 = vpop.f32.mrf.mxu0
        %v3268 = vadd.f32 %v911, %v3267
        %3269 = vdwg.mxu0
        %3270 = vmatprep.subr.bf16.mxu0 %v2263
        %3271 = vmatpush1.bf16.msra.mxu0 %v2262
        %3272 = vmatprep.subr.bf16.mxu0 %v2255
        %3273 = vmatpush1.bf16.msra.mxu0 %v2254
        %3274 = vmatprep.subr.bf16.mxu0 %v2247
        %3275 = vmatpush1.bf16.msra.mxu0 %v2246
        %3276 = vmatprep.subr.bf16.mxu0 %v2239
        %3277 = vmatpush1.bf16.msra.mxu0 %v2238
        %3278 = vmatprep.subr.bf16.mxu0 %v2231
        %3279 = vmatpush1.bf16.msra.mxu0 %v2230
        %3280 = vmatprep.subr.bf16.mxu0 %v2223
        %3281 = vmatpush1.bf16.msra.mxu0 %v2222
        %3282 = vmatprep.subr.bf16.mxu0 %v2215
        %3283 = vmatpush1.bf16.msra.mxu0 %v2214
        %3284 = vmatprep.subr.bf16.mxu0 %v2207
        %3285 = vmatpush1.bf16.msra.mxu0 %v2206
        %3286 = vmatprep.subr.bf16.mxu0 %v2327
        %3287 = vmatpush2.bf16.msra.mxu0 %v2326
        %3288 = vmatprep.subr.bf16.mxu0 %v2319
        %3289 = vmatpush2.bf16.msra.mxu0 %v2318
        %3290 = vmatprep.subr.bf16.mxu0 %v2311
        %3291 = vmatpush2.bf16.msra.mxu0 %v2310
        %3292 = vmatprep.subr.bf16.mxu0 %v2303
        %3293 = vmatpush2.bf16.msra.mxu0 %v2302
        %3294 = vmatprep.subr.bf16.mxu0 %v2295
        %3295 = vmatpush2.bf16.msra.mxu0 %v2294
        %3296 = vmatprep.subr.bf16.mxu0 %v2287
        %3297 = vmatpush2.bf16.msra.mxu0 %v2286
        %3298 = vmatprep.subr.bf16.mxu0 %v2279
        %3299 = vmatpush2.bf16.msra.mxu0 %v2278
        %3300 = vmatprep.subr.bf16.mxu0 %v2271
        %3301 = vmatpush2.bf16.msra.mxu0 %v2270
        %3302 = vmatprep.mubr.bf16.mxu0 %v876
        %3303 = vmatmul.mubr.bf16.gmra.mxu0 %v875
        %v3304 = vpop.f32.mrf.mxu0
        %v3305 = vadd.f32 %v3262, %v3304
        %v3306 = vpop.f32.mrf.mxu0
        %v3307 = vadd.f32 %v3264, %v3306
        %v3308 = vpop.f32.mrf.mxu0
        %v3309 = vadd.f32 %v3266, %v3308
        %v3310 = vpop.f32.mrf.mxu0
        %v3311 = vadd.f32 %v3268, %v3310
        %3312 = vdwg.mxu0
        %3313 = vmatprep.subr.bf16.mxu0 %v2391
        %3314 = vmatpush1.bf16.msra.mxu0 %v2390
        %3315 = vmatprep.subr.bf16.mxu0 %v2383
        %3316 = vmatpush1.bf16.msra.mxu0 %v2382
        %3317 = vmatprep.subr.bf16.mxu0 %v2375
        %3318 = vmatpush1.bf16.msra.mxu0 %v2374
        %3319 = vmatprep.subr.bf16.mxu0 %v2367
        %3320 = vmatpush1.bf16.msra.mxu0 %v2366
        %3321 = vmatprep.subr.bf16.mxu0 %v2359
        %3322 = vmatpush1.bf16.msra.mxu0 %v2358
        %3323 = vmatprep.subr.bf16.mxu0 %v2351
        %3324 = vmatpush1.bf16.msra.mxu0 %v2350
        %3325 = vmatprep.subr.bf16.mxu0 %v2343
        %3326 = vmatpush1.bf16.msra.mxu0 %v2342
        %3327 = vmatprep.subr.bf16.mxu0 %v2335
        %3328 = vmatpush1.bf16.msra.mxu0 %v2334
        %3329 = vmatprep.subr.bf16.mxu0 %v2455
        %3330 = vmatpush2.bf16.msra.mxu0 %v2454
        %3331 = vmatprep.subr.bf16.mxu0 %v2447
        %3332 = vmatpush2.bf16.msra.mxu0 %v2446
        %3333 = vmatprep.subr.bf16.mxu0 %v2439
        %3334 = vmatpush2.bf16.msra.mxu0 %v2438
        %3335 = vmatprep.subr.bf16.mxu0 %v2431
        %3336 = vmatpush2.bf16.msra.mxu0 %v2430
        %3337 = vmatprep.subr.bf16.mxu0 %v2423
        %3338 = vmatpush2.bf16.msra.mxu0 %v2422
        %3339 = vmatprep.subr.bf16.mxu0 %v2415
        %3340 = vmatpush2.bf16.msra.mxu0 %v2414
        %3341 = vmatprep.subr.bf16.mxu0 %v2407
        %3342 = vmatpush2.bf16.msra.mxu0 %v2406
        %3343 = vmatprep.subr.bf16.mxu0 %v2399
        %3344 = vmatpush2.bf16.msra.mxu0 %v2398
        %3345 = vmatprep.mubr.bf16.mxu0 %v878
        %3346 = vmatmul.mubr.bf16.gmra.mxu0 %v877
        %v3347 = vpop.f32.mrf.mxu0
        %v3348 = vadd.f32 %v3305, %v3347
        %v3349 = vpop.f32.mrf.mxu0
        %v3350 = vadd.f32 %v3307, %v3349
        %v3351 = vpop.f32.mrf.mxu0
        %v3352 = vadd.f32 %v3309, %v3351
        %v3353 = vpop.f32.mrf.mxu0
        %v3354 = vadd.f32 %v3311, %v3353
        %3355 = vdwg.mxu0
        %v3356 = vtanh.pop %v2961
        %v3357 = vtanh.pop %v2963
        %v3358 = vtanh.pop %v3090
        %v3359 = vtanh.pop %v3092
        %v3360 = vtanh.pop %v3219
        %v3361 = vtanh.pop %v3221
        %v3362 = vtanh.pop %v3348
        %v3363 = vtanh.pop %v3350
        %v3364 = vtanh.pop %v2965
        %v3365 = vtanh.pop %v2967
        %v3366 = vtanh.pop %v3094
        %v3367 = vtanh.pop %v3096
        %v3368 = vtanh.pop %v3223
        %v3369 = vtanh.pop %v3225
        %v3370 = vtanh.pop %v3352
        %v3371 = vtanh.pop %v3354
        %v3372 = vld [vmem:[%s386] sm:$0xff]
        %v3373 = vld [vmem:[%s386 + $0x8] sm:$0xff]
        %v3374 = vld [vmem:[%s386 + $0x10] sm:$0xff]
        %v3375 = vld [vmem:[%s386 + $0x18] sm:$0xff]
        %v3376 = vld [vmem:[%s386 + $0x20] sm:$0xff]
        %v3377 = vld [vmem:[%s386 + $0x28] sm:$0xff]
        %v3378 = vld [vmem:[%s386 + $0x30] sm:$0xff]
        %v3379 = vld [vmem:[%s386 + $0x38] sm:$0xff]
        %v3380 = vld [vmem:[%s386 + $0x40] sm:$0xff]
        %v3381 = vld [vmem:[%s386 + $0x48] sm:$0xff]
        %v3382 = vld [vmem:[%s386 + $0x50] sm:$0xff]
        %v3383 = vld [vmem:[%s386 + $0x58] sm:$0xff]
        %v3384 = vpack.c.bf16 %v3378, %v3372
        %v3385 = vpack.c.bf16 %v3379, %v3373
        %v3386 = vpack.c.bf16 %v3380, %v3374
        %v3387 = vpack.c.bf16 %v3381, %v3375
        %v3388 = vpack.c.bf16 %v3382, %v3376
        %v3389 = vpack.c.bf16 %v3383, %v3377
        %3390 = vmatprep.subr.bf16.mxu0 %v2129
        %3391 = vmatpush1.bf16.msra.mxu0 %v2128
        %3392 = vmatprep.subr.bf16.mxu0 %v2121
        %3393 = vmatpush1.bf16.msra.mxu0 %v2120
        %3394 = vmatprep.subr.bf16.mxu0 %v2113
        %3395 = vmatpush1.bf16.msra.mxu0 %v2112
        %3396 = vmatprep.subr.bf16.mxu0 %v2105
        %3397 = vmatpush1.bf16.msra.mxu0 %v2104
        %3398 = vmatprep.subr.bf16.mxu0 %v2097
        %3399 = vmatpush1.bf16.msra.mxu0 %v2096
        %3400 = vmatprep.subr.bf16.mxu0 %v2089
        %3401 = vmatpush1.bf16.msra.mxu0 %v2088
        %3402 = vmatprep.subr.bf16.mxu0 %v2081
        %3403 = vmatpush1.bf16.msra.mxu0 %v2080
        %3404 = vmatprep.subr.bf16.mxu0 %v2073
        %3405 = vmatpush1.bf16.msra.mxu0 %v2072
        %3406 = vmatprep.subr.bf16.mxu0 %v2193
        %3407 = vmatpush2.bf16.msra.mxu0 %v2192
        %3408 = vmatprep.subr.bf16.mxu0 %v2185
        %3409 = vmatpush2.bf16.msra.mxu0 %v2184
        %3410 = vmatprep.subr.bf16.mxu0 %v2177
        %3411 = vmatpush2.bf16.msra.mxu0 %v2176
        %3412 = vmatprep.subr.bf16.mxu0 %v2169
        %3413 = vmatpush2.bf16.msra.mxu0 %v2168
        %3414 = vmatprep.subr.bf16.mxu0 %v2161
        %3415 = vmatpush2.bf16.msra.mxu0 %v2160
        %3416 = vmatprep.subr.bf16.mxu0 %v2153
        %3417 = vmatpush2.bf16.msra.mxu0 %v2152
        %3418 = vmatprep.subr.bf16.mxu0 %v2145
        %3419 = vmatpush2.bf16.msra.mxu0 %v2144
        %3420 = vmatprep.subr.bf16.mxu0 %v2137
        %3421 = vmatpush2.bf16.msra.mxu0 %v2136
        %3422 = vmatprep.mubr.bf16.mxu0 %v3385
        %3423 = vmatmul.mubr.bf16.gmra.mxu0 %v3384
        %v3424 = vpop.f32.mrf.mxu0
        %v3425 = vadd.f32 %v883, %v3424
        %v3426 = vpop.f32.mrf.mxu0
        %v3427 = vadd.f32 %v887, %v3426
        %v3428 = vpop.f32.mrf.mxu0
        %v3429 = vadd.f32 %v883, %v3428
        %v3430 = vpop.f32.mrf.mxu0
        %v3431 = vadd.f32 %v887, %v3430
        %3432 = vdwg.mxu0
        %3433 = vmatprep.subr.bf16.mxu0 %v2257
        %3434 = vmatpush1.bf16.msra.mxu0 %v2256
        %3435 = vmatprep.subr.bf16.mxu0 %v2249
        %3436 = vmatpush1.bf16.msra.mxu0 %v2248
        %3437 = vmatprep.subr.bf16.mxu0 %v2241
        %3438 = vmatpush1.bf16.msra.mxu0 %v2240
        %3439 = vmatprep.subr.bf16.mxu0 %v2233
        %3440 = vmatpush1.bf16.msra.mxu0 %v2232
        %3441 = vmatprep.subr.bf16.mxu0 %v2225
        %3442 = vmatpush1.bf16.msra.mxu0 %v2224
        %3443 = vmatprep.subr.bf16.mxu0 %v2217
        %3444 = vmatpush1.bf16.msra.mxu0 %v2216
        %3445 = vmatprep.subr.bf16.mxu0 %v2209
        %3446 = vmatpush1.bf16.msra.mxu0 %v2208
        %3447 = vmatprep.subr.bf16.mxu0 %v2201
        %3448 = vmatpush1.bf16.msra.mxu0 %v2200
        %3449 = vmatprep.subr.bf16.mxu0 %v2321
        %3450 = vmatpush2.bf16.msra.mxu0 %v2320
        %3451 = vmatprep.subr.bf16.mxu0 %v2313
        %3452 = vmatpush2.bf16.msra.mxu0 %v2312
        %3453 = vmatprep.subr.bf16.mxu0 %v2305
        %3454 = vmatpush2.bf16.msra.mxu0 %v2304
        %3455 = vmatprep.subr.bf16.mxu0 %v2297
        %3456 = vmatpush2.bf16.msra.mxu0 %v2296
        %3457 = vmatprep.subr.bf16.mxu0 %v2289
        %3458 = vmatpush2.bf16.msra.mxu0 %v2288
        %3459 = vmatprep.subr.bf16.mxu0 %v2281
        %3460 = vmatpush2.bf16.msra.mxu0 %v2280
        %3461 = vmatprep.subr.bf16.mxu0 %v2273
        %3462 = vmatpush2.bf16.msra.mxu0 %v2272
        %3463 = vmatprep.subr.bf16.mxu0 %v2265
        %3464 = vmatpush2.bf16.msra.mxu0 %v2264
        %3465 = vmatprep.mubr.bf16.mxu0 %v3387
        %3466 = vmatmul.mubr.bf16.gmra.mxu0 %v3386
        %v3467 = vpop.f32.mrf.mxu0
        %v3468 = vadd.f32 %v3425, %v3467
        %v3469 = vpop.f32.mrf.mxu0
        %v3470 = vadd.f32 %v3427, %v3469
        %v3471 = vpop.f32.mrf.mxu0
        %v3472 = vadd.f32 %v3429, %v3471
        %v3473 = vpop.f32.mrf.mxu0
        %v3474 = vadd.f32 %v3431, %v3473
        %3475 = vdwg.mxu0
        %3476 = vmatprep.subr.bf16.mxu0 %v2385
        %3477 = vmatpush1.bf16.msra.mxu0 %v2384
        %3478 = vmatprep.subr.bf16.mxu0 %v2377
        %3479 = vmatpush1.bf16.msra.mxu0 %v2376
        %3480 = vmatprep.subr.bf16.mxu0 %v2369
        %3481 = vmatpush1.bf16.msra.mxu0 %v2368
        %3482 = vmatprep.subr.bf16.mxu0 %v2361
        %3483 = vmatpush1.bf16.msra.mxu0 %v2360
        %3484 = vmatprep.subr.bf16.mxu0 %v2353
        %3485 = vmatpush1.bf16.msra.mxu0 %v2352
        %3486 = vmatprep.subr.bf16.mxu0 %v2345
        %3487 = vmatpush1.bf16.msra.mxu0 %v2344
        %3488 = vmatprep.subr.bf16.mxu0 %v2337
        %3489 = vmatpush1.bf16.msra.mxu0 %v2336
        %3490 = vmatprep.subr.bf16.mxu0 %v2329
        %3491 = vmatpush1.bf16.msra.mxu0 %v2328
        %3492 = vmatprep.subr.bf16.mxu0 %v2449
        %3493 = vmatpush2.bf16.msra.mxu0 %v2448
        %3494 = vmatprep.subr.bf16.mxu0 %v2441
        %3495 = vmatpush2.bf16.msra.mxu0 %v2440
        %3496 = vmatprep.subr.bf16.mxu0 %v2433
        %3497 = vmatpush2.bf16.msra.mxu0 %v2432
        %3498 = vmatprep.subr.bf16.mxu0 %v2425
        %3499 = vmatpush2.bf16.msra.mxu0 %v2424
        %3500 = vmatprep.subr.bf16.mxu0 %v2417
        %3501 = vmatpush2.bf16.msra.mxu0 %v2416
        %3502 = vmatprep.subr.bf16.mxu0 %v2409
        %3503 = vmatpush2.bf16.msra.mxu0 %v2408
        %3504 = vmatprep.subr.bf16.mxu0 %v2401
        %3505 = vmatpush2.bf16.msra.mxu0 %v2400
        %3506 = vmatprep.subr.bf16.mxu0 %v2393
        %3507 = vmatpush2.bf16.msra.mxu0 %v2392
        %3508 = vmatprep.mubr.bf16.mxu0 %v3389
        %3509 = vmatmul.mubr.bf16.gmra.mxu0 %v3388
        %v3510 = vpop.f32.mrf.mxu0
        %v3511 = vadd.f32 %v3468, %v3510
        %v3512 = vpop.f32.mrf.mxu0
        %v3513 = vadd.f32 %v3470, %v3512
        %v3514 = vpop.f32.mrf.mxu0
        %v3515 = vadd.f32 %v3472, %v3514
        %v3516 = vpop.f32.mrf.mxu0
        %v3517 = vadd.f32 %v3474, %v3516
        %3518 = vdwg.mxu0
        %3519 = vmatprep.subr.bf16.mxu0 %v2131
        %3520 = vmatpush1.bf16.msra.mxu0 %v2130
        %3521 = vmatprep.subr.bf16.mxu0 %v2123
        %3522 = vmatpush1.bf16.msra.mxu0 %v2122
        %3523 = vmatprep.subr.bf16.mxu0 %v2115
        %3524 = vmatpush1.bf16.msra.mxu0 %v2114
        %3525 = vmatprep.subr.bf16.mxu0 %v2107
        %3526 = vmatpush1.bf16.msra.mxu0 %v2106
        %3527 = vmatprep.subr.bf16.mxu0 %v2099
        %3528 = vmatpush1.bf16.msra.mxu0 %v2098
        %3529 = vmatprep.subr.bf16.mxu0 %v2091
        %3530 = vmatpush1.bf16.msra.mxu0 %v2090
        %3531 = vmatprep.subr.bf16.mxu0 %v2083
        %3532 = vmatpush1.bf16.msra.mxu0 %v2082
        %3533 = vmatprep.subr.bf16.mxu0 %v2075
        %3534 = vmatpush1.bf16.msra.mxu0 %v2074
        %3535 = vmatprep.subr.bf16.mxu0 %v2195
        %3536 = vmatpush2.bf16.msra.mxu0 %v2194
        %3537 = vmatprep.subr.bf16.mxu0 %v2187
        %3538 = vmatpush2.bf16.msra.mxu0 %v2186
        %3539 = vmatprep.subr.bf16.mxu0 %v2179
        %3540 = vmatpush2.bf16.msra.mxu0 %v2178
        %3541 = vmatprep.subr.bf16.mxu0 %v2171
        %3542 = vmatpush2.bf16.msra.mxu0 %v2170
        %3543 = vmatprep.subr.bf16.mxu0 %v2163
        %3544 = vmatpush2.bf16.msra.mxu0 %v2162
        %3545 = vmatprep.subr.bf16.mxu0 %v2155
        %3546 = vmatpush2.bf16.msra.mxu0 %v2154
        %3547 = vmatprep.subr.bf16.mxu0 %v2147
        %3548 = vmatpush2.bf16.msra.mxu0 %v2146
        %3549 = vmatprep.subr.bf16.mxu0 %v2139
        %3550 = vmatpush2.bf16.msra.mxu0 %v2138
        %3551 = vmatprep.mubr.bf16.mxu0 %v3385
        %3552 = vmatmul.mubr.bf16.gmra.mxu0 %v3384
        %v3553 = vpop.f32.mrf.mxu0
        %v3554 = vadd.f32 %v891, %v3553
        %v3555 = vpop.f32.mrf.mxu0
        %v3556 = vadd.f32 %v895, %v3555
        %v3557 = vpop.f32.mrf.mxu0
        %v3558 = vadd.f32 %v891, %v3557
        %v3559 = vpop.f32.mrf.mxu0
        %v3560 = vadd.f32 %v895, %v3559
        %3561 = vdwg.mxu0
        %3562 = vmatprep.subr.bf16.mxu0 %v2259
        %3563 = vmatpush1.bf16.msra.mxu0 %v2258
        %3564 = vmatprep.subr.bf16.mxu0 %v2251
        %3565 = vmatpush1.bf16.msra.mxu0 %v2250
        %3566 = vmatprep.subr.bf16.mxu0 %v2243
        %3567 = vmatpush1.bf16.msra.mxu0 %v2242
        %3568 = vmatprep.subr.bf16.mxu0 %v2235
        %3569 = vmatpush1.bf16.msra.mxu0 %v2234
        %3570 = vmatprep.subr.bf16.mxu0 %v2227
        %3571 = vmatpush1.bf16.msra.mxu0 %v2226
        %3572 = vmatprep.subr.bf16.mxu0 %v2219
        %3573 = vmatpush1.bf16.msra.mxu0 %v2218
        %3574 = vmatprep.subr.bf16.mxu0 %v2211
        %3575 = vmatpush1.bf16.msra.mxu0 %v2210
        %3576 = vmatprep.subr.bf16.mxu0 %v2203
        %3577 = vmatpush1.bf16.msra.mxu0 %v2202
        %3578 = vmatprep.subr.bf16.mxu0 %v2323
        %3579 = vmatpush2.bf16.msra.mxu0 %v2322
        %3580 = vmatprep.subr.bf16.mxu0 %v2315
        %3581 = vmatpush2.bf16.msra.mxu0 %v2314
        %3582 = vmatprep.subr.bf16.mxu0 %v2307
        %3583 = vmatpush2.bf16.msra.mxu0 %v2306
        %3584 = vmatprep.subr.bf16.mxu0 %v2299
        %3585 = vmatpush2.bf16.msra.mxu0 %v2298
        %3586 = vmatprep.subr.bf16.mxu0 %v2291
        %3587 = vmatpush2.bf16.msra.mxu0 %v2290
        %3588 = vmatprep.subr.bf16.mxu0 %v2283
        %3589 = vmatpush2.bf16.msra.mxu0 %v2282
        %3590 = vmatprep.subr.bf16.mxu0 %v2275
        %3591 = vmatpush2.bf16.msra.mxu0 %v2274
        %3592 = vmatprep.subr.bf16.mxu0 %v2267
        %3593 = vmatpush2.bf16.msra.mxu0 %v2266
        %3594 = vmatprep.mubr.bf16.mxu0 %v3387
        %3595 = vmatmul.mubr.bf16.gmra.mxu0 %v3386
        %v3596 = vpop.f32.mrf.mxu0
        %v3597 = vadd.f32 %v3554, %v3596
        %v3598 = vpop.f32.mrf.mxu0
        %v3599 = vadd.f32 %v3556, %v3598
        %v3600 = vpop.f32.mrf.mxu0
        %v3601 = vadd.f32 %v3558, %v3600
        %v3602 = vpop.f32.mrf.mxu0
        %v3603 = vadd.f32 %v3560, %v3602
        %3604 = vdwg.mxu0
        %3605 = vmatprep.subr.bf16.mxu0 %v2387
        %3606 = vmatpush1.bf16.msra.mxu0 %v2386
        %3607 = vmatprep.subr.bf16.mxu0 %v2379
        %3608 = vmatpush1.bf16.msra.mxu0 %v2378
        %3609 = vmatprep.subr.bf16.mxu0 %v2371
        %3610 = vmatpush1.bf16.msra.mxu0 %v2370
        %3611 = vmatprep.subr.bf16.mxu0 %v2363
        %3612 = vmatpush1.bf16.msra.mxu0 %v2362
        %3613 = vmatprep.subr.bf16.mxu0 %v2355
        %3614 = vmatpush1.bf16.msra.mxu0 %v2354
        %3615 = vmatprep.subr.bf16.mxu0 %v2347
        %3616 = vmatpush1.bf16.msra.mxu0 %v2346
        %3617 = vmatprep.subr.bf16.mxu0 %v2339
        %3618 = vmatpush1.bf16.msra.mxu0 %v2338
        %3619 = vmatprep.subr.bf16.mxu0 %v2331
        %3620 = vmatpush1.bf16.msra.mxu0 %v2330
        %3621 = vmatprep.subr.bf16.mxu0 %v2451
        %3622 = vmatpush2.bf16.msra.mxu0 %v2450
        %3623 = vmatprep.subr.bf16.mxu0 %v2443
        %3624 = vmatpush2.bf16.msra.mxu0 %v2442
        %3625 = vmatprep.subr.bf16.mxu0 %v2435
        %3626 = vmatpush2.bf16.msra.mxu0 %v2434
        %3627 = vmatprep.subr.bf16.mxu0 %v2427
        %3628 = vmatpush2.bf16.msra.mxu0 %v2426
        %3629 = vmatprep.subr.bf16.mxu0 %v2419
        %3630 = vmatpush2.bf16.msra.mxu0 %v2418
        %3631 = vmatprep.subr.bf16.mxu0 %v2411
        %3632 = vmatpush2.bf16.msra.mxu0 %v2410
        %3633 = vmatprep.subr.bf16.mxu0 %v2403
        %3634 = vmatpush2.bf16.msra.mxu0 %v2402
        %3635 = vmatprep.subr.bf16.mxu0 %v2395
        %3636 = vmatpush2.bf16.msra.mxu0 %v2394
        %3637 = vmatprep.mubr.bf16.mxu0 %v3389
        %3638 = vmatmul.mubr.bf16.gmra.mxu0 %v3388
        %v3639 = vpop.f32.mrf.mxu0
        %v3640 = vadd.f32 %v3597, %v3639
        %v3641 = vpop.f32.mrf.mxu0
        %v3642 = vadd.f32 %v3599, %v3641
        %v3643 = vpop.f32.mrf.mxu0
        %v3644 = vadd.f32 %v3601, %v3643
        %v3645 = vpop.f32.mrf.mxu0
        %v3646 = vadd.f32 %v3603, %v3645
        %3647 = vdwg.mxu0
        %3648 = vmatprep.subr.bf16.mxu0 %v2133
        %3649 = vmatpush1.bf16.msra.mxu0 %v2132
        %3650 = vmatprep.subr.bf16.mxu0 %v2125
        %3651 = vmatpush1.bf16.msra.mxu0 %v2124
        %3652 = vmatprep.subr.bf16.mxu0 %v2117
        %3653 = vmatpush1.bf16.msra.mxu0 %v2116
        %3654 = vmatprep.subr.bf16.mxu0 %v2109
        %3655 = vmatpush1.bf16.msra.mxu0 %v2108
        %3656 = vmatprep.subr.bf16.mxu0 %v2101
        %3657 = vmatpush1.bf16.msra.mxu0 %v2100
        %3658 = vmatprep.subr.bf16.mxu0 %v2093
        %3659 = vmatpush1.bf16.msra.mxu0 %v2092
        %3660 = vmatprep.subr.bf16.mxu0 %v2085
        %3661 = vmatpush1.bf16.msra.mxu0 %v2084
        %3662 = vmatprep.subr.bf16.mxu0 %v2077
        %3663 = vmatpush1.bf16.msra.mxu0 %v2076
        %3664 = vmatprep.subr.bf16.mxu0 %v2197
        %3665 = vmatpush2.bf16.msra.mxu0 %v2196
        %3666 = vmatprep.subr.bf16.mxu0 %v2189
        %3667 = vmatpush2.bf16.msra.mxu0 %v2188
        %3668 = vmatprep.subr.bf16.mxu0 %v2181
        %3669 = vmatpush2.bf16.msra.mxu0 %v2180
        %3670 = vmatprep.subr.bf16.mxu0 %v2173
        %3671 = vmatpush2.bf16.msra.mxu0 %v2172
        %3672 = vmatprep.subr.bf16.mxu0 %v2165
        %3673 = vmatpush2.bf16.msra.mxu0 %v2164
        %3674 = vmatprep.subr.bf16.mxu0 %v2157
        %3675 = vmatpush2.bf16.msra.mxu0 %v2156
        %3676 = vmatprep.subr.bf16.mxu0 %v2149
        %3677 = vmatpush2.bf16.msra.mxu0 %v2148
        %3678 = vmatprep.subr.bf16.mxu0 %v2141
        %3679 = vmatpush2.bf16.msra.mxu0 %v2140
        %3680 = vmatprep.mubr.bf16.mxu0 %v3385
        %3681 = vmatmul.mubr.bf16.gmra.mxu0 %v3384
        %v3682 = vpop.f32.mrf.mxu0
        %v3683 = vadd.f32 %v899, %v3682
        %v3684 = vpop.f32.mrf.mxu0
        %v3685 = vadd.f32 %v903, %v3684
        %v3686 = vpop.f32.mrf.mxu0
        %v3687 = vadd.f32 %v899, %v3686
        %v3688 = vpop.f32.mrf.mxu0
        %v3689 = vadd.f32 %v903, %v3688
        %3690 = vdwg.mxu0
        %3691 = vmatprep.subr.bf16.mxu0 %v2261
        %3692 = vmatpush1.bf16.msra.mxu0 %v2260
        %3693 = vmatprep.subr.bf16.mxu0 %v2253
        %3694 = vmatpush1.bf16.msra.mxu0 %v2252
        %3695 = vmatprep.subr.bf16.mxu0 %v2245
        %3696 = vmatpush1.bf16.msra.mxu0 %v2244
        %3697 = vmatprep.subr.bf16.mxu0 %v2237
        %3698 = vmatpush1.bf16.msra.mxu0 %v2236
        %3699 = vmatprep.subr.bf16.mxu0 %v2229
        %3700 = vmatpush1.bf16.msra.mxu0 %v2228
        %3701 = vmatprep.subr.bf16.mxu0 %v2221
        %3702 = vmatpush1.bf16.msra.mxu0 %v2220
        %3703 = vmatprep.subr.bf16.mxu0 %v2213
        %3704 = vmatpush1.bf16.msra.mxu0 %v2212
        %3705 = vmatprep.subr.bf16.mxu0 %v2205
        %3706 = vmatpush1.bf16.msra.mxu0 %v2204
        %3707 = vmatprep.subr.bf16.mxu0 %v2325
        %3708 = vmatpush2.bf16.msra.mxu0 %v2324
        %3709 = vmatprep.subr.bf16.mxu0 %v2317
        %3710 = vmatpush2.bf16.msra.mxu0 %v2316
        %3711 = vmatprep.subr.bf16.mxu0 %v2309
        %3712 = vmatpush2.bf16.msra.mxu0 %v2308
        %3713 = vmatprep.subr.bf16.mxu0 %v2301
        %3714 = vmatpush2.bf16.msra.mxu0 %v2300
        %3715 = vmatprep.subr.bf16.mxu0 %v2293
        %3716 = vmatpush2.bf16.msra.mxu0 %v2292
        %3717 = vmatprep.subr.bf16.mxu0 %v2285
        %3718 = vmatpush2.bf16.msra.mxu0 %v2284
        %3719 = vmatprep.subr.bf16.mxu0 %v2277
        %3720 = vmatpush2.bf16.msra.mxu0 %v2276
        %3721 = vmatprep.subr.bf16.mxu0 %v2269
        %3722 = vmatpush2.bf16.msra.mxu0 %v2268
        %3723 = vmatprep.mubr.bf16.mxu0 %v3387
        %3724 = vmatmul.mubr.bf16.gmra.mxu0 %v3386
        %v3725 = vpop.f32.mrf.mxu0
        %v3726 = vadd.f32 %v3683, %v3725
        %v3727 = vpop.f32.mrf.mxu0
        %v3728 = vadd.f32 %v3685, %v3727
        %v3729 = vpop.f32.mrf.mxu0
        %v3730 = vadd.f32 %v3687, %v3729
        %v3731 = vpop.f32.mrf.mxu0
        %v3732 = vadd.f32 %v3689, %v3731
        %3733 = vdwg.mxu0
        %3734 = vmatprep.subr.bf16.mxu0 %v2389
        %3735 = vmatpush1.bf16.msra.mxu0 %v2388
        %3736 = vmatprep.subr.bf16.mxu0 %v2381
        %3737 = vmatpush1.bf16.msra.mxu0 %v2380
        %3738 = vmatprep.subr.bf16.mxu0 %v2373
        %3739 = vmatpush1.bf16.msra.mxu0 %v2372
        %3740 = vmatprep.subr.bf16.mxu0 %v2365
        %3741 = vmatpush1.bf16.msra.mxu0 %v2364
        %3742 = vmatprep.subr.bf16.mxu0 %v2357
        %3743 = vmatpush1.bf16.msra.mxu0 %v2356
        %3744 = vmatprep.subr.bf16.mxu0 %v2349
        %3745 = vmatpush1.bf16.msra.mxu0 %v2348
        %3746 = vmatprep.subr.bf16.mxu0 %v2341
        %3747 = vmatpush1.bf16.msra.mxu0 %v2340
        %3748 = vmatprep.subr.bf16.mxu0 %v2333
        %3749 = vmatpush1.bf16.msra.mxu0 %v2332
        %3750 = vmatprep.subr.bf16.mxu0 %v2453
        %3751 = vmatpush2.bf16.msra.mxu0 %v2452
        %3752 = vmatprep.subr.bf16.mxu0 %v2445
        %3753 = vmatpush2.bf16.msra.mxu0 %v2444
        %3754 = vmatprep.subr.bf16.mxu0 %v2437
        %3755 = vmatpush2.bf16.msra.mxu0 %v2436
        %3756 = vmatprep.subr.bf16.mxu0 %v2429
        %3757 = vmatpush2.bf16.msra.mxu0 %v2428
        %3758 = vmatprep.subr.bf16.mxu0 %v2421
        %3759 = vmatpush2.bf16.msra.mxu0 %v2420
        %3760 = vmatprep.subr.bf16.mxu0 %v2413
        %3761 = vmatpush2.bf16.msra.mxu0 %v2412
        %3762 = vmatprep.subr.bf16.mxu0 %v2405
        %3763 = vmatpush2.bf16.msra.mxu0 %v2404
        %3764 = vmatprep.subr.bf16.mxu0 %v2397
        %3765 = vmatpush2.bf16.msra.mxu0 %v2396
        %3766 = vmatprep.mubr.bf16.mxu0 %v3389
        %3767 = vmatmul.mubr.bf16.gmra.mxu0 %v3388
        %v3768 = vpop.f32.mrf.mxu0
        %v3769 = vadd.f32 %v3726, %v3768
        %v3770 = vpop.f32.mrf.mxu0
        %v3771 = vadd.f32 %v3728, %v3770
        %v3772 = vpop.f32.mrf.mxu0
        %v3773 = vadd.f32 %v3730, %v3772
        %v3774 = vpop.f32.mrf.mxu0
        %v3775 = vadd.f32 %v3732, %v3774
        %3776 = vdwg.mxu0
        %3777 = vmatprep.subr.bf16.mxu0 %v2135
        %3778 = vmatpush1.bf16.msra.mxu0 %v2134
        %3779 = vmatprep.subr.bf16.mxu0 %v2127
        %3780 = vmatpush1.bf16.msra.mxu0 %v2126
        %3781 = vmatprep.subr.bf16.mxu0 %v2119
        %3782 = vmatpush1.bf16.msra.mxu0 %v2118
        %3783 = vmatprep.subr.bf16.mxu0 %v2111
        %3784 = vmatpush1.bf16.msra.mxu0 %v2110
        %3785 = vmatprep.subr.bf16.mxu0 %v2103
        %3786 = vmatpush1.bf16.msra.mxu0 %v2102
        %3787 = vmatprep.subr.bf16.mxu0 %v2095
        %3788 = vmatpush1.bf16.msra.mxu0 %v2094
        %3789 = vmatprep.subr.bf16.mxu0 %v2087
        %3790 = vmatpush1.bf16.msra.mxu0 %v2086
        %3791 = vmatprep.subr.bf16.mxu0 %v2079
        %3792 = vmatpush1.bf16.msra.mxu0 %v2078
        %3793 = vmatprep.subr.bf16.mxu0 %v2199
        %3794 = vmatpush2.bf16.msra.mxu0 %v2198
        %3795 = vmatprep.subr.bf16.mxu0 %v2191
        %3796 = vmatpush2.bf16.msra.mxu0 %v2190
        %3797 = vmatprep.subr.bf16.mxu0 %v2183
        %3798 = vmatpush2.bf16.msra.mxu0 %v2182
        %3799 = vmatprep.subr.bf16.mxu0 %v2175
        %3800 = vmatpush2.bf16.msra.mxu0 %v2174
        %3801 = vmatprep.subr.bf16.mxu0 %v2167
        %3802 = vmatpush2.bf16.msra.mxu0 %v2166
        %3803 = vmatprep.subr.bf16.mxu0 %v2159
        %3804 = vmatpush2.bf16.msra.mxu0 %v2158
        %3805 = vmatprep.subr.bf16.mxu0 %v2151
        %3806 = vmatpush2.bf16.msra.mxu0 %v2150
        %3807 = vmatprep.subr.bf16.mxu0 %v2143
        %3808 = vmatpush2.bf16.msra.mxu0 %v2142
        %3809 = vmatprep.mubr.bf16.mxu0 %v3385
        %3810 = vmatmul.mubr.bf16.gmra.mxu0 %v3384
        %v3811 = vpop.f32.mrf.mxu0
        %v3812 = vadd.f32 %v907, %v3811
        %v3813 = vpop.f32.mrf.mxu0
        %v3814 = vadd.f32 %v911, %v3813
        %v3815 = vpop.f32.mrf.mxu0
        %v3816 = vadd.f32 %v907, %v3815
        %v3817 = vpop.f32.mrf.mxu0
        %v3818 = vadd.f32 %v911, %v3817
        %3819 = vdwg.mxu0
        %3820 = vmatprep.subr.bf16.mxu0 %v2263
        %3821 = vmatpush1.bf16.msra.mxu0 %v2262
        %3822 = vmatprep.subr.bf16.mxu0 %v2255
        %3823 = vmatpush1.bf16.msra.mxu0 %v2254
        %3824 = vmatprep.subr.bf16.mxu0 %v2247
        %3825 = vmatpush1.bf16.msra.mxu0 %v2246
        %3826 = vmatprep.subr.bf16.mxu0 %v2239
        %3827 = vmatpush1.bf16.msra.mxu0 %v2238
        %3828 = vmatprep.subr.bf16.mxu0 %v2231
        %3829 = vmatpush1.bf16.msra.mxu0 %v2230
        %3830 = vmatprep.subr.bf16.mxu0 %v2223
        %3831 = vmatpush1.bf16.msra.mxu0 %v2222
        %3832 = vmatprep.subr.bf16.mxu0 %v2215
        %3833 = vmatpush1.bf16.msra.mxu0 %v2214
        %3834 = vmatprep.subr.bf16.mxu0 %v2207
        %3835 = vmatpush1.bf16.msra.mxu0 %v2206
        %3836 = vmatprep.subr.bf16.mxu0 %v2327
        %3837 = vmatpush2.bf16.msra.mxu0 %v2326
        %3838 = vmatprep.subr.bf16.mxu0 %v2319
        %3839 = vmatpush2.bf16.msra.mxu0 %v2318
        %3840 = vmatprep.subr.bf16.mxu0 %v2311
        %3841 = vmatpush2.bf16.msra.mxu0 %v2310
        %3842 = vmatprep.subr.bf16.mxu0 %v2303
        %3843 = vmatpush2.bf16.msra.mxu0 %v2302
        %3844 = vmatprep.subr.bf16.mxu0 %v2295
        %3845 = vmatpush2.bf16.msra.mxu0 %v2294
        %3846 = vmatprep.subr.bf16.mxu0 %v2287
        %3847 = vmatpush2.bf16.msra.mxu0 %v2286
        %3848 = vmatprep.subr.bf16.mxu0 %v2279
        %3849 = vmatpush2.bf16.msra.mxu0 %v2278
        %3850 = vmatprep.subr.bf16.mxu0 %v2271
        %3851 = vmatpush2.bf16.msra.mxu0 %v2270
        %3852 = vmatprep.mubr.bf16.mxu0 %v3387
        %3853 = vmatmul.mubr.bf16.gmra.mxu0 %v3386
        %v3854 = vpop.f32.mrf.mxu0
        %v3855 = vadd.f32 %v3812, %v3854
        %v3856 = vpop.f32.mrf.mxu0
        %v3857 = vadd.f32 %v3814, %v3856
        %v3858 = vpop.f32.mrf.mxu0
        %v3859 = vadd.f32 %v3816, %v3858
        %v3860 = vpop.f32.mrf.mxu0
        %v3861 = vadd.f32 %v3818, %v3860
        %3862 = vdwg.mxu0
        %3863 = vmatprep.subr.bf16.mxu0 %v2391
        %3864 = vmatpush1.bf16.msra.mxu0 %v2390
        %3865 = vmatprep.subr.bf16.mxu0 %v2383
        %3866 = vmatpush1.bf16.msra.mxu0 %v2382
        %3867 = vmatprep.subr.bf16.mxu0 %v2375
        %3868 = vmatpush1.bf16.msra.mxu0 %v2374
        %3869 = vmatprep.subr.bf16.mxu0 %v2367
        %3870 = vmatpush1.bf16.msra.mxu0 %v2366
        %3871 = vmatprep.subr.bf16.mxu0 %v2359
        %3872 = vmatpush1.bf16.msra.mxu0 %v2358
        %3873 = vmatprep.subr.bf16.mxu0 %v2351
        %3874 = vmatpush1.bf16.msra.mxu0 %v2350
        %3875 = vmatprep.subr.bf16.mxu0 %v2343
        %3876 = vmatpush1.bf16.msra.mxu0 %v2342
        %3877 = vmatprep.subr.bf16.mxu0 %v2335
        %3878 = vmatpush1.bf16.msra.mxu0 %v2334
        %3879 = vmatprep.subr.bf16.mxu0 %v2455
        %3880 = vmatpush2.bf16.msra.mxu0 %v2454
        %3881 = vmatprep.subr.bf16.mxu0 %v2447
        %3882 = vmatpush2.bf16.msra.mxu0 %v2446
        %3883 = vmatprep.subr.bf16.mxu0 %v2439
        %3884 = vmatpush2.bf16.msra.mxu0 %v2438
        %3885 = vmatprep.subr.bf16.mxu0 %v2431
        %3886 = vmatpush2.bf16.msra.mxu0 %v2430
        %3887 = vmatprep.subr.bf16.mxu0 %v2423
        %3888 = vmatpush2.bf16.msra.mxu0 %v2422
        %3889 = vmatprep.subr.bf16.mxu0 %v2415
        %3890 = vmatpush2.bf16.msra.mxu0 %v2414
        %3891 = vmatprep.subr.bf16.mxu0 %v2407
        %3892 = vmatpush2.bf16.msra.mxu0 %v2406
        %3893 = vmatprep.subr.bf16.mxu0 %v2399
        %3894 = vmatpush2.bf16.msra.mxu0 %v2398
        %3895 = vmatprep.mubr.bf16.mxu0 %v3389
        %3896 = vmatmul.mubr.bf16.gmra.mxu0 %v3388
        %v3897 = vpop.f32.mrf.mxu0
        %v3898 = vadd.f32 %v3855, %v3897
        %v3899 = vpop.f32.mrf.mxu0
        %v3900 = vadd.f32 %v3857, %v3899
        %v3901 = vpop.f32.mrf.mxu0
        %v3902 = vadd.f32 %v3859, %v3901
        %v3903 = vpop.f32.mrf.mxu0
        %v3904 = vadd.f32 %v3861, %v3903
        %3905 = vdwg.mxu0
        %v3906 = vtanh.pop %v3511
        %v3907 = vtanh.pop %v3513
        %v3908 = vtanh.pop %v3640
        %v3909 = vtanh.pop %v3642
        %v3910 = vtanh.pop %v3769
        %v3911 = vtanh.pop %v3771
        %v3912 = vtanh.pop %v3898
        %v3913 = vtanh.pop %v3900
        %v3914 = vtanh.pop %v3515
        %v3915 = vtanh.pop %v3517
        %v3916 = vtanh.pop %v3644
        %v3917 = vtanh.pop %v3646
        %v3918 = vtanh.pop %v3773
        %v3919 = vtanh.pop %v3775
        %v3920 = vtanh.pop %v3902
        %v3921 = vtanh.pop %v3904
        %v3922 = vld [vmem:[%s395] sm:$0xff]
        %v3923 = vld [vmem:[%s395 + $0x8] sm:$0xff]
        %v3924 = vld [vmem:[%s395 + $0x10] sm:$0xff]
        %v3925 = vld [vmem:[%s395 + $0x18] sm:$0xff]
        %v3926 = vld [vmem:[%s395 + $0x20] sm:$0xff]
        %v3927 = vld [vmem:[%s395 + $0x28] sm:$0xff]
        %v3928 = vld [vmem:[%s395 + $0x30] sm:$0xff]
        %v3929 = vld [vmem:[%s395 + $0x38] sm:$0xff]
        %v3930 = vld [vmem:[%s395 + $0x40] sm:$0xff]
        %v3931 = vld [vmem:[%s395 + $0x48] sm:$0xff]
        %v3932 = vld [vmem:[%s395 + $0x50] sm:$0xff]
        %v3933 = vld [vmem:[%s395 + $0x58] sm:$0xff]
        %v3934 = vpack.c.bf16 %v3928, %v3922
        %v3935 = vpack.c.bf16 %v3929, %v3923
        %v3936 = vpack.c.bf16 %v3930, %v3924
        %v3937 = vpack.c.bf16 %v3931, %v3925
        %v3938 = vpack.c.bf16 %v3932, %v3926
        %v3939 = vpack.c.bf16 %v3933, %v3927
        %3940 = vmatprep.subr.bf16.mxu0 %v2129
        %3941 = vmatpush1.bf16.msra.mxu0 %v2128
        %3942 = vmatprep.subr.bf16.mxu0 %v2121
        %3943 = vmatpush1.bf16.msra.mxu0 %v2120
        %3944 = vmatprep.subr.bf16.mxu0 %v2113
        %3945 = vmatpush1.bf16.msra.mxu0 %v2112
        %3946 = vmatprep.subr.bf16.mxu0 %v2105
        %3947 = vmatpush1.bf16.msra.mxu0 %v2104
        %3948 = vmatprep.subr.bf16.mxu0 %v2097
        %3949 = vmatpush1.bf16.msra.mxu0 %v2096
        %3950 = vmatprep.subr.bf16.mxu0 %v2089
        %3951 = vmatpush1.bf16.msra.mxu0 %v2088
        %3952 = vmatprep.subr.bf16.mxu0 %v2081
        %3953 = vmatpush1.bf16.msra.mxu0 %v2080
        %3954 = vmatprep.subr.bf16.mxu0 %v2073
        %3955 = vmatpush1.bf16.msra.mxu0 %v2072
        %3956 = vmatprep.subr.bf16.mxu0 %v2193
        %3957 = vmatpush2.bf16.msra.mxu0 %v2192
        %3958 = vmatprep.subr.bf16.mxu0 %v2185
        %3959 = vmatpush2.bf16.msra.mxu0 %v2184
        %3960 = vmatprep.subr.bf16.mxu0 %v2177
        %3961 = vmatpush2.bf16.msra.mxu0 %v2176
        %3962 = vmatprep.subr.bf16.mxu0 %v2169
        %3963 = vmatpush2.bf16.msra.mxu0 %v2168
        %3964 = vmatprep.subr.bf16.mxu0 %v2161
        %3965 = vmatpush2.bf16.msra.mxu0 %v2160
        %3966 = vmatprep.subr.bf16.mxu0 %v2153
        %3967 = vmatpush2.bf16.msra.mxu0 %v2152
        %3968 = vmatprep.subr.bf16.mxu0 %v2145
        %3969 = vmatpush2.bf16.msra.mxu0 %v2144
        %3970 = vmatprep.subr.bf16.mxu0 %v2137
        %3971 = vmatpush2.bf16.msra.mxu0 %v2136
        %3972 = vmatprep.mubr.bf16.mxu0 %v3935
        %3973 = vmatmul.mubr.bf16.gmra.mxu0 %v3934
        %v3974 = vpop.f32.mrf.mxu0
        %v3975 = vadd.f32 %v883, %v3974
        %v3976 = vpop.f32.mrf.mxu0
        %v3977 = vadd.f32 %v887, %v3976
        %v3978 = vpop.f32.mrf.mxu0
        %v3979 = vadd.f32 %v883, %v3978
        %v3980 = vpop.f32.mrf.mxu0
        %v3981 = vadd.f32 %v887, %v3980
        %3982 = vdwg.mxu0
        %3983 = vmatprep.subr.bf16.mxu0 %v2257
        %3984 = vmatpush1.bf16.msra.mxu0 %v2256
        %3985 = vmatprep.subr.bf16.mxu0 %v2249
        %3986 = vmatpush1.bf16.msra.mxu0 %v2248
        %3987 = vmatprep.subr.bf16.mxu0 %v2241
        %3988 = vmatpush1.bf16.msra.mxu0 %v2240
        %3989 = vmatprep.subr.bf16.mxu0 %v2233
        %3990 = vmatpush1.bf16.msra.mxu0 %v2232
        %3991 = vmatprep.subr.bf16.mxu0 %v2225
        %3992 = vmatpush1.bf16.msra.mxu0 %v2224
        %3993 = vmatprep.subr.bf16.mxu0 %v2217
        %3994 = vmatpush1.bf16.msra.mxu0 %v2216
        %3995 = vmatprep.subr.bf16.mxu0 %v2209
        %3996 = vmatpush1.bf16.msra.mxu0 %v2208
        %3997 = vmatprep.subr.bf16.mxu0 %v2201
        %3998 = vmatpush1.bf16.msra.mxu0 %v2200
        %3999 = vmatprep.subr.bf16.mxu0 %v2321
        %4000 = vmatpush2.bf16.msra.mxu0 %v2320
        %4001 = vmatprep.subr.bf16.mxu0 %v2313
        %4002 = vmatpush2.bf16.msra.mxu0 %v2312
        %4003 = vmatprep.subr.bf16.mxu0 %v2305
        %4004 = vmatpush2.bf16.msra.mxu0 %v2304
        %4005 = vmatprep.subr.bf16.mxu0 %v2297
        %4006 = vmatpush2.bf16.msra.mxu0 %v2296
        %4007 = vmatprep.subr.bf16.mxu0 %v2289
        %4008 = vmatpush2.bf16.msra.mxu0 %v2288
        %4009 = vmatprep.subr.bf16.mxu0 %v2281
        %4010 = vmatpush2.bf16.msra.mxu0 %v2280
        %4011 = vmatprep.subr.bf16.mxu0 %v2273
        %4012 = vmatpush2.bf16.msra.mxu0 %v2272
        %4013 = vmatprep.subr.bf16.mxu0 %v2265
        %4014 = vmatpush2.bf16.msra.mxu0 %v2264
        %4015 = vmatprep.mubr.bf16.mxu0 %v3937
        %4016 = vmatmul.mubr.bf16.gmra.mxu0 %v3936
        %v4017 = vpop.f32.mrf.mxu0
        %v4018 = vadd.f32 %v3975, %v4017
        %v4019 = vpop.f32.mrf.mxu0
        %v4020 = vadd.f32 %v3977, %v4019
        %v4021 = vpop.f32.mrf.mxu0
        %v4022 = vadd.f32 %v3979, %v4021
        %v4023 = vpop.f32.mrf.mxu0
        %v4024 = vadd.f32 %v3981, %v4023
        %4025 = vdwg.mxu0
        %4026 = vmatprep.subr.bf16.mxu0 %v2385
        %4027 = vmatpush1.bf16.msra.mxu0 %v2384
        %4028 = vmatprep.subr.bf16.mxu0 %v2377
        %4029 = vmatpush1.bf16.msra.mxu0 %v2376
        %4030 = vmatprep.subr.bf16.mxu0 %v2369
        %4031 = vmatpush1.bf16.msra.mxu0 %v2368
        %4032 = vmatprep.subr.bf16.mxu0 %v2361
        %4033 = vmatpush1.bf16.msra.mxu0 %v2360
        %4034 = vmatprep.subr.bf16.mxu0 %v2353
        %4035 = vmatpush1.bf16.msra.mxu0 %v2352
        %4036 = vmatprep.subr.bf16.mxu0 %v2345
        %4037 = vmatpush1.bf16.msra.mxu0 %v2344
        %4038 = vmatprep.subr.bf16.mxu0 %v2337
        %4039 = vmatpush1.bf16.msra.mxu0 %v2336
        %4040 = vmatprep.subr.bf16.mxu0 %v2329
        %4041 = vmatpush1.bf16.msra.mxu0 %v2328
        %4042 = vmatprep.subr.bf16.mxu0 %v2449
        %4043 = vmatpush2.bf16.msra.mxu0 %v2448
        %4044 = vmatprep.subr.bf16.mxu0 %v2441
        %4045 = vmatpush2.bf16.msra.mxu0 %v2440
        %4046 = vmatprep.subr.bf16.mxu0 %v2433
        %4047 = vmatpush2.bf16.msra.mxu0 %v2432
        %4048 = vmatprep.subr.bf16.mxu0 %v2425
        %4049 = vmatpush2.bf16.msra.mxu0 %v2424
        %4050 = vmatprep.subr.bf16.mxu0 %v2417
        %4051 = vmatpush2.bf16.msra.mxu0 %v2416
        %4052 = vmatprep.subr.bf16.mxu0 %v2409
        %4053 = vmatpush2.bf16.msra.mxu0 %v2408
        %4054 = vmatprep.subr.bf16.mxu0 %v2401
        %4055 = vmatpush2.bf16.msra.mxu0 %v2400
        %4056 = vmatprep.subr.bf16.mxu0 %v2393
        %4057 = vmatpush2.bf16.msra.mxu0 %v2392
        %4058 = vmatprep.mubr.bf16.mxu0 %v3939
        %4059 = vmatmul.mubr.bf16.gmra.mxu0 %v3938
        %v4060 = vpop.f32.mrf.mxu0
        %v4061 = vadd.f32 %v4018, %v4060
        %v4062 = vpop.f32.mrf.mxu0
        %v4063 = vadd.f32 %v4020, %v4062
        %v4064 = vpop.f32.mrf.mxu0
        %v4065 = vadd.f32 %v4022, %v4064
        %v4066 = vpop.f32.mrf.mxu0
        %v4067 = vadd.f32 %v4024, %v4066
        %4068 = vdwg.mxu0
        %4069 = vmatprep.subr.bf16.mxu0 %v2131
        %4070 = vmatpush1.bf16.msra.mxu0 %v2130
        %4071 = vmatprep.subr.bf16.mxu0 %v2123
        %4072 = vmatpush1.bf16.msra.mxu0 %v2122
        %4073 = vmatprep.subr.bf16.mxu0 %v2115
        %4074 = vmatpush1.bf16.msra.mxu0 %v2114
        %4075 = vmatprep.subr.bf16.mxu0 %v2107
        %4076 = vmatpush1.bf16.msra.mxu0 %v2106
        %4077 = vmatprep.subr.bf16.mxu0 %v2099
        %4078 = vmatpush1.bf16.msra.mxu0 %v2098
        %4079 = vmatprep.subr.bf16.mxu0 %v2091
        %4080 = vmatpush1.bf16.msra.mxu0 %v2090
        %4081 = vmatprep.subr.bf16.mxu0 %v2083
        %4082 = vmatpush1.bf16.msra.mxu0 %v2082
        %4083 = vmatprep.subr.bf16.mxu0 %v2075
        %4084 = vmatpush1.bf16.msra.mxu0 %v2074
        %4085 = vmatprep.subr.bf16.mxu0 %v2195
        %4086 = vmatpush2.bf16.msra.mxu0 %v2194
        %4087 = vmatprep.subr.bf16.mxu0 %v2187
        %4088 = vmatpush2.bf16.msra.mxu0 %v2186
        %4089 = vmatprep.subr.bf16.mxu0 %v2179
        %4090 = vmatpush2.bf16.msra.mxu0 %v2178
        %4091 = vmatprep.subr.bf16.mxu0 %v2171
        %4092 = vmatpush2.bf16.msra.mxu0 %v2170
        %4093 = vmatprep.subr.bf16.mxu0 %v2163
        %4094 = vmatpush2.bf16.msra.mxu0 %v2162
        %4095 = vmatprep.subr.bf16.mxu0 %v2155
        %4096 = vmatpush2.bf16.msra.mxu0 %v2154
        %4097 = vmatprep.subr.bf16.mxu0 %v2147
        %4098 = vmatpush2.bf16.msra.mxu0 %v2146
        %4099 = vmatprep.subr.bf16.mxu0 %v2139
        %4100 = vmatpush2.bf16.msra.mxu0 %v2138
        %4101 = vmatprep.mubr.bf16.mxu0 %v3935
        %4102 = vmatmul.mubr.bf16.gmra.mxu0 %v3934
        %v4103 = vpop.f32.mrf.mxu0
        %v4104 = vadd.f32 %v891, %v4103
        %v4105 = vpop.f32.mrf.mxu0
        %v4106 = vadd.f32 %v895, %v4105
        %v4107 = vpop.f32.mrf.mxu0
        %v4108 = vadd.f32 %v891, %v4107
        %v4109 = vpop.f32.mrf.mxu0
        %v4110 = vadd.f32 %v895, %v4109
        %4111 = vdwg.mxu0
        %4112 = vmatprep.subr.bf16.mxu0 %v2259
        %4113 = vmatpush1.bf16.msra.mxu0 %v2258
        %4114 = vmatprep.subr.bf16.mxu0 %v2251
        %4115 = vmatpush1.bf16.msra.mxu0 %v2250
        %4116 = vmatprep.subr.bf16.mxu0 %v2243
        %4117 = vmatpush1.bf16.msra.mxu0 %v2242
        %4118 = vmatprep.subr.bf16.mxu0 %v2235
        %4119 = vmatpush1.bf16.msra.mxu0 %v2234
        %4120 = vmatprep.subr.bf16.mxu0 %v2227
        %4121 = vmatpush1.bf16.msra.mxu0 %v2226
        %4122 = vmatprep.subr.bf16.mxu0 %v2219
        %4123 = vmatpush1.bf16.msra.mxu0 %v2218
        %4124 = vmatprep.subr.bf16.mxu0 %v2211
        %4125 = vmatpush1.bf16.msra.mxu0 %v2210
        %4126 = vmatprep.subr.bf16.mxu0 %v2203
        %4127 = vmatpush1.bf16.msra.mxu0 %v2202
        %4128 = vmatprep.subr.bf16.mxu0 %v2323
        %4129 = vmatpush2.bf16.msra.mxu0 %v2322
        %4130 = vmatprep.subr.bf16.mxu0 %v2315
        %4131 = vmatpush2.bf16.msra.mxu0 %v2314
        %4132 = vmatprep.subr.bf16.mxu0 %v2307
        %4133 = vmatpush2.bf16.msra.mxu0 %v2306
        %4134 = vmatprep.subr.bf16.mxu0 %v2299
        %4135 = vmatpush2.bf16.msra.mxu0 %v2298
        %4136 = vmatprep.subr.bf16.mxu0 %v2291
        %4137 = vmatpush2.bf16.msra.mxu0 %v2290
        %4138 = vmatprep.subr.bf16.mxu0 %v2283
        %4139 = vmatpush2.bf16.msra.mxu0 %v2282
        %4140 = vmatprep.subr.bf16.mxu0 %v2275
        %4141 = vmatpush2.bf16.msra.mxu0 %v2274
        %4142 = vmatprep.subr.bf16.mxu0 %v2267
        %4143 = vmatpush2.bf16.msra.mxu0 %v2266
        %4144 = vmatprep.mubr.bf16.mxu0 %v3937
        %4145 = vmatmul.mubr.bf16.gmra.mxu0 %v3936
        %v4146 = vpop.f32.mrf.mxu0
        %v4147 = vadd.f32 %v4104, %v4146
        %v4148 = vpop.f32.mrf.mxu0
        %v4149 = vadd.f32 %v4106, %v4148
        %v4150 = vpop.f32.mrf.mxu0
        %v4151 = vadd.f32 %v4108, %v4150
        %v4152 = vpop.f32.mrf.mxu0
        %v4153 = vadd.f32 %v4110, %v4152
        %4154 = vdwg.mxu0
        %4155 = vmatprep.subr.bf16.mxu0 %v2387
        %4156 = vmatpush1.bf16.msra.mxu0 %v2386
        %4157 = vmatprep.subr.bf16.mxu0 %v2379
        %4158 = vmatpush1.bf16.msra.mxu0 %v2378
        %4159 = vmatprep.subr.bf16.mxu0 %v2371
        %4160 = vmatpush1.bf16.msra.mxu0 %v2370
        %4161 = vmatprep.subr.bf16.mxu0 %v2363
        %4162 = vmatpush1.bf16.msra.mxu0 %v2362
        %4163 = vmatprep.subr.bf16.mxu0 %v2355
        %4164 = vmatpush1.bf16.msra.mxu0 %v2354
        %4165 = vmatprep.subr.bf16.mxu0 %v2347
        %4166 = vmatpush1.bf16.msra.mxu0 %v2346
        %4167 = vmatprep.subr.bf16.mxu0 %v2339
        %4168 = vmatpush1.bf16.msra.mxu0 %v2338
        %4169 = vmatprep.subr.bf16.mxu0 %v2331
        %4170 = vmatpush1.bf16.msra.mxu0 %v2330
        %4171 = vmatprep.subr.bf16.mxu0 %v2451
        %4172 = vmatpush2.bf16.msra.mxu0 %v2450
        %4173 = vmatprep.subr.bf16.mxu0 %v2443
        %4174 = vmatpush2.bf16.msra.mxu0 %v2442
        %4175 = vmatprep.subr.bf16.mxu0 %v2435
        %4176 = vmatpush2.bf16.msra.mxu0 %v2434
        %4177 = vmatprep.subr.bf16.mxu0 %v2427
        %4178 = vmatpush2.bf16.msra.mxu0 %v2426
        %4179 = vmatprep.subr.bf16.mxu0 %v2419
        %4180 = vmatpush2.bf16.msra.mxu0 %v2418
        %4181 = vmatprep.subr.bf16.mxu0 %v2411
        %4182 = vmatpush2.bf16.msra.mxu0 %v2410
        %4183 = vmatprep.subr.bf16.mxu0 %v2403
        %4184 = vmatpush2.bf16.msra.mxu0 %v2402
        %4185 = vmatprep.subr.bf16.mxu0 %v2395
        %4186 = vmatpush2.bf16.msra.mxu0 %v2394
        %4187 = vmatprep.mubr.bf16.mxu0 %v3939
        %4188 = vmatmul.mubr.bf16.gmra.mxu0 %v3938
        %v4189 = vpop.f32.mrf.mxu0
        %v4190 = vadd.f32 %v4147, %v4189
        %v4191 = vpop.f32.mrf.mxu0
        %v4192 = vadd.f32 %v4149, %v4191
        %v4193 = vpop.f32.mrf.mxu0
        %v4194 = vadd.f32 %v4151, %v4193
        %v4195 = vpop.f32.mrf.mxu0
        %v4196 = vadd.f32 %v4153, %v4195
        %4197 = vdwg.mxu0
        %4198 = vmatprep.subr.bf16.mxu0 %v2133
        %4199 = vmatpush1.bf16.msra.mxu0 %v2132
        %4200 = vmatprep.subr.bf16.mxu0 %v2125
        %4201 = vmatpush1.bf16.msra.mxu0 %v2124
        %4202 = vmatprep.subr.bf16.mxu0 %v2117
        %4203 = vmatpush1.bf16.msra.mxu0 %v2116
        %4204 = vmatprep.subr.bf16.mxu0 %v2109
        %4205 = vmatpush1.bf16.msra.mxu0 %v2108
        %4206 = vmatprep.subr.bf16.mxu0 %v2101
        %4207 = vmatpush1.bf16.msra.mxu0 %v2100
        %4208 = vmatprep.subr.bf16.mxu0 %v2093
        %4209 = vmatpush1.bf16.msra.mxu0 %v2092
        %4210 = vmatprep.subr.bf16.mxu0 %v2085
        %4211 = vmatpush1.bf16.msra.mxu0 %v2084
        %4212 = vmatprep.subr.bf16.mxu0 %v2077
        %4213 = vmatpush1.bf16.msra.mxu0 %v2076
        %4214 = vmatprep.subr.bf16.mxu0 %v2197
        %4215 = vmatpush2.bf16.msra.mxu0 %v2196
        %4216 = vmatprep.subr.bf16.mxu0 %v2189
        %4217 = vmatpush2.bf16.msra.mxu0 %v2188
        %4218 = vmatprep.subr.bf16.mxu0 %v2181
        %4219 = vmatpush2.bf16.msra.mxu0 %v2180
        %4220 = vmatprep.subr.bf16.mxu0 %v2173
        %4221 = vmatpush2.bf16.msra.mxu0 %v2172
        %4222 = vmatprep.subr.bf16.mxu0 %v2165
        %4223 = vmatpush2.bf16.msra.mxu0 %v2164
        %4224 = vmatprep.subr.bf16.mxu0 %v2157
        %4225 = vmatpush2.bf16.msra.mxu0 %v2156
        %4226 = vmatprep.subr.bf16.mxu0 %v2149
        %4227 = vmatpush2.bf16.msra.mxu0 %v2148
        %4228 = vmatprep.subr.bf16.mxu0 %v2141
        %4229 = vmatpush2.bf16.msra.mxu0 %v2140
        %4230 = vmatprep.mubr.bf16.mxu0 %v3935
        %4231 = vmatmul.mubr.bf16.gmra.mxu0 %v3934
        %v4232 = vpop.f32.mrf.mxu0
        %v4233 = vadd.f32 %v899, %v4232
        %v4234 = vpop.f32.mrf.mxu0
        %v4235 = vadd.f32 %v903, %v4234
        %v4236 = vpop.f32.mrf.mxu0
        %v4237 = vadd.f32 %v899, %v4236
        %v4238 = vpop.f32.mrf.mxu0
        %v4239 = vadd.f32 %v903, %v4238
        %4240 = vdwg.mxu0
        %4241 = vmatprep.subr.bf16.mxu0 %v2261
        %4242 = vmatpush1.bf16.msra.mxu0 %v2260
        %4243 = vmatprep.subr.bf16.mxu0 %v2253
        %4244 = vmatpush1.bf16.msra.mxu0 %v2252
        %4245 = vmatprep.subr.bf16.mxu0 %v2245
        %4246 = vmatpush1.bf16.msra.mxu0 %v2244
        %4247 = vmatprep.subr.bf16.mxu0 %v2237
        %4248 = vmatpush1.bf16.msra.mxu0 %v2236
        %4249 = vmatprep.subr.bf16.mxu0 %v2229
        %4250 = vmatpush1.bf16.msra.mxu0 %v2228
        %4251 = vmatprep.subr.bf16.mxu0 %v2221
        %4252 = vmatpush1.bf16.msra.mxu0 %v2220
        %4253 = vmatprep.subr.bf16.mxu0 %v2213
        %4254 = vmatpush1.bf16.msra.mxu0 %v2212
        %4255 = vmatprep.subr.bf16.mxu0 %v2205
        %4256 = vmatpush1.bf16.msra.mxu0 %v2204
        %4257 = vmatprep.subr.bf16.mxu0 %v2325
        %4258 = vmatpush2.bf16.msra.mxu0 %v2324
        %4259 = vmatprep.subr.bf16.mxu0 %v2317
        %4260 = vmatpush2.bf16.msra.mxu0 %v2316
        %4261 = vmatprep.subr.bf16.mxu0 %v2309
        %4262 = vmatpush2.bf16.msra.mxu0 %v2308
        %4263 = vmatprep.subr.bf16.mxu0 %v2301
        %4264 = vmatpush2.bf16.msra.mxu0 %v2300
        %4265 = vmatprep.subr.bf16.mxu0 %v2293
        %4266 = vmatpush2.bf16.msra.mxu0 %v2292
        %4267 = vmatprep.subr.bf16.mxu0 %v2285
        %4268 = vmatpush2.bf16.msra.mxu0 %v2284
        %4269 = vmatprep.subr.bf16.mxu0 %v2277
        %4270 = vmatpush2.bf16.msra.mxu0 %v2276
        %4271 = vmatprep.subr.bf16.mxu0 %v2269
        %4272 = vmatpush2.bf16.msra.mxu0 %v2268
        %4273 = vmatprep.mubr.bf16.mxu0 %v3937
        %4274 = vmatmul.mubr.bf16.gmra.mxu0 %v3936
        %v4275 = vpop.f32.mrf.mxu0
        %v4276 = vadd.f32 %v4233, %v4275
        %v4277 = vpop.f32.mrf.mxu0
        %v4278 = vadd.f32 %v4235, %v4277
        %v4279 = vpop.f32.mrf.mxu0
        %v4280 = vadd.f32 %v4237, %v4279
        %v4281 = vpop.f32.mrf.mxu0
        %v4282 = vadd.f32 %v4239, %v4281
        %4283 = vdwg.mxu0
        %4284 = vmatprep.subr.bf16.mxu0 %v2389
        %4285 = vmatpush1.bf16.msra.mxu0 %v2388
        %4286 = vmatprep.subr.bf16.mxu0 %v2381
        %4287 = vmatpush1.bf16.msra.mxu0 %v2380
        %4288 = vmatprep.subr.bf16.mxu0 %v2373
        %4289 = vmatpush1.bf16.msra.mxu0 %v2372
        %4290 = vmatprep.subr.bf16.mxu0 %v2365
        %4291 = vmatpush1.bf16.msra.mxu0 %v2364
        %4292 = vmatprep.subr.bf16.mxu0 %v2357
        %4293 = vmatpush1.bf16.msra.mxu0 %v2356
        %4294 = vmatprep.subr.bf16.mxu0 %v2349
        %4295 = vmatpush1.bf16.msra.mxu0 %v2348
        %4296 = vmatprep.subr.bf16.mxu0 %v2341
        %4297 = vmatpush1.bf16.msra.mxu0 %v2340
        %4298 = vmatprep.subr.bf16.mxu0 %v2333
        %4299 = vmatpush1.bf16.msra.mxu0 %v2332
        %4300 = vmatprep.subr.bf16.mxu0 %v2453
        %4301 = vmatpush2.bf16.msra.mxu0 %v2452
        %4302 = vmatprep.subr.bf16.mxu0 %v2445
        %4303 = vmatpush2.bf16.msra.mxu0 %v2444
        %4304 = vmatprep.subr.bf16.mxu0 %v2437
        %4305 = vmatpush2.bf16.msra.mxu0 %v2436
        %4306 = vmatprep.subr.bf16.mxu0 %v2429
        %4307 = vmatpush2.bf16.msra.mxu0 %v2428
        %4308 = vmatprep.subr.bf16.mxu0 %v2421
        %4309 = vmatpush2.bf16.msra.mxu0 %v2420
        %4310 = vmatprep.subr.bf16.mxu0 %v2413
        %4311 = vmatpush2.bf16.msra.mxu0 %v2412
        %4312 = vmatprep.subr.bf16.mxu0 %v2405
        %4313 = vmatpush2.bf16.msra.mxu0 %v2404
        %4314 = vmatprep.subr.bf16.mxu0 %v2397
        %4315 = vmatpush2.bf16.msra.mxu0 %v2396
        %4316 = vmatprep.mubr.bf16.mxu0 %v3939
        %4317 = vmatmul.mubr.bf16.gmra.mxu0 %v3938
        %v4318 = vpop.f32.mrf.mxu0
        %v4319 = vadd.f32 %v4276, %v4318
        %v4320 = vpop.f32.mrf.mxu0
        %v4321 = vadd.f32 %v4278, %v4320
        %v4322 = vpop.f32.mrf.mxu0
        %v4323 = vadd.f32 %v4280, %v4322
        %v4324 = vpop.f32.mrf.mxu0
        %v4325 = vadd.f32 %v4282, %v4324
        %4326 = vdwg.mxu0
        %4327 = vmatprep.subr.bf16.mxu0 %v2135
        %4328 = vmatpush1.bf16.msra.mxu0 %v2134
        %4329 = vmatprep.subr.bf16.mxu0 %v2127
        %4330 = vmatpush1.bf16.msra.mxu0 %v2126
        %4331 = vmatprep.subr.bf16.mxu0 %v2119
        %4332 = vmatpush1.bf16.msra.mxu0 %v2118
        %4333 = vmatprep.subr.bf16.mxu0 %v2111
        %4334 = vmatpush1.bf16.msra.mxu0 %v2110
        %4335 = vmatprep.subr.bf16.mxu0 %v2103
        %4336 = vmatpush1.bf16.msra.mxu0 %v2102
        %4337 = vmatprep.subr.bf16.mxu0 %v2095
        %4338 = vmatpush1.bf16.msra.mxu0 %v2094
        %4339 = vmatprep.subr.bf16.mxu0 %v2087
        %4340 = vmatpush1.bf16.msra.mxu0 %v2086
        %4341 = vmatprep.subr.bf16.mxu0 %v2079
        %4342 = vmatpush1.bf16.msra.mxu0 %v2078
        %4343 = vmatprep.subr.bf16.mxu0 %v2199
        %4344 = vmatpush2.bf16.msra.mxu0 %v2198
        %4345 = vmatprep.subr.bf16.mxu0 %v2191
        %4346 = vmatpush2.bf16.msra.mxu0 %v2190
        %4347 = vmatprep.subr.bf16.mxu0 %v2183
        %4348 = vmatpush2.bf16.msra.mxu0 %v2182
        %4349 = vmatprep.subr.bf16.mxu0 %v2175
        %4350 = vmatpush2.bf16.msra.mxu0 %v2174
        %4351 = vmatprep.subr.bf16.mxu0 %v2167
        %4352 = vmatpush2.bf16.msra.mxu0 %v2166
        %4353 = vmatprep.subr.bf16.mxu0 %v2159
        %4354 = vmatpush2.bf16.msra.mxu0 %v2158
        %4355 = vmatprep.subr.bf16.mxu0 %v2151
        %4356 = vmatpush2.bf16.msra.mxu0 %v2150
        %4357 = vmatprep.subr.bf16.mxu0 %v2143
        %4358 = vmatpush2.bf16.msra.mxu0 %v2142
        %4359 = vmatprep.mubr.bf16.mxu0 %v3935
        %4360 = vmatmul.mubr.bf16.gmra.mxu0 %v3934
        %v4361 = vpop.f32.mrf.mxu0
        %v4362 = vadd.f32 %v907, %v4361
        %v4363 = vpop.f32.mrf.mxu0
        %v4364 = vadd.f32 %v911, %v4363
        %v4365 = vpop.f32.mrf.mxu0
        %v4366 = vadd.f32 %v907, %v4365
        %v4367 = vpop.f32.mrf.mxu0
        %v4368 = vadd.f32 %v911, %v4367
        %4369 = vdwg.mxu0
        %4370 = vmatprep.subr.bf16.mxu0 %v2263
        %4371 = vmatpush1.bf16.msra.mxu0 %v2262
        %4372 = vmatprep.subr.bf16.mxu0 %v2255
        %4373 = vmatpush1.bf16.msra.mxu0 %v2254
        %4374 = vmatprep.subr.bf16.mxu0 %v2247
        %4375 = vmatpush1.bf16.msra.mxu0 %v2246
        %4376 = vmatprep.subr.bf16.mxu0 %v2239
        %4377 = vmatpush1.bf16.msra.mxu0 %v2238
        %4378 = vmatprep.subr.bf16.mxu0 %v2231
        %4379 = vmatpush1.bf16.msra.mxu0 %v2230
        %4380 = vmatprep.subr.bf16.mxu0 %v2223
        %4381 = vmatpush1.bf16.msra.mxu0 %v2222
        %4382 = vmatprep.subr.bf16.mxu0 %v2215
        %4383 = vmatpush1.bf16.msra.mxu0 %v2214
        %4384 = vmatprep.subr.bf16.mxu0 %v2207
        %4385 = vmatpush1.bf16.msra.mxu0 %v2206
        %4386 = vmatprep.subr.bf16.mxu0 %v2327
        %4387 = vmatpush2.bf16.msra.mxu0 %v2326
        %4388 = vmatprep.subr.bf16.mxu0 %v2319
        %4389 = vmatpush2.bf16.msra.mxu0 %v2318
        %4390 = vmatprep.subr.bf16.mxu0 %v2311
        %4391 = vmatpush2.bf16.msra.mxu0 %v2310
        %4392 = vmatprep.subr.bf16.mxu0 %v2303
        %4393 = vmatpush2.bf16.msra.mxu0 %v2302
        %4394 = vmatprep.subr.bf16.mxu0 %v2295
        %4395 = vmatpush2.bf16.msra.mxu0 %v2294
        %4396 = vmatprep.subr.bf16.mxu0 %v2287
        %4397 = vmatpush2.bf16.msra.mxu0 %v2286
        %4398 = vmatprep.subr.bf16.mxu0 %v2279
        %4399 = vmatpush2.bf16.msra.mxu0 %v2278
        %4400 = vmatprep.subr.bf16.mxu0 %v2271
        %4401 = vmatpush2.bf16.msra.mxu0 %v2270
        %4402 = vmatprep.mubr.bf16.mxu0 %v3937
        %4403 = vmatmul.mubr.bf16.gmra.mxu0 %v3936
        %v4404 = vpop.f32.mrf.mxu0
        %v4405 = vadd.f32 %v4362, %v4404
        %v4406 = vpop.f32.mrf.mxu0
        %v4407 = vadd.f32 %v4364, %v4406
        %v4408 = vpop.f32.mrf.mxu0
        %v4409 = vadd.f32 %v4366, %v4408
        %v4410 = vpop.f32.mrf.mxu0
        %v4411 = vadd.f32 %v4368, %v4410
        %4412 = vdwg.mxu0
        %4413 = vmatprep.subr.bf16.mxu0 %v2391
        %4414 = vmatpush1.bf16.msra.mxu0 %v2390
        %4415 = vmatprep.subr.bf16.mxu0 %v2383
        %4416 = vmatpush1.bf16.msra.mxu0 %v2382
        %4417 = vmatprep.subr.bf16.mxu0 %v2375
        %4418 = vmatpush1.bf16.msra.mxu0 %v2374
        %4419 = vmatprep.subr.bf16.mxu0 %v2367
        %4420 = vmatpush1.bf16.msra.mxu0 %v2366
        %4421 = vmatprep.subr.bf16.mxu0 %v2359
        %4422 = vmatpush1.bf16.msra.mxu0 %v2358
        %4423 = vmatprep.subr.bf16.mxu0 %v2351
        %4424 = vmatpush1.bf16.msra.mxu0 %v2350
        %4425 = vmatprep.subr.bf16.mxu0 %v2343
        %4426 = vmatpush1.bf16.msra.mxu0 %v2342
        %4427 = vmatprep.subr.bf16.mxu0 %v2335
        %4428 = vmatpush1.bf16.msra.mxu0 %v2334
        %4429 = vmatprep.subr.bf16.mxu0 %v2455
        %4430 = vmatpush2.bf16.msra.mxu0 %v2454
        %4431 = vmatprep.subr.bf16.mxu0 %v2447
        %4432 = vmatpush2.bf16.msra.mxu0 %v2446
        %4433 = vmatprep.subr.bf16.mxu0 %v2439
        %4434 = vmatpush2.bf16.msra.mxu0 %v2438
        %4435 = vmatprep.subr.bf16.mxu0 %v2431
        %4436 = vmatpush2.bf16.msra.mxu0 %v2430
        %4437 = vmatprep.subr.bf16.mxu0 %v2423
        %4438 = vmatpush2.bf16.msra.mxu0 %v2422
        %4439 = vmatprep.subr.bf16.mxu0 %v2415
        %4440 = vmatpush2.bf16.msra.mxu0 %v2414
        %4441 = vmatprep.subr.bf16.mxu0 %v2407
        %4442 = vmatpush2.bf16.msra.mxu0 %v2406
        %4443 = vmatprep.subr.bf16.mxu0 %v2399
        %4444 = vmatpush2.bf16.msra.mxu0 %v2398
        %4445 = vmatprep.mubr.bf16.mxu0 %v3939
        %4446 = vmatmul.mubr.bf16.gmra.mxu0 %v3938
        %v4447 = vpop.f32.mrf.mxu0
        %v4448 = vadd.f32 %v4405, %v4447
        %v4449 = vpop.f32.mrf.mxu0
        %v4450 = vadd.f32 %v4407, %v4449
        %v4451 = vpop.f32.mrf.mxu0
        %v4452 = vadd.f32 %v4409, %v4451
        %v4453 = vpop.f32.mrf.mxu0
        %v4454 = vadd.f32 %v4411, %v4453
        %4455 = vdwg.mxu0
        %v4456 = vtanh.pop %v4061
        %v4457 = vtanh.pop %v4063
        %v4458 = vtanh.pop %v4190
        %v4459 = vtanh.pop %v4192
        %v4460 = vtanh.pop %v4319
        %v4461 = vtanh.pop %v4321
        %v4462 = vtanh.pop %v4448
        %v4463 = vtanh.pop %v4450
        %v4464 = vtanh.pop %v4065
        %v4465 = vtanh.pop %v4067
        %v4466 = vtanh.pop %v4194
        %v4467 = vtanh.pop %v4196
        %v4468 = vtanh.pop %v4323
        %v4469 = vtanh.pop %v4325
        %v4470 = vtanh.pop %v4452
        %v4471 = vtanh.pop %v4454
        %v4472 = vsub.f32 %v3906, %v4456
        %v4473 = vsub.f32 %v3907, %v4457
        %v4474 = vsub.f32 %v3908, %v4458
        %v4475 = vsub.f32 %v3909, %v4459
        %v4476 = vsub.f32 %v3910, %v4460
        %v4477 = vsub.f32 %v3911, %v4461
        %v4478 = vsub.f32 %v3912, %v4462
        %v4479 = vsub.f32 %v3913, %v4463
        %v4480 = vsub.f32 %v3914, %v4464
        %v4481 = vsub.f32 %v3915, %v4465
        %v4482 = vsub.f32 %v3916, %v4466
        %v4483 = vsub.f32 %v3917, %v4467
        %v4484 = vsub.f32 %v3918, %v4468
        %v4485 = vsub.f32 %v3919, %v4469
        %v4486 = vsub.f32 %v3920, %v4470
        %v4487 = vsub.f32 %v3921, %v4471
        %v4488 = vadd.f32 %v3356, %v4472
        %v4489 = vadd.f32 %v3357, %v4473
        %v4490 = vadd.f32 %v3358, %v4474
        %v4491 = vadd.f32 %v3359, %v4475
        %v4492 = vadd.f32 %v3360, %v4476
        %v4493 = vadd.f32 %v3361, %v4477
        %v4494 = vadd.f32 %v3362, %v4478
        %v4495 = vadd.f32 %v3363, %v4479
        %v4496 = vadd.f32 %v3364, %v4480
        %v4497 = vadd.f32 %v3365, %v4481
        %v4498 = vadd.f32 %v3366, %v4482
        %v4499 = vadd.f32 %v3367, %v4483
        %v4500 = vadd.f32 %v3368, %v4484
        %v4501 = vadd.f32 %v3369, %v4485
        %v4502 = vadd.f32 %v3370, %v4486
        %v4503 = vadd.f32 %v3371, %v4487
        %v4504 = vpack.c.bf16 %v4496, %v4488
        %v4505 = vpack.c.bf16 %v4497, %v4489
        %v4506 = vpack.c.bf16 %v4498, %v4490
        %v4507 = vpack.c.bf16 %v4499, %v4491
        %v4508 = vpack.c.bf16 %v4500, %v4492
        %v4509 = vpack.c.bf16 %v4501, %v4493
        %v4510 = vpack.c.bf16 %v4502, %v4494
        %v4511 = vpack.c.bf16 %v4503, %v4495
        %v4512 = vld [vmem:[#allocation11] sm:$0xff]
        %v4513 = vld [vmem:[#allocation11 + $0x8] sm:$0xff]
        %v4514 = vld [vmem:[#allocation11 + $0x10] sm:$0xff]
        %v4515 = vld [vmem:[#allocation11 + $0x18] sm:$0xff]
        %v4516 = vld [vmem:[#allocation11 + $0x20] sm:$0xff]
        %v4517 = vld [vmem:[#allocation11 + $0x28] sm:$0xff]
        %v4518 = vld [vmem:[#allocation11 + $0x30] sm:$0xff]
        %v4519 = vld [vmem:[#allocation11 + $0x38] sm:$0xff]
        %v4520 = vld [vmem:[#allocation11 + $0x40] sm:$0xff]
        %v4521 = vld [vmem:[#allocation11 + $0x48] sm:$0xff]
        %v4522 = vld [vmem:[#allocation11 + $0x50] sm:$0xff]
        %v4523 = vld [vmem:[#allocation11 + $0x58] sm:$0xff]
        %v4524 = vld [vmem:[#allocation11 + $0x60] sm:$0xff]
        %v4525 = vld [vmem:[#allocation11 + $0x68] sm:$0xff]
        %v4526 = vld [vmem:[#allocation11 + $0x70] sm:$0xff]
        %v4527 = vld [vmem:[#allocation11 + $0x78] sm:$0xff]
        %v4528 = vld [vmem:[#allocation11 + $0x80] sm:$0xff]
        %v4529 = vld [vmem:[#allocation11 + $0x88] sm:$0xff]
        %v4530 = vld [vmem:[#allocation11 + $0x90] sm:$0xff]
        %v4531 = vld [vmem:[#allocation11 + $0x98] sm:$0xff]
        %v4532 = vld [vmem:[#allocation11 + $0xa0] sm:$0xff]
        %v4533 = vld [vmem:[#allocation11 + $0xa8] sm:$0xff]
        %v4534 = vld [vmem:[#allocation11 + $0xb0] sm:$0xff]
        %v4535 = vld [vmem:[#allocation11 + $0xb8] sm:$0xff]
        %v4536 = vld [vmem:[#allocation11 + $0xc0] sm:$0xff]
        %v4537 = vld [vmem:[#allocation11 + $0xc8] sm:$0xff]
        %v4538 = vld [vmem:[#allocation11 + $0xd0] sm:$0xff]
        %v4539 = vld [vmem:[#allocation11 + $0xd8] sm:$0xff]
        %v4540 = vld [vmem:[#allocation11 + $0xe0] sm:$0xff]
        %v4541 = vld [vmem:[#allocation11 + $0xe8] sm:$0xff]
        %v4542 = vld [vmem:[#allocation11 + $0xf0] sm:$0xff]
        %v4543 = vld [vmem:[#allocation11 + $0xf8] sm:$0xff]
        %v4544 = vld [vmem:[#allocation11 + $0x100] sm:$0xff]
        %v4545 = vld [vmem:[#allocation11 + $0x108] sm:$0xff]
        %v4546 = vld [vmem:[#allocation11 + $0x110] sm:$0xff]
        %v4547 = vld [vmem:[#allocation11 + $0x118] sm:$0xff]
        %v4548 = vld [vmem:[#allocation11 + $0x120] sm:$0xff]
        %v4549 = vld [vmem:[#allocation11 + $0x128] sm:$0xff]
        %v4550 = vld [vmem:[#allocation11 + $0x130] sm:$0xff]
        %v4551 = vld [vmem:[#allocation11 + $0x138] sm:$0xff]
        %v4552 = vld [vmem:[#allocation11 + $0x140] sm:$0xff]
        %v4553 = vld [vmem:[#allocation11 + $0x148] sm:$0xff]
        %v4554 = vld [vmem:[#allocation11 + $0x150] sm:$0xff]
        %v4555 = vld [vmem:[#allocation11 + $0x158] sm:$0xff]
        %v4556 = vld [vmem:[#allocation11 + $0x160] sm:$0xff]
        %v4557 = vld [vmem:[#allocation11 + $0x168] sm:$0xff]
        %v4558 = vld [vmem:[#allocation11 + $0x170] sm:$0xff]
        %v4559 = vld [vmem:[#allocation11 + $0x178] sm:$0xff]
        %v4560 = vld [vmem:[#allocation11 + $0x180] sm:$0xff]
        %v4561 = vld [vmem:[#allocation11 + $0x188] sm:$0xff]
        %v4562 = vld [vmem:[#allocation11 + $0x190] sm:$0xff]
        %v4563 = vld [vmem:[#allocation11 + $0x198] sm:$0xff]
        %v4564 = vld [vmem:[#allocation11 + $0x1a0] sm:$0xff]
        %v4565 = vld [vmem:[#allocation11 + $0x1a8] sm:$0xff]
        %v4566 = vld [vmem:[#allocation11 + $0x1b0] sm:$0xff]
        %v4567 = vld [vmem:[#allocation11 + $0x1b8] sm:$0xff]
        %v4568 = vld [vmem:[#allocation11 + $0x1c0] sm:$0xff]
        %v4569 = vld [vmem:[#allocation11 + $0x1c8] sm:$0xff]
        %v4570 = vld [vmem:[#allocation11 + $0x1d0] sm:$0xff]
        %v4571 = vld [vmem:[#allocation11 + $0x1d8] sm:$0xff]
        %v4572 = vld [vmem:[#allocation11 + $0x1e0] sm:$0xff]
        %v4573 = vld [vmem:[#allocation11 + $0x1e8] sm:$0xff]
        %v4574 = vld [vmem:[#allocation11 + $0x1f0] sm:$0xff]
        %v4575 = vld [vmem:[#allocation11 + $0x1f8] sm:$0xff]
        %v4576 = vld [vmem:[#allocation11 + $0x200] sm:$0xff]
        %v4577 = vld [vmem:[#allocation11 + $0x208] sm:$0xff]
        %v4578 = vld [vmem:[#allocation11 + $0x210] sm:$0xff]
        %v4579 = vld [vmem:[#allocation11 + $0x218] sm:$0xff]
        %v4580 = vld [vmem:[#allocation11 + $0x220] sm:$0xff]
        %v4581 = vld [vmem:[#allocation11 + $0x228] sm:$0xff]
        %v4582 = vld [vmem:[#allocation11 + $0x230] sm:$0xff]
        %v4583 = vld [vmem:[#allocation11 + $0x238] sm:$0xff]
        %v4584 = vld [vmem:[#allocation11 + $0x240] sm:$0xff]
        %v4585 = vld [vmem:[#allocation11 + $0x248] sm:$0xff]
        %v4586 = vld [vmem:[#allocation11 + $0x250] sm:$0xff]
        %v4587 = vld [vmem:[#allocation11 + $0x258] sm:$0xff]
        %v4588 = vld [vmem:[#allocation11 + $0x260] sm:$0xff]
        %v4589 = vld [vmem:[#allocation11 + $0x268] sm:$0xff]
        %v4590 = vld [vmem:[#allocation11 + $0x270] sm:$0xff]
        %v4591 = vld [vmem:[#allocation11 + $0x278] sm:$0xff]
        %v4592 = vld [vmem:[#allocation11 + $0x280] sm:$0xff]
        %v4593 = vld [vmem:[#allocation11 + $0x288] sm:$0xff]
        %v4594 = vld [vmem:[#allocation11 + $0x290] sm:$0xff]
        %v4595 = vld [vmem:[#allocation11 + $0x298] sm:$0xff]
        %v4596 = vld [vmem:[#allocation11 + $0x2a0] sm:$0xff]
        %v4597 = vld [vmem:[#allocation11 + $0x2a8] sm:$0xff]
        %v4598 = vld [vmem:[#allocation11 + $0x2b0] sm:$0xff]
        %v4599 = vld [vmem:[#allocation11 + $0x2b8] sm:$0xff]
        %v4600 = vld [vmem:[#allocation11 + $0x2c0] sm:$0xff]
        %v4601 = vld [vmem:[#allocation11 + $0x2c8] sm:$0xff]
        %v4602 = vld [vmem:[#allocation11 + $0x2d0] sm:$0xff]
        %v4603 = vld [vmem:[#allocation11 + $0x2d8] sm:$0xff]
        %v4604 = vld [vmem:[#allocation11 + $0x2e0] sm:$0xff]
        %v4605 = vld [vmem:[#allocation11 + $0x2e8] sm:$0xff]
        %v4606 = vld [vmem:[#allocation11 + $0x2f0] sm:$0xff]
        %v4607 = vld [vmem:[#allocation11 + $0x2f8] sm:$0xff]
        %v4608 = vld [vmem:[#allocation11 + $0x300] sm:$0xff]
        %v4609 = vld [vmem:[#allocation11 + $0x308] sm:$0xff]
        %v4610 = vld [vmem:[#allocation11 + $0x310] sm:$0xff]
        %v4611 = vld [vmem:[#allocation11 + $0x318] sm:$0xff]
        %v4612 = vld [vmem:[#allocation11 + $0x320] sm:$0xff]
        %v4613 = vld [vmem:[#allocation11 + $0x328] sm:$0xff]
        %v4614 = vld [vmem:[#allocation11 + $0x330] sm:$0xff]
        %v4615 = vld [vmem:[#allocation11 + $0x338] sm:$0xff]
        %v4616 = vld [vmem:[#allocation11 + $0x340] sm:$0xff]
        %v4617 = vld [vmem:[#allocation11 + $0x348] sm:$0xff]
        %v4618 = vld [vmem:[#allocation11 + $0x350] sm:$0xff]
        %v4619 = vld [vmem:[#allocation11 + $0x358] sm:$0xff]
        %v4620 = vld [vmem:[#allocation11 + $0x360] sm:$0xff]
        %v4621 = vld [vmem:[#allocation11 + $0x368] sm:$0xff]
        %v4622 = vld [vmem:[#allocation11 + $0x370] sm:$0xff]
        %v4623 = vld [vmem:[#allocation11 + $0x378] sm:$0xff]
        %v4624 = vld [vmem:[#allocation11 + $0x380] sm:$0xff]
        %v4625 = vld [vmem:[#allocation11 + $0x388] sm:$0xff]
        %v4626 = vld [vmem:[#allocation11 + $0x390] sm:$0xff]
        %v4627 = vld [vmem:[#allocation11 + $0x398] sm:$0xff]
        %v4628 = vld [vmem:[#allocation11 + $0x3a0] sm:$0xff]
        %v4629 = vld [vmem:[#allocation11 + $0x3a8] sm:$0xff]
        %v4630 = vld [vmem:[#allocation11 + $0x3b0] sm:$0xff]
        %v4631 = vld [vmem:[#allocation11 + $0x3b8] sm:$0xff]
        %v4632 = vld [vmem:[#allocation11 + $0x3c0] sm:$0xff]
        %v4633 = vld [vmem:[#allocation11 + $0x3c8] sm:$0xff]
        %v4634 = vld [vmem:[#allocation11 + $0x3d0] sm:$0xff]
        %v4635 = vld [vmem:[#allocation11 + $0x3d8] sm:$0xff]
        %v4636 = vld [vmem:[#allocation11 + $0x3e0] sm:$0xff]
        %v4637 = vld [vmem:[#allocation11 + $0x3e8] sm:$0xff]
        %v4638 = vld [vmem:[#allocation11 + $0x3f0] sm:$0xff]
        %v4639 = vld [vmem:[#allocation11 + $0x3f8] sm:$0xff]
        %v4640 = vld [vmem:[#allocation11 + $0x400] sm:$0xff]
        %v4641 = vld [vmem:[#allocation11 + $0x408] sm:$0xff]
        %v4642 = vld [vmem:[#allocation11 + $0x410] sm:$0xff]
        %v4643 = vld [vmem:[#allocation11 + $0x418] sm:$0xff]
        %v4644 = vld [vmem:[#allocation11 + $0x420] sm:$0xff]
        %v4645 = vld [vmem:[#allocation11 + $0x428] sm:$0xff]
        %v4646 = vld [vmem:[#allocation11 + $0x430] sm:$0xff]
        %v4647 = vld [vmem:[#allocation11 + $0x438] sm:$0xff]
        %v4648 = vld [vmem:[#allocation11 + $0x440] sm:$0xff]
        %v4649 = vld [vmem:[#allocation11 + $0x448] sm:$0xff]
        %v4650 = vld [vmem:[#allocation11 + $0x450] sm:$0xff]
        %v4651 = vld [vmem:[#allocation11 + $0x458] sm:$0xff]
        %v4652 = vld [vmem:[#allocation11 + $0x460] sm:$0xff]
        %v4653 = vld [vmem:[#allocation11 + $0x468] sm:$0xff]
        %v4654 = vld [vmem:[#allocation11 + $0x470] sm:$0xff]
        %v4655 = vld [vmem:[#allocation11 + $0x478] sm:$0xff]
        %v4656 = vld [vmem:[#allocation11 + $0x480] sm:$0xff]
        %v4657 = vld [vmem:[#allocation11 + $0x488] sm:$0xff]
        %v4658 = vld [vmem:[#allocation11 + $0x490] sm:$0xff]
        %v4659 = vld [vmem:[#allocation11 + $0x498] sm:$0xff]
        %v4660 = vld [vmem:[#allocation11 + $0x4a0] sm:$0xff]
        %v4661 = vld [vmem:[#allocation11 + $0x4a8] sm:$0xff]
        %v4662 = vld [vmem:[#allocation11 + $0x4b0] sm:$0xff]
        %v4663 = vld [vmem:[#allocation11 + $0x4b8] sm:$0xff]
        %v4664 = vld [vmem:[#allocation11 + $0x4c0] sm:$0xff]
        %v4665 = vld [vmem:[#allocation11 + $0x4c8] sm:$0xff]
        %v4666 = vld [vmem:[#allocation11 + $0x4d0] sm:$0xff]
        %v4667 = vld [vmem:[#allocation11 + $0x4d8] sm:$0xff]
        %v4668 = vld [vmem:[#allocation11 + $0x4e0] sm:$0xff]
        %v4669 = vld [vmem:[#allocation11 + $0x4e8] sm:$0xff]
        %v4670 = vld [vmem:[#allocation11 + $0x4f0] sm:$0xff]
        %v4671 = vld [vmem:[#allocation11 + $0x4f8] sm:$0xff]
        %v4672 = vld [vmem:[#allocation11 + $0x500] sm:$0xff]
        %v4673 = vld [vmem:[#allocation11 + $0x508] sm:$0xff]
        %v4674 = vld [vmem:[#allocation11 + $0x510] sm:$0xff]
        %v4675 = vld [vmem:[#allocation11 + $0x518] sm:$0xff]
        %v4676 = vld [vmem:[#allocation11 + $0x520] sm:$0xff]
        %v4677 = vld [vmem:[#allocation11 + $0x528] sm:$0xff]
        %v4678 = vld [vmem:[#allocation11 + $0x530] sm:$0xff]
        %v4679 = vld [vmem:[#allocation11 + $0x538] sm:$0xff]
        %v4680 = vld [vmem:[#allocation11 + $0x540] sm:$0xff]
        %v4681 = vld [vmem:[#allocation11 + $0x548] sm:$0xff]
        %v4682 = vld [vmem:[#allocation11 + $0x550] sm:$0xff]
        %v4683 = vld [vmem:[#allocation11 + $0x558] sm:$0xff]
        %v4684 = vld [vmem:[#allocation11 + $0x560] sm:$0xff]
        %v4685 = vld [vmem:[#allocation11 + $0x568] sm:$0xff]
        %v4686 = vld [vmem:[#allocation11 + $0x570] sm:$0xff]
        %v4687 = vld [vmem:[#allocation11 + $0x578] sm:$0xff]
        %v4688 = vld [vmem:[#allocation11 + $0x580] sm:$0xff]
        %v4689 = vld [vmem:[#allocation11 + $0x588] sm:$0xff]
        %v4690 = vld [vmem:[#allocation11 + $0x590] sm:$0xff]
        %v4691 = vld [vmem:[#allocation11 + $0x598] sm:$0xff]
        %v4692 = vld [vmem:[#allocation11 + $0x5a0] sm:$0xff]
        %v4693 = vld [vmem:[#allocation11 + $0x5a8] sm:$0xff]
        %v4694 = vld [vmem:[#allocation11 + $0x5b0] sm:$0xff]
        %v4695 = vld [vmem:[#allocation11 + $0x5b8] sm:$0xff]
        %v4696 = vld [vmem:[#allocation11 + $0x5c0] sm:$0xff]
        %v4697 = vld [vmem:[#allocation11 + $0x5c8] sm:$0xff]
        %v4698 = vld [vmem:[#allocation11 + $0x5d0] sm:$0xff]
        %v4699 = vld [vmem:[#allocation11 + $0x5d8] sm:$0xff]
        %v4700 = vld [vmem:[#allocation11 + $0x5e0] sm:$0xff]
        %v4701 = vld [vmem:[#allocation11 + $0x5e8] sm:$0xff]
        %v4702 = vld [vmem:[#allocation11 + $0x5f0] sm:$0xff]
        %v4703 = vld [vmem:[#allocation11 + $0x5f8] sm:$0xff]
        %v4704 = vld [vmem:[#allocation11 + $0x600] sm:$0xff]
        %v4705 = vld [vmem:[#allocation11 + $0x608] sm:$0xff]
        %v4706 = vld [vmem:[#allocation11 + $0x610] sm:$0xff]
        %v4707 = vld [vmem:[#allocation11 + $0x618] sm:$0xff]
        %v4708 = vld [vmem:[#allocation11 + $0x620] sm:$0xff]
        %v4709 = vld [vmem:[#allocation11 + $0x628] sm:$0xff]
        %v4710 = vld [vmem:[#allocation11 + $0x630] sm:$0xff]
        %v4711 = vld [vmem:[#allocation11 + $0x638] sm:$0xff]
        %v4712 = vld [vmem:[#allocation11 + $0x640] sm:$0xff]
        %v4713 = vld [vmem:[#allocation11 + $0x648] sm:$0xff]
        %v4714 = vld [vmem:[#allocation11 + $0x650] sm:$0xff]
        %v4715 = vld [vmem:[#allocation11 + $0x658] sm:$0xff]
        %v4716 = vld [vmem:[#allocation11 + $0x660] sm:$0xff]
        %v4717 = vld [vmem:[#allocation11 + $0x668] sm:$0xff]
        %v4718 = vld [vmem:[#allocation11 + $0x670] sm:$0xff]
        %v4719 = vld [vmem:[#allocation11 + $0x678] sm:$0xff]
        %v4720 = vld [vmem:[#allocation11 + $0x680] sm:$0xff]
        %v4721 = vld [vmem:[#allocation11 + $0x688] sm:$0xff]
        %v4722 = vld [vmem:[#allocation11 + $0x690] sm:$0xff]
        %v4723 = vld [vmem:[#allocation11 + $0x698] sm:$0xff]
        %v4724 = vld [vmem:[#allocation11 + $0x6a0] sm:$0xff]
        %v4725 = vld [vmem:[#allocation11 + $0x6a8] sm:$0xff]
        %v4726 = vld [vmem:[#allocation11 + $0x6b0] sm:$0xff]
        %v4727 = vld [vmem:[#allocation11 + $0x6b8] sm:$0xff]
        %v4728 = vld [vmem:[#allocation11 + $0x6c0] sm:$0xff]
        %v4729 = vld [vmem:[#allocation11 + $0x6c8] sm:$0xff]
        %v4730 = vld [vmem:[#allocation11 + $0x6d0] sm:$0xff]
        %v4731 = vld [vmem:[#allocation11 + $0x6d8] sm:$0xff]
        %v4732 = vld [vmem:[#allocation11 + $0x6e0] sm:$0xff]
        %v4733 = vld [vmem:[#allocation11 + $0x6e8] sm:$0xff]
        %v4734 = vld [vmem:[#allocation11 + $0x6f0] sm:$0xff]
        %v4735 = vld [vmem:[#allocation11 + $0x6f8] sm:$0xff]
        %v4736 = vld [vmem:[#allocation11 + $0x700] sm:$0xff]
        %v4737 = vld [vmem:[#allocation11 + $0x708] sm:$0xff]
        %v4738 = vld [vmem:[#allocation11 + $0x710] sm:$0xff]
        %v4739 = vld [vmem:[#allocation11 + $0x718] sm:$0xff]
        %v4740 = vld [vmem:[#allocation11 + $0x720] sm:$0xff]
        %v4741 = vld [vmem:[#allocation11 + $0x728] sm:$0xff]
        %v4742 = vld [vmem:[#allocation11 + $0x730] sm:$0xff]
        %v4743 = vld [vmem:[#allocation11 + $0x738] sm:$0xff]
        %v4744 = vld [vmem:[#allocation11 + $0x740] sm:$0xff]
        %v4745 = vld [vmem:[#allocation11 + $0x748] sm:$0xff]
        %v4746 = vld [vmem:[#allocation11 + $0x750] sm:$0xff]
        %v4747 = vld [vmem:[#allocation11 + $0x758] sm:$0xff]
        %v4748 = vld [vmem:[#allocation11 + $0x760] sm:$0xff]
        %v4749 = vld [vmem:[#allocation11 + $0x768] sm:$0xff]
        %v4750 = vld [vmem:[#allocation11 + $0x770] sm:$0xff]
        %v4751 = vld [vmem:[#allocation11 + $0x778] sm:$0xff]
        %v4752 = vld [vmem:[#allocation11 + $0x780] sm:$0xff]
        %v4753 = vld [vmem:[#allocation11 + $0x788] sm:$0xff]
        %v4754 = vld [vmem:[#allocation11 + $0x790] sm:$0xff]
        %v4755 = vld [vmem:[#allocation11 + $0x798] sm:$0xff]
        %v4756 = vld [vmem:[#allocation11 + $0x7a0] sm:$0xff]
        %v4757 = vld [vmem:[#allocation11 + $0x7a8] sm:$0xff]
        %v4758 = vld [vmem:[#allocation11 + $0x7b0] sm:$0xff]
        %v4759 = vld [vmem:[#allocation11 + $0x7b8] sm:$0xff]
        %v4760 = vld [vmem:[#allocation11 + $0x7c0] sm:$0xff]
        %v4761 = vld [vmem:[#allocation11 + $0x7c8] sm:$0xff]
        %v4762 = vld [vmem:[#allocation11 + $0x7d0] sm:$0xff]
        %v4763 = vld [vmem:[#allocation11 + $0x7d8] sm:$0xff]
        %v4764 = vld [vmem:[#allocation11 + $0x7e0] sm:$0xff]
        %v4765 = vld [vmem:[#allocation11 + $0x7e8] sm:$0xff]
        %v4766 = vld [vmem:[#allocation11 + $0x7f0] sm:$0xff]
        %v4767 = vld [vmem:[#allocation11 + $0x7f8] sm:$0xff]
        %v4768 = vld [vmem:[#allocation11 + $0x800] sm:$0xff]
        %v4769 = vld [vmem:[#allocation11 + $0x808] sm:$0xff]
        %v4770 = vld [vmem:[#allocation11 + $0x810] sm:$0xff]
        %v4771 = vld [vmem:[#allocation11 + $0x818] sm:$0xff]
        %v4772 = vld [vmem:[#allocation11 + $0x820] sm:$0xff]
        %v4773 = vld [vmem:[#allocation11 + $0x828] sm:$0xff]
        %v4774 = vld [vmem:[#allocation11 + $0x830] sm:$0xff]
        %v4775 = vld [vmem:[#allocation11 + $0x838] sm:$0xff]
        %v4776 = vld [vmem:[#allocation11 + $0x840] sm:$0xff]
        %v4777 = vld [vmem:[#allocation11 + $0x848] sm:$0xff]
        %v4778 = vld [vmem:[#allocation11 + $0x850] sm:$0xff]
        %v4779 = vld [vmem:[#allocation11 + $0x858] sm:$0xff]
        %v4780 = vld [vmem:[#allocation11 + $0x860] sm:$0xff]
        %v4781 = vld [vmem:[#allocation11 + $0x868] sm:$0xff]
        %v4782 = vld [vmem:[#allocation11 + $0x870] sm:$0xff]
        %v4783 = vld [vmem:[#allocation11 + $0x878] sm:$0xff]
        %v4784 = vld [vmem:[#allocation11 + $0x880] sm:$0xff]
        %v4785 = vld [vmem:[#allocation11 + $0x888] sm:$0xff]
        %v4786 = vld [vmem:[#allocation11 + $0x890] sm:$0xff]
        %v4787 = vld [vmem:[#allocation11 + $0x898] sm:$0xff]
        %v4788 = vld [vmem:[#allocation11 + $0x8a0] sm:$0xff]
        %v4789 = vld [vmem:[#allocation11 + $0x8a8] sm:$0xff]
        %v4790 = vld [vmem:[#allocation11 + $0x8b0] sm:$0xff]
        %v4791 = vld [vmem:[#allocation11 + $0x8b8] sm:$0xff]
        %v4792 = vld [vmem:[#allocation11 + $0x8c0] sm:$0xff]
        %v4793 = vld [vmem:[#allocation11 + $0x8c8] sm:$0xff]
        %v4794 = vld [vmem:[#allocation11 + $0x8d0] sm:$0xff]
        %v4795 = vld [vmem:[#allocation11 + $0x8d8] sm:$0xff]
        %v4796 = vld [vmem:[#allocation11 + $0x8e0] sm:$0xff]
        %v4797 = vld [vmem:[#allocation11 + $0x8e8] sm:$0xff]
        %v4798 = vld [vmem:[#allocation11 + $0x8f0] sm:$0xff]
        %v4799 = vld [vmem:[#allocation11 + $0x8f8] sm:$0xff]
        %v4800 = vld [vmem:[#allocation11 + $0x900] sm:$0xff]
        %v4801 = vld [vmem:[#allocation11 + $0x908] sm:$0xff]
        %v4802 = vld [vmem:[#allocation11 + $0x910] sm:$0xff]
        %v4803 = vld [vmem:[#allocation11 + $0x918] sm:$0xff]
        %v4804 = vld [vmem:[#allocation11 + $0x920] sm:$0xff]
        %v4805 = vld [vmem:[#allocation11 + $0x928] sm:$0xff]
        %v4806 = vld [vmem:[#allocation11 + $0x930] sm:$0xff]
        %v4807 = vld [vmem:[#allocation11 + $0x938] sm:$0xff]
        %v4808 = vld [vmem:[#allocation11 + $0x940] sm:$0xff]
        %v4809 = vld [vmem:[#allocation11 + $0x948] sm:$0xff]
        %v4810 = vld [vmem:[#allocation11 + $0x950] sm:$0xff]
        %v4811 = vld [vmem:[#allocation11 + $0x958] sm:$0xff]
        %v4812 = vld [vmem:[#allocation11 + $0x960] sm:$0xff]
        %v4813 = vld [vmem:[#allocation11 + $0x968] sm:$0xff]
        %v4814 = vld [vmem:[#allocation11 + $0x970] sm:$0xff]
        %v4815 = vld [vmem:[#allocation11 + $0x978] sm:$0xff]
        %v4816 = vld [vmem:[#allocation11 + $0x980] sm:$0xff]
        %v4817 = vld [vmem:[#allocation11 + $0x988] sm:$0xff]
        %v4818 = vld [vmem:[#allocation11 + $0x990] sm:$0xff]
        %v4819 = vld [vmem:[#allocation11 + $0x998] sm:$0xff]
        %v4820 = vld [vmem:[#allocation11 + $0x9a0] sm:$0xff]
        %v4821 = vld [vmem:[#allocation11 + $0x9a8] sm:$0xff]
        %v4822 = vld [vmem:[#allocation11 + $0x9b0] sm:$0xff]
        %v4823 = vld [vmem:[#allocation11 + $0x9b8] sm:$0xff]
        %v4824 = vld [vmem:[#allocation11 + $0x9c0] sm:$0xff]
        %v4825 = vld [vmem:[#allocation11 + $0x9c8] sm:$0xff]
        %v4826 = vld [vmem:[#allocation11 + $0x9d0] sm:$0xff]
        %v4827 = vld [vmem:[#allocation11 + $0x9d8] sm:$0xff]
        %v4828 = vld [vmem:[#allocation11 + $0x9e0] sm:$0xff]
        %v4829 = vld [vmem:[#allocation11 + $0x9e8] sm:$0xff]
        %v4830 = vld [vmem:[#allocation11 + $0x9f0] sm:$0xff]
        %v4831 = vld [vmem:[#allocation11 + $0x9f8] sm:$0xff]
        %v4832 = vld [vmem:[#allocation11 + $0xa00] sm:$0xff]
        %v4833 = vld [vmem:[#allocation11 + $0xa08] sm:$0xff]
        %v4834 = vld [vmem:[#allocation11 + $0xa10] sm:$0xff]
        %v4835 = vld [vmem:[#allocation11 + $0xa18] sm:$0xff]
        %v4836 = vld [vmem:[#allocation11 + $0xa20] sm:$0xff]
        %v4837 = vld [vmem:[#allocation11 + $0xa28] sm:$0xff]
        %v4838 = vld [vmem:[#allocation11 + $0xa30] sm:$0xff]
        %v4839 = vld [vmem:[#allocation11 + $0xa38] sm:$0xff]
        %v4840 = vld [vmem:[#allocation11 + $0xa40] sm:$0xff]
        %v4841 = vld [vmem:[#allocation11 + $0xa48] sm:$0xff]
        %v4842 = vld [vmem:[#allocation11 + $0xa50] sm:$0xff]
        %v4843 = vld [vmem:[#allocation11 + $0xa58] sm:$0xff]
        %v4844 = vld [vmem:[#allocation11 + $0xa60] sm:$0xff]
        %v4845 = vld [vmem:[#allocation11 + $0xa68] sm:$0xff]
        %v4846 = vld [vmem:[#allocation11 + $0xa70] sm:$0xff]
        %v4847 = vld [vmem:[#allocation11 + $0xa78] sm:$0xff]
        %v4848 = vld [vmem:[#allocation11 + $0xa80] sm:$0xff]
        %v4849 = vld [vmem:[#allocation11 + $0xa88] sm:$0xff]
        %v4850 = vld [vmem:[#allocation11 + $0xa90] sm:$0xff]
        %v4851 = vld [vmem:[#allocation11 + $0xa98] sm:$0xff]
        %v4852 = vld [vmem:[#allocation11 + $0xaa0] sm:$0xff]
        %v4853 = vld [vmem:[#allocation11 + $0xaa8] sm:$0xff]
        %v4854 = vld [vmem:[#allocation11 + $0xab0] sm:$0xff]
        %v4855 = vld [vmem:[#allocation11 + $0xab8] sm:$0xff]
        %v4856 = vld [vmem:[#allocation11 + $0xac0] sm:$0xff]
        %v4857 = vld [vmem:[#allocation11 + $0xac8] sm:$0xff]
        %v4858 = vld [vmem:[#allocation11 + $0xad0] sm:$0xff]
        %v4859 = vld [vmem:[#allocation11 + $0xad8] sm:$0xff]
        %v4860 = vld [vmem:[#allocation11 + $0xae0] sm:$0xff]
        %v4861 = vld [vmem:[#allocation11 + $0xae8] sm:$0xff]
        %v4862 = vld [vmem:[#allocation11 + $0xaf0] sm:$0xff]
        %v4863 = vld [vmem:[#allocation11 + $0xaf8] sm:$0xff]
        %v4864 = vld [vmem:[#allocation11 + $0xb00] sm:$0xff]
        %v4865 = vld [vmem:[#allocation11 + $0xb08] sm:$0xff]
        %v4866 = vld [vmem:[#allocation11 + $0xb10] sm:$0xff]
        %v4867 = vld [vmem:[#allocation11 + $0xb18] sm:$0xff]
        %v4868 = vld [vmem:[#allocation11 + $0xb20] sm:$0xff]
        %v4869 = vld [vmem:[#allocation11 + $0xb28] sm:$0xff]
        %v4870 = vld [vmem:[#allocation11 + $0xb30] sm:$0xff]
        %v4871 = vld [vmem:[#allocation11 + $0xb38] sm:$0xff]
        %v4872 = vld [vmem:[#allocation11 + $0xb40] sm:$0xff]
        %v4873 = vld [vmem:[#allocation11 + $0xb48] sm:$0xff]
        %v4874 = vld [vmem:[#allocation11 + $0xb50] sm:$0xff]
        %v4875 = vld [vmem:[#allocation11 + $0xb58] sm:$0xff]
        %v4876 = vld [vmem:[#allocation11 + $0xb60] sm:$0xff]
        %v4877 = vld [vmem:[#allocation11 + $0xb68] sm:$0xff]
        %v4878 = vld [vmem:[#allocation11 + $0xb70] sm:$0xff]
        %v4879 = vld [vmem:[#allocation11 + $0xb78] sm:$0xff]
        %v4880 = vld [vmem:[#allocation11 + $0xb80] sm:$0xff]
        %v4881 = vld [vmem:[#allocation11 + $0xb88] sm:$0xff]
        %v4882 = vld [vmem:[#allocation11 + $0xb90] sm:$0xff]
        %v4883 = vld [vmem:[#allocation11 + $0xb98] sm:$0xff]
        %v4884 = vld [vmem:[#allocation11 + $0xba0] sm:$0xff]
        %v4885 = vld [vmem:[#allocation11 + $0xba8] sm:$0xff]
        %v4886 = vld [vmem:[#allocation11 + $0xbb0] sm:$0xff]
        %v4887 = vld [vmem:[#allocation11 + $0xbb8] sm:$0xff]
        %v4888 = vld [vmem:[#allocation11 + $0xbc0] sm:$0xff]
        %v4889 = vld [vmem:[#allocation11 + $0xbc8] sm:$0xff]
        %v4890 = vld [vmem:[#allocation11 + $0xbd0] sm:$0xff]
        %v4891 = vld [vmem:[#allocation11 + $0xbd8] sm:$0xff]
        %v4892 = vld [vmem:[#allocation11 + $0xbe0] sm:$0xff]
        %v4893 = vld [vmem:[#allocation11 + $0xbe8] sm:$0xff]
        %v4894 = vld [vmem:[#allocation11 + $0xbf0] sm:$0xff]
        %v4895 = vld [vmem:[#allocation11 + $0xbf8] sm:$0xff]
        %v4896 = vld [vmem:[#allocation13] sm:$0x3f]
        %v4898 = vlaneseq
        %v4899 = vshrl.u32 %v4898, 7
        %v4900 = vsub.s32 0, %v4899
        %v4901 = vrot.slane %v4896, %v4900
        %v4902 = vlaneseq
        %v4903 = vshrl.u32 %v4902, 7
        %v4904 = vsub.s32 1, %v4903
        %v4905 = vrot.slane %v4896, %v4904
        %v4906 = vlaneseq
        %v4907 = vshrl.u32 %v4906, 7
        %v4908 = vsub.s32 2, %v4907
        %v4909 = vrot.slane %v4896, %v4908
        %v4910 = vlaneseq
        %v4911 = vshrl.u32 %v4910, 7
        %v4912 = vsub.s32 3, %v4911
        %v4913 = vrot.slane %v4896, %v4912
        %v4914 = vlaneseq
        %v4915 = vshrl.u32 %v4914, 7
        %v4916 = vsub.s32 4, %v4915
        %v4917 = vrot.slane %v4896, %v4916
        %v4918 = vlaneseq
        %v4919 = vshrl.u32 %v4918, 7
        %v4920 = vsub.s32 5, %v4919
        %v4921 = vrot.slane %v4896, %v4920
        %v5312 = vunpack.c.l.b16 %v4512
        %v5313 = vunpack.c.h.b16 %v4512
        %v5314 = vunpack.c.l.b16 %v4513
        %v5315 = vunpack.c.h.b16 %v4513
        %v5316 = vunpack.c.l.b16 %v4514
        %v5317 = vunpack.c.h.b16 %v4514
        %v5318 = vunpack.c.l.b16 %v4515
        %v5319 = vunpack.c.h.b16 %v4515
        %v5320 = vunpack.c.l.b16 %v4516
        %v5321 = vunpack.c.h.b16 %v4516
        %v5322 = vunpack.c.l.b16 %v4517
        %v5323 = vunpack.c.h.b16 %v4517
        %v5324 = vunpack.c.l.b16 %v4518
        %v5325 = vunpack.c.h.b16 %v4518
        %v5326 = vunpack.c.l.b16 %v4519
        %v5327 = vunpack.c.h.b16 %v4519
        %v5328 = vunpack.c.l.b16 %v4520
        %v5329 = vunpack.c.h.b16 %v4520
        %v5330 = vunpack.c.l.b16 %v4521
        %v5331 = vunpack.c.h.b16 %v4521
        %v5332 = vunpack.c.l.b16 %v4522
        %v5333 = vunpack.c.h.b16 %v4522
        %v5334 = vunpack.c.l.b16 %v4523
        %v5335 = vunpack.c.h.b16 %v4523
        %v5336 = vunpack.c.l.b16 %v4524
        %v5337 = vunpack.c.h.b16 %v4524
        %v5338 = vunpack.c.l.b16 %v4525
        %v5339 = vunpack.c.h.b16 %v4525
        %v5340 = vunpack.c.l.b16 %v4526
        %v5341 = vunpack.c.h.b16 %v4526
        %v5342 = vunpack.c.l.b16 %v4527
        %v5343 = vunpack.c.h.b16 %v4527
        %v5344 = vunpack.c.l.b16 %v4528
        %v5345 = vunpack.c.h.b16 %v4528
        %v5346 = vunpack.c.l.b16 %v4529
        %v5347 = vunpack.c.h.b16 %v4529
        %v5348 = vunpack.c.l.b16 %v4530
        %v5349 = vunpack.c.h.b16 %v4530
        %v5350 = vunpack.c.l.b16 %v4531
        %v5351 = vunpack.c.h.b16 %v4531
        %v5352 = vunpack.c.l.b16 %v4532
        %v5353 = vunpack.c.h.b16 %v4532
        %v5354 = vunpack.c.l.b16 %v4533
        %v5355 = vunpack.c.h.b16 %v4533
        %v5356 = vunpack.c.l.b16 %v4534
        %v5357 = vunpack.c.h.b16 %v4534
        %v5358 = vunpack.c.l.b16 %v4535
        %v5359 = vunpack.c.h.b16 %v4535
        %v5360 = vunpack.c.l.b16 %v4536
        %v5361 = vunpack.c.h.b16 %v4536
        %v5362 = vunpack.c.l.b16 %v4537
        %v5363 = vunpack.c.h.b16 %v4537
        %v5364 = vunpack.c.l.b16 %v4538
        %v5365 = vunpack.c.h.b16 %v4538
        %v5366 = vunpack.c.l.b16 %v4539
        %v5367 = vunpack.c.h.b16 %v4539
        %v5368 = vunpack.c.l.b16 %v4540
        %v5369 = vunpack.c.h.b16 %v4540
        %v5370 = vunpack.c.l.b16 %v4541
        %v5371 = vunpack.c.h.b16 %v4541
        %v5372 = vunpack.c.l.b16 %v4542
        %v5373 = vunpack.c.h.b16 %v4542
        %v5374 = vunpack.c.l.b16 %v4543
        %v5375 = vunpack.c.h.b16 %v4543
        %v5376 = vunpack.c.l.b16 %v4544
        %v5377 = vunpack.c.h.b16 %v4544
        %v5378 = vunpack.c.l.b16 %v4545
        %v5379 = vunpack.c.h.b16 %v4545
        %v5380 = vunpack.c.l.b16 %v4546
        %v5381 = vunpack.c.h.b16 %v4546
        %v5382 = vunpack.c.l.b16 %v4547
        %v5383 = vunpack.c.h.b16 %v4547
        %v5384 = vunpack.c.l.b16 %v4548
        %v5385 = vunpack.c.h.b16 %v4548
        %v5386 = vunpack.c.l.b16 %v4549
        %v5387 = vunpack.c.h.b16 %v4549
        %v5388 = vunpack.c.l.b16 %v4550
        %v5389 = vunpack.c.h.b16 %v4550
        %v5390 = vunpack.c.l.b16 %v4551
        %v5391 = vunpack.c.h.b16 %v4551
        %v5392 = vunpack.c.l.b16 %v4552
        %v5393 = vunpack.c.h.b16 %v4552
        %v5394 = vunpack.c.l.b16 %v4553
        %v5395 = vunpack.c.h.b16 %v4553
        %v5396 = vunpack.c.l.b16 %v4554
        %v5397 = vunpack.c.h.b16 %v4554
        %v5398 = vunpack.c.l.b16 %v4555
        %v5399 = vunpack.c.h.b16 %v4555
        %v5400 = vunpack.c.l.b16 %v4556
        %v5401 = vunpack.c.h.b16 %v4556
        %v5402 = vunpack.c.l.b16 %v4557
        %v5403 = vunpack.c.h.b16 %v4557
        %v5404 = vunpack.c.l.b16 %v4558
        %v5405 = vunpack.c.h.b16 %v4558
        %v5406 = vunpack.c.l.b16 %v4559
        %v5407 = vunpack.c.h.b16 %v4559
        %v5408 = vunpack.c.l.b16 %v4560
        %v5409 = vunpack.c.h.b16 %v4560
        %v5410 = vunpack.c.l.b16 %v4561
        %v5411 = vunpack.c.h.b16 %v4561
        %v5412 = vunpack.c.l.b16 %v4562
        %v5413 = vunpack.c.h.b16 %v4562
        %v5414 = vunpack.c.l.b16 %v4563
        %v5415 = vunpack.c.h.b16 %v4563
        %v5416 = vunpack.c.l.b16 %v4564
        %v5417 = vunpack.c.h.b16 %v4564
        %v5418 = vunpack.c.l.b16 %v4565
        %v5419 = vunpack.c.h.b16 %v4565
        %v5420 = vunpack.c.l.b16 %v4566
        %v5421 = vunpack.c.h.b16 %v4566
        %v5422 = vunpack.c.l.b16 %v4567
        %v5423 = vunpack.c.h.b16 %v4567
        %v5424 = vunpack.c.l.b16 %v4568
        %v5425 = vunpack.c.h.b16 %v4568
        %v5426 = vunpack.c.l.b16 %v4569
        %v5427 = vunpack.c.h.b16 %v4569
        %v5428 = vunpack.c.l.b16 %v4570
        %v5429 = vunpack.c.h.b16 %v4570
        %v5430 = vunpack.c.l.b16 %v4571
        %v5431 = vunpack.c.h.b16 %v4571
        %v5432 = vunpack.c.l.b16 %v4572
        %v5433 = vunpack.c.h.b16 %v4572
        %v5434 = vunpack.c.l.b16 %v4573
        %v5435 = vunpack.c.h.b16 %v4573
        %v5436 = vunpack.c.l.b16 %v4574
        %v5437 = vunpack.c.h.b16 %v4574
        %v5438 = vunpack.c.l.b16 %v4575
        %v5439 = vunpack.c.h.b16 %v4575
        %v5440 = vunpack.c.l.b16 %v4576
        %v5441 = vunpack.c.h.b16 %v4576
        %v5442 = vunpack.c.l.b16 %v4577
        %v5443 = vunpack.c.h.b16 %v4577
        %v5444 = vunpack.c.l.b16 %v4578
        %v5445 = vunpack.c.h.b16 %v4578
        %v5446 = vunpack.c.l.b16 %v4579
        %v5447 = vunpack.c.h.b16 %v4579
        %v5448 = vunpack.c.l.b16 %v4580
        %v5449 = vunpack.c.h.b16 %v4580
        %v5450 = vunpack.c.l.b16 %v4581
        %v5451 = vunpack.c.h.b16 %v4581
        %v5452 = vunpack.c.l.b16 %v4582
        %v5453 = vunpack.c.h.b16 %v4582
        %v5454 = vunpack.c.l.b16 %v4583
        %v5455 = vunpack.c.h.b16 %v4583
        %v5456 = vunpack.c.l.b16 %v4584
        %v5457 = vunpack.c.h.b16 %v4584
        %v5458 = vunpack.c.l.b16 %v4585
        %v5459 = vunpack.c.h.b16 %v4585
        %v5460 = vunpack.c.l.b16 %v4586
        %v5461 = vunpack.c.h.b16 %v4586
        %v5462 = vunpack.c.l.b16 %v4587
        %v5463 = vunpack.c.h.b16 %v4587
        %v5464 = vunpack.c.l.b16 %v4588
        %v5465 = vunpack.c.h.b16 %v4588
        %v5466 = vunpack.c.l.b16 %v4589
        %v5467 = vunpack.c.h.b16 %v4589
        %v5468 = vunpack.c.l.b16 %v4590
        %v5469 = vunpack.c.h.b16 %v4590
        %v5470 = vunpack.c.l.b16 %v4591
        %v5471 = vunpack.c.h.b16 %v4591
        %v5472 = vunpack.c.l.b16 %v4592
        %v5473 = vunpack.c.h.b16 %v4592
        %v5474 = vunpack.c.l.b16 %v4593
        %v5475 = vunpack.c.h.b16 %v4593
        %v5476 = vunpack.c.l.b16 %v4594
        %v5477 = vunpack.c.h.b16 %v4594
        %v5478 = vunpack.c.l.b16 %v4595
        %v5479 = vunpack.c.h.b16 %v4595
        %v5480 = vunpack.c.l.b16 %v4596
        %v5481 = vunpack.c.h.b16 %v4596
        %v5482 = vunpack.c.l.b16 %v4597
        %v5483 = vunpack.c.h.b16 %v4597
        %v5484 = vunpack.c.l.b16 %v4598
        %v5485 = vunpack.c.h.b16 %v4598
        %v5486 = vunpack.c.l.b16 %v4599
        %v5487 = vunpack.c.h.b16 %v4599
        %v5488 = vunpack.c.l.b16 %v4600
        %v5489 = vunpack.c.h.b16 %v4600
        %v5490 = vunpack.c.l.b16 %v4601
        %v5491 = vunpack.c.h.b16 %v4601
        %v5492 = vunpack.c.l.b16 %v4602
        %v5493 = vunpack.c.h.b16 %v4602
        %v5494 = vunpack.c.l.b16 %v4603
        %v5495 = vunpack.c.h.b16 %v4603
        %v5496 = vunpack.c.l.b16 %v4604
        %v5497 = vunpack.c.h.b16 %v4604
        %v5498 = vunpack.c.l.b16 %v4605
        %v5499 = vunpack.c.h.b16 %v4605
        %v5500 = vunpack.c.l.b16 %v4606
        %v5501 = vunpack.c.h.b16 %v4606
        %v5502 = vunpack.c.l.b16 %v4607
        %v5503 = vunpack.c.h.b16 %v4607
        %v5504 = vunpack.c.l.b16 %v4608
        %v5505 = vunpack.c.h.b16 %v4608
        %v5506 = vunpack.c.l.b16 %v4609
        %v5507 = vunpack.c.h.b16 %v4609
        %v5508 = vunpack.c.l.b16 %v4610
        %v5509 = vunpack.c.h.b16 %v4610
        %v5510 = vunpack.c.l.b16 %v4611
        %v5511 = vunpack.c.h.b16 %v4611
        %v5512 = vunpack.c.l.b16 %v4612
        %v5513 = vunpack.c.h.b16 %v4612
        %v5514 = vunpack.c.l.b16 %v4613
        %v5515 = vunpack.c.h.b16 %v4613
        %v5516 = vunpack.c.l.b16 %v4614
        %v5517 = vunpack.c.h.b16 %v4614
        %v5518 = vunpack.c.l.b16 %v4615
        %v5519 = vunpack.c.h.b16 %v4615
        %v5520 = vunpack.c.l.b16 %v4616
        %v5521 = vunpack.c.h.b16 %v4616
        %v5522 = vunpack.c.l.b16 %v4617
        %v5523 = vunpack.c.h.b16 %v4617
        %v5524 = vunpack.c.l.b16 %v4618
        %v5525 = vunpack.c.h.b16 %v4618
        %v5526 = vunpack.c.l.b16 %v4619
        %v5527 = vunpack.c.h.b16 %v4619
        %v5528 = vunpack.c.l.b16 %v4620
        %v5529 = vunpack.c.h.b16 %v4620
        %v5530 = vunpack.c.l.b16 %v4621
        %v5531 = vunpack.c.h.b16 %v4621
        %v5532 = vunpack.c.l.b16 %v4622
        %v5533 = vunpack.c.h.b16 %v4622
        %v5534 = vunpack.c.l.b16 %v4623
        %v5535 = vunpack.c.h.b16 %v4623
        %v5536 = vunpack.c.l.b16 %v4624
        %v5537 = vunpack.c.h.b16 %v4624
        %v5538 = vunpack.c.l.b16 %v4625
        %v5539 = vunpack.c.h.b16 %v4625
        %v5540 = vunpack.c.l.b16 %v4626
        %v5541 = vunpack.c.h.b16 %v4626
        %v5542 = vunpack.c.l.b16 %v4627
        %v5543 = vunpack.c.h.b16 %v4627
        %v5544 = vunpack.c.l.b16 %v4628
        %v5545 = vunpack.c.h.b16 %v4628
        %v5546 = vunpack.c.l.b16 %v4629
        %v5547 = vunpack.c.h.b16 %v4629
        %v5548 = vunpack.c.l.b16 %v4630
        %v5549 = vunpack.c.h.b16 %v4630
        %v5550 = vunpack.c.l.b16 %v4631
        %v5551 = vunpack.c.h.b16 %v4631
        %v5552 = vunpack.c.l.b16 %v4632
        %v5553 = vunpack.c.h.b16 %v4632
        %v5554 = vunpack.c.l.b16 %v4633
        %v5555 = vunpack.c.h.b16 %v4633
        %v5556 = vunpack.c.l.b16 %v4634
        %v5557 = vunpack.c.h.b16 %v4634
        %v5558 = vunpack.c.l.b16 %v4635
        %v5559 = vunpack.c.h.b16 %v4635
        %v5560 = vunpack.c.l.b16 %v4636
        %v5561 = vunpack.c.h.b16 %v4636
        %v5562 = vunpack.c.l.b16 %v4637
        %v5563 = vunpack.c.h.b16 %v4637
        %v5564 = vunpack.c.l.b16 %v4638
        %v5565 = vunpack.c.h.b16 %v4638
        %v5566 = vunpack.c.l.b16 %v4639
        %v5567 = vunpack.c.h.b16 %v4639
        %v5568 = vunpack.c.l.b16 %v4640
        %v5569 = vunpack.c.h.b16 %v4640
        %v5570 = vunpack.c.l.b16 %v4641
        %v5571 = vunpack.c.h.b16 %v4641
        %v5572 = vunpack.c.l.b16 %v4642
        %v5573 = vunpack.c.h.b16 %v4642
        %v5574 = vunpack.c.l.b16 %v4643
        %v5575 = vunpack.c.h.b16 %v4643
        %v5576 = vunpack.c.l.b16 %v4644
        %v5577 = vunpack.c.h.b16 %v4644
        %v5578 = vunpack.c.l.b16 %v4645
        %v5579 = vunpack.c.h.b16 %v4645
        %v5580 = vunpack.c.l.b16 %v4646
        %v5581 = vunpack.c.h.b16 %v4646
        %v5582 = vunpack.c.l.b16 %v4647
        %v5583 = vunpack.c.h.b16 %v4647
        %v5584 = vunpack.c.l.b16 %v4648
        %v5585 = vunpack.c.h.b16 %v4648
        %v5586 = vunpack.c.l.b16 %v4649
        %v5587 = vunpack.c.h.b16 %v4649
        %v5588 = vunpack.c.l.b16 %v4650
        %v5589 = vunpack.c.h.b16 %v4650
        %v5590 = vunpack.c.l.b16 %v4651
        %v5591 = vunpack.c.h.b16 %v4651
        %v5592 = vunpack.c.l.b16 %v4652
        %v5593 = vunpack.c.h.b16 %v4652
        %v5594 = vunpack.c.l.b16 %v4653
        %v5595 = vunpack.c.h.b16 %v4653
        %v5596 = vunpack.c.l.b16 %v4654
        %v5597 = vunpack.c.h.b16 %v4654
        %v5598 = vunpack.c.l.b16 %v4655
        %v5599 = vunpack.c.h.b16 %v4655
        %v5600 = vunpack.c.l.b16 %v4656
        %v5601 = vunpack.c.h.b16 %v4656
        %v5602 = vunpack.c.l.b16 %v4657
        %v5603 = vunpack.c.h.b16 %v4657
        %v5604 = vunpack.c.l.b16 %v4658
        %v5605 = vunpack.c.h.b16 %v4658
        %v5606 = vunpack.c.l.b16 %v4659
        %v5607 = vunpack.c.h.b16 %v4659
        %v5608 = vunpack.c.l.b16 %v4660
        %v5609 = vunpack.c.h.b16 %v4660
        %v5610 = vunpack.c.l.b16 %v4661
        %v5611 = vunpack.c.h.b16 %v4661
        %v5612 = vunpack.c.l.b16 %v4662
        %v5613 = vunpack.c.h.b16 %v4662
        %v5614 = vunpack.c.l.b16 %v4663
        %v5615 = vunpack.c.h.b16 %v4663
        %v5616 = vunpack.c.l.b16 %v4664
        %v5617 = vunpack.c.h.b16 %v4664
        %v5618 = vunpack.c.l.b16 %v4665
        %v5619 = vunpack.c.h.b16 %v4665
        %v5620 = vunpack.c.l.b16 %v4666
        %v5621 = vunpack.c.h.b16 %v4666
        %v5622 = vunpack.c.l.b16 %v4667
        %v5623 = vunpack.c.h.b16 %v4667
        %v5624 = vunpack.c.l.b16 %v4668
        %v5625 = vunpack.c.h.b16 %v4668
        %v5626 = vunpack.c.l.b16 %v4669
        %v5627 = vunpack.c.h.b16 %v4669
        %v5628 = vunpack.c.l.b16 %v4670
        %v5629 = vunpack.c.h.b16 %v4670
        %v5630 = vunpack.c.l.b16 %v4671
        %v5631 = vunpack.c.h.b16 %v4671
        %v5632 = vunpack.c.l.b16 %v4672
        %v5633 = vunpack.c.h.b16 %v4672
        %v5634 = vunpack.c.l.b16 %v4673
        %v5635 = vunpack.c.h.b16 %v4673
        %v5636 = vunpack.c.l.b16 %v4674
        %v5637 = vunpack.c.h.b16 %v4674
        %v5638 = vunpack.c.l.b16 %v4675
        %v5639 = vunpack.c.h.b16 %v4675
        %v5640 = vunpack.c.l.b16 %v4676
        %v5641 = vunpack.c.h.b16 %v4676
        %v5642 = vunpack.c.l.b16 %v4677
        %v5643 = vunpack.c.h.b16 %v4677
        %v5644 = vunpack.c.l.b16 %v4678
        %v5645 = vunpack.c.h.b16 %v4678
        %v5646 = vunpack.c.l.b16 %v4679
        %v5647 = vunpack.c.h.b16 %v4679
        %v5648 = vunpack.c.l.b16 %v4680
        %v5649 = vunpack.c.h.b16 %v4680
        %v5650 = vunpack.c.l.b16 %v4681
        %v5651 = vunpack.c.h.b16 %v4681
        %v5652 = vunpack.c.l.b16 %v4682
        %v5653 = vunpack.c.h.b16 %v4682
        %v5654 = vunpack.c.l.b16 %v4683
        %v5655 = vunpack.c.h.b16 %v4683
        %v5656 = vunpack.c.l.b16 %v4684
        %v5657 = vunpack.c.h.b16 %v4684
        %v5658 = vunpack.c.l.b16 %v4685
        %v5659 = vunpack.c.h.b16 %v4685
        %v5660 = vunpack.c.l.b16 %v4686
        %v5661 = vunpack.c.h.b16 %v4686
        %v5662 = vunpack.c.l.b16 %v4687
        %v5663 = vunpack.c.h.b16 %v4687
        %v5664 = vunpack.c.l.b16 %v4688
        %v5665 = vunpack.c.h.b16 %v4688
        %v5666 = vunpack.c.l.b16 %v4689
        %v5667 = vunpack.c.h.b16 %v4689
        %v5668 = vunpack.c.l.b16 %v4690
        %v5669 = vunpack.c.h.b16 %v4690
        %v5670 = vunpack.c.l.b16 %v4691
        %v5671 = vunpack.c.h.b16 %v4691
        %v5672 = vunpack.c.l.b16 %v4692
        %v5673 = vunpack.c.h.b16 %v4692
        %v5674 = vunpack.c.l.b16 %v4693
        %v5675 = vunpack.c.h.b16 %v4693
        %v5676 = vunpack.c.l.b16 %v4694
        %v5677 = vunpack.c.h.b16 %v4694
        %v5678 = vunpack.c.l.b16 %v4695
        %v5679 = vunpack.c.h.b16 %v4695
        %v5680 = vunpack.c.l.b16 %v4696
        %v5681 = vunpack.c.h.b16 %v4696
        %v5682 = vunpack.c.l.b16 %v4697
        %v5683 = vunpack.c.h.b16 %v4697
        %v5684 = vunpack.c.l.b16 %v4698
        %v5685 = vunpack.c.h.b16 %v4698
        %v5686 = vunpack.c.l.b16 %v4699
        %v5687 = vunpack.c.h.b16 %v4699
        %v5688 = vunpack.c.l.b16 %v4700
        %v5689 = vunpack.c.h.b16 %v4700
        %v5690 = vunpack.c.l.b16 %v4701
        %v5691 = vunpack.c.h.b16 %v4701
        %v5692 = vunpack.c.l.b16 %v4702
        %v5693 = vunpack.c.h.b16 %v4702
        %v5694 = vunpack.c.l.b16 %v4703
        %v5695 = vunpack.c.h.b16 %v4703
        %v5696 = vunpack.c.l.b16 %v4704
        %v5697 = vunpack.c.h.b16 %v4704
        %v5698 = vunpack.c.l.b16 %v4705
        %v5699 = vunpack.c.h.b16 %v4705
        %v5700 = vunpack.c.l.b16 %v4706
        %v5701 = vunpack.c.h.b16 %v4706
        %v5702 = vunpack.c.l.b16 %v4707
        %v5703 = vunpack.c.h.b16 %v4707
        %v5704 = vunpack.c.l.b16 %v4708
        %v5705 = vunpack.c.h.b16 %v4708
        %v5706 = vunpack.c.l.b16 %v4709
        %v5707 = vunpack.c.h.b16 %v4709
        %v5708 = vunpack.c.l.b16 %v4710
        %v5709 = vunpack.c.h.b16 %v4710
        %v5710 = vunpack.c.l.b16 %v4711
        %v5711 = vunpack.c.h.b16 %v4711
        %v5712 = vunpack.c.l.b16 %v4712
        %v5713 = vunpack.c.h.b16 %v4712
        %v5714 = vunpack.c.l.b16 %v4713
        %v5715 = vunpack.c.h.b16 %v4713
        %v5716 = vunpack.c.l.b16 %v4714
        %v5717 = vunpack.c.h.b16 %v4714
        %v5718 = vunpack.c.l.b16 %v4715
        %v5719 = vunpack.c.h.b16 %v4715
        %v5720 = vunpack.c.l.b16 %v4716
        %v5721 = vunpack.c.h.b16 %v4716
        %v5722 = vunpack.c.l.b16 %v4717
        %v5723 = vunpack.c.h.b16 %v4717
        %v5724 = vunpack.c.l.b16 %v4718
        %v5725 = vunpack.c.h.b16 %v4718
        %v5726 = vunpack.c.l.b16 %v4719
        %v5727 = vunpack.c.h.b16 %v4719
        %v5728 = vunpack.c.l.b16 %v4720
        %v5729 = vunpack.c.h.b16 %v4720
        %v5730 = vunpack.c.l.b16 %v4721
        %v5731 = vunpack.c.h.b16 %v4721
        %v5732 = vunpack.c.l.b16 %v4722
        %v5733 = vunpack.c.h.b16 %v4722
        %v5734 = vunpack.c.l.b16 %v4723
        %v5735 = vunpack.c.h.b16 %v4723
        %v5736 = vunpack.c.l.b16 %v4724
        %v5737 = vunpack.c.h.b16 %v4724
        %v5738 = vunpack.c.l.b16 %v4725
        %v5739 = vunpack.c.h.b16 %v4725
        %v5740 = vunpack.c.l.b16 %v4726
        %v5741 = vunpack.c.h.b16 %v4726
        %v5742 = vunpack.c.l.b16 %v4727
        %v5743 = vunpack.c.h.b16 %v4727
        %v5744 = vunpack.c.l.b16 %v4728
        %v5745 = vunpack.c.h.b16 %v4728
        %v5746 = vunpack.c.l.b16 %v4729
        %v5747 = vunpack.c.h.b16 %v4729
        %v5748 = vunpack.c.l.b16 %v4730
        %v5749 = vunpack.c.h.b16 %v4730
        %v5750 = vunpack.c.l.b16 %v4731
        %v5751 = vunpack.c.h.b16 %v4731
        %v5752 = vunpack.c.l.b16 %v4732
        %v5753 = vunpack.c.h.b16 %v4732
        %v5754 = vunpack.c.l.b16 %v4733
        %v5755 = vunpack.c.h.b16 %v4733
        %v5756 = vunpack.c.l.b16 %v4734
        %v5757 = vunpack.c.h.b16 %v4734
        %v5758 = vunpack.c.l.b16 %v4735
        %v5759 = vunpack.c.h.b16 %v4735
        %v5760 = vunpack.c.l.b16 %v4736
        %v5761 = vunpack.c.h.b16 %v4736
        %v5762 = vunpack.c.l.b16 %v4737
        %v5763 = vunpack.c.h.b16 %v4737
        %v5764 = vunpack.c.l.b16 %v4738
        %v5765 = vunpack.c.h.b16 %v4738
        %v5766 = vunpack.c.l.b16 %v4739
        %v5767 = vunpack.c.h.b16 %v4739
        %v5768 = vunpack.c.l.b16 %v4740
        %v5769 = vunpack.c.h.b16 %v4740
        %v5770 = vunpack.c.l.b16 %v4741
        %v5771 = vunpack.c.h.b16 %v4741
        %v5772 = vunpack.c.l.b16 %v4742
        %v5773 = vunpack.c.h.b16 %v4742
        %v5774 = vunpack.c.l.b16 %v4743
        %v5775 = vunpack.c.h.b16 %v4743
        %v5776 = vunpack.c.l.b16 %v4744
        %v5777 = vunpack.c.h.b16 %v4744
        %v5778 = vunpack.c.l.b16 %v4745
        %v5779 = vunpack.c.h.b16 %v4745
        %v5780 = vunpack.c.l.b16 %v4746
        %v5781 = vunpack.c.h.b16 %v4746
        %v5782 = vunpack.c.l.b16 %v4747
        %v5783 = vunpack.c.h.b16 %v4747
        %v5784 = vunpack.c.l.b16 %v4748
        %v5785 = vunpack.c.h.b16 %v4748
        %v5786 = vunpack.c.l.b16 %v4749
        %v5787 = vunpack.c.h.b16 %v4749
        %v5788 = vunpack.c.l.b16 %v4750
        %v5789 = vunpack.c.h.b16 %v4750
        %v5790 = vunpack.c.l.b16 %v4751
        %v5791 = vunpack.c.h.b16 %v4751
        %v5792 = vunpack.c.l.b16 %v4752
        %v5793 = vunpack.c.h.b16 %v4752
        %v5794 = vunpack.c.l.b16 %v4753
        %v5795 = vunpack.c.h.b16 %v4753
        %v5796 = vunpack.c.l.b16 %v4754
        %v5797 = vunpack.c.h.b16 %v4754
        %v5798 = vunpack.c.l.b16 %v4755
        %v5799 = vunpack.c.h.b16 %v4755
        %v5800 = vunpack.c.l.b16 %v4756
        %v5801 = vunpack.c.h.b16 %v4756
        %v5802 = vunpack.c.l.b16 %v4757
        %v5803 = vunpack.c.h.b16 %v4757
        %v5804 = vunpack.c.l.b16 %v4758
        %v5805 = vunpack.c.h.b16 %v4758
        %v5806 = vunpack.c.l.b16 %v4759
        %v5807 = vunpack.c.h.b16 %v4759
        %v5808 = vunpack.c.l.b16 %v4760
        %v5809 = vunpack.c.h.b16 %v4760
        %v5810 = vunpack.c.l.b16 %v4761
        %v5811 = vunpack.c.h.b16 %v4761
        %v5812 = vunpack.c.l.b16 %v4762
        %v5813 = vunpack.c.h.b16 %v4762
        %v5814 = vunpack.c.l.b16 %v4763
        %v5815 = vunpack.c.h.b16 %v4763
        %v5816 = vunpack.c.l.b16 %v4764
        %v5817 = vunpack.c.h.b16 %v4764
        %v5818 = vunpack.c.l.b16 %v4765
        %v5819 = vunpack.c.h.b16 %v4765
        %v5820 = vunpack.c.l.b16 %v4766
        %v5821 = vunpack.c.h.b16 %v4766
        %v5822 = vunpack.c.l.b16 %v4767
        %v5823 = vunpack.c.h.b16 %v4767
        %v5824 = vunpack.c.l.b16 %v4768
        %v5825 = vunpack.c.h.b16 %v4768
        %v5826 = vunpack.c.l.b16 %v4769
        %v5827 = vunpack.c.h.b16 %v4769
        %v5828 = vunpack.c.l.b16 %v4770
        %v5829 = vunpack.c.h.b16 %v4770
        %v5830 = vunpack.c.l.b16 %v4771
        %v5831 = vunpack.c.h.b16 %v4771
        %v5832 = vunpack.c.l.b16 %v4772
        %v5833 = vunpack.c.h.b16 %v4772
        %v5834 = vunpack.c.l.b16 %v4773
        %v5835 = vunpack.c.h.b16 %v4773
        %v5836 = vunpack.c.l.b16 %v4774
        %v5837 = vunpack.c.h.b16 %v4774
        %v5838 = vunpack.c.l.b16 %v4775
        %v5839 = vunpack.c.h.b16 %v4775
        %v5840 = vunpack.c.l.b16 %v4776
        %v5841 = vunpack.c.h.b16 %v4776
        %v5842 = vunpack.c.l.b16 %v4777
        %v5843 = vunpack.c.h.b16 %v4777
        %v5844 = vunpack.c.l.b16 %v4778
        %v5845 = vunpack.c.h.b16 %v4778
        %v5846 = vunpack.c.l.b16 %v4779
        %v5847 = vunpack.c.h.b16 %v4779
        %v5848 = vunpack.c.l.b16 %v4780
        %v5849 = vunpack.c.h.b16 %v4780
        %v5850 = vunpack.c.l.b16 %v4781
        %v5851 = vunpack.c.h.b16 %v4781
        %v5852 = vunpack.c.l.b16 %v4782
        %v5853 = vunpack.c.h.b16 %v4782
        %v5854 = vunpack.c.l.b16 %v4783
        %v5855 = vunpack.c.h.b16 %v4783
        %v5856 = vunpack.c.l.b16 %v4784
        %v5857 = vunpack.c.h.b16 %v4784
        %v5858 = vunpack.c.l.b16 %v4785
        %v5859 = vunpack.c.h.b16 %v4785
        %v5860 = vunpack.c.l.b16 %v4786
        %v5861 = vunpack.c.h.b16 %v4786
        %v5862 = vunpack.c.l.b16 %v4787
        %v5863 = vunpack.c.h.b16 %v4787
        %v5864 = vunpack.c.l.b16 %v4788
        %v5865 = vunpack.c.h.b16 %v4788
        %v5866 = vunpack.c.l.b16 %v4789
        %v5867 = vunpack.c.h.b16 %v4789
        %v5868 = vunpack.c.l.b16 %v4790
        %v5869 = vunpack.c.h.b16 %v4790
        %v5870 = vunpack.c.l.b16 %v4791
        %v5871 = vunpack.c.h.b16 %v4791
        %v5872 = vunpack.c.l.b16 %v4792
        %v5873 = vunpack.c.h.b16 %v4792
        %v5874 = vunpack.c.l.b16 %v4793
        %v5875 = vunpack.c.h.b16 %v4793
        %v5876 = vunpack.c.l.b16 %v4794
        %v5877 = vunpack.c.h.b16 %v4794
        %v5878 = vunpack.c.l.b16 %v4795
        %v5879 = vunpack.c.h.b16 %v4795
        %v5880 = vunpack.c.l.b16 %v4796
        %v5881 = vunpack.c.h.b16 %v4796
        %v5882 = vunpack.c.l.b16 %v4797
        %v5883 = vunpack.c.h.b16 %v4797
        %v5884 = vunpack.c.l.b16 %v4798
        %v5885 = vunpack.c.h.b16 %v4798
        %v5886 = vunpack.c.l.b16 %v4799
        %v5887 = vunpack.c.h.b16 %v4799
        %v5888 = vunpack.c.l.b16 %v4800
        %v5889 = vunpack.c.h.b16 %v4800
        %v5890 = vunpack.c.l.b16 %v4801
        %v5891 = vunpack.c.h.b16 %v4801
        %v5892 = vunpack.c.l.b16 %v4802
        %v5893 = vunpack.c.h.b16 %v4802
        %v5894 = vunpack.c.l.b16 %v4803
        %v5895 = vunpack.c.h.b16 %v4803
        %v5896 = vunpack.c.l.b16 %v4804
        %v5897 = vunpack.c.h.b16 %v4804
        %v5898 = vunpack.c.l.b16 %v4805
        %v5899 = vunpack.c.h.b16 %v4805
        %v5900 = vunpack.c.l.b16 %v4806
        %v5901 = vunpack.c.h.b16 %v4806
        %v5902 = vunpack.c.l.b16 %v4807
        %v5903 = vunpack.c.h.b16 %v4807
        %v5904 = vunpack.c.l.b16 %v4808
        %v5905 = vunpack.c.h.b16 %v4808
        %v5906 = vunpack.c.l.b16 %v4809
        %v5907 = vunpack.c.h.b16 %v4809
        %v5908 = vunpack.c.l.b16 %v4810
        %v5909 = vunpack.c.h.b16 %v4810
        %v5910 = vunpack.c.l.b16 %v4811
        %v5911 = vunpack.c.h.b16 %v4811
        %v5912 = vunpack.c.l.b16 %v4812
        %v5913 = vunpack.c.h.b16 %v4812
        %v5914 = vunpack.c.l.b16 %v4813
        %v5915 = vunpack.c.h.b16 %v4813
        %v5916 = vunpack.c.l.b16 %v4814
        %v5917 = vunpack.c.h.b16 %v4814
        %v5918 = vunpack.c.l.b16 %v4815
        %v5919 = vunpack.c.h.b16 %v4815
        %v5920 = vunpack.c.l.b16 %v4816
        %v5921 = vunpack.c.h.b16 %v4816
        %v5922 = vunpack.c.l.b16 %v4817
        %v5923 = vunpack.c.h.b16 %v4817
        %v5924 = vunpack.c.l.b16 %v4818
        %v5925 = vunpack.c.h.b16 %v4818
        %v5926 = vunpack.c.l.b16 %v4819
        %v5927 = vunpack.c.h.b16 %v4819
        %v5928 = vunpack.c.l.b16 %v4820
        %v5929 = vunpack.c.h.b16 %v4820
        %v5930 = vunpack.c.l.b16 %v4821
        %v5931 = vunpack.c.h.b16 %v4821
        %v5932 = vunpack.c.l.b16 %v4822
        %v5933 = vunpack.c.h.b16 %v4822
        %v5934 = vunpack.c.l.b16 %v4823
        %v5935 = vunpack.c.h.b16 %v4823
        %v5936 = vunpack.c.l.b16 %v4824
        %v5937 = vunpack.c.h.b16 %v4824
        %v5938 = vunpack.c.l.b16 %v4825
        %v5939 = vunpack.c.h.b16 %v4825
        %v5940 = vunpack.c.l.b16 %v4826
        %v5941 = vunpack.c.h.b16 %v4826
        %v5942 = vunpack.c.l.b16 %v4827
        %v5943 = vunpack.c.h.b16 %v4827
        %v5944 = vunpack.c.l.b16 %v4828
        %v5945 = vunpack.c.h.b16 %v4828
        %v5946 = vunpack.c.l.b16 %v4829
        %v5947 = vunpack.c.h.b16 %v4829
        %v5948 = vunpack.c.l.b16 %v4830
        %v5949 = vunpack.c.h.b16 %v4830
        %v5950 = vunpack.c.l.b16 %v4831
        %v5951 = vunpack.c.h.b16 %v4831
        %v5952 = vunpack.c.l.b16 %v4832
        %v5953 = vunpack.c.h.b16 %v4832
        %v5954 = vunpack.c.l.b16 %v4833
        %v5955 = vunpack.c.h.b16 %v4833
        %v5956 = vunpack.c.l.b16 %v4834
        %v5957 = vunpack.c.h.b16 %v4834
        %v5958 = vunpack.c.l.b16 %v4835
        %v5959 = vunpack.c.h.b16 %v4835
        %v5960 = vunpack.c.l.b16 %v4836
        %v5961 = vunpack.c.h.b16 %v4836
        %v5962 = vunpack.c.l.b16 %v4837
        %v5963 = vunpack.c.h.b16 %v4837
        %v5964 = vunpack.c.l.b16 %v4838
        %v5965 = vunpack.c.h.b16 %v4838
        %v5966 = vunpack.c.l.b16 %v4839
        %v5967 = vunpack.c.h.b16 %v4839
        %v5968 = vunpack.c.l.b16 %v4840
        %v5969 = vunpack.c.h.b16 %v4840
        %v5970 = vunpack.c.l.b16 %v4841
        %v5971 = vunpack.c.h.b16 %v4841
        %v5972 = vunpack.c.l.b16 %v4842
        %v5973 = vunpack.c.h.b16 %v4842
        %v5974 = vunpack.c.l.b16 %v4843
        %v5975 = vunpack.c.h.b16 %v4843
        %v5976 = vunpack.c.l.b16 %v4844
        %v5977 = vunpack.c.h.b16 %v4844
        %v5978 = vunpack.c.l.b16 %v4845
        %v5979 = vunpack.c.h.b16 %v4845
        %v5980 = vunpack.c.l.b16 %v4846
        %v5981 = vunpack.c.h.b16 %v4846
        %v5982 = vunpack.c.l.b16 %v4847
        %v5983 = vunpack.c.h.b16 %v4847
        %v5984 = vunpack.c.l.b16 %v4848
        %v5985 = vunpack.c.h.b16 %v4848
        %v5986 = vunpack.c.l.b16 %v4849
        %v5987 = vunpack.c.h.b16 %v4849
        %v5988 = vunpack.c.l.b16 %v4850
        %v5989 = vunpack.c.h.b16 %v4850
        %v5990 = vunpack.c.l.b16 %v4851
        %v5991 = vunpack.c.h.b16 %v4851
        %v5992 = vunpack.c.l.b16 %v4852
        %v5993 = vunpack.c.h.b16 %v4852
        %v5994 = vunpack.c.l.b16 %v4853
        %v5995 = vunpack.c.h.b16 %v4853
        %v5996 = vunpack.c.l.b16 %v4854
        %v5997 = vunpack.c.h.b16 %v4854
        %v5998 = vunpack.c.l.b16 %v4855
        %v5999 = vunpack.c.h.b16 %v4855
        %v6000 = vunpack.c.l.b16 %v4856
        %v6001 = vunpack.c.h.b16 %v4856
        %v6002 = vunpack.c.l.b16 %v4857
        %v6003 = vunpack.c.h.b16 %v4857
        %v6004 = vunpack.c.l.b16 %v4858
        %v6005 = vunpack.c.h.b16 %v4858
        %v6006 = vunpack.c.l.b16 %v4859
        %v6007 = vunpack.c.h.b16 %v4859
        %v6008 = vunpack.c.l.b16 %v4860
        %v6009 = vunpack.c.h.b16 %v4860
        %v6010 = vunpack.c.l.b16 %v4861
        %v6011 = vunpack.c.h.b16 %v4861
        %v6012 = vunpack.c.l.b16 %v4862
        %v6013 = vunpack.c.h.b16 %v4862
        %v6014 = vunpack.c.l.b16 %v4863
        %v6015 = vunpack.c.h.b16 %v4863
        %v6016 = vunpack.c.l.b16 %v4864
        %v6017 = vunpack.c.h.b16 %v4864
        %v6018 = vunpack.c.l.b16 %v4865
        %v6019 = vunpack.c.h.b16 %v4865
        %v6020 = vunpack.c.l.b16 %v4866
        %v6021 = vunpack.c.h.b16 %v4866
        %v6022 = vunpack.c.l.b16 %v4867
        %v6023 = vunpack.c.h.b16 %v4867
        %v6024 = vunpack.c.l.b16 %v4868
        %v6025 = vunpack.c.h.b16 %v4868
        %v6026 = vunpack.c.l.b16 %v4869
        %v6027 = vunpack.c.h.b16 %v4869
        %v6028 = vunpack.c.l.b16 %v4870
        %v6029 = vunpack.c.h.b16 %v4870
        %v6030 = vunpack.c.l.b16 %v4871
        %v6031 = vunpack.c.h.b16 %v4871
        %v6032 = vunpack.c.l.b16 %v4872
        %v6033 = vunpack.c.h.b16 %v4872
        %v6034 = vunpack.c.l.b16 %v4873
        %v6035 = vunpack.c.h.b16 %v4873
        %v6036 = vunpack.c.l.b16 %v4874
        %v6037 = vunpack.c.h.b16 %v4874
        %v6038 = vunpack.c.l.b16 %v4875
        %v6039 = vunpack.c.h.b16 %v4875
        %v6040 = vunpack.c.l.b16 %v4876
        %v6041 = vunpack.c.h.b16 %v4876
        %v6042 = vunpack.c.l.b16 %v4877
        %v6043 = vunpack.c.h.b16 %v4877
        %v6044 = vunpack.c.l.b16 %v4878
        %v6045 = vunpack.c.h.b16 %v4878
        %v6046 = vunpack.c.l.b16 %v4879
        %v6047 = vunpack.c.h.b16 %v4879
        %v6048 = vunpack.c.l.b16 %v4880
        %v6049 = vunpack.c.h.b16 %v4880
        %v6050 = vunpack.c.l.b16 %v4881
        %v6051 = vunpack.c.h.b16 %v4881
        %v6052 = vunpack.c.l.b16 %v4882
        %v6053 = vunpack.c.h.b16 %v4882
        %v6054 = vunpack.c.l.b16 %v4883
        %v6055 = vunpack.c.h.b16 %v4883
        %v6056 = vunpack.c.l.b16 %v4884
        %v6057 = vunpack.c.h.b16 %v4884
        %v6058 = vunpack.c.l.b16 %v4885
        %v6059 = vunpack.c.h.b16 %v4885
        %v6060 = vunpack.c.l.b16 %v4886
        %v6061 = vunpack.c.h.b16 %v4886
        %v6062 = vunpack.c.l.b16 %v4887
        %v6063 = vunpack.c.h.b16 %v4887
        %v6064 = vunpack.c.l.b16 %v4888
        %v6065 = vunpack.c.h.b16 %v4888
        %v6066 = vunpack.c.l.b16 %v4889
        %v6067 = vunpack.c.h.b16 %v4889
        %v6068 = vunpack.c.l.b16 %v4890
        %v6069 = vunpack.c.h.b16 %v4890
        %v6070 = vunpack.c.l.b16 %v4891
        %v6071 = vunpack.c.h.b16 %v4891
        %v6072 = vunpack.c.l.b16 %v4892
        %v6073 = vunpack.c.h.b16 %v4892
        %v6074 = vunpack.c.l.b16 %v4893
        %v6075 = vunpack.c.h.b16 %v4893
        %v6076 = vunpack.c.l.b16 %v4894
        %v6077 = vunpack.c.h.b16 %v4894
        %v6078 = vunpack.c.l.b16 %v4895
        %v6079 = vunpack.c.h.b16 %v4895
        %v6080 = vpack.c.b16 %v5318, %v5312
        %v6081 = vpack.c.b16 %v5319, %v5313
        %v6082 = vpack.c.b16 %v5320, %v5314
        %v6083 = vpack.c.b16 %v5321, %v5315
        %v6084 = vpack.c.b16 %v5322, %v5316
        %v6085 = vpack.c.b16 %v5323, %v5317
        %v6086 = vpack.c.b16 %v5330, %v5324
        %v6087 = vpack.c.b16 %v5331, %v5325
        %v6088 = vpack.c.b16 %v5332, %v5326
        %v6089 = vpack.c.b16 %v5333, %v5327
        %v6090 = vpack.c.b16 %v5334, %v5328
        %v6091 = vpack.c.b16 %v5335, %v5329
        %v6092 = vpack.c.b16 %v5342, %v5336
        %v6093 = vpack.c.b16 %v5343, %v5337
        %v6094 = vpack.c.b16 %v5344, %v5338
        %v6095 = vpack.c.b16 %v5345, %v5339
        %v6096 = vpack.c.b16 %v5346, %v5340
        %v6097 = vpack.c.b16 %v5347, %v5341
        %v6098 = vpack.c.b16 %v5354, %v5348
        %v6099 = vpack.c.b16 %v5355, %v5349
        %v6100 = vpack.c.b16 %v5356, %v5350
        %v6101 = vpack.c.b16 %v5357, %v5351
        %v6102 = vpack.c.b16 %v5358, %v5352
        %v6103 = vpack.c.b16 %v5359, %v5353
        %v6104 = vpack.c.b16 %v5366, %v5360
        %v6105 = vpack.c.b16 %v5367, %v5361
        %v6106 = vpack.c.b16 %v5368, %v5362
        %v6107 = vpack.c.b16 %v5369, %v5363
        %v6108 = vpack.c.b16 %v5370, %v5364
        %v6109 = vpack.c.b16 %v5371, %v5365
        %v6110 = vpack.c.b16 %v5378, %v5372
        %v6111 = vpack.c.b16 %v5379, %v5373
        %v6112 = vpack.c.b16 %v5380, %v5374
        %v6113 = vpack.c.b16 %v5381, %v5375
        %v6114 = vpack.c.b16 %v5382, %v5376
        %v6115 = vpack.c.b16 %v5383, %v5377
        %v6116 = vpack.c.b16 %v5390, %v5384
        %v6117 = vpack.c.b16 %v5391, %v5385
        %v6118 = vpack.c.b16 %v5392, %v5386
        %v6119 = vpack.c.b16 %v5393, %v5387
        %v6120 = vpack.c.b16 %v5394, %v5388
        %v6121 = vpack.c.b16 %v5395, %v5389
        %v6122 = vpack.c.b16 %v5402, %v5396
        %v6123 = vpack.c.b16 %v5403, %v5397
        %v6124 = vpack.c.b16 %v5404, %v5398
        %v6125 = vpack.c.b16 %v5405, %v5399
        %v6126 = vpack.c.b16 %v5406, %v5400
        %v6127 = vpack.c.b16 %v5407, %v5401
        %v6128 = vpack.c.b16 %v5414, %v5408
        %v6129 = vpack.c.b16 %v5415, %v5409
        %v6130 = vpack.c.b16 %v5416, %v5410
        %v6131 = vpack.c.b16 %v5417, %v5411
        %v6132 = vpack.c.b16 %v5418, %v5412
        %v6133 = vpack.c.b16 %v5419, %v5413
        %v6134 = vpack.c.b16 %v5426, %v5420
        %v6135 = vpack.c.b16 %v5427, %v5421
        %v6136 = vpack.c.b16 %v5428, %v5422
        %v6137 = vpack.c.b16 %v5429, %v5423
        %v6138 = vpack.c.b16 %v5430, %v5424
        %v6139 = vpack.c.b16 %v5431, %v5425
        %v6140 = vpack.c.b16 %v5438, %v5432
        %v6141 = vpack.c.b16 %v5439, %v5433
        %v6142 = vpack.c.b16 %v5440, %v5434
        %v6143 = vpack.c.b16 %v5441, %v5435
        %v6144 = vpack.c.b16 %v5442, %v5436
        %v6145 = vpack.c.b16 %v5443, %v5437
        %v6146 = vpack.c.b16 %v5450, %v5444
        %v6147 = vpack.c.b16 %v5451, %v5445
        %v6148 = vpack.c.b16 %v5452, %v5446
        %v6149 = vpack.c.b16 %v5453, %v5447
        %v6150 = vpack.c.b16 %v5454, %v5448
        %v6151 = vpack.c.b16 %v5455, %v5449
        %v6152 = vpack.c.b16 %v5462, %v5456
        %v6153 = vpack.c.b16 %v5463, %v5457
        %v6154 = vpack.c.b16 %v5464, %v5458
        %v6155 = vpack.c.b16 %v5465, %v5459
        %v6156 = vpack.c.b16 %v5466, %v5460
        %v6157 = vpack.c.b16 %v5467, %v5461
        %v6158 = vpack.c.b16 %v5474, %v5468
        %v6159 = vpack.c.b16 %v5475, %v5469
        %v6160 = vpack.c.b16 %v5476, %v5470
        %v6161 = vpack.c.b16 %v5477, %v5471
        %v6162 = vpack.c.b16 %v5478, %v5472
        %v6163 = vpack.c.b16 %v5479, %v5473
        %v6164 = vpack.c.b16 %v5486, %v5480
        %v6165 = vpack.c.b16 %v5487, %v5481
        %v6166 = vpack.c.b16 %v5488, %v5482
        %v6167 = vpack.c.b16 %v5489, %v5483
        %v6168 = vpack.c.b16 %v5490, %v5484
        %v6169 = vpack.c.b16 %v5491, %v5485
        %v6170 = vpack.c.b16 %v5498, %v5492
        %v6171 = vpack.c.b16 %v5499, %v5493
        %v6172 = vpack.c.b16 %v5500, %v5494
        %v6173 = vpack.c.b16 %v5501, %v5495
        %v6174 = vpack.c.b16 %v5502, %v5496
        %v6175 = vpack.c.b16 %v5503, %v5497
        %v6176 = vpack.c.b16 %v5510, %v5504
        %v6177 = vpack.c.b16 %v5511, %v5505
        %v6178 = vpack.c.b16 %v5512, %v5506
        %v6179 = vpack.c.b16 %v5513, %v5507
        %v6180 = vpack.c.b16 %v5514, %v5508
        %v6181 = vpack.c.b16 %v5515, %v5509
        %v6182 = vpack.c.b16 %v5522, %v5516
        %v6183 = vpack.c.b16 %v5523, %v5517
        %v6184 = vpack.c.b16 %v5524, %v5518
        %v6185 = vpack.c.b16 %v5525, %v5519
        %v6186 = vpack.c.b16 %v5526, %v5520
        %v6187 = vpack.c.b16 %v5527, %v5521
        %v6188 = vpack.c.b16 %v5534, %v5528
        %v6189 = vpack.c.b16 %v5535, %v5529
        %v6190 = vpack.c.b16 %v5536, %v5530
        %v6191 = vpack.c.b16 %v5537, %v5531
        %v6192 = vpack.c.b16 %v5538, %v5532
        %v6193 = vpack.c.b16 %v5539, %v5533
        %v6194 = vpack.c.b16 %v5546, %v5540
        %v6195 = vpack.c.b16 %v5547, %v5541
        %v6196 = vpack.c.b16 %v5548, %v5542
        %v6197 = vpack.c.b16 %v5549, %v5543
        %v6198 = vpack.c.b16 %v5550, %v5544
        %v6199 = vpack.c.b16 %v5551, %v5545
        %v6200 = vpack.c.b16 %v5558, %v5552
        %v6201 = vpack.c.b16 %v5559, %v5553
        %v6202 = vpack.c.b16 %v5560, %v5554
        %v6203 = vpack.c.b16 %v5561, %v5555
        %v6204 = vpack.c.b16 %v5562, %v5556
        %v6205 = vpack.c.b16 %v5563, %v5557
        %v6206 = vpack.c.b16 %v5570, %v5564
        %v6207 = vpack.c.b16 %v5571, %v5565
        %v6208 = vpack.c.b16 %v5572, %v5566
        %v6209 = vpack.c.b16 %v5573, %v5567
        %v6210 = vpack.c.b16 %v5574, %v5568
        %v6211 = vpack.c.b16 %v5575, %v5569
        %v6212 = vpack.c.b16 %v5582, %v5576
        %v6213 = vpack.c.b16 %v5583, %v5577
        %v6214 = vpack.c.b16 %v5584, %v5578
        %v6215 = vpack.c.b16 %v5585, %v5579
        %v6216 = vpack.c.b16 %v5586, %v5580
        %v6217 = vpack.c.b16 %v5587, %v5581
        %v6218 = vpack.c.b16 %v5594, %v5588
        %v6219 = vpack.c.b16 %v5595, %v5589
        %v6220 = vpack.c.b16 %v5596, %v5590
        %v6221 = vpack.c.b16 %v5597, %v5591
        %v6222 = vpack.c.b16 %v5598, %v5592
        %v6223 = vpack.c.b16 %v5599, %v5593
        %v6224 = vpack.c.b16 %v5606, %v5600
        %v6225 = vpack.c.b16 %v5607, %v5601
        %v6226 = vpack.c.b16 %v5608, %v5602
        %v6227 = vpack.c.b16 %v5609, %v5603
        %v6228 = vpack.c.b16 %v5610, %v5604
        %v6229 = vpack.c.b16 %v5611, %v5605
        %v6230 = vpack.c.b16 %v5618, %v5612
        %v6231 = vpack.c.b16 %v5619, %v5613
        %v6232 = vpack.c.b16 %v5620, %v5614
        %v6233 = vpack.c.b16 %v5621, %v5615
        %v6234 = vpack.c.b16 %v5622, %v5616
        %v6235 = vpack.c.b16 %v5623, %v5617
        %v6236 = vpack.c.b16 %v5630, %v5624
        %v6237 = vpack.c.b16 %v5631, %v5625
        %v6238 = vpack.c.b16 %v5632, %v5626
        %v6239 = vpack.c.b16 %v5633, %v5627
        %v6240 = vpack.c.b16 %v5634, %v5628
        %v6241 = vpack.c.b16 %v5635, %v5629
        %v6242 = vpack.c.b16 %v5642, %v5636
        %v6243 = vpack.c.b16 %v5643, %v5637
        %v6244 = vpack.c.b16 %v5644, %v5638
        %v6245 = vpack.c.b16 %v5645, %v5639
        %v6246 = vpack.c.b16 %v5646, %v5640
        %v6247 = vpack.c.b16 %v5647, %v5641
        %v6248 = vpack.c.b16 %v5654, %v5648
        %v6249 = vpack.c.b16 %v5655, %v5649
        %v6250 = vpack.c.b16 %v5656, %v5650
        %v6251 = vpack.c.b16 %v5657, %v5651
        %v6252 = vpack.c.b16 %v5658, %v5652
        %v6253 = vpack.c.b16 %v5659, %v5653
        %v6254 = vpack.c.b16 %v5666, %v5660
        %v6255 = vpack.c.b16 %v5667, %v5661
        %v6256 = vpack.c.b16 %v5668, %v5662
        %v6257 = vpack.c.b16 %v5669, %v5663
        %v6258 = vpack.c.b16 %v5670, %v5664
        %v6259 = vpack.c.b16 %v5671, %v5665
        %v6260 = vpack.c.b16 %v5678, %v5672
        %v6261 = vpack.c.b16 %v5679, %v5673
        %v6262 = vpack.c.b16 %v5680, %v5674
        %v6263 = vpack.c.b16 %v5681, %v5675
        %v6264 = vpack.c.b16 %v5682, %v5676
        %v6265 = vpack.c.b16 %v5683, %v5677
        %v6266 = vpack.c.b16 %v5690, %v5684
        %v6267 = vpack.c.b16 %v5691, %v5685
        %v6268 = vpack.c.b16 %v5692, %v5686
        %v6269 = vpack.c.b16 %v5693, %v5687
        %v6270 = vpack.c.b16 %v5694, %v5688
        %v6271 = vpack.c.b16 %v5695, %v5689
        %v6272 = vpack.c.b16 %v5702, %v5696
        %v6273 = vpack.c.b16 %v5703, %v5697
        %v6274 = vpack.c.b16 %v5704, %v5698
        %v6275 = vpack.c.b16 %v5705, %v5699
        %v6276 = vpack.c.b16 %v5706, %v5700
        %v6277 = vpack.c.b16 %v5707, %v5701
        %v6278 = vpack.c.b16 %v5714, %v5708
        %v6279 = vpack.c.b16 %v5715, %v5709
        %v6280 = vpack.c.b16 %v5716, %v5710
        %v6281 = vpack.c.b16 %v5717, %v5711
        %v6282 = vpack.c.b16 %v5718, %v5712
        %v6283 = vpack.c.b16 %v5719, %v5713
        %v6284 = vpack.c.b16 %v5726, %v5720
        %v6285 = vpack.c.b16 %v5727, %v5721
        %v6286 = vpack.c.b16 %v5728, %v5722
        %v6287 = vpack.c.b16 %v5729, %v5723
        %v6288 = vpack.c.b16 %v5730, %v5724
        %v6289 = vpack.c.b16 %v5731, %v5725
        %v6290 = vpack.c.b16 %v5738, %v5732
        %v6291 = vpack.c.b16 %v5739, %v5733
        %v6292 = vpack.c.b16 %v5740, %v5734
        %v6293 = vpack.c.b16 %v5741, %v5735
        %v6294 = vpack.c.b16 %v5742, %v5736
        %v6295 = vpack.c.b16 %v5743, %v5737
        %v6296 = vpack.c.b16 %v5750, %v5744
        %v6297 = vpack.c.b16 %v5751, %v5745
        %v6298 = vpack.c.b16 %v5752, %v5746
        %v6299 = vpack.c.b16 %v5753, %v5747
        %v6300 = vpack.c.b16 %v5754, %v5748
        %v6301 = vpack.c.b16 %v5755, %v5749
        %v6302 = vpack.c.b16 %v5762, %v5756
        %v6303 = vpack.c.b16 %v5763, %v5757
        %v6304 = vpack.c.b16 %v5764, %v5758
        %v6305 = vpack.c.b16 %v5765, %v5759
        %v6306 = vpack.c.b16 %v5766, %v5760
        %v6307 = vpack.c.b16 %v5767, %v5761
        %v6308 = vpack.c.b16 %v5774, %v5768
        %v6309 = vpack.c.b16 %v5775, %v5769
        %v6310 = vpack.c.b16 %v5776, %v5770
        %v6311 = vpack.c.b16 %v5777, %v5771
        %v6312 = vpack.c.b16 %v5778, %v5772
        %v6313 = vpack.c.b16 %v5779, %v5773
        %v6314 = vpack.c.b16 %v5786, %v5780
        %v6315 = vpack.c.b16 %v5787, %v5781
        %v6316 = vpack.c.b16 %v5788, %v5782
        %v6317 = vpack.c.b16 %v5789, %v5783
        %v6318 = vpack.c.b16 %v5790, %v5784
        %v6319 = vpack.c.b16 %v5791, %v5785
        %v6320 = vpack.c.b16 %v5798, %v5792
        %v6321 = vpack.c.b16 %v5799, %v5793
        %v6322 = vpack.c.b16 %v5800, %v5794
        %v6323 = vpack.c.b16 %v5801, %v5795
        %v6324 = vpack.c.b16 %v5802, %v5796
        %v6325 = vpack.c.b16 %v5803, %v5797
        %v6326 = vpack.c.b16 %v5810, %v5804
        %v6327 = vpack.c.b16 %v5811, %v5805
        %v6328 = vpack.c.b16 %v5812, %v5806
        %v6329 = vpack.c.b16 %v5813, %v5807
        %v6330 = vpack.c.b16 %v5814, %v5808
        %v6331 = vpack.c.b16 %v5815, %v5809
        %v6332 = vpack.c.b16 %v5822, %v5816
        %v6333 = vpack.c.b16 %v5823, %v5817
        %v6334 = vpack.c.b16 %v5824, %v5818
        %v6335 = vpack.c.b16 %v5825, %v5819
        %v6336 = vpack.c.b16 %v5826, %v5820
        %v6337 = vpack.c.b16 %v5827, %v5821
        %v6338 = vpack.c.b16 %v5834, %v5828
        %v6339 = vpack.c.b16 %v5835, %v5829
        %v6340 = vpack.c.b16 %v5836, %v5830
        %v6341 = vpack.c.b16 %v5837, %v5831
        %v6342 = vpack.c.b16 %v5838, %v5832
        %v6343 = vpack.c.b16 %v5839, %v5833
        %v6344 = vpack.c.b16 %v5846, %v5840
        %v6345 = vpack.c.b16 %v5847, %v5841
        %v6346 = vpack.c.b16 %v5848, %v5842
        %v6347 = vpack.c.b16 %v5849, %v5843
        %v6348 = vpack.c.b16 %v5850, %v5844
        %v6349 = vpack.c.b16 %v5851, %v5845
        %v6350 = vpack.c.b16 %v5858, %v5852
        %v6351 = vpack.c.b16 %v5859, %v5853
        %v6352 = vpack.c.b16 %v5860, %v5854
        %v6353 = vpack.c.b16 %v5861, %v5855
        %v6354 = vpack.c.b16 %v5862, %v5856
        %v6355 = vpack.c.b16 %v5863, %v5857
        %v6356 = vpack.c.b16 %v5870, %v5864
        %v6357 = vpack.c.b16 %v5871, %v5865
        %v6358 = vpack.c.b16 %v5872, %v5866
        %v6359 = vpack.c.b16 %v5873, %v5867
        %v6360 = vpack.c.b16 %v5874, %v5868
        %v6361 = vpack.c.b16 %v5875, %v5869
        %v6362 = vpack.c.b16 %v5882, %v5876
        %v6363 = vpack.c.b16 %v5883, %v5877
        %v6364 = vpack.c.b16 %v5884, %v5878
        %v6365 = vpack.c.b16 %v5885, %v5879
        %v6366 = vpack.c.b16 %v5886, %v5880
        %v6367 = vpack.c.b16 %v5887, %v5881
        %v6368 = vpack.c.b16 %v5894, %v5888
        %v6369 = vpack.c.b16 %v5895, %v5889
        %v6370 = vpack.c.b16 %v5896, %v5890
        %v6371 = vpack.c.b16 %v5897, %v5891
        %v6372 = vpack.c.b16 %v5898, %v5892
        %v6373 = vpack.c.b16 %v5899, %v5893
        %v6374 = vpack.c.b16 %v5906, %v5900
        %v6375 = vpack.c.b16 %v5907, %v5901
        %v6376 = vpack.c.b16 %v5908, %v5902
        %v6377 = vpack.c.b16 %v5909, %v5903
        %v6378 = vpack.c.b16 %v5910, %v5904
        %v6379 = vpack.c.b16 %v5911, %v5905
        %v6380 = vpack.c.b16 %v5918, %v5912
        %v6381 = vpack.c.b16 %v5919, %v5913
        %v6382 = vpack.c.b16 %v5920, %v5914
        %v6383 = vpack.c.b16 %v5921, %v5915
        %v6384 = vpack.c.b16 %v5922, %v5916
        %v6385 = vpack.c.b16 %v5923, %v5917
        %v6386 = vpack.c.b16 %v5930, %v5924
        %v6387 = vpack.c.b16 %v5931, %v5925
        %v6388 = vpack.c.b16 %v5932, %v5926
        %v6389 = vpack.c.b16 %v5933, %v5927
        %v6390 = vpack.c.b16 %v5934, %v5928
        %v6391 = vpack.c.b16 %v5935, %v5929
        %v6392 = vpack.c.b16 %v5942, %v5936
        %v6393 = vpack.c.b16 %v5943, %v5937
        %v6394 = vpack.c.b16 %v5944, %v5938
        %v6395 = vpack.c.b16 %v5945, %v5939
        %v6396 = vpack.c.b16 %v5946, %v5940
        %v6397 = vpack.c.b16 %v5947, %v5941
        %v6398 = vpack.c.b16 %v5954, %v5948
        %v6399 = vpack.c.b16 %v5955, %v5949
        %v6400 = vpack.c.b16 %v5956, %v5950
        %v6401 = vpack.c.b16 %v5957, %v5951
        %v6402 = vpack.c.b16 %v5958, %v5952
        %v6403 = vpack.c.b16 %v5959, %v5953
        %v6404 = vpack.c.b16 %v5966, %v5960
        %v6405 = vpack.c.b16 %v5967, %v5961
        %v6406 = vpack.c.b16 %v5968, %v5962
        %v6407 = vpack.c.b16 %v5969, %v5963
        %v6408 = vpack.c.b16 %v5970, %v5964
        %v6409 = vpack.c.b16 %v5971, %v5965
        %v6410 = vpack.c.b16 %v5978, %v5972
        %v6411 = vpack.c.b16 %v5979, %v5973
        %v6412 = vpack.c.b16 %v5980, %v5974
        %v6413 = vpack.c.b16 %v5981, %v5975
        %v6414 = vpack.c.b16 %v5982, %v5976
        %v6415 = vpack.c.b16 %v5983, %v5977
        %v6416 = vpack.c.b16 %v5990, %v5984
        %v6417 = vpack.c.b16 %v5991, %v5985
        %v6418 = vpack.c.b16 %v5992, %v5986
        %v6419 = vpack.c.b16 %v5993, %v5987
        %v6420 = vpack.c.b16 %v5994, %v5988
        %v6421 = vpack.c.b16 %v5995, %v5989
        %v6422 = vpack.c.b16 %v6002, %v5996
        %v6423 = vpack.c.b16 %v6003, %v5997
        %v6424 = vpack.c.b16 %v6004, %v5998
        %v6425 = vpack.c.b16 %v6005, %v5999
        %v6426 = vpack.c.b16 %v6006, %v6000
        %v6427 = vpack.c.b16 %v6007, %v6001
        %v6428 = vpack.c.b16 %v6014, %v6008
        %v6429 = vpack.c.b16 %v6015, %v6009
        %v6430 = vpack.c.b16 %v6016, %v6010
        %v6431 = vpack.c.b16 %v6017, %v6011
        %v6432 = vpack.c.b16 %v6018, %v6012
        %v6433 = vpack.c.b16 %v6019, %v6013
        %v6434 = vpack.c.b16 %v6026, %v6020
        %v6435 = vpack.c.b16 %v6027, %v6021
        %v6436 = vpack.c.b16 %v6028, %v6022
        %v6437 = vpack.c.b16 %v6029, %v6023
        %v6438 = vpack.c.b16 %v6030, %v6024
        %v6439 = vpack.c.b16 %v6031, %v6025
        %v6440 = vpack.c.b16 %v6038, %v6032
        %v6441 = vpack.c.b16 %v6039, %v6033
        %v6442 = vpack.c.b16 %v6040, %v6034
        %v6443 = vpack.c.b16 %v6041, %v6035
        %v6444 = vpack.c.b16 %v6042, %v6036
        %v6445 = vpack.c.b16 %v6043, %v6037
        %v6446 = vpack.c.b16 %v6050, %v6044
        %v6447 = vpack.c.b16 %v6051, %v6045
        %v6448 = vpack.c.b16 %v6052, %v6046
        %v6449 = vpack.c.b16 %v6053, %v6047
        %v6450 = vpack.c.b16 %v6054, %v6048
        %v6451 = vpack.c.b16 %v6055, %v6049
        %v6452 = vpack.c.b16 %v6062, %v6056
        %v6453 = vpack.c.b16 %v6063, %v6057
        %v6454 = vpack.c.b16 %v6064, %v6058
        %v6455 = vpack.c.b16 %v6065, %v6059
        %v6456 = vpack.c.b16 %v6066, %v6060
        %v6457 = vpack.c.b16 %v6067, %v6061
        %v6458 = vpack.c.b16 %v6074, %v6068
        %v6459 = vpack.c.b16 %v6075, %v6069
        %v6460 = vpack.c.b16 %v6076, %v6070
        %v6461 = vpack.c.b16 %v6077, %v6071
        %v6462 = vpack.c.b16 %v6078, %v6072
        %v6463 = vpack.c.b16 %v6079, %v6073
        %6848 = vmatprep.subr.bf16.mxu0 %v6123
        %6849 = vmatpush1.bf16.msra.mxu0 %v6122
        %6850 = vmatprep.subr.bf16.mxu0 %v6117
        %6851 = vmatpush1.bf16.msra.mxu0 %v6116
        %6852 = vmatprep.subr.bf16.mxu0 %v6111
        %6853 = vmatpush1.bf16.msra.mxu0 %v6110
        %6854 = vmatprep.subr.bf16.mxu0 %v6105
        %6855 = vmatpush1.bf16.msra.mxu0 %v6104
        %6856 = vmatprep.subr.bf16.mxu0 %v6099
        %6857 = vmatpush1.bf16.msra.mxu0 %v6098
        %6858 = vmatprep.subr.bf16.mxu0 %v6093
        %6859 = vmatpush1.bf16.msra.mxu0 %v6092
        %6860 = vmatprep.subr.bf16.mxu0 %v6087
        %6861 = vmatpush1.bf16.msra.mxu0 %v6086
        %6862 = vmatprep.subr.bf16.mxu0 %v6081
        %6863 = vmatpush1.bf16.msra.mxu0 %v6080
        %6864 = vmatprep.subr.bf16.mxu0 %v6171
        %6865 = vmatpush2.bf16.msra.mxu0 %v6170
        %6866 = vmatprep.subr.bf16.mxu0 %v6165
        %6867 = vmatpush2.bf16.msra.mxu0 %v6164
        %6868 = vmatprep.subr.bf16.mxu0 %v6159
        %6869 = vmatpush2.bf16.msra.mxu0 %v6158
        %6870 = vmatprep.subr.bf16.mxu0 %v6153
        %6871 = vmatpush2.bf16.msra.mxu0 %v6152
        %6872 = vmatprep.subr.bf16.mxu0 %v6147
        %6873 = vmatpush2.bf16.msra.mxu0 %v6146
        %6874 = vmatprep.subr.bf16.mxu0 %v6141
        %6875 = vmatpush2.bf16.msra.mxu0 %v6140
        %6876 = vmatprep.subr.bf16.mxu0 %v6135
        %6877 = vmatpush2.bf16.msra.mxu0 %v6134
        %6878 = vmatprep.subr.bf16.mxu0 %v6129
        %6879 = vmatpush2.bf16.msra.mxu0 %v6128
        %6880 = vmatprep.mubr.bf16.mxu0 %v4505
        %6881 = vmatmul.mubr.bf16.gmra.mxu0 %v4504
        %v6882 = vpop.f32.mrf.mxu0
        %v6883 = vadd.f32 %v4901, %v6882
        %v6884 = vpop.f32.mrf.mxu0
        %v6885 = vadd.f32 %v4905, %v6884
        %v6886 = vpop.f32.mrf.mxu0
        %v6887 = vadd.f32 %v4901, %v6886
        %v6888 = vpop.f32.mrf.mxu0
        %v6889 = vadd.f32 %v4905, %v6888
        %6890 = vdwg.mxu0
        %6891 = vmatprep.subr.bf16.mxu0 %v6219
        %6892 = vmatpush1.bf16.msra.mxu0 %v6218
        %6893 = vmatprep.subr.bf16.mxu0 %v6213
        %6894 = vmatpush1.bf16.msra.mxu0 %v6212
        %6895 = vmatprep.subr.bf16.mxu0 %v6207
        %6896 = vmatpush1.bf16.msra.mxu0 %v6206
        %6897 = vmatprep.subr.bf16.mxu0 %v6201
        %6898 = vmatpush1.bf16.msra.mxu0 %v6200
        %6899 = vmatprep.subr.bf16.mxu0 %v6195
        %6900 = vmatpush1.bf16.msra.mxu0 %v6194
        %6901 = vmatprep.subr.bf16.mxu0 %v6189
        %6902 = vmatpush1.bf16.msra.mxu0 %v6188
        %6903 = vmatprep.subr.bf16.mxu0 %v6183
        %6904 = vmatpush1.bf16.msra.mxu0 %v6182
        %6905 = vmatprep.subr.bf16.mxu0 %v6177
        %6906 = vmatpush1.bf16.msra.mxu0 %v6176
        %6907 = vmatprep.subr.bf16.mxu0 %v6267
        %6908 = vmatpush2.bf16.msra.mxu0 %v6266
        %6909 = vmatprep.subr.bf16.mxu0 %v6261
        %6910 = vmatpush2.bf16.msra.mxu0 %v6260
        %6911 = vmatprep.subr.bf16.mxu0 %v6255
        %6912 = vmatpush2.bf16.msra.mxu0 %v6254
        %6913 = vmatprep.subr.bf16.mxu0 %v6249
        %6914 = vmatpush2.bf16.msra.mxu0 %v6248
        %6915 = vmatprep.subr.bf16.mxu0 %v6243
        %6916 = vmatpush2.bf16.msra.mxu0 %v6242
        %6917 = vmatprep.subr.bf16.mxu0 %v6237
        %6918 = vmatpush2.bf16.msra.mxu0 %v6236
        %6919 = vmatprep.subr.bf16.mxu0 %v6231
        %6920 = vmatpush2.bf16.msra.mxu0 %v6230
        %6921 = vmatprep.subr.bf16.mxu0 %v6225
        %6922 = vmatpush2.bf16.msra.mxu0 %v6224
        %6923 = vmatprep.mubr.bf16.mxu0 %v4507
        %6924 = vmatmul.mubr.bf16.gmra.mxu0 %v4506
        %v6925 = vpop.f32.mrf.mxu0
        %v6926 = vadd.f32 %v6883, %v6925
        %v6927 = vpop.f32.mrf.mxu0
        %v6928 = vadd.f32 %v6885, %v6927
        %v6929 = vpop.f32.mrf.mxu0
        %v6930 = vadd.f32 %v6887, %v6929
        %v6931 = vpop.f32.mrf.mxu0
        %v6932 = vadd.f32 %v6889, %v6931
        %6933 = vdwg.mxu0
        %6934 = vmatprep.subr.bf16.mxu0 %v6315
        %6935 = vmatpush1.bf16.msra.mxu0 %v6314
        %6936 = vmatprep.subr.bf16.mxu0 %v6309
        %6937 = vmatpush1.bf16.msra.mxu0 %v6308
        %6938 = vmatprep.subr.bf16.mxu0 %v6303
        %6939 = vmatpush1.bf16.msra.mxu0 %v6302
        %6940 = vmatprep.subr.bf16.mxu0 %v6297
        %6941 = vmatpush1.bf16.msra.mxu0 %v6296
        %6942 = vmatprep.subr.bf16.mxu0 %v6291
        %6943 = vmatpush1.bf16.msra.mxu0 %v6290
        %6944 = vmatprep.subr.bf16.mxu0 %v6285
        %6945 = vmatpush1.bf16.msra.mxu0 %v6284
        %6946 = vmatprep.subr.bf16.mxu0 %v6279
        %6947 = vmatpush1.bf16.msra.mxu0 %v6278
        %6948 = vmatprep.subr.bf16.mxu0 %v6273
        %6949 = vmatpush1.bf16.msra.mxu0 %v6272
        %6950 = vmatprep.subr.bf16.mxu0 %v6363
        %6951 = vmatpush2.bf16.msra.mxu0 %v6362
        %6952 = vmatprep.subr.bf16.mxu0 %v6357
        %6953 = vmatpush2.bf16.msra.mxu0 %v6356
        %6954 = vmatprep.subr.bf16.mxu0 %v6351
        %6955 = vmatpush2.bf16.msra.mxu0 %v6350
        %6956 = vmatprep.subr.bf16.mxu0 %v6345
        %6957 = vmatpush2.bf16.msra.mxu0 %v6344
        %6958 = vmatprep.subr.bf16.mxu0 %v6339
        %6959 = vmatpush2.bf16.msra.mxu0 %v6338
        %6960 = vmatprep.subr.bf16.mxu0 %v6333
        %6961 = vmatpush2.bf16.msra.mxu0 %v6332
        %6962 = vmatprep.subr.bf16.mxu0 %v6327
        %6963 = vmatpush2.bf16.msra.mxu0 %v6326
        %6964 = vmatprep.subr.bf16.mxu0 %v6321
        %6965 = vmatpush2.bf16.msra.mxu0 %v6320
        %6966 = vmatprep.mubr.bf16.mxu0 %v4509
        %6967 = vmatmul.mubr.bf16.gmra.mxu0 %v4508
        %v6968 = vpop.f32.mrf.mxu0
        %v6969 = vadd.f32 %v6926, %v6968
        %v6970 = vpop.f32.mrf.mxu0
        %v6971 = vadd.f32 %v6928, %v6970
        %v6972 = vpop.f32.mrf.mxu0
        %v6973 = vadd.f32 %v6930, %v6972
        %v6974 = vpop.f32.mrf.mxu0
        %v6975 = vadd.f32 %v6932, %v6974
        %6976 = vdwg.mxu0
        %6977 = vmatprep.subr.bf16.mxu0 %v6411
        %6978 = vmatpush1.bf16.msra.mxu0 %v6410
        %6979 = vmatprep.subr.bf16.mxu0 %v6405
        %6980 = vmatpush1.bf16.msra.mxu0 %v6404
        %6981 = vmatprep.subr.bf16.mxu0 %v6399
        %6982 = vmatpush1.bf16.msra.mxu0 %v6398
        %6983 = vmatprep.subr.bf16.mxu0 %v6393
        %6984 = vmatpush1.bf16.msra.mxu0 %v6392
        %6985 = vmatprep.subr.bf16.mxu0 %v6387
        %6986 = vmatpush1.bf16.msra.mxu0 %v6386
        %6987 = vmatprep.subr.bf16.mxu0 %v6381
        %6988 = vmatpush1.bf16.msra.mxu0 %v6380
        %6989 = vmatprep.subr.bf16.mxu0 %v6375
        %6990 = vmatpush1.bf16.msra.mxu0 %v6374
        %6991 = vmatprep.subr.bf16.mxu0 %v6369
        %6992 = vmatpush1.bf16.msra.mxu0 %v6368
        %6993 = vmatprep.subr.bf16.mxu0 %v6459
        %6994 = vmatpush2.bf16.msra.mxu0 %v6458
        %6995 = vmatprep.subr.bf16.mxu0 %v6453
        %6996 = vmatpush2.bf16.msra.mxu0 %v6452
        %6997 = vmatprep.subr.bf16.mxu0 %v6447
        %6998 = vmatpush2.bf16.msra.mxu0 %v6446
        %6999 = vmatprep.subr.bf16.mxu0 %v6441
        %7000 = vmatpush2.bf16.msra.mxu0 %v6440
        %7001 = vmatprep.subr.bf16.mxu0 %v6435
        %7002 = vmatpush2.bf16.msra.mxu0 %v6434
        %7003 = vmatprep.subr.bf16.mxu0 %v6429
        %7004 = vmatpush2.bf16.msra.mxu0 %v6428
        %7005 = vmatprep.subr.bf16.mxu0 %v6423
        %7006 = vmatpush2.bf16.msra.mxu0 %v6422
        %7007 = vmatprep.subr.bf16.mxu0 %v6417
        %7008 = vmatpush2.bf16.msra.mxu0 %v6416
        %7009 = vmatprep.mubr.bf16.mxu0 %v4511
        %7010 = vmatmul.mubr.bf16.gmra.mxu0 %v4510
        %v7011 = vpop.f32.mrf.mxu0
        %v7012 = vadd.f32 %v6969, %v7011
        %v7013 = vpop.f32.mrf.mxu0
        %v7014 = vadd.f32 %v6971, %v7013
        %v7015 = vpop.f32.mrf.mxu0
        %v7016 = vadd.f32 %v6973, %v7015
        %v7017 = vpop.f32.mrf.mxu0
        %v7018 = vadd.f32 %v6975, %v7017
        %7019 = vdwg.mxu0
        %7020 = vmatprep.subr.bf16.mxu0 %v6125
        %7021 = vmatpush1.bf16.msra.mxu0 %v6124
        %7022 = vmatprep.subr.bf16.mxu0 %v6119
        %7023 = vmatpush1.bf16.msra.mxu0 %v6118
        %7024 = vmatprep.subr.bf16.mxu0 %v6113
        %7025 = vmatpush1.bf16.msra.mxu0 %v6112
        %7026 = vmatprep.subr.bf16.mxu0 %v6107
        %7027 = vmatpush1.bf16.msra.mxu0 %v6106
        %7028 = vmatprep.subr.bf16.mxu0 %v6101
        %7029 = vmatpush1.bf16.msra.mxu0 %v6100
        %7030 = vmatprep.subr.bf16.mxu0 %v6095
        %7031 = vmatpush1.bf16.msra.mxu0 %v6094
        %7032 = vmatprep.subr.bf16.mxu0 %v6089
        %7033 = vmatpush1.bf16.msra.mxu0 %v6088
        %7034 = vmatprep.subr.bf16.mxu0 %v6083
        %7035 = vmatpush1.bf16.msra.mxu0 %v6082
        %7036 = vmatprep.subr.bf16.mxu0 %v6173
        %7037 = vmatpush2.bf16.msra.mxu0 %v6172
        %7038 = vmatprep.subr.bf16.mxu0 %v6167
        %7039 = vmatpush2.bf16.msra.mxu0 %v6166
        %7040 = vmatprep.subr.bf16.mxu0 %v6161
        %7041 = vmatpush2.bf16.msra.mxu0 %v6160
        %7042 = vmatprep.subr.bf16.mxu0 %v6155
        %7043 = vmatpush2.bf16.msra.mxu0 %v6154
        %7044 = vmatprep.subr.bf16.mxu0 %v6149
        %7045 = vmatpush2.bf16.msra.mxu0 %v6148
        %7046 = vmatprep.subr.bf16.mxu0 %v6143
        %7047 = vmatpush2.bf16.msra.mxu0 %v6142
        %7048 = vmatprep.subr.bf16.mxu0 %v6137
        %7049 = vmatpush2.bf16.msra.mxu0 %v6136
        %7050 = vmatprep.subr.bf16.mxu0 %v6131
        %7051 = vmatpush2.bf16.msra.mxu0 %v6130
        %7052 = vmatprep.mubr.bf16.mxu0 %v4505
        %7053 = vmatmul.mubr.bf16.gmra.mxu0 %v4504
        %v7054 = vpop.f32.mrf.mxu0
        %v7055 = vadd.f32 %v4909, %v7054
        %v7056 = vpop.f32.mrf.mxu0
        %v7057 = vadd.f32 %v4913, %v7056
        %v7058 = vpop.f32.mrf.mxu0
        %v7059 = vadd.f32 %v4909, %v7058
        %v7060 = vpop.f32.mrf.mxu0
        %v7061 = vadd.f32 %v4913, %v7060
        %7062 = vdwg.mxu0
        %7063 = vmatprep.subr.bf16.mxu0 %v6221
        %7064 = vmatpush1.bf16.msra.mxu0 %v6220
        %7065 = vmatprep.subr.bf16.mxu0 %v6215
        %7066 = vmatpush1.bf16.msra.mxu0 %v6214
        %7067 = vmatprep.subr.bf16.mxu0 %v6209
        %7068 = vmatpush1.bf16.msra.mxu0 %v6208
        %7069 = vmatprep.subr.bf16.mxu0 %v6203
        %7070 = vmatpush1.bf16.msra.mxu0 %v6202
        %7071 = vmatprep.subr.bf16.mxu0 %v6197
        %7072 = vmatpush1.bf16.msra.mxu0 %v6196
        %7073 = vmatprep.subr.bf16.mxu0 %v6191
        %7074 = vmatpush1.bf16.msra.mxu0 %v6190
        %7075 = vmatprep.subr.bf16.mxu0 %v6185
        %7076 = vmatpush1.bf16.msra.mxu0 %v6184
        %7077 = vmatprep.subr.bf16.mxu0 %v6179
        %7078 = vmatpush1.bf16.msra.mxu0 %v6178
        %7079 = vmatprep.subr.bf16.mxu0 %v6269
        %7080 = vmatpush2.bf16.msra.mxu0 %v6268
        %7081 = vmatprep.subr.bf16.mxu0 %v6263
        %7082 = vmatpush2.bf16.msra.mxu0 %v6262
        %7083 = vmatprep.subr.bf16.mxu0 %v6257
        %7084 = vmatpush2.bf16.msra.mxu0 %v6256
        %7085 = vmatprep.subr.bf16.mxu0 %v6251
        %7086 = vmatpush2.bf16.msra.mxu0 %v6250
        %7087 = vmatprep.subr.bf16.mxu0 %v6245
        %7088 = vmatpush2.bf16.msra.mxu0 %v6244
        %7089 = vmatprep.subr.bf16.mxu0 %v6239
        %7090 = vmatpush2.bf16.msra.mxu0 %v6238
        %7091 = vmatprep.subr.bf16.mxu0 %v6233
        %7092 = vmatpush2.bf16.msra.mxu0 %v6232
        %7093 = vmatprep.subr.bf16.mxu0 %v6227
        %7094 = vmatpush2.bf16.msra.mxu0 %v6226
        %7095 = vmatprep.mubr.bf16.mxu0 %v4507
        %7096 = vmatmul.mubr.bf16.gmra.mxu0 %v4506
        %v7097 = vpop.f32.mrf.mxu0
        %v7098 = vadd.f32 %v7055, %v7097
        %v7099 = vpop.f32.mrf.mxu0
        %v7100 = vadd.f32 %v7057, %v7099
        %v7101 = vpop.f32.mrf.mxu0
        %v7102 = vadd.f32 %v7059, %v7101
        %v7103 = vpop.f32.mrf.mxu0
        %v7104 = vadd.f32 %v7061, %v7103
        %7105 = vdwg.mxu0
        %7106 = vmatprep.subr.bf16.mxu0 %v6317
        %7107 = vmatpush1.bf16.msra.mxu0 %v6316
        %7108 = vmatprep.subr.bf16.mxu0 %v6311
        %7109 = vmatpush1.bf16.msra.mxu0 %v6310
        %7110 = vmatprep.subr.bf16.mxu0 %v6305
        %7111 = vmatpush1.bf16.msra.mxu0 %v6304
        %7112 = vmatprep.subr.bf16.mxu0 %v6299
        %7113 = vmatpush1.bf16.msra.mxu0 %v6298
        %7114 = vmatprep.subr.bf16.mxu0 %v6293
        %7115 = vmatpush1.bf16.msra.mxu0 %v6292
        %7116 = vmatprep.subr.bf16.mxu0 %v6287
        %7117 = vmatpush1.bf16.msra.mxu0 %v6286
        %7118 = vmatprep.subr.bf16.mxu0 %v6281
        %7119 = vmatpush1.bf16.msra.mxu0 %v6280
        %7120 = vmatprep.subr.bf16.mxu0 %v6275
        %7121 = vmatpush1.bf16.msra.mxu0 %v6274
        %7122 = vmatprep.subr.bf16.mxu0 %v6365
        %7123 = vmatpush2.bf16.msra.mxu0 %v6364
        %7124 = vmatprep.subr.bf16.mxu0 %v6359
        %7125 = vmatpush2.bf16.msra.mxu0 %v6358
        %7126 = vmatprep.subr.bf16.mxu0 %v6353
        %7127 = vmatpush2.bf16.msra.mxu0 %v6352
        %7128 = vmatprep.subr.bf16.mxu0 %v6347
        %7129 = vmatpush2.bf16.msra.mxu0 %v6346
        %7130 = vmatprep.subr.bf16.mxu0 %v6341
        %7131 = vmatpush2.bf16.msra.mxu0 %v6340
        %7132 = vmatprep.subr.bf16.mxu0 %v6335
        %7133 = vmatpush2.bf16.msra.mxu0 %v6334
        %7134 = vmatprep.subr.bf16.mxu0 %v6329
        %7135 = vmatpush2.bf16.msra.mxu0 %v6328
        %7136 = vmatprep.subr.bf16.mxu0 %v6323
        %7137 = vmatpush2.bf16.msra.mxu0 %v6322
        %7138 = vmatprep.mubr.bf16.mxu0 %v4509
        %7139 = vmatmul.mubr.bf16.gmra.mxu0 %v4508
        %v7140 = vpop.f32.mrf.mxu0
        %v7141 = vadd.f32 %v7098, %v7140
        %v7142 = vpop.f32.mrf.mxu0
        %v7143 = vadd.f32 %v7100, %v7142
        %v7144 = vpop.f32.mrf.mxu0
        %v7145 = vadd.f32 %v7102, %v7144
        %v7146 = vpop.f32.mrf.mxu0
        %v7147 = vadd.f32 %v7104, %v7146
        %7148 = vdwg.mxu0
        %7149 = vmatprep.subr.bf16.mxu0 %v6413
        %7150 = vmatpush1.bf16.msra.mxu0 %v6412
        %7151 = vmatprep.subr.bf16.mxu0 %v6407
        %7152 = vmatpush1.bf16.msra.mxu0 %v6406
        %7153 = vmatprep.subr.bf16.mxu0 %v6401
        %7154 = vmatpush1.bf16.msra.mxu0 %v6400
        %7155 = vmatprep.subr.bf16.mxu0 %v6395
        %7156 = vmatpush1.bf16.msra.mxu0 %v6394
        %7157 = vmatprep.subr.bf16.mxu0 %v6389
        %7158 = vmatpush1.bf16.msra.mxu0 %v6388
        %7159 = vmatprep.subr.bf16.mxu0 %v6383
        %7160 = vmatpush1.bf16.msra.mxu0 %v6382
        %7161 = vmatprep.subr.bf16.mxu0 %v6377
        %7162 = vmatpush1.bf16.msra.mxu0 %v6376
        %7163 = vmatprep.subr.bf16.mxu0 %v6371
        %7164 = vmatpush1.bf16.msra.mxu0 %v6370
        %7165 = vmatprep.subr.bf16.mxu0 %v6461
        %7166 = vmatpush2.bf16.msra.mxu0 %v6460
        %7167 = vmatprep.subr.bf16.mxu0 %v6455
        %7168 = vmatpush2.bf16.msra.mxu0 %v6454
        %7169 = vmatprep.subr.bf16.mxu0 %v6449
        %7170 = vmatpush2.bf16.msra.mxu0 %v6448
        %7171 = vmatprep.subr.bf16.mxu0 %v6443
        %7172 = vmatpush2.bf16.msra.mxu0 %v6442
        %7173 = vmatprep.subr.bf16.mxu0 %v6437
        %7174 = vmatpush2.bf16.msra.mxu0 %v6436
        %7175 = vmatprep.subr.bf16.mxu0 %v6431
        %7176 = vmatpush2.bf16.msra.mxu0 %v6430
        %7177 = vmatprep.subr.bf16.mxu0 %v6425
        %7178 = vmatpush2.bf16.msra.mxu0 %v6424
        %7179 = vmatprep.subr.bf16.mxu0 %v6419
        %7180 = vmatpush2.bf16.msra.mxu0 %v6418
        %7181 = vmatprep.mubr.bf16.mxu0 %v4511
        %7182 = vmatmul.mubr.bf16.gmra.mxu0 %v4510
        %v7183 = vpop.f32.mrf.mxu0
        %v7184 = vadd.f32 %v7141, %v7183
        %v7185 = vpop.f32.mrf.mxu0
        %v7186 = vadd.f32 %v7143, %v7185
        %v7187 = vpop.f32.mrf.mxu0
        %v7188 = vadd.f32 %v7145, %v7187
        %v7189 = vpop.f32.mrf.mxu0
        %v7190 = vadd.f32 %v7147, %v7189
        %7191 = vdwg.mxu0
        %7192 = vmatprep.subr.bf16.mxu0 %v6127
        %7193 = vmatpush1.bf16.msra.mxu0 %v6126
        %7194 = vmatprep.subr.bf16.mxu0 %v6121
        %7195 = vmatpush1.bf16.msra.mxu0 %v6120
        %7196 = vmatprep.subr.bf16.mxu0 %v6115
        %7197 = vmatpush1.bf16.msra.mxu0 %v6114
        %7198 = vmatprep.subr.bf16.mxu0 %v6109
        %7199 = vmatpush1.bf16.msra.mxu0 %v6108
        %7200 = vmatprep.subr.bf16.mxu0 %v6103
        %7201 = vmatpush1.bf16.msra.mxu0 %v6102
        %7202 = vmatprep.subr.bf16.mxu0 %v6097
        %7203 = vmatpush1.bf16.msra.mxu0 %v6096
        %7204 = vmatprep.subr.bf16.mxu0 %v6091
        %7205 = vmatpush1.bf16.msra.mxu0 %v6090
        %7206 = vmatprep.subr.bf16.mxu0 %v6085
        %7207 = vmatpush1.bf16.msra.mxu0 %v6084
        %7208 = vmatprep.subr.bf16.mxu0 %v6175
        %7209 = vmatpush2.bf16.msra.mxu0 %v6174
        %7210 = vmatprep.subr.bf16.mxu0 %v6169
        %7211 = vmatpush2.bf16.msra.mxu0 %v6168
        %7212 = vmatprep.subr.bf16.mxu0 %v6163
        %7213 = vmatpush2.bf16.msra.mxu0 %v6162
        %7214 = vmatprep.subr.bf16.mxu0 %v6157
        %7215 = vmatpush2.bf16.msra.mxu0 %v6156
        %7216 = vmatprep.subr.bf16.mxu0 %v6151
        %7217 = vmatpush2.bf16.msra.mxu0 %v6150
        %7218 = vmatprep.subr.bf16.mxu0 %v6145
        %7219 = vmatpush2.bf16.msra.mxu0 %v6144
        %7220 = vmatprep.subr.bf16.mxu0 %v6139
        %7221 = vmatpush2.bf16.msra.mxu0 %v6138
        %7222 = vmatprep.subr.bf16.mxu0 %v6133
        %7223 = vmatpush2.bf16.msra.mxu0 %v6132
        %7224 = vmatprep.mubr.bf16.mxu0 %v4505
        %7225 = vmatmul.mubr.bf16.gmra.mxu0 %v4504
        %v7226 = vpop.f32.mrf.mxu0
        %v7227 = vadd.f32 %v4917, %v7226
        %v7228 = vpop.f32.mrf.mxu0
        %v7229 = vadd.f32 %v4921, %v7228
        %v7230 = vpop.f32.mrf.mxu0
        %v7231 = vadd.f32 %v4917, %v7230
        %v7232 = vpop.f32.mrf.mxu0
        %v7233 = vadd.f32 %v4921, %v7232
        %7234 = vdwg.mxu0
        %7235 = vmatprep.subr.bf16.mxu0 %v6223
        %7236 = vmatpush1.bf16.msra.mxu0 %v6222
        %7237 = vmatprep.subr.bf16.mxu0 %v6217
        %7238 = vmatpush1.bf16.msra.mxu0 %v6216
        %7239 = vmatprep.subr.bf16.mxu0 %v6211
        %7240 = vmatpush1.bf16.msra.mxu0 %v6210
        %7241 = vmatprep.subr.bf16.mxu0 %v6205
        %7242 = vmatpush1.bf16.msra.mxu0 %v6204
        %7243 = vmatprep.subr.bf16.mxu0 %v6199
        %7244 = vmatpush1.bf16.msra.mxu0 %v6198
        %7245 = vmatprep.subr.bf16.mxu0 %v6193
        %7246 = vmatpush1.bf16.msra.mxu0 %v6192
        %7247 = vmatprep.subr.bf16.mxu0 %v6187
        %7248 = vmatpush1.bf16.msra.mxu0 %v6186
        %7249 = vmatprep.subr.bf16.mxu0 %v6181
        %7250 = vmatpush1.bf16.msra.mxu0 %v6180
        %7251 = vmatprep.subr.bf16.mxu0 %v6271
        %7252 = vmatpush2.bf16.msra.mxu0 %v6270
        %7253 = vmatprep.subr.bf16.mxu0 %v6265
        %7254 = vmatpush2.bf16.msra.mxu0 %v6264
        %7255 = vmatprep.subr.bf16.mxu0 %v6259
        %7256 = vmatpush2.bf16.msra.mxu0 %v6258
        %7257 = vmatprep.subr.bf16.mxu0 %v6253
        %7258 = vmatpush2.bf16.msra.mxu0 %v6252
        %7259 = vmatprep.subr.bf16.mxu0 %v6247
        %7260 = vmatpush2.bf16.msra.mxu0 %v6246
        %7261 = vmatprep.subr.bf16.mxu0 %v6241
        %7262 = vmatpush2.bf16.msra.mxu0 %v6240
        %7263 = vmatprep.subr.bf16.mxu0 %v6235
        %7264 = vmatpush2.bf16.msra.mxu0 %v6234
        %7265 = vmatprep.subr.bf16.mxu0 %v6229
        %7266 = vmatpush2.bf16.msra.mxu0 %v6228
        %7267 = vmatprep.mubr.bf16.mxu0 %v4507
        %7268 = vmatmul.mubr.bf16.gmra.mxu0 %v4506
        %v7269 = vpop.f32.mrf.mxu0
        %v7270 = vadd.f32 %v7227, %v7269
        %v7271 = vpop.f32.mrf.mxu0
        %v7272 = vadd.f32 %v7229, %v7271
        %v7273 = vpop.f32.mrf.mxu0
        %v7274 = vadd.f32 %v7231, %v7273
        %v7275 = vpop.f32.mrf.mxu0
        %v7276 = vadd.f32 %v7233, %v7275
        %7277 = vdwg.mxu0
        %7278 = vmatprep.subr.bf16.mxu0 %v6319
        %7279 = vmatpush1.bf16.msra.mxu0 %v6318
        %7280 = vmatprep.subr.bf16.mxu0 %v6313
        %7281 = vmatpush1.bf16.msra.mxu0 %v6312
        %7282 = vmatprep.subr.bf16.mxu0 %v6307
        %7283 = vmatpush1.bf16.msra.mxu0 %v6306
        %7284 = vmatprep.subr.bf16.mxu0 %v6301
        %7285 = vmatpush1.bf16.msra.mxu0 %v6300
        %7286 = vmatprep.subr.bf16.mxu0 %v6295
        %7287 = vmatpush1.bf16.msra.mxu0 %v6294
        %7288 = vmatprep.subr.bf16.mxu0 %v6289
        %7289 = vmatpush1.bf16.msra.mxu0 %v6288
        %7290 = vmatprep.subr.bf16.mxu0 %v6283
        %7291 = vmatpush1.bf16.msra.mxu0 %v6282
        %7292 = vmatprep.subr.bf16.mxu0 %v6277
        %7293 = vmatpush1.bf16.msra.mxu0 %v6276
        %7294 = vmatprep.subr.bf16.mxu0 %v6367
        %7295 = vmatpush2.bf16.msra.mxu0 %v6366
        %7296 = vmatprep.subr.bf16.mxu0 %v6361
        %7297 = vmatpush2.bf16.msra.mxu0 %v6360
        %7298 = vmatprep.subr.bf16.mxu0 %v6355
        %7299 = vmatpush2.bf16.msra.mxu0 %v6354
        %7300 = vmatprep.subr.bf16.mxu0 %v6349
        %7301 = vmatpush2.bf16.msra.mxu0 %v6348
        %7302 = vmatprep.subr.bf16.mxu0 %v6343
        %7303 = vmatpush2.bf16.msra.mxu0 %v6342
        %7304 = vmatprep.subr.bf16.mxu0 %v6337
        %7305 = vmatpush2.bf16.msra.mxu0 %v6336
        %7306 = vmatprep.subr.bf16.mxu0 %v6331
        %7307 = vmatpush2.bf16.msra.mxu0 %v6330
        %7308 = vmatprep.subr.bf16.mxu0 %v6325
        %7309 = vmatpush2.bf16.msra.mxu0 %v6324
        %7310 = vmatprep.mubr.bf16.mxu0 %v4509
        %7311 = vmatmul.mubr.bf16.gmra.mxu0 %v4508
        %v7312 = vpop.f32.mrf.mxu0
        %v7313 = vadd.f32 %v7270, %v7312
        %v7314 = vpop.f32.mrf.mxu0
        %v7315 = vadd.f32 %v7272, %v7314
        %v7316 = vpop.f32.mrf.mxu0
        %v7317 = vadd.f32 %v7274, %v7316
        %v7318 = vpop.f32.mrf.mxu0
        %v7319 = vadd.f32 %v7276, %v7318
        %7320 = vdwg.mxu0
        %7321 = vmatprep.subr.bf16.mxu0 %v6415
        %7322 = vmatpush1.bf16.msra.mxu0 %v6414
        %7323 = vmatprep.subr.bf16.mxu0 %v6409
        %7324 = vmatpush1.bf16.msra.mxu0 %v6408
        %7325 = vmatprep.subr.bf16.mxu0 %v6403
        %7326 = vmatpush1.bf16.msra.mxu0 %v6402
        %7327 = vmatprep.subr.bf16.mxu0 %v6397
        %7328 = vmatpush1.bf16.msra.mxu0 %v6396
        %7329 = vmatprep.subr.bf16.mxu0 %v6391
        %7330 = vmatpush1.bf16.msra.mxu0 %v6390
        %7331 = vmatprep.subr.bf16.mxu0 %v6385
        %7332 = vmatpush1.bf16.msra.mxu0 %v6384
        %7333 = vmatprep.subr.bf16.mxu0 %v6379
        %7334 = vmatpush1.bf16.msra.mxu0 %v6378
        %7335 = vmatprep.subr.bf16.mxu0 %v6373
        %7336 = vmatpush1.bf16.msra.mxu0 %v6372
        %7337 = vmatprep.subr.bf16.mxu0 %v6463
        %7338 = vmatpush2.bf16.msra.mxu0 %v6462
        %7339 = vmatprep.subr.bf16.mxu0 %v6457
        %7340 = vmatpush2.bf16.msra.mxu0 %v6456
        %7341 = vmatprep.subr.bf16.mxu0 %v6451
        %7342 = vmatpush2.bf16.msra.mxu0 %v6450
        %7343 = vmatprep.subr.bf16.mxu0 %v6445
        %7344 = vmatpush2.bf16.msra.mxu0 %v6444
        %7345 = vmatprep.subr.bf16.mxu0 %v6439
        %7346 = vmatpush2.bf16.msra.mxu0 %v6438
        %7347 = vmatprep.subr.bf16.mxu0 %v6433
        %7348 = vmatpush2.bf16.msra.mxu0 %v6432
        %7349 = vmatprep.subr.bf16.mxu0 %v6427
        %7350 = vmatpush2.bf16.msra.mxu0 %v6426
        %7351 = vmatprep.subr.bf16.mxu0 %v6421
        %7352 = vmatpush2.bf16.msra.mxu0 %v6420
        %7353 = vmatprep.mubr.bf16.mxu0 %v4511
        %7354 = vmatmul.mubr.bf16.gmra.mxu0 %v4510
        %v7355 = vpop.f32.mrf.mxu0
        %v7356 = vadd.f32 %v7313, %v7355
        %v7357 = vpop.f32.mrf.mxu0
        %v7358 = vadd.f32 %v7315, %v7357
        %v7359 = vpop.f32.mrf.mxu0
        %v7360 = vadd.f32 %v7317, %v7359
        %v7361 = vpop.f32.mrf.mxu0
        %v7362 = vadd.f32 %v7319, %v7361
        %7363 = vdwg.mxu0
        %v7364 = vtanh.pop %v7012
        %v7365 = vtanh.pop %v7014
        %v7366 = vtanh.pop %v7184
        %v7367 = vtanh.pop %v7186
        %v7368 = vtanh.pop %v7356
        %v7369 = vtanh.pop %v7358
        %v7370 = vtanh.pop %v7016
        %v7371 = vtanh.pop %v7018
        %v7372 = vtanh.pop %v7188
        %v7373 = vtanh.pop %v7190
        %v7374 = vtanh.pop %v7360
        %v7375 = vtanh.pop %v7362
        %7376 = vst [vmem:[%s451] sm:$0xff] %v7364
        %7377 = vst [vmem:[%s451 + $0x8] sm:$0xff] %v7365
        %7378 = vst [vmem:[%s451 + $0x10] sm:$0xff] %v7366
        %7379 = vst [vmem:[%s451 + $0x18] sm:$0xff] %v7367
        %7380 = vst [vmem:[%s451 + $0x20] sm:$0xff] %v7368
        %7381 = vst [vmem:[%s451 + $0x28] sm:$0xff] %v7369
        %7382 = vst [vmem:[%s451 + $0x30] sm:$0xff] %v7370
        %7383 = vst [vmem:[%s451 + $0x38] sm:$0xff] %v7371
        %7384 = vst [vmem:[%s451 + $0x40] sm:$0xff] %v7372
        %7385 = vst [vmem:[%s451 + $0x48] sm:$0xff] %v7373
        %7386 = vst [vmem:[%s451 + $0x50] sm:$0xff] %v7374
        %7387 = vst [vmem:[%s451 + $0x58] sm:$0xff] %v7375
        %s7388 = sand.u32 %s199, 1
        %s7389 = scalar_lea.sflag [#allocation4], %s7388
        %s7390 = sand.u32 %s199, 1
        %s7391 = smul.addr %s7390, 96
        %s7392 = scalar_lea.vmem [#allocation14], %s7391
        // Predicated region
        $region77: #{tpu_custom_call.1} parent=47 // pred_check
          %p7393 = pneg %p209
        $region78: #{tpu_custom_call.1} parent=47 // pred_check_branch
          %7395 = sbr.rel (%p7393) target = $region80
        $region79: #{tpu_custom_call.1} parent=47 // pred_region
          %s7396 = smul.u32 2, %s29
          %s7397 = ssub.s32 3, %s7396
          %p7398 = scmp.lt.s32.totalorder %s7397, 2
          %s7399 = scalar_select %p7398, %s7397, 2
          %s7400 = smul.u32 128, %s7399
          %s7401 = smul.u32 %s7400, 6
          %s7403 = ssub.s32 1536, %s7401
          %7404 = vsyncadd %s7389, %s7403
          %p7405 = scmp.ne.s32.totalorder 0, %s7401
          %s7406 = smul.addr %s7396, 6
          %s7407 = smul.addr %s7406, 128
          %s7408 = scalar_lea.hbm %s7, %s7407
          %s7409 = smul.u32 48, %s7399
          %s7410 = sshll.u32 %s7392, 4
          %s7411 = int_to_ptr.vmem [resolvable:$true] %s7410
          %s7412 = sshll.u32 %s7409, 4
          %7416 = dma.vmem_to_hbm [thread:$0]  (%p7405), %s7411, %s7412, %s7408, %s7389, 768, 768, 48
        $region80: #{tpu_custom_call.1} parent=47 // pred_fallthru
          _
      $region48: #{tpu_custom_call.1} parent=5 // pred_fallthru
        _
      %p7417 = scmp.le.s32.totalorder 2, %s24
      // Predicated region
      $region81: #{tpu_custom_call.1} parent=5 // pred_check
        %p7418 = pneg %p7417
      $region82: #{tpu_custom_call.1} parent=5 // pred_check_branch
        %7420 = sbr.rel (%p7418) target = $region84
      $region83: #{tpu_custom_call.1} parent=5 // pred_region
        %s7421 = ssub.s32 %s24, 2
        // Predicated region
        $region85: #{tpu_custom_call.1} parent=83 // pred_check
          %p7422 = pneg %p215
        $region86: #{tpu_custom_call.1} parent=83 // pred_check_branch
          %7424 = sbr.rel (%p7422) target = $region88
        $region87: #{tpu_custom_call.1} parent=83 // pred_region
          %s7425 = sand.u32 %s200, 1
          %s7426 = scalar_lea.sflag [#allocation4], %s7425
          %s7427 = sand.u32 %s200, 1
          %s7428 = smul.addr %s7427, 96
          %s7429 = scalar_lea.vmem [#allocation14], %s7428
          %7430 = dma.done %s7426, 1536
        $region88: #{tpu_custom_call.1} parent=83 // pred_fallthru
          _
      $region84: #{tpu_custom_call.1} parent=5 // pred_fallthru
        _
    $region6: #{tpu_custom_call.1} parent=1 // loop_footer
      %s28 = sadd.s32 1, %s24
    $region7: #{tpu_custom_call.1} parent=1 // loop_footer_branch
      %23 = sbr.rel target = $region3
    $region8: #{tpu_custom_call.1} parent=1 // loop_exit
      _
    %7431 = vsyncpa [#allocation3], 1
    %s7432 = scalar_lea.sflag [#allocation3], 1
    %7433 = vsyncpa %s7432, 1
    %7434 = vsyncpa [#allocation6], 1
    %s7435 = scalar_lea.sflag [#allocation6], 1
    %7436 = vsyncpa %s7435, 1
    %7437 = vsyncpa [#allocation9], 1
    %7438 = vsyncpa [#allocation12], 1
    %7439 = vsyncpa [#allocation4], 1
    %s7440 = scalar_lea.sflag [#allocation4], 1
    %7441 = vsyncpa %s7440, 1

</llo_original>
